<compile_context>
chip_gen: v7x
topology: tpu7x:2x2x1
jax: 0.10.0
libtpu: 0.0.40
codegen_flags: <defaults>
</compile_context>

<pallas_src>
import functools

import jax
import jax.numpy as jnp
from jax.experimental import pallas as pl
from jax.experimental.pallas import tpu as pltpu

_LANES = 128


def _round_up(x, m):
    return ((x + m - 1) // m) * m


def _pick_batch_tile(n, ho, wo, target_rows=512):
    """Largest divisor of n whose matmul row count (bt*ho*wo) stays near the target."""
    best = 1
    for d in range(1, n + 1):
        if n % d == 0 and d * ho * wo <= max(target_rows, ho * wo):
            best = d
    return best


# ----------------------------- in-kernel helpers (traced inside kernels) -----------------------------

def _zero_pad_hw(x):
    """(bt, h, w, c) -> (bt, h+2, w+2, c) with a zero halo (conv padding=1)."""
    bt, h, w, c = x.shape
    zr = jnp.zeros((bt, 1, w, c), x.dtype)
    x = jnp.concatenate([zr, x, zr], axis=1)
    zc = jnp.zeros((bt, h + 2, 1, c), x.dtype)
    return jnp.concatenate([zc, x, zc], axis=2)


def _tap(xpad, kh, kw, stride, ho, wo):
    """Extract the (kh, kw) conv tap: xpad[:, kh + stride*i, kw + stride*j, :] -> (bt, ho, wo, c).

    Only contiguous static slices, leading-dim reshapes and sublane concatenation are used
    (no strided vector slices), so it lowers cleanly on Mosaic.
    """
    if stride == 1:
        xr = xpad[:, kh:kh + ho]
    else:
        hp = xpad.shape[1]
        end = min(kh + stride * ho, hp)
        xr = xpad[:, kh:end]
        need = stride * ho - (end - kh)
        if need > 0:  # over-read guard for odd spatial sizes; padded rows are discarded below
            xr = jnp.concatenate(
                [xr, jnp.zeros((xr.shape[0], need) + xr.shape[2:], xr.dtype)], axis=1)
        xr = xr.reshape(xr.shape[0], ho, stride, xr.shape[2], xr.shape[3])[:, :, 0]
    # xr: (bt, ho, Wp, c)
    if stride == 1:
        return xr[:, :, kw:kw + wo, :]
    cols = [xr[:, :, kw + stride * j: kw + stride * j + 1, :] for j in range(wo)]
    return jnp.concatenate(cols, axis=2)


# ----------------------------- Pallas kernels -----------------------------

def _make_conv1_kernel(*, stride, ho, wo, cinp, coutp, prologue, has_sc):
    """BN1+ReLU (optional prologue) -> conv3x3(stride) -> BN2+ReLU (epilogue, halo-padded bf16)
       [+ fused 1x1 shortcut projection output]."""

    def kernel(*refs):
        it = iter(refs)
        x_ref = next(it)
        if prologue:
            s1_ref = next(it)
            b1_ref = next(it)
        w1_ref = next(it)
        s2_ref = next(it)
        b2_ref = next(it)
        wsc_ref = next(it) if has_sc else None
        a2p_ref = next(it)
        sc_ref = next(it) if has_sc else None

        bt = x_ref.shape[0]
        if prologue:
            # Fused BN1 + ReLU prologue in f32, cast to bf16 for the MXU, then zero-pad in VMEM.
            s1 = s1_ref[...].reshape(1, 1, 1, cinp)
            b1 = b1_ref[...].reshape(1, 1, 1, cinp)
            a1 = jnp.maximum(x_ref[...] * s1 + b1, 0.0).astype(jnp.bfloat16)
            xpad = _zero_pad_hw(a1)
        else:
            xpad = x_ref[...]  # already activated + halo-padded bf16 (from previous kernel)

        m = bt * ho * wo
        acc = jnp.zeros((m, coutp), jnp.float32)
        center = None
        for kh in range(3):
            for kw in range(3):
                t = kh * 3 + kw
                xt = _tap(xpad, kh, kw, stride, ho, wo).reshape(m, cinp)
                if kh == 1 and kw == 1:
                    center = xt  # reused for the fused 1x1 shortcut projection
                wt = w1_ref[t * cinp:(t + 1) * cinp, :]
                acc = acc + jnp.dot(xt, wt, preferred_element_type=jnp.float32)

        # Fused BN2 + ReLU epilogue (f32), emit zero-padded bf16 activation for conv2.
        a2 = jnp.maximum(acc * s2_ref[...] + b2_ref[...], 0.0)
        a2p_ref[...] = _zero_pad_hw(a2.astype(jnp.bfloat16).reshape(bt, ho, wo, coutp))

        if has_sc:
            sc = jnp.dot(center, wsc_ref[...], preferred_element_type=jnp.float32)
            sc_ref[...] = sc.reshape(bt, ho, wo, coutp)

    return kernel


def _make_conv2_kernel(*, ho, wo, cp, has_next):
    """conv3x3(stride=1) -> fused residual add [-> fused BN1+ReLU of the next block]."""

    def kernel(*refs):
        it = iter(refs)
        a2p_ref = next(it)
        w2_ref = next(it)
        res_ref = next(it)
        if has_next:
            s1_ref = next(it)
            b1_ref = next(it)
        o_ref = next(it)
        a1p_ref = next(it) if has_next else None

        bt = a2p_ref.shape[0]
        m = bt * ho * wo
        xpad = a2p_ref[...]
        acc = jnp.zeros((m, cp), jnp.float32)
        for kh in range(3):
            for kw in range(3):
                t = kh * 3 + kw
                xt = _tap(xpad, kh, kw, 1, ho, wo).reshape(m, cp)
                wt = w2_ref[t * cp:(t + 1) * cp, :]
                acc = acc + jnp.dot(xt, wt, preferred_element_type=jnp.float32)

        o = acc + res_ref[...].reshape(m, cp)  # fused residual add (f32)
        o_ref[...] = o.reshape(bt, ho, wo, cp)

        if has_next:
            # Fused BN1+ReLU of the *next* block as an epilogue; halo-padded bf16 output.
            a1n = jnp.maximum(o * s1_ref[...] + b1_ref[...], 0.0)
            a1p_ref[...] = _zero_pad_hw(a1n.astype(jnp.bfloat16).reshape(bt, ho, wo, cp))

    return kernel


# ----------------------------- pallas_call wrappers -----------------------------

def _conv1_call(x, w1_flat, s2, b2, *, stride, ho, wo, cinp, coutp,
                prologue, s1=None, b1=None, wsc_flat=None):
    n = x.shape[0]
    bt = _pick_batch_tile(n, ho, wo)
    grid = (n // bt,)
    has_sc = wsc_flat is not None
    hin, win = x.shape[1], x.shape[2]

    in_specs = [pl.BlockSpec((bt, hin, win, cinp), lambda i: (i, 0, 0, 0))]
    args = [x]
    if prologue:
        in_specs += [pl.BlockSpec((1, cinp), lambda i: (0, 0))] * 2
        args += [s1, b1]
    in_specs.append(pl.BlockSpec((9 * cinp, coutp), lambda i: (0, 0)))
    args.append(w1_flat)
    in_specs += [pl.BlockSpec((1, coutp), lambda i: (0, 0))] * 2
    args += [s2, b2]
    if has_sc:
        in_specs.append(pl.BlockSpec((cinp, coutp), lambda i: (0, 0)))
        args.append(wsc_flat)

    out_shape = [jax.ShapeDtypeStruct((n, ho + 2, wo + 2, coutp), jnp.bfloat16)]
    out_specs = [pl.BlockSpec((bt, ho + 2, wo + 2, coutp), lambda i: (i, 0, 0, 0))]
    if has_sc:
        out_shape.append(jax.ShapeDtypeStruct((n, ho, wo, coutp), jnp.float32))
        out_specs.append(pl.BlockSpec((bt, ho, wo, coutp), lambda i: (i, 0, 0, 0)))

    flops = 2 * n * ho * wo * (9 * cinp) * coutp
    if has_sc:
        flops += 2 * n * ho * wo * cinp * coutp
    bytes_accessed = (x.size * x.dtype.itemsize + w1_flat.size * 2
                      + n * (ho + 2) * (wo + 2) * coutp * 2
                      + (n * ho * wo * coutp * 4 if has_sc else 0))

    kernel = _make_conv1_kernel(stride=stride, ho=ho, wo=wo, cinp=cinp, coutp=coutp,
                                prologue=prologue, has_sc=has_sc)
    outs = pl.pallas_call(
        kernel,
        grid=grid,
        in_specs=in_specs,
        out_specs=out_specs,
        out_shape=out_shape,
        compiler_params=pltpu.CompilerParams(dimension_semantics=("parallel",)),
        cost_estimate=pl.CostEstimate(flops=int(flops), transcendentals=0,
                                      bytes_accessed=int(bytes_accessed)),
    )(*args)
    return outs


def _conv2_call(a2p, w2_flat, shortcut, *, ho, wo, cp, s1n=None, b1n=None):
    n = a2p.shape[0]
    bt = _pick_batch_tile(n, ho, wo)
    grid = (n // bt,)
    has_next = s1n is not None

    in_specs = [
        pl.BlockSpec((bt, ho + 2, wo + 2, cp), lambda i: (i, 0, 0, 0)),
        pl.BlockSpec((9 * cp, cp), lambda i: (0, 0)),
        pl.BlockSpec((bt, ho, wo, cp), lambda i: (i, 0, 0, 0)),
    ]
    args = [a2p, w2_flat, shortcut]
    if has_next:
        in_specs += [pl.BlockSpec((1, cp), lambda i: (0, 0))] * 2
        args += [s1n, b1n]

    out_shape = [jax.ShapeDtypeStruct((n, ho, wo, cp), jnp.float32)]
    out_specs = [pl.BlockSpec((bt, ho, wo, cp), lambda i: (i, 0, 0, 0))]
    if has_next:
        out_shape.append(jax.ShapeDtypeStruct((n, ho + 2, wo + 2, cp), jnp.bfloat16))
        out_specs.append(pl.BlockSpec((bt, ho + 2, wo + 2, cp), lambda i: (i, 0, 0, 0)))

    flops = 2 * n * ho * wo * (9 * cp) * cp
    bytes_accessed = (a2p.size * 2 + w2_flat.size * 2 + shortcut.size * 4
                      + n * ho * wo * cp * 4
                      + (n * (ho + 2) * (wo + 2) * cp * 2 if has_next else 0))

    kernel = _make_conv2_kernel(ho=ho, wo=wo, cp=cp, has_next=has_next)
    outs = pl.pallas_call(
        kernel,
        grid=grid,
        in_specs=in_specs,
        out_specs=out_specs,
        out_shape=out_shape,
        compiler_params=pltpu.CompilerParams(dimension_semantics=("parallel",)),
        cost_estimate=pl.CostEstimate(flops=int(flops), transcendentals=0,
                                      bytes_accessed=int(bytes_accessed)),
    )(*args)
    return outs


# ----------------------------- parameter folding (plain JAX, constant-folded under jit) -----------------------------

def _fold_bn(gamma, beta, mean, var, cp, eps=1e-5):
    scale = gamma / jnp.sqrt(var + eps)
    shift = beta - mean * scale
    c = gamma.shape[0]
    scale = jnp.pad(scale, (0, cp - c)).reshape(1, cp).astype(jnp.float32)
    shift = jnp.pad(shift, (0, cp - c)).reshape(1, cp).astype(jnp.float32)
    return scale, shift


def _fold_conv3x3(w_oihw, cinp, coutp):
    o, i, _, _ = w_oihw.shape
    w = jnp.transpose(w_oihw, (2, 3, 1, 0))  # (3, 3, I, O) -- tap-major, matches in-kernel order
    w = jnp.pad(w, ((0, 0), (0, 0), (0, cinp - i), (0, coutp - o)))
    return w.reshape(9 * cinp, coutp).astype(jnp.bfloat16)


def _fold_conv1x1(w_oihw, cinp, coutp):
    o, i, _, _ = w_oihw.shape
    w = jnp.transpose(w_oihw, (2, 3, 1, 0)).reshape(i, o)
    w = jnp.pad(w, ((0, cinp - i), (0, coutp - o)))
    return w.astype(jnp.bfloat16)


# ----------------------------- Conv_Group forward -----------------------------

def conv_group_forward(x_nchw, block_params):
    x = jnp.transpose(x_nchw, (0, 2, 3, 1)).astype(jnp.float32)  # NCHW -> NHWC
    n, hi, wi, _ = x.shape
    nb = len(block_params)

    a1p = None     # halo-padded, activated bf16 input to the current block's conv1
    resid = None   # residual stream (f32, channel-padded) -- shortcut for 'equal' blocks
    out = None
    cout_last = None

    for bi, p in enumerate(block_params):
        equal = p["equal"]
        stride = p["stride"]
        cout_b, cin_b = p["conv1"].shape[0], p["conv1"].shape[1]
        cinp = _round_up(cin_b, _LANES)
        coutp = _round_up(cout_b, _LANES)
        ho = (hi + 2 - 3) // stride + 1
        wo = (wi + 2 - 3) // stride + 1

        s2, b2 = _fold_bn(*p["bn2"], coutp)
        w1 = _fold_conv3x3(p["conv1"], cinp, coutp)
        w2 = _fold_conv3x3(p["conv2"], coutp, coutp)
        wsc = _fold_conv1x1(p["conv_sc"], cinp, coutp) if not equal else None

        if bi == 0:
            # Fuse BN1+ReLU of the first block as a prologue on the raw (channel-padded) input.
            s1, b1 = _fold_bn(*p["bn1"], cinp)
            x_p = jnp.pad(x, ((0, 0), (0, 0), (0, 0), (0, cinp - cin_b)))
            outs = _conv1_call(x_p, w1, s2, b2, stride=stride, ho=ho, wo=wo,
                               cinp=cinp, coutp=coutp, prologue=True,
                               s1=s1, b1=b1, wsc_flat=wsc)
            identity = x_p
        else:
            outs = _conv1_call(a1p, w1, s2, b2, stride=stride, ho=ho, wo=wo,
                               cinp=cinp, coutp=coutp, prologue=False, wsc_flat=wsc)
            identity = resid

        if equal:
            (a2p,) = outs
            shortcut = identity          # raw pre-activation input (f32), as in WRN
        else:
            a2p, sc = outs
            shortcut = sc                # fused 1x1 projection of BN1ReLU(x) (f32)

        has_next = bi + 1 < nb
        if has_next:
            s1n, b1n = _fold_bn(*block_params[bi + 1]["bn1"], coutp)
            o, a1p = _conv2_call(a2p, w2, shortcut, ho=ho, wo=wo, cp=coutp,
                                 s1n=s1n, b1n=b1n)
        else:
            (o,) = _conv2_call(a2p, w2, shortcut, ho=ho, wo=wo, cp=coutp)
            a1p = None

        resid = o
        out = o
        hi, wi = ho, wo
        cout_last = cout_b

    y = out[:, :, :, :cout_last]
    return jnp.transpose(y, (0, 3, 1, 2))  # NHWC -> NCHW


# ----------------------------- synthetic parameters (matches Conv_Group(block, in, out, n, strides)) -----------------------------

def init_conv_group_params(key, in_planes, out_planes, n, strides, dropout_rate=0.0):
    del dropout_rate  # dropoutRate=0.0 -> identity
    blocks = []
    for i in range(int(n)):
        inp = in_planes if i == 0 else out_planes
        st = strides if i == 0 else 1
        equal = (inp == out_planes)
        key, *ks = jax.random.split(key, 12)
        p = {
            "equal": equal,
            "stride": st,
            # BN params: (gamma, beta, running_mean, running_var)
            "bn1": (
                jax.random.uniform(ks[0], (inp,), minval=0.5, maxval=1.5),
                0.1 * jax.random.normal(ks[1], (inp,)),
                0.1 * jax.random.normal(ks[2], (inp,)),
                jax.random.uniform(ks[3], (inp,), minval=0.5, maxval=1.5),
            ),
            "conv1": 0.1 * jax.random.normal(ks[4], (out_planes, inp, 3, 3)),
            "bn2": (
                jax.random.uniform(ks[5], (out_planes,), minval=0.5, maxval=1.5),
                0.1 * jax.random.normal(ks[6], (out_planes,)),
                0.1 * jax.random.normal(ks[7], (out_planes,)),
                jax.random.uniform(ks[8], (out_planes,), minval=0.5, maxval=1.5),
            ),
            "conv2": 0.1 * jax.random.normal(ks[9], (out_planes, out_planes, 3, 3)),
        }
        if not equal:
            p["conv_sc"] = 0.1 * jax.random.normal(ks[10], (out_planes, inp, 1, 1))
        blocks.append(p)
    return blocks


if __name__ == "__main__":
    key = jax.random.PRNGKey(0)
    kx, kp = jax.random.split(key)

    # Conv_Group(BasicBlock, input=4, output=8, n=2, strides=2, dropoutRate=0.0)
    N, C, H, W = 2, 4, 16, 16
    x = jax.random.normal(kx, (N, C, H, W), dtype=jnp.float32)
    params = init_conv_group_params(kp, in_planes=4, out_planes=8, n=2, strides=2)

    fwd = jax.jit(functools.partial(conv_group_forward, block_params=params))
    y = jax.block_until_ready(fwd(x))

    assert y.shape == (N, 8, H // 2, W // 2), y.shape
    assert bool(jnp.all(jnp.isfinite(y)))
    print("KERNEL_OK")
</pallas_src>

<mosaic_0001>
module attributes {stable_mosaic.version = 11 : i64} {
  func.func @kernel(%arg0: i32, %arg1: memref<2x10x10x128xbf16, #tpu.memory_space<vmem>>, %arg2: memref<1152x128xbf16, #tpu.memory_space<vmem>>, %arg3: memref<2x8x8x128xf32, #tpu.memory_space<vmem>>, %arg4: memref<1x128xf32, #tpu.memory_space<vmem>>, %arg5: memref<1x128xf32, #tpu.memory_space<vmem>>, %arg6: memref<2x8x8x128xf32, #tpu.memory_space<vmem>>, %arg7: memref<2x10x10x128xbf16, #tpu.memory_space<vmem>>) attributes {dimension_semantics = [#tpu.dimension_semantics<parallel>], iteration_bounds = array<i64: 1>, scalar_prefetch = 0 : i64, scratch_operands = 0 : i64, tpu.core_type = #tpu.core_type<tc>, window_params = [{transform_indices = @transform_0, window_bounds = array<i64: 2, 10, 10, 128>}, {pipeline_mode = #tpu.pipeline_mode<synchronous>, transform_indices = @transform_1, window_bounds = array<i64: 1152, 128>}, {transform_indices = @transform_2, window_bounds = array<i64: 2, 8, 8, 128>}, {pipeline_mode = #tpu.pipeline_mode<synchronous>, transform_indices = @transform_3, window_bounds = array<i64: 1, 128>}, {pipeline_mode = #tpu.pipeline_mode<synchronous>, transform_indices = @transform_4, window_bounds = array<i64: 1, 128>}, {transform_indices = @transform_5, window_bounds = array<i64: 2, 8, 8, 128>}, {transform_indices = @transform_6, window_bounds = array<i64: 2, 10, 10, 128>}]} {
    %c0 = arith.constant 0 : index
    %c0_0 = arith.constant 0 : index
    %c0_1 = arith.constant 0 : index
    %c0_2 = arith.constant 0 : index
    %0 = vector.load %arg1[%c0, %c0_0, %c0_1, %c0_2] : memref<2x10x10x128xbf16, #tpu.memory_space<vmem>>, vector<2x10x10x128xbf16>
    %cst = arith.constant 0.000000e+00 : f32
    %1 = vector.broadcast %cst : f32 to vector<128x128xf32>
    %2 = vector.extract_strided_slice %0 {offsets = [0, 0, 0, 0], sizes = [2, 8, 10, 128], strides = [1, 1, 1, 1]} : vector<2x10x10x128xbf16> to vector<2x8x10x128xbf16>
    %3 = vector.extract_strided_slice %2 {offsets = [0, 0, 0, 0], sizes = [2, 8, 8, 128], strides = [1, 1, 1, 1]} : vector<2x8x10x128xbf16> to vector<2x8x8x128xbf16>
    %4 = vector.shape_cast %3 : vector<2x8x8x128xbf16> to vector<128x128xbf16>
    %c0_3 = arith.constant 0 : index
    %c0_4 = arith.constant 0 : index
    %5 = vector.load %arg2[%c0_3, %c0_4] : memref<1152x128xbf16, #tpu.memory_space<vmem>>, vector<128x128xbf16>
    %cst_5 = arith.constant dense<0.000000e+00> : vector<128x128xf32>
    %6 = tpu.matmul %4, %5, %cst_5 {dimension_numbers = #tpu.dot_dimension_numbers<[1], [0], [0], [1], [0, 0, 1, 1], [], []>} : vector<128x128xbf16>, vector<128x128xbf16>, vector<128x128xf32> -> vector<128x128xf32>
    %7 = arith.addf %1, %6 : vector<128x128xf32>
    %8 = vector.extract_strided_slice %0 {offsets = [0, 0, 0, 0], sizes = [2, 8, 10, 128], strides = [1, 1, 1, 1]} : vector<2x10x10x128xbf16> to vector<2x8x10x128xbf16>
    %9 = vector.extract_strided_slice %8 {offsets = [0, 0, 1, 0], sizes = [2, 8, 8, 128], strides = [1, 1, 1, 1]} : vector<2x8x10x128xbf16> to vector<2x8x8x128xbf16>
    %10 = vector.shape_cast %9 : vector<2x8x8x128xbf16> to vector<128x128xbf16>
    %c128 = arith.constant 128 : index
    %c0_6 = arith.constant 0 : index
    %11 = vector.load %arg2[%c128, %c0_6] : memref<1152x128xbf16, #tpu.memory_space<vmem>>, vector<128x128xbf16>
    %cst_7 = arith.constant dense<0.000000e+00> : vector<128x128xf32>
    %12 = tpu.matmul %10, %11, %cst_7 {dimension_numbers = #tpu.dot_dimension_numbers<[1], [0], [0], [1], [0, 0, 1, 1], [], []>} : vector<128x128xbf16>, vector<128x128xbf16>, vector<128x128xf32> -> vector<128x128xf32>
    %13 = arith.addf %7, %12 : vector<128x128xf32>
    %14 = vector.extract_strided_slice %0 {offsets = [0, 0, 0, 0], sizes = [2, 8, 10, 128], strides = [1, 1, 1, 1]} : vector<2x10x10x128xbf16> to vector<2x8x10x128xbf16>
    %15 = vector.extract_strided_slice %14 {offsets = [0, 0, 2, 0], sizes = [2, 8, 8, 128], strides = [1, 1, 1, 1]} : vector<2x8x10x128xbf16> to vector<2x8x8x128xbf16>
    %16 = vector.shape_cast %15 : vector<2x8x8x128xbf16> to vector<128x128xbf16>
    %c256 = arith.constant 256 : index
    %c0_8 = arith.constant 0 : index
    %17 = vector.load %arg2[%c256, %c0_8] : memref<1152x128xbf16, #tpu.memory_space<vmem>>, vector<128x128xbf16>
    %cst_9 = arith.constant dense<0.000000e+00> : vector<128x128xf32>
    %18 = tpu.matmul %16, %17, %cst_9 {dimension_numbers = #tpu.dot_dimension_numbers<[1], [0], [0], [1], [0, 0, 1, 1], [], []>} : vector<128x128xbf16>, vector<128x128xbf16>, vector<128x128xf32> -> vector<128x128xf32>
    %19 = arith.addf %13, %18 : vector<128x128xf32>
    %20 = vector.extract_strided_slice %0 {offsets = [0, 1, 0, 0], sizes = [2, 8, 10, 128], strides = [1, 1, 1, 1]} : vector<2x10x10x128xbf16> to vector<2x8x10x128xbf16>
    %21 = vector.extract_strided_slice %20 {offsets = [0, 0, 0, 0], sizes = [2, 8, 8, 128], strides = [1, 1, 1, 1]} : vector<2x8x10x128xbf16> to vector<2x8x8x128xbf16>
    %22 = vector.shape_cast %21 : vector<2x8x8x128xbf16> to vector<128x128xbf16>
    %c384 = arith.constant 384 : index
    %c0_10 = arith.constant 0 : index
    %23 = vector.load %arg2[%c384, %c0_10] : memref<1152x128xbf16, #tpu.memory_space<vmem>>, vector<128x128xbf16>
    %cst_11 = arith.constant dense<0.000000e+00> : vector<128x128xf32>
    %24 = tpu.matmul %22, %23, %cst_11 {dimension_numbers = #tpu.dot_dimension_numbers<[1], [0], [0], [1], [0, 0, 1, 1], [], []>} : vector<128x128xbf16>, vector<128x128xbf16>, vector<128x128xf32> -> vector<128x128xf32>
    %25 = arith.addf %19, %24 : vector<128x128xf32>
    %26 = vector.extract_strided_slice %0 {offsets = [0, 1, 0, 0], sizes = [2, 8, 10, 128], strides = [1, 1, 1, 1]} : vector<2x10x10x128xbf16> to vector<2x8x10x128xbf16>
    %27 = vector.extract_strided_slice %26 {offsets = [0, 0, 1, 0], sizes = [2, 8, 8, 128], strides = [1, 1, 1, 1]} : vector<2x8x10x128xbf16> to vector<2x8x8x128xbf16>
    %28 = vector.shape_cast %27 : vector<2x8x8x128xbf16> to vector<128x128xbf16>
    %c512 = arith.constant 512 : index
    %c0_12 = arith.constant 0 : index
    %29 = vector.load %arg2[%c512, %c0_12] : memref<1152x128xbf16, #tpu.memory_space<vmem>>, vector<128x128xbf16>
    %cst_13 = arith.constant dense<0.000000e+00> : vector<128x128xf32>
    %30 = tpu.matmul %28, %29, %cst_13 {dimension_numbers = #tpu.dot_dimension_numbers<[1], [0], [0], [1], [0, 0, 1, 1], [], []>} : vector<128x128xbf16>, vector<128x128xbf16>, vector<128x128xf32> -> vector<128x128xf32>
    %31 = arith.addf %25, %30 : vector<128x128xf32>
    %32 = vector.extract_strided_slice %0 {offsets = [0, 1, 0, 0], sizes = [2, 8, 10, 128], strides = [1, 1, 1, 1]} : vector<2x10x10x128xbf16> to vector<2x8x10x128xbf16>
    %33 = vector.extract_strided_slice %32 {offsets = [0, 0, 2, 0], sizes = [2, 8, 8, 128], strides = [1, 1, 1, 1]} : vector<2x8x10x128xbf16> to vector<2x8x8x128xbf16>
    %34 = vector.shape_cast %33 : vector<2x8x8x128xbf16> to vector<128x128xbf16>
    %c640 = arith.constant 640 : index
    %c0_14 = arith.constant 0 : index
    %35 = vector.load %arg2[%c640, %c0_14] : memref<1152x128xbf16, #tpu.memory_space<vmem>>, vector<128x128xbf16>
    %cst_15 = arith.constant dense<0.000000e+00> : vector<128x128xf32>
    %36 = tpu.matmul %34, %35, %cst_15 {dimension_numbers = #tpu.dot_dimension_numbers<[1], [0], [0], [1], [0, 0, 1, 1], [], []>} : vector<128x128xbf16>, vector<128x128xbf16>, vector<128x128xf32> -> vector<128x128xf32>
    %37 = arith.addf %31, %36 : vector<128x128xf32>
    %38 = vector.extract_strided_slice %0 {offsets = [0, 2, 0, 0], sizes = [2, 8, 10, 128], strides = [1, 1, 1, 1]} : vector<2x10x10x128xbf16> to vector<2x8x10x128xbf16>
    %39 = vector.extract_strided_slice %38 {offsets = [0, 0, 0, 0], sizes = [2, 8, 8, 128], strides = [1, 1, 1, 1]} : vector<2x8x10x128xbf16> to vector<2x8x8x128xbf16>
    %40 = vector.shape_cast %39 : vector<2x8x8x128xbf16> to vector<128x128xbf16>
    %c768 = arith.constant 768 : index
    %c0_16 = arith.constant 0 : index
    %41 = vector.load %arg2[%c768, %c0_16] : memref<1152x128xbf16, #tpu.memory_space<vmem>>, vector<128x128xbf16>
    %cst_17 = arith.constant dense<0.000000e+00> : vector<128x128xf32>
    %42 = tpu.matmul %40, %41, %cst_17 {dimension_numbers = #tpu.dot_dimension_numbers<[1], [0], [0], [1], [0, 0, 1, 1], [], []>} : vector<128x128xbf16>, vector<128x128xbf16>, vector<128x128xf32> -> vector<128x128xf32>
    %43 = arith.addf %37, %42 : vector<128x128xf32>
    %44 = vector.extract_strided_slice %0 {offsets = [0, 2, 0, 0], sizes = [2, 8, 10, 128], strides = [1, 1, 1, 1]} : vector<2x10x10x128xbf16> to vector<2x8x10x128xbf16>
    %45 = vector.extract_strided_slice %44 {offsets = [0, 0, 1, 0], sizes = [2, 8, 8, 128], strides = [1, 1, 1, 1]} : vector<2x8x10x128xbf16> to vector<2x8x8x128xbf16>
    %46 = vector.shape_cast %45 : vector<2x8x8x128xbf16> to vector<128x128xbf16>
    %c896 = arith.constant 896 : index
    %c0_18 = arith.constant 0 : index
    %47 = vector.load %arg2[%c896, %c0_18] : memref<1152x128xbf16, #tpu.memory_space<vmem>>, vector<128x128xbf16>
    %cst_19 = arith.constant dense<0.000000e+00> : vector<128x128xf32>
    %48 = tpu.matmul %46, %47, %cst_19 {dimension_numbers = #tpu.dot_dimension_numbers<[1], [0], [0], [1], [0, 0, 1, 1], [], []>} : vector<128x128xbf16>, vector<128x128xbf16>, vector<128x128xf32> -> vector<128x128xf32>
    %49 = arith.addf %43, %48 : vector<128x128xf32>
    %50 = vector.extract_strided_slice %0 {offsets = [0, 2, 0, 0], sizes = [2, 8, 10, 128], strides = [1, 1, 1, 1]} : vector<2x10x10x128xbf16> to vector<2x8x10x128xbf16>
    %51 = vector.extract_strided_slice %50 {offsets = [0, 0, 2, 0], sizes = [2, 8, 8, 128], strides = [1, 1, 1, 1]} : vector<2x8x10x128xbf16> to vector<2x8x8x128xbf16>
    %52 = vector.shape_cast %51 : vector<2x8x8x128xbf16> to vector<128x128xbf16>
    %c1024 = arith.constant 1024 : index
    %c0_20 = arith.constant 0 : index
    %53 = vector.load %arg2[%c1024, %c0_20] : memref<1152x128xbf16, #tpu.memory_space<vmem>>, vector<128x128xbf16>
    %cst_21 = arith.constant dense<0.000000e+00> : vector<128x128xf32>
    %54 = tpu.matmul %52, %53, %cst_21 {dimension_numbers = #tpu.dot_dimension_numbers<[1], [0], [0], [1], [0, 0, 1, 1], [], []>} : vector<128x128xbf16>, vector<128x128xbf16>, vector<128x128xf32> -> vector<128x128xf32>
    %55 = arith.addf %49, %54 : vector<128x128xf32>
    %c0_22 = arith.constant 0 : index
    %c0_23 = arith.constant 0 : index
    %c0_24 = arith.constant 0 : index
    %c0_25 = arith.constant 0 : index
    %56 = vector.load %arg3[%c0_22, %c0_23, %c0_24, %c0_25] : memref<2x8x8x128xf32, #tpu.memory_space<vmem>>, vector<2x8x8x128xf32>
    %57 = vector.shape_cast %56 : vector<2x8x8x128xf32> to vector<128x128xf32>
    %58 = arith.addf %55, %57 : vector<128x128xf32>
    %59 = vector.shape_cast %58 : vector<128x128xf32> to vector<2x8x8x128xf32>
    %c0_26 = arith.constant 0 : index
    %c0_27 = arith.constant 0 : index
    %c0_28 = arith.constant 0 : index
    %c0_29 = arith.constant 0 : index
    %60 = vector.load %arg6[%c0_26, %c0_27, %c0_28, %c0_29] : memref<2x8x8x128xf32, #tpu.memory_space<vmem>>, vector<2x8x8x128xf32>
    tpu.vector_store %arg6[%c0_26, %c0_27, %c0_28, %c0_29], %59 {strides = array<i32>} : memref<2x8x8x128xf32, #tpu.memory_space<vmem>>, vector<2x8x8x128xf32>,
    %c0_30 = arith.constant 0 : index
    %c0_31 = arith.constant 0 : index
    %61 = vector.load %arg4[%c0_30, %c0_31] : memref<1x128xf32, #tpu.memory_space<vmem>>, vector<1x128xf32>
    %62 = vector.broadcast %61 : vector<1x128xf32> to vector<128x128xf32>
    %63 = arith.mulf %58, %62 : vector<128x128xf32>
    %c0_32 = arith.constant 0 : index
    %c0_33 = arith.constant 0 : index
    %64 = vector.load %arg5[%c0_32, %c0_33] : memref<1x128xf32, #tpu.memory_space<vmem>>, vector<1x128xf32>
    %65 = vector.broadcast %64 : vector<1x128xf32> to vector<128x128xf32>
    %66 = arith.addf %63, %65 : vector<128x128xf32>
    %cst_34 = arith.constant 0.000000e+00 : f32
    %67 = vector.broadcast %cst_34 : f32 to vector<128x128xf32>
    %68 = arith.maximumf %66, %67 : vector<128x128xf32>
    %69 = arith.truncf %68 : vector<128x128xf32> to vector<128x128xbf16>
    %70 = vector.shape_cast %69 : vector<128x128xbf16> to vector<2x8x8x128xbf16>
    %cst_35 = arith.constant 0.000000e+00 : bf16
    %71 = vector.broadcast %cst_35 : bf16 to vector<2x1x8x128xbf16>
    %72 = tpu.concatenate %71, %70, %71 in 1 : vector<2x1x8x128xbf16>, vector<2x8x8x128xbf16>, vector<2x1x8x128xbf16> -> vector<2x10x8x128xbf16>
    %cst_36 = arith.constant 0.000000e+00 : bf16
    %73 = vector.broadcast %cst_36 : bf16 to vector<2x10x1x128xbf16>
    %74 = tpu.concatenate %73, %72, %73 in 2 : vector<2x10x1x128xbf16>, vector<2x10x8x128xbf16>, vector<2x10x1x128xbf16> -> vector<2x10x10x128xbf16>
    %c0_37 = arith.constant 0 : index
    %c0_38 = arith.constant 0 : index
    %c0_39 = arith.constant 0 : index
    %c0_40 = arith.constant 0 : index
    %75 = vector.load %arg7[%c0_37, %c0_38, %c0_39, %c0_40] : memref<2x10x10x128xbf16, #tpu.memory_space<vmem>>, vector<2x10x10x128xbf16>
    tpu.vector_store %arg7[%c0_37, %c0_38, %c0_39, %c0_40], %74 {strides = array<i32>} : memref<2x10x10x128xbf16, #tpu.memory_space<vmem>>, vector<2x10x10x128xbf16>,
    return
  }
  func.func @transform_0(%arg0: i32) -> (i32, i32, i32, i32) {
    %c0_i32 = arith.constant 0 : i32
    %c0_i32_0 = arith.constant 0 : i32
    %c0_i32_1 = arith.constant 0 : i32
    %c0_i32_2 = arith.constant 0 : i32
    return %arg0, %c0_i32, %c0_i32_0, %c0_i32_1 : i32, i32, i32, i32
  }
  func.func @transform_1(%arg0: i32) -> (i32, i32) {
    %c0_i32 = arith.constant 0 : i32
    %c0_i32_0 = arith.constant 0 : i32
    %c0_i32_1 = arith.constant 0 : i32
    return %c0_i32, %c0_i32_0 : i32, i32
  }
  func.func @transform_2(%arg0: i32) -> (i32, i32, i32, i32) {
    %c0_i32 = arith.constant 0 : i32
    %c0_i32_0 = arith.constant 0 : i32
    %c0_i32_1 = arith.constant 0 : i32
    %c0_i32_2 = arith.constant 0 : i32
    return %arg0, %c0_i32, %c0_i32_0, %c0_i32_1 : i32, i32, i32, i32
  }
  func.func @transform_3(%arg0: i32) -> (i32, i32) {
    %c0_i32 = arith.constant 0 : i32
    %c0_i32_0 = arith.constant 0 : i32
    %c0_i32_1 = arith.constant 0 : i32
    return %c0_i32, %c0_i32_0 : i32, i32
  }
  func.func @transform_4(%arg0: i32) -> (i32, i32) {
    %c0_i32 = arith.constant 0 : i32
    %c0_i32_0 = arith.constant 0 : i32
    %c0_i32_1 = arith.constant 0 : i32
    return %c0_i32, %c0_i32_0 : i32, i32
  }
  func.func @transform_5(%arg0: i32) -> (i32, i32, i32, i32) {
    %c0_i32 = arith.constant 0 : i32
    %c0_i32_0 = arith.constant 0 : i32
    %c0_i32_1 = arith.constant 0 : i32
    %c0_i32_2 = arith.constant 0 : i32
    return %arg0, %c0_i32, %c0_i32_0, %c0_i32_1 : i32, i32, i32, i32
  }
  func.func @transform_6(%arg0: i32) -> (i32, i32, i32, i32) {
    %c0_i32 = arith.constant 0 : i32
    %c0_i32_0 = arith.constant 0 : i32
    %c0_i32_1 = arith.constant 0 : i32
    %c0_i32_2 = arith.constant 0 : i32
    return %arg0, %c0_i32, %c0_i32_0, %c0_i32_1 : i32, i32, i32, i32
  }
}

module attributes {stable_mosaic.version = 11 : i64} {
  func.func @kernel(%arg0: i32, %arg1: memref<2x16x16x128xf32, #tpu.memory_space<vmem>>, %arg2: memref<1x128xf32, #tpu.memory_space<vmem>>, %arg3: memref<1x128xf32, #tpu.memory_space<vmem>>, %arg4: memref<1152x128xbf16, #tpu.memory_space<vmem>>, %arg5: memref<1x128xf32, #tpu.memory_space<vmem>>, %arg6: memref<1x128xf32, #tpu.memory_space<vmem>>, %arg7: memref<128x128xbf16, #tpu.memory_space<vmem>>, %arg8: memref<2x10x10x128xbf16, #tpu.memory_space<vmem>>, %arg9: memref<2x8x8x128xf32, #tpu.memory_space<vmem>>) attributes {dimension_semantics = [#tpu.dimension_semantics<parallel>], iteration_bounds = array<i64: 1>, scalar_prefetch = 0 : i64, scratch_operands = 0 : i64, tpu.core_type = #tpu.core_type<tc>, window_params = [{transform_indices = @transform_0, window_bounds = array<i64: 2, 16, 16, 128>}, {pipeline_mode = #tpu.pipeline_mode<synchronous>, transform_indices = @transform_1, window_bounds = array<i64: 1, 128>}, {pipeline_mode = #tpu.pipeline_mode<synchronous>, transform_indices = @transform_2, window_bounds = array<i64: 1, 128>}, {pipeline_mode = #tpu.pipeline_mode<synchronous>, transform_indices = @transform_3, window_bounds = array<i64: 1152, 128>}, {pipeline_mode = #tpu.pipeline_mode<synchronous>, transform_indices = @transform_4, window_bounds = array<i64: 1, 128>}, {pipeline_mode = #tpu.pipeline_mode<synchronous>, transform_indices = @transform_5, window_bounds = array<i64: 1, 128>}, {pipeline_mode = #tpu.pipeline_mode<synchronous>, transform_indices = @transform_6, window_bounds = array<i64: 128, 128>}, {transform_indices = @transform_7, window_bounds = array<i64: 2, 10, 10, 128>}, {transform_indices = @transform_8, window_bounds = array<i64: 2, 8, 8, 128>}]} {
    %c0 = arith.constant 0 : index
    %c0_0 = arith.constant 0 : index
    %0 = vector.load %arg2[%c0, %c0_0] : memref<1x128xf32, #tpu.memory_space<vmem>>, vector<1x128xf32>
    %1 = vector.shape_cast %0 : vector<1x128xf32> to vector<1x1x1x128xf32>
    %c0_1 = arith.constant 0 : index
    %c0_2 = arith.constant 0 : index
    %2 = vector.load %arg3[%c0_1, %c0_2] : memref<1x128xf32, #tpu.memory_space<vmem>>, vector<1x128xf32>
    %3 = vector.shape_cast %2 : vector<1x128xf32> to vector<1x1x1x128xf32>
    %c0_3 = arith.constant 0 : index
    %c0_4 = arith.constant 0 : index
    %c0_5 = arith.constant 0 : index
    %c0_6 = arith.constant 0 : index
    %4 = vector.load %arg1[%c0_3, %c0_4, %c0_5, %c0_6] : memref<2x16x16x128xf32, #tpu.memory_space<vmem>>, vector<2x16x16x128xf32>
    %5 = vector.broadcast %1 : vector<1x1x1x128xf32> to vector<2x16x16x128xf32>
    %6 = arith.mulf %4, %5 : vector<2x16x16x128xf32>
    %7 = vector.broadcast %3 : vector<1x1x1x128xf32> to vector<2x16x16x128xf32>
    %8 = arith.addf %6, %7 : vector<2x16x16x128xf32>
    %cst = arith.constant 0.000000e+00 : f32
    %9 = vector.broadcast %cst : f32 to vector<2x16x16x128xf32>
    %10 = arith.maximumf %8, %9 : vector<2x16x16x128xf32>
    %11 = arith.truncf %10 : vector<2x16x16x128xf32> to vector<2x16x16x128xbf16>
    %cst_7 = arith.constant 0.000000e+00 : bf16
    %12 = vector.broadcast %cst_7 : bf16 to vector<2x1x16x128xbf16>
    %13 = tpu.concatenate %12, %11, %12 in 1 : vector<2x1x16x128xbf16>, vector<2x16x16x128xbf16>, vector<2x1x16x128xbf16> -> vector<2x18x16x128xbf16>
    %cst_8 = arith.constant 0.000000e+00 : bf16
    %14 = vector.broadcast %cst_8 : bf16 to vector<2x18x1x128xbf16>
    %15 = tpu.concatenate %14, %13, %14 in 2 : vector<2x18x1x128xbf16>, vector<2x18x16x128xbf16>, vector<2x18x1x128xbf16> -> vector<2x18x18x128xbf16>
    %cst_9 = arith.constant 0.000000e+00 : f32
    %16 = vector.broadcast %cst_9 : f32 to vector<128x128xf32>
    %17 = vector.extract_strided_slice %15 {offsets = [0, 0, 0, 0], sizes = [2, 16, 18, 128], strides = [1, 1, 1, 1]} : vector<2x18x18x128xbf16> to vector<2x16x18x128xbf16>
    %18 = vector.shape_cast %17 : vector<2x16x18x128xbf16> to vector<2x8x2x18x128xbf16>
    %19 = vector.extract_strided_slice %18 {offsets = [0, 0, 0, 0, 0], sizes = [2, 8, 1, 18, 128], strides = [1, 1, 1, 1, 1]} : vector<2x8x2x18x128xbf16> to vector<2x8x1x18x128xbf16>
    %20 = vector.shape_cast %19 : vector<2x8x1x18x128xbf16> to vector<2x8x18x128xbf16>
    %21 = vector.extract_strided_slice %20 {offsets = [0, 0, 0, 0], sizes = [2, 8, 1, 128], strides = [1, 1, 1, 1]} : vector<2x8x18x128xbf16> to vector<2x8x1x128xbf16>
    %22 = vector.extract_strided_slice %20 {offsets = [0, 0, 2, 0], sizes = [2, 8, 1, 128], strides = [1, 1, 1, 1]} : vector<2x8x18x128xbf16> to vector<2x8x1x128xbf16>
    %23 = vector.extract_strided_slice %20 {offsets = [0, 0, 4, 0], sizes = [2, 8, 1, 128], strides = [1, 1, 1, 1]} : vector<2x8x18x128xbf16> to vector<2x8x1x128xbf16>
    %24 = vector.extract_strided_slice %20 {offsets = [0, 0, 6, 0], sizes = [2, 8, 1, 128], strides = [1, 1, 1, 1]} : vector<2x8x18x128xbf16> to vector<2x8x1x128xbf16>
    %25 = vector.extract_strided_slice %20 {offsets = [0, 0, 8, 0], sizes = [2, 8, 1, 128], strides = [1, 1, 1, 1]} : vector<2x8x18x128xbf16> to vector<2x8x1x128xbf16>
    %26 = vector.extract_strided_slice %20 {offsets = [0, 0, 10, 0], sizes = [2, 8, 1, 128], strides = [1, 1, 1, 1]} : vector<2x8x18x128xbf16> to vector<2x8x1x128xbf16>
    %27 = vector.extract_strided_slice %20 {offsets = [0, 0, 12, 0], sizes = [2, 8, 1, 128], strides = [1, 1, 1, 1]} : vector<2x8x18x128xbf16> to vector<2x8x1x128xbf16>
    %28 = vector.extract_strided_slice %20 {offsets = [0, 0, 14, 0], sizes = [2, 8, 1, 128], strides = [1, 1, 1, 1]} : vector<2x8x18x128xbf16> to vector<2x8x1x128xbf16>
    %29 = tpu.concatenate %21, %22, %23, %24, %25, %26, %27, %28 in 2 : vector<2x8x1x128xbf16>, vector<2x8x1x128xbf16>, vector<2x8x1x128xbf16>, vector<2x8x1x128xbf16>, vector<2x8x1x128xbf16>, vector<2x8x1x128xbf16>, vector<2x8x1x128xbf16>, vector<2x8x1x128xbf16> -> vector<2x8x8x128xbf16>
    %30 = vector.shape_cast %29 : vector<2x8x8x128xbf16> to vector<128x128xbf16>
    %c0_10 = arith.constant 0 : index
    %c0_11 = arith.constant 0 : index
    %31 = vector.load %arg4[%c0_10, %c0_11] : memref<1152x128xbf16, #tpu.memory_space<vmem>>, vector<128x128xbf16>
    %cst_12 = arith.constant dense<0.000000e+00> : vector<128x128xf32>
    %32 = tpu.matmul %30, %31, %cst_12 {dimension_numbers = #tpu.dot_dimension_numbers<[1], [0], [0], [1], [0, 0, 1, 1], [], []>} : vector<128x128xbf16>, vector<128x128xbf16>, vector<128x128xf32> -> vector<128x128xf32>
    %33 = arith.addf %16, %32 : vector<128x128xf32>
    %34 = vector.extract_strided_slice %15 {offsets = [0, 0, 0, 0], sizes = [2, 16, 18, 128], strides = [1, 1, 1, 1]} : vector<2x18x18x128xbf16> to vector<2x16x18x128xbf16>
    %35 = vector.shape_cast %34 : vector<2x16x18x128xbf16> to vector<2x8x2x18x128xbf16>
    %36 = vector.extract_strided_slice %35 {offsets = [0, 0, 0, 0, 0], sizes = [2, 8, 1, 18, 128], strides = [1, 1, 1, 1, 1]} : vector<2x8x2x18x128xbf16> to vector<2x8x1x18x128xbf16>
    %37 = vector.shape_cast %36 : vector<2x8x1x18x128xbf16> to vector<2x8x18x128xbf16>
    %38 = vector.extract_strided_slice %37 {offsets = [0, 0, 1, 0], sizes = [2, 8, 1, 128], strides = [1, 1, 1, 1]} : vector<2x8x18x128xbf16> to vector<2x8x1x128xbf16>
    %39 = vector.extract_strided_slice %37 {offsets = [0, 0, 3, 0], sizes = [2, 8, 1, 128], strides = [1, 1, 1, 1]} : vector<2x8x18x128xbf16> to vector<2x8x1x128xbf16>
    %40 = vector.extract_strided_slice %37 {offsets = [0, 0, 5, 0], sizes = [2, 8, 1, 128], strides = [1, 1, 1, 1]} : vector<2x8x18x128xbf16> to vector<2x8x1x128xbf16>
    %41 = vector.extract_strided_slice %37 {offsets = [0, 0, 7, 0], sizes = [2, 8, 1, 128], strides = [1, 1, 1, 1]} : vector<2x8x18x128xbf16> to vector<2x8x1x128xbf16>
    %42 = vector.extract_strided_slice %37 {offsets = [0, 0, 9, 0], sizes = [2, 8, 1, 128], strides = [1, 1, 1, 1]} : vector<2x8x18x128xbf16> to vector<2x8x1x128xbf16>
    %43 = vector.extract_strided_slice %37 {offsets = [0, 0, 11, 0], sizes = [2, 8, 1, 128], strides = [1, 1, 1, 1]} : vector<2x8x18x128xbf16> to vector<2x8x1x128xbf16>
    %44 = vector.extract_strided_slice %37 {offsets = [0, 0, 13, 0], sizes = [2, 8, 1, 128], strides = [1, 1, 1, 1]} : vector<2x8x18x128xbf16> to vector<2x8x1x128xbf16>
    %45 = vector.extract_strided_slice %37 {offsets = [0, 0, 15, 0], sizes = [2, 8, 1, 128], strides = [1, 1, 1, 1]} : vector<2x8x18x128xbf16> to vector<2x8x1x128xbf16>
    %46 = tpu.concatenate %38, %39, %40, %41, %42, %43, %44, %45 in 2 : vector<2x8x1x128xbf16>, vector<2x8x1x128xbf16>, vector<2x8x1x128xbf16>, vector<2x8x1x128xbf16>, vector<2x8x1x128xbf16>, vector<2x8x1x128xbf16>, vector<2x8x1x128xbf16>, vector<2x8x1x128xbf16> -> vector<2x8x8x128xbf16>
    %47 = vector.shape_cast %46 : vector<2x8x8x128xbf16> to vector<128x128xbf16>
    %c128 = arith.constant 128 : index
    %c0_13 = arith.constant 0 : index
    %48 = vector.load %arg4[%c128, %c0_13] : memref<1152x128xbf16, #tpu.memory_space<vmem>>, vector<128x128xbf16>
    %cst_14 = arith.constant dense<0.000000e+00> : vector<128x128xf32>
    %49 = tpu.matmul %47, %48, %cst_14 {dimension_numbers = #tpu.dot_dimension_numbers<[1], [0], [0], [1], [0, 0, 1, 1], [], []>} : vector<128x128xbf16>, vector<128x128xbf16>, vector<128x128xf32> -> vector<128x128xf32>
    %50 = arith.addf %33, %49 : vector<128x128xf32>
    %51 = vector.extract_strided_slice %15 {offsets = [0, 0, 0, 0], sizes = [2, 16, 18, 128], strides = [1, 1, 1, 1]} : vector<2x18x18x128xbf16> to vector<2x16x18x128xbf16>
    %52 = vector.shape_cast %51 : vector<2x16x18x128xbf16> to vector<2x8x2x18x128xbf16>
    %53 = vector.extract_strided_slice %52 {offsets = [0, 0, 0, 0, 0], sizes = [2, 8, 1, 18, 128], strides = [1, 1, 1, 1, 1]} : vector<2x8x2x18x128xbf16> to vector<2x8x1x18x128xbf16>
    %54 = vector.shape_cast %53 : vector<2x8x1x18x128xbf16> to vector<2x8x18x128xbf16>
    %55 = vector.extract_strided_slice %54 {offsets = [0, 0, 2, 0], sizes = [2, 8, 1, 128], strides = [1, 1, 1, 1]} : vector<2x8x18x128xbf16> to vector<2x8x1x128xbf16>
    %56 = vector.extract_strided_slice %54 {offsets = [0, 0, 4, 0], sizes = [2, 8, 1, 128], strides = [1, 1, 1, 1]} : vector<2x8x18x128xbf16> to vector<2x8x1x128xbf16>
    %57 = vector.extract_strided_slice %54 {offsets = [0, 0, 6, 0], sizes = [2, 8, 1, 128], strides = [1, 1, 1, 1]} : vector<2x8x18x128xbf16> to vector<2x8x1x128xbf16>
    %58 = vector.extract_strided_slice %54 {offsets = [0, 0, 8, 0], sizes = [2, 8, 1, 128], strides = [1, 1, 1, 1]} : vector<2x8x18x128xbf16> to vector<2x8x1x128xbf16>
    %59 = vector.extract_strided_slice %54 {offsets = [0, 0, 10, 0], sizes = [2, 8, 1, 128], strides = [1, 1, 1, 1]} : vector<2x8x18x128xbf16> to vector<2x8x1x128xbf16>
    %60 = vector.extract_strided_slice %54 {offsets = [0, 0, 12, 0], sizes = [2, 8, 1, 128], strides = [1, 1, 1, 1]} : vector<2x8x18x128xbf16> to vector<2x8x1x128xbf16>
    %61 = vector.extract_strided_slice %54 {offsets = [0, 0, 14, 0], sizes = [2, 8, 1, 128], strides = [1, 1, 1, 1]} : vector<2x8x18x128xbf16> to vector<2x8x1x128xbf16>
    %62 = vector.extract_strided_slice %54 {offsets = [0, 0, 16, 0], sizes = [2, 8, 1, 128], strides = [1, 1, 1, 1]} : vector<2x8x18x128xbf16> to vector<2x8x1x128xbf16>
    %63 = tpu.concatenate %55, %56, %57, %58, %59, %60, %61, %62 in 2 : vector<2x8x1x128xbf16>, vector<2x8x1x128xbf16>, vector<2x8x1x128xbf16>, vector<2x8x1x128xbf16>, vector<2x8x1x128xbf16>, vector<2x8x1x128xbf16>, vector<2x8x1x128xbf16>, vector<2x8x1x128xbf16> -> vector<2x8x8x128xbf16>
    %64 = vector.shape_cast %63 : vector<2x8x8x128xbf16> to vector<128x128xbf16>
    %c256 = arith.constant 256 : index
    %c0_15 = arith.constant 0 : index
    %65 = vector.load %arg4[%c256, %c0_15] : memref<1152x128xbf16, #tpu.memory_space<vmem>>, vector<128x128xbf16>
    %cst_16 = arith.constant dense<0.000000e+00> : vector<128x128xf32>
    %66 = tpu.matmul %64, %65, %cst_16 {dimension_numbers = #tpu.dot_dimension_numbers<[1], [0], [0], [1], [0, 0, 1, 1], [], []>} : vector<128x128xbf16>, vector<128x128xbf16>, vector<128x128xf32> -> vector<128x128xf32>
    %67 = arith.addf %50, %66 : vector<128x128xf32>
    %68 = vector.extract_strided_slice %15 {offsets = [0, 1, 0, 0], sizes = [2, 16, 18, 128], strides = [1, 1, 1, 1]} : vector<2x18x18x128xbf16> to vector<2x16x18x128xbf16>
    %69 = vector.shape_cast %68 : vector<2x16x18x128xbf16> to vector<2x8x2x18x128xbf16>
    %70 = vector.extract_strided_slice %69 {offsets = [0, 0, 0, 0, 0], sizes = [2, 8, 1, 18, 128], strides = [1, 1, 1, 1, 1]} : vector<2x8x2x18x128xbf16> to vector<2x8x1x18x128xbf16>
    %71 = vector.shape_cast %70 : vector<2x8x1x18x128xbf16> to vector<2x8x18x128xbf16>
    %72 = vector.extract_strided_slice %71 {offsets = [0, 0, 0, 0], sizes = [2, 8, 1, 128], strides = [1, 1, 1, 1]} : vector<2x8x18x128xbf16> to vector<2x8x1x128xbf16>
    %73 = vector.extract_strided_slice %71 {offsets = [0, 0, 2, 0], sizes = [2, 8, 1, 128], strides = [1, 1, 1, 1]} : vector<2x8x18x128xbf16> to vector<2x8x1x128xbf16>
    %74 = vector.extract_strided_slice %71 {offsets = [0, 0, 4, 0], sizes = [2, 8, 1, 128], strides = [1, 1, 1, 1]} : vector<2x8x18x128xbf16> to vector<2x8x1x128xbf16>
    %75 = vector.extract_strided_slice %71 {offsets = [0, 0, 6, 0], sizes = [2, 8, 1, 128], strides = [1, 1, 1, 1]} : vector<2x8x18x128xbf16> to vector<2x8x1x128xbf16>
    %76 = vector.extract_strided_slice %71 {offsets = [0, 0, 8, 0], sizes = [2, 8, 1, 128], strides = [1, 1, 1, 1]} : vector<2x8x18x128xbf16> to vector<2x8x1x128xbf16>
    %77 = vector.extract_strided_slice %71 {offsets = [0, 0, 10, 0], sizes = [2, 8, 1, 128], strides = [1, 1, 1, 1]} : vector<2x8x18x128xbf16> to vector<2x8x1x128xbf16>
    %78 = vector.extract_strided_slice %71 {offsets = [0, 0, 12, 0], sizes = [2, 8, 1, 128], strides = [1, 1, 1, 1]} : vector<2x8x18x128xbf16> to vector<2x8x1x128xbf16>
    %79 = vector.extract_strided_slice %71 {offsets = [0, 0, 14, 0], sizes = [2, 8, 1, 128], strides = [1, 1, 1, 1]} : vector<2x8x18x128xbf16> to vector<2x8x1x128xbf16>
    %80 = tpu.concatenate %72, %73, %74, %75, %76, %77, %78, %79 in 2 : vector<2x8x1x128xbf16>, vector<2x8x1x128xbf16>, vector<2x8x1x128xbf16>, vector<2x8x1x128xbf16>, vector<2x8x1x128xbf16>, vector<2x8x1x128xbf16>, vector<2x8x1x128xbf16>, vector<2x8x1x128xbf16> -> vector<2x8x8x128xbf16>
    %81 = vector.shape_cast %80 : vector<2x8x8x128xbf16> to vector<128x128xbf16>
    %c384 = arith.constant 384 : index
    %c0_17 = arith.constant 0 : index
    %82 = vector.load %arg4[%c384, %c0_17] : memref<1152x128xbf16, #tpu.memory_space<vmem>>, vector<128x128xbf16>
    %cst_18 = arith.constant dense<0.000000e+00> : vector<128x128xf32>
    %83 = tpu.matmul %81, %82, %cst_18 {dimension_numbers = #tpu.dot_dimension_numbers<[1], [0], [0], [1], [0, 0, 1, 1], [], []>} : vector<128x128xbf16>, vector<128x128xbf16>, vector<128x128xf32> -> vector<128x128xf32>
    %84 = arith.addf %67, %83 : vector<128x128xf32>
    %85 = vector.extract_strided_slice %15 {offsets = [0, 1, 0, 0], sizes = [2, 16, 18, 128], strides = [1, 1, 1, 1]} : vector<2x18x18x128xbf16> to vector<2x16x18x128xbf16>
    %86 = vector.shape_cast %85 : vector<2x16x18x128xbf16> to vector<2x8x2x18x128xbf16>
    %87 = vector.extract_strided_slice %86 {offsets = [0, 0, 0, 0, 0], sizes = [2, 8, 1, 18, 128], strides = [1, 1, 1, 1, 1]} : vector<2x8x2x18x128xbf16> to vector<2x8x1x18x128xbf16>
    %88 = vector.shape_cast %87 : vector<2x8x1x18x128xbf16> to vector<2x8x18x128xbf16>
    %89 = vector.extract_strided_slice %88 {offsets = [0, 0, 1, 0], sizes = [2, 8, 1, 128], strides = [1, 1, 1, 1]} : vector<2x8x18x128xbf16> to vector<2x8x1x128xbf16>
    %90 = vector.extract_strided_slice %88 {offsets = [0, 0, 3, 0], sizes = [2, 8, 1, 128], strides = [1, 1, 1, 1]} : vector<2x8x18x128xbf16> to vector<2x8x1x128xbf16>
    %91 = vector.extract_strided_slice %88 {offsets = [0, 0, 5, 0], sizes = [2, 8, 1, 128], strides = [1, 1, 1, 1]} : vector<2x8x18x128xbf16> to vector<2x8x1x128xbf16>
    %92 = vector.extract_strided_slice %88 {offsets = [0, 0, 7, 0], sizes = [2, 8, 1, 128], strides = [1, 1, 1, 1]} : vector<2x8x18x128xbf16> to vector<2x8x1x128xbf16>
    %93 = vector.extract_strided_slice %88 {offsets = [0, 0, 9, 0], sizes = [2, 8, 1, 128], strides = [1, 1, 1, 1]} : vector<2x8x18x128xbf16> to vector<2x8x1x128xbf16>
    %94 = vector.extract_strided_slice %88 {offsets = [0, 0, 11, 0], sizes = [2, 8, 1, 128], strides = [1, 1, 1, 1]} : vector<2x8x18x128xbf16> to vector<2x8x1x128xbf16>
    %95 = vector.extract_strided_slice %88 {offsets = [0, 0, 13, 0], sizes = [2, 8, 1, 128], strides = [1, 1, 1, 1]} : vector<2x8x18x128xbf16> to vector<2x8x1x128xbf16>
    %96 = vector.extract_strided_slice %88 {offsets = [0, 0, 15, 0], sizes = [2, 8, 1, 128], strides = [1, 1, 1, 1]} : vector<2x8x18x128xbf16> to vector<2x8x1x128xbf16>
    %97 = tpu.concatenate %89, %90, %91, %92, %93, %94, %95, %96 in 2 : vector<2x8x1x128xbf16>, vector<2x8x1x128xbf16>, vector<2x8x1x128xbf16>, vector<2x8x1x128xbf16>, vector<2x8x1x128xbf16>, vector<2x8x1x128xbf16>, vector<2x8x1x128xbf16>, vector<2x8x1x128xbf16> -> vector<2x8x8x128xbf16>
    %98 = vector.shape_cast %97 : vector<2x8x8x128xbf16> to vector<128x128xbf16>
    %c512 = arith.constant 512 : index
    %c0_19 = arith.constant 0 : index
    %99 = vector.load %arg4[%c512, %c0_19] : memref<1152x128xbf16, #tpu.memory_space<vmem>>, vector<128x128xbf16>
    %cst_20 = arith.constant dense<0.000000e+00> : vector<128x128xf32>
    %100 = tpu.matmul %98, %99, %cst_20 {dimension_numbers = #tpu.dot_dimension_numbers<[1], [0], [0], [1], [0, 0, 1, 1], [], []>} : vector<128x128xbf16>, vector<128x128xbf16>, vector<128x128xf32> -> vector<128x128xf32>
    %101 = arith.addf %84, %100 : vector<128x128xf32>
    %102 = vector.extract_strided_slice %15 {offsets = [0, 1, 0, 0], sizes = [2, 16, 18, 128], strides = [1, 1, 1, 1]} : vector<2x18x18x128xbf16> to vector<2x16x18x128xbf16>
    %103 = vector.shape_cast %102 : vector<2x16x18x128xbf16> to vector<2x8x2x18x128xbf16>
    %104 = vector.extract_strided_slice %103 {offsets = [0, 0, 0, 0, 0], sizes = [2, 8, 1, 18, 128], strides = [1, 1, 1, 1, 1]} : vector<2x8x2x18x128xbf16> to vector<2x8x1x18x128xbf16>
    %105 = vector.shape_cast %104 : vector<2x8x1x18x128xbf16> to vector<2x8x18x128xbf16>
    %106 = vector.extract_strided_slice %105 {offsets = [0, 0, 2, 0], sizes = [2, 8, 1, 128], strides = [1, 1, 1, 1]} : vector<2x8x18x128xbf16> to vector<2x8x1x128xbf16>
    %107 = vector.extract_strided_slice %105 {offsets = [0, 0, 4, 0], sizes = [2, 8, 1, 128], strides = [1, 1, 1, 1]} : vector<2x8x18x128xbf16> to vector<2x8x1x128xbf16>
    %108 = vector.extract_strided_slice %105 {offsets = [0, 0, 6, 0], sizes = [2, 8, 1, 128], strides = [1, 1, 1, 1]} : vector<2x8x18x128xbf16> to vector<2x8x1x128xbf16>
    %109 = vector.extract_strided_slice %105 {offsets = [0, 0, 8, 0], sizes = [2, 8, 1, 128], strides = [1, 1, 1, 1]} : vector<2x8x18x128xbf16> to vector<2x8x1x128xbf16>
    %110 = vector.extract_strided_slice %105 {offsets = [0, 0, 10, 0], sizes = [2, 8, 1, 128], strides = [1, 1, 1, 1]} : vector<2x8x18x128xbf16> to vector<2x8x1x128xbf16>
    %111 = vector.extract_strided_slice %105 {offsets = [0, 0, 12, 0], sizes = [2, 8, 1, 128], strides = [1, 1, 1, 1]} : vector<2x8x18x128xbf16> to vector<2x8x1x128xbf16>
    %112 = vector.extract_strided_slice %105 {offsets = [0, 0, 14, 0], sizes = [2, 8, 1, 128], strides = [1, 1, 1, 1]} : vector<2x8x18x128xbf16> to vector<2x8x1x128xbf16>
    %113 = vector.extract_strided_slice %105 {offsets = [0, 0, 16, 0], sizes = [2, 8, 1, 128], strides = [1, 1, 1, 1]} : vector<2x8x18x128xbf16> to vector<2x8x1x128xbf16>
    %114 = tpu.concatenate %106, %107, %108, %109, %110, %111, %112, %113 in 2 : vector<2x8x1x128xbf16>, vector<2x8x1x128xbf16>, vector<2x8x1x128xbf16>, vector<2x8x1x128xbf16>, vector<2x8x1x128xbf16>, vector<2x8x1x128xbf16>, vector<2x8x1x128xbf16>, vector<2x8x1x128xbf16> -> vector<2x8x8x128xbf16>
    %115 = vector.shape_cast %114 : vector<2x8x8x128xbf16> to vector<128x128xbf16>
    %c640 = arith.constant 640 : index
    %c0_21 = arith.constant 0 : index
    %116 = vector.load %arg4[%c640, %c0_21] : memref<1152x128xbf16, #tpu.memory_space<vmem>>, vector<128x128xbf16>
    %cst_22 = arith.constant dense<0.000000e+00> : vector<128x128xf32>
    %117 = tpu.matmul %115, %116, %cst_22 {dimension_numbers = #tpu.dot_dimension_numbers<[1], [0], [0], [1], [0, 0, 1, 1], [], []>} : vector<128x128xbf16>, vector<128x128xbf16>, vector<128x128xf32> -> vector<128x128xf32>
    %118 = arith.addf %101, %117 : vector<128x128xf32>
    %119 = vector.extract_strided_slice %15 {offsets = [0, 2, 0, 0], sizes = [2, 16, 18, 128], strides = [1, 1, 1, 1]} : vector<2x18x18x128xbf16> to vector<2x16x18x128xbf16>
    %120 = vector.shape_cast %119 : vector<2x16x18x128xbf16> to vector<2x8x2x18x128xbf16>
    %121 = vector.extract_strided_slice %120 {offsets = [0, 0, 0, 0, 0], sizes = [2, 8, 1, 18, 128], strides = [1, 1, 1, 1, 1]} : vector<2x8x2x18x128xbf16> to vector<2x8x1x18x128xbf16>
    %122 = vector.shape_cast %121 : vector<2x8x1x18x128xbf16> to vector<2x8x18x128xbf16>
    %123 = vector.extract_strided_slice %122 {offsets = [0, 0, 0, 0], sizes = [2, 8, 1, 128], strides = [1, 1, 1, 1]} : vector<2x8x18x128xbf16> to vector<2x8x1x128xbf16>
    %124 = vector.extract_strided_slice %122 {offsets = [0, 0, 2, 0], sizes = [2, 8, 1, 128], strides = [1, 1, 1, 1]} : vector<2x8x18x128xbf16> to vector<2x8x1x128xbf16>
    %125 = vector.extract_strided_slice %122 {offsets = [0, 0, 4, 0], sizes = [2, 8, 1, 128], strides = [1, 1, 1, 1]} : vector<2x8x18x128xbf16> to vector<2x8x1x128xbf16>
    %126 = vector.extract_strided_slice %122 {offsets = [0, 0, 6, 0], sizes = [2, 8, 1, 128], strides = [1, 1, 1, 1]} : vector<2x8x18x128xbf16> to vector<2x8x1x128xbf16>
    %127 = vector.extract_strided_slice %122 {offsets = [0, 0, 8, 0], sizes = [2, 8, 1, 128], strides = [1, 1, 1, 1]} : vector<2x8x18x128xbf16> to vector<2x8x1x128xbf16>
    %128 = vector.extract_strided_slice %122 {offsets = [0, 0, 10, 0], sizes = [2, 8, 1, 128], strides = [1, 1, 1, 1]} : vector<2x8x18x128xbf16> to vector<2x8x1x128xbf16>
    %129 = vector.extract_strided_slice %122 {offsets = [0, 0, 12, 0], sizes = [2, 8, 1, 128], strides = [1, 1, 1, 1]} : vector<2x8x18x128xbf16> to vector<2x8x1x128xbf16>
    %130 = vector.extract_strided_slice %122 {offsets = [0, 0, 14, 0], sizes = [2, 8, 1, 128], strides = [1, 1, 1, 1]} : vector<2x8x18x128xbf16> to vector<2x8x1x128xbf16>
    %131 = tpu.concatenate %123, %124, %125, %126, %127, %128, %129, %130 in 2 : vector<2x8x1x128xbf16>, vector<2x8x1x128xbf16>, vector<2x8x1x128xbf16>, vector<2x8x1x128xbf16>, vector<2x8x1x128xbf16>, vector<2x8x1x128xbf16>, vector<2x8x1x128xbf16>, vector<2x8x1x128xbf16> -> vector<2x8x8x128xbf16>
    %132 = vector.shape_cast %131 : vector<2x8x8x128xbf16> to vector<128x128xbf16>
    %c768 = arith.constant 768 : index
    %c0_23 = arith.constant 0 : index
    %133 = vector.load %arg4[%c768, %c0_23] : memref<1152x128xbf16, #tpu.memory_space<vmem>>, vector<128x128xbf16>
    %cst_24 = arith.constant dense<0.000000e+00> : vector<128x128xf32>
    %134 = tpu.matmul %132, %133, %cst_24 {dimension_numbers = #tpu.dot_dimension_numbers<[1], [0], [0], [1], [0, 0, 1, 1], [], []>} : vector<128x128xbf16>, vector<128x128xbf16>, vector<128x128xf32> -> vector<128x128xf32>
    %135 = arith.addf %118, %134 : vector<128x128xf32>
    %136 = vector.extract_strided_slice %15 {offsets = [0, 2, 0, 0], sizes = [2, 16, 18, 128], strides = [1, 1, 1, 1]} : vector<2x18x18x128xbf16> to vector<2x16x18x128xbf16>
    %137 = vector.shape_cast %136 : vector<2x16x18x128xbf16> to vector<2x8x2x18x128xbf16>
    %138 = vector.extract_strided_slice %137 {offsets = [0, 0, 0, 0, 0], sizes = [2, 8, 1, 18, 128], strides = [1, 1, 1, 1, 1]} : vector<2x8x2x18x128xbf16> to vector<2x8x1x18x128xbf16>
    %139 = vector.shape_cast %138 : vector<2x8x1x18x128xbf16> to vector<2x8x18x128xbf16>
    %140 = vector.extract_strided_slice %139 {offsets = [0, 0, 1, 0], sizes = [2, 8, 1, 128], strides = [1, 1, 1, 1]} : vector<2x8x18x128xbf16> to vector<2x8x1x128xbf16>
    %141 = vector.extract_strided_slice %139 {offsets = [0, 0, 3, 0], sizes = [2, 8, 1, 128], strides = [1, 1, 1, 1]} : vector<2x8x18x128xbf16> to vector<2x8x1x128xbf16>
    %142 = vector.extract_strided_slice %139 {offsets = [0, 0, 5, 0], sizes = [2, 8, 1, 128], strides = [1, 1, 1, 1]} : vector<2x8x18x128xbf16> to vector<2x8x1x128xbf16>
    %143 = vector.extract_strided_slice %139 {offsets = [0, 0, 7, 0], sizes = [2, 8, 1, 128], strides = [1, 1, 1, 1]} : vector<2x8x18x128xbf16> to vector<2x8x1x128xbf16>
    %144 = vector.extract_strided_slice %139 {offsets = [0, 0, 9, 0], sizes = [2, 8, 1, 128], strides = [1, 1, 1, 1]} : vector<2x8x18x128xbf16> to vector<2x8x1x128xbf16>
    %145 = vector.extract_strided_slice %139 {offsets = [0, 0, 11, 0], sizes = [2, 8, 1, 128], strides = [1, 1, 1, 1]} : vector<2x8x18x128xbf16> to vector<2x8x1x128xbf16>
    %146 = vector.extract_strided_slice %139 {offsets = [0, 0, 13, 0], sizes = [2, 8, 1, 128], strides = [1, 1, 1, 1]} : vector<2x8x18x128xbf16> to vector<2x8x1x128xbf16>
    %147 = vector.extract_strided_slice %139 {offsets = [0, 0, 15, 0], sizes = [2, 8, 1, 128], strides = [1, 1, 1, 1]} : vector<2x8x18x128xbf16> to vector<2x8x1x128xbf16>
    %148 = tpu.concatenate %140, %141, %142, %143, %144, %145, %146, %147 in 2 : vector<2x8x1x128xbf16>, vector<2x8x1x128xbf16>, vector<2x8x1x128xbf16>, vector<2x8x1x128xbf16>, vector<2x8x1x128xbf16>, vector<2x8x1x128xbf16>, vector<2x8x1x128xbf16>, vector<2x8x1x128xbf16> -> vector<2x8x8x128xbf16>
    %149 = vector.shape_cast %148 : vector<2x8x8x128xbf16> to vector<128x128xbf16>
    %c896 = arith.constant 896 : index
    %c0_25 = arith.constant 0 : index
    %150 = vector.load %arg4[%c896, %c0_25] : memref<1152x128xbf16, #tpu.memory_space<vmem>>, vector<128x128xbf16>
    %cst_26 = arith.constant dense<0.000000e+00> : vector<128x128xf32>
    %151 = tpu.matmul %149, %150, %cst_26 {dimension_numbers = #tpu.dot_dimension_numbers<[1], [0], [0], [1], [0, 0, 1, 1], [], []>} : vector<128x128xbf16>, vector<128x128xbf16>, vector<128x128xf32> -> vector<128x128xf32>
    %152 = arith.addf %135, %151 : vector<128x128xf32>
    %153 = vector.extract_strided_slice %15 {offsets = [0, 2, 0, 0], sizes = [2, 16, 18, 128], strides = [1, 1, 1, 1]} : vector<2x18x18x128xbf16> to vector<2x16x18x128xbf16>
    %154 = vector.shape_cast %153 : vector<2x16x18x128xbf16> to vector<2x8x2x18x128xbf16>
    %155 = vector.extract_strided_slice %154 {offsets = [0, 0, 0, 0, 0], sizes = [2, 8, 1, 18, 128], strides = [1, 1, 1, 1, 1]} : vector<2x8x2x18x128xbf16> to vector<2x8x1x18x128xbf16>
    %156 = vector.shape_cast %155 : vector<2x8x1x18x128xbf16> to vector<2x8x18x128xbf16>
    %157 = vector.extract_strided_slice %156 {offsets = [0, 0, 2, 0], sizes = [2, 8, 1, 128], strides = [1, 1, 1, 1]} : vector<2x8x18x128xbf16> to vector<2x8x1x128xbf16>
    %158 = vector.extract_strided_slice %156 {offsets = [0, 0, 4, 0], sizes = [2, 8, 1, 128], strides = [1, 1, 1, 1]} : vector<2x8x18x128xbf16> to vector<2x8x1x128xbf16>
    %159 = vector.extract_strided_slice %156 {offsets = [0, 0, 6, 0], sizes = [2, 8, 1, 128], strides = [1, 1, 1, 1]} : vector<2x8x18x128xbf16> to vector<2x8x1x128xbf16>
    %160 = vector.extract_strided_slice %156 {offsets = [0, 0, 8, 0], sizes = [2, 8, 1, 128], strides = [1, 1, 1, 1]} : vector<2x8x18x128xbf16> to vector<2x8x1x128xbf16>
    %161 = vector.extract_strided_slice %156 {offsets = [0, 0, 10, 0], sizes = [2, 8, 1, 128], strides = [1, 1, 1, 1]} : vector<2x8x18x128xbf16> to vector<2x8x1x128xbf16>
    %162 = vector.extract_strided_slice %156 {offsets = [0, 0, 12, 0], sizes = [2, 8, 1, 128], strides = [1, 1, 1, 1]} : vector<2x8x18x128xbf16> to vector<2x8x1x128xbf16>
    %163 = vector.extract_strided_slice %156 {offsets = [0, 0, 14, 0], sizes = [2, 8, 1, 128], strides = [1, 1, 1, 1]} : vector<2x8x18x128xbf16> to vector<2x8x1x128xbf16>
    %164 = vector.extract_strided_slice %156 {offsets = [0, 0, 16, 0], sizes = [2, 8, 1, 128], strides = [1, 1, 1, 1]} : vector<2x8x18x128xbf16> to vector<2x8x1x128xbf16>
    %165 = tpu.concatenate %157, %158, %159, %160, %161, %162, %163, %164 in 2 : vector<2x8x1x128xbf16>, vector<2x8x1x128xbf16>, vector<2x8x1x128xbf16>, vector<2x8x1x128xbf16>, vector<2x8x1x128xbf16>, vector<2x8x1x128xbf16>, vector<2x8x1x128xbf16>, vector<2x8x1x128xbf16> -> vector<2x8x8x128xbf16>
    %166 = vector.shape_cast %165 : vector<2x8x8x128xbf16> to vector<128x128xbf16>
    %c1024 = arith.constant 1024 : index
    %c0_27 = arith.constant 0 : index
    %167 = vector.load %arg4[%c1024, %c0_27] : memref<1152x128xbf16, #tpu.memory_space<vmem>>, vector<128x128xbf16>
    %cst_28 = arith.constant dense<0.000000e+00> : vector<128x128xf32>
    %168 = tpu.matmul %166, %167, %cst_28 {dimension_numbers = #tpu.dot_dimension_numbers<[1], [0], [0], [1], [0, 0, 1, 1], [], []>} : vector<128x128xbf16>, vector<128x128xbf16>, vector<128x128xf32> -> vector<128x128xf32>
    %169 = arith.addf %152, %168 : vector<128x128xf32>
    %c0_29 = arith.constant 0 : index
    %c0_30 = arith.constant 0 : index
    %170 = vector.load %arg5[%c0_29, %c0_30] : memref<1x128xf32, #tpu.memory_space<vmem>>, vector<1x128xf32>
    %171 = vector.broadcast %170 : vector<1x128xf32> to vector<128x128xf32>
    %172 = arith.mulf %169, %171 : vector<128x128xf32>
    %c0_31 = arith.constant 0 : index
    %c0_32 = arith.constant 0 : index
    %173 = vector.load %arg6[%c0_31, %c0_32] : memref<1x128xf32, #tpu.memory_space<vmem>>, vector<1x128xf32>
    %174 = vector.broadcast %173 : vector<1x128xf32> to vector<128x128xf32>
    %175 = arith.addf %172, %174 : vector<128x128xf32>
    %cst_33 = arith.constant 0.000000e+00 : f32
    %176 = vector.broadcast %cst_33 : f32 to vector<128x128xf32>
    %177 = arith.maximumf %175, %176 : vector<128x128xf32>
    %178 = arith.truncf %177 : vector<128x128xf32> to vector<128x128xbf16>
    %179 = vector.shape_cast %178 : vector<128x128xbf16> to vector<2x8x8x128xbf16>
    %cst_34 = arith.constant 0.000000e+00 : bf16
    %180 = vector.broadcast %cst_34 : bf16 to vector<2x1x8x128xbf16>
    %181 = tpu.concatenate %180, %179, %180 in 1 : vector<2x1x8x128xbf16>, vector<2x8x8x128xbf16>, vector<2x1x8x128xbf16> -> vector<2x10x8x128xbf16>
    %cst_35 = arith.constant 0.000000e+00 : bf16
    %182 = vector.broadcast %cst_35 : bf16 to vector<2x10x1x128xbf16>
    %183 = tpu.concatenate %182, %181, %182 in 2 : vector<2x10x1x128xbf16>, vector<2x10x8x128xbf16>, vector<2x10x1x128xbf16> -> vector<2x10x10x128xbf16>
    %c0_36 = arith.constant 0 : index
    %c0_37 = arith.constant 0 : index
    %c0_38 = arith.constant 0 : index
    %c0_39 = arith.constant 0 : index
    %184 = vector.load %arg8[%c0_36, %c0_37, %c0_38, %c0_39] : memref<2x10x10x128xbf16, #tpu.memory_space<vmem>>, vector<2x10x10x128xbf16>
    tpu.vector_store %arg8[%c0_36, %c0_37, %c0_38, %c0_39], %183 {strides = array<i32>} : memref<2x10x10x128xbf16, #tpu.memory_space<vmem>>, vector<2x10x10x128xbf16>,
    %c0_40 = arith.constant 0 : index
    %c0_41 = arith.constant 0 : index
    %185 = vector.load %arg7[%c0_40, %c0_41] : memref<128x128xbf16, #tpu.memory_space<vmem>>, vector<128x128xbf16>
    %cst_42 = arith.constant dense<0.000000e+00> : vector<128x128xf32>
    %186 = tpu.matmul %98, %185, %cst_42 {dimension_numbers = #tpu.dot_dimension_numbers<[1], [0], [0], [1], [0, 0, 1, 1], [], []>} : vector<128x128xbf16>, vector<128x128xbf16>, vector<128x128xf32> -> vector<128x128xf32>
    %187 = vector.shape_cast %186 : vector<128x128xf32> to vector<2x8x8x128xf32>
    %c0_43 = arith.constant 0 : index
    %c0_44 = arith.constant 0 : index
    %c0_45 = arith.constant 0 : index
    %c0_46 = arith.constant 0 : index
    %188 = vector.load %arg9[%c0_43, %c0_44, %c0_45, %c0_46] : memref<2x8x8x128xf32, #tpu.memory_space<vmem>>, vector<2x8x8x128xf32>
    tpu.vector_store %arg9[%c0_43, %c0_44, %c0_45, %c0_46], %187 {strides = array<i32>} : memref<2x8x8x128xf32, #tpu.memory_space<vmem>>, vector<2x8x8x128xf32>,
    return
  }
  func.func @transform_0(%arg0: i32) -> (i32, i32, i32, i32) {
    %c0_i32 = arith.constant 0 : i32
    %c0_i32_0 = arith.constant 0 : i32
    %c0_i32_1 = arith.constant 0 : i32
    %c0_i32_2 = arith.constant 0 : i32
    return %arg0, %c0_i32, %c0_i32_0, %c0_i32_1 : i32, i32, i32, i32
  }
  func.func @transform_1(%arg0: i32) -> (i32, i32) {
    %c0_i32 = arith.constant 0 : i32
    %c0_i32_0 = arith.constant 0 : i32
    %c0_i32_1 = arith.constant 0 : i32
    return %c0_i32, %c0_i32_0 : i32, i32
  }
  func.func @transform_2(%arg0: i32) -> (i32, i32) {
    %c0_i32 = arith.constant 0 : i32
    %c0_i32_0 = arith.constant 0 : i32
    %c0_i32_1 = arith.constant 0 : i32
    return %c0_i32, %c0_i32_0 : i32, i32
  }
  func.func @transform_3(%arg0: i32) -> (i32, i32) {
    %c0_i32 = arith.constant 0 : i32
    %c0_i32_0 = arith.constant 0 : i32
    %c0_i32_1 = arith.constant 0 : i32
    return %c0_i32, %c0_i32_0 : i32, i32
  }
  func.func @transform_4(%arg0: i32) -> (i32, i32) {
    %c0_i32 = arith.constant 0 : i32
    %c0_i32_0 = arith.constant 0 : i32
    %c0_i32_1 = arith.constant 0 : i32
    return %c0_i32, %c0_i32_0 : i32, i32
  }
  func.func @transform_5(%arg0: i32) -> (i32, i32) {
    %c0_i32 = arith.constant 0 : i32
    %c0_i32_0 = arith.constant 0 : i32
    %c0_i32_1 = arith.constant 0 : i32
    return %c0_i32, %c0_i32_0 : i32, i32
  }
  func.func @transform_6(%arg0: i32) -> (i32, i32) {
    %c0_i32 = arith.constant 0 : i32
    %c0_i32_0 = arith.constant 0 : i32
    %c0_i32_1 = arith.constant 0 : i32
    return %c0_i32, %c0_i32_0 : i32, i32
  }
  func.func @transform_7(%arg0: i32) -> (i32, i32, i32, i32) {
    %c0_i32 = arith.constant 0 : i32
    %c0_i32_0 = arith.constant 0 : i32
    %c0_i32_1 = arith.constant 0 : i32
    %c0_i32_2 = arith.constant 0 : i32
    return %arg0, %c0_i32, %c0_i32_0, %c0_i32_1 : i32, i32, i32, i32
  }
  func.func @transform_8(%arg0: i32) -> (i32, i32, i32, i32) {
    %c0_i32 = arith.constant 0 : i32
    %c0_i32_0 = arith.constant 0 : i32
    %c0_i32_1 = arith.constant 0 : i32
    %c0_i32_2 = arith.constant 0 : i32
    return %arg0, %c0_i32, %c0_i32_0, %c0_i32_1 : i32, i32, i32, i32
  }
}

module attributes {stable_mosaic.version = 11 : i64} {
  func.func @kernel(%arg0: i32, %arg1: memref<2x10x10x128xbf16, #tpu.memory_space<vmem>>, %arg2: memref<1152x128xbf16, #tpu.memory_space<vmem>>, %arg3: memref<1x128xf32, #tpu.memory_space<vmem>>, %arg4: memref<1x128xf32, #tpu.memory_space<vmem>>, %arg5: memref<2x10x10x128xbf16, #tpu.memory_space<vmem>>) attributes {dimension_semantics = [#tpu.dimension_semantics<parallel>], iteration_bounds = array<i64: 1>, scalar_prefetch = 0 : i64, scratch_operands = 0 : i64, tpu.core_type = #tpu.core_type<tc>, window_params = [{transform_indices = @transform_0, window_bounds = array<i64: 2, 10, 10, 128>}, {pipeline_mode = #tpu.pipeline_mode<synchronous>, transform_indices = @transform_1, window_bounds = array<i64: 1152, 128>}, {pipeline_mode = #tpu.pipeline_mode<synchronous>, transform_indices = @transform_2, window_bounds = array<i64: 1, 128>}, {pipeline_mode = #tpu.pipeline_mode<synchronous>, transform_indices = @transform_3, window_bounds = array<i64: 1, 128>}, {transform_indices = @transform_4, window_bounds = array<i64: 2, 10, 10, 128>}]} {
    %c0 = arith.constant 0 : index
    %c0_0 = arith.constant 0 : index
    %c0_1 = arith.constant 0 : index
    %c0_2 = arith.constant 0 : index
    %0 = vector.load %arg1[%c0, %c0_0, %c0_1, %c0_2] : memref<2x10x10x128xbf16, #tpu.memory_space<vmem>>, vector<2x10x10x128xbf16>
    %cst = arith.constant 0.000000e+00 : f32
    %1 = vector.broadcast %cst : f32 to vector<128x128xf32>
    %2 = vector.extract_strided_slice %0 {offsets = [0, 0, 0, 0], sizes = [2, 8, 10, 128], strides = [1, 1, 1, 1]} : vector<2x10x10x128xbf16> to vector<2x8x10x128xbf16>
    %3 = vector.extract_strided_slice %2 {offsets = [0, 0, 0, 0], sizes = [2, 8, 8, 128], strides = [1, 1, 1, 1]} : vector<2x8x10x128xbf16> to vector<2x8x8x128xbf16>
    %4 = vector.shape_cast %3 : vector<2x8x8x128xbf16> to vector<128x128xbf16>
    %c0_3 = arith.constant 0 : index
    %c0_4 = arith.constant 0 : index
    %5 = vector.load %arg2[%c0_3, %c0_4] : memref<1152x128xbf16, #tpu.memory_space<vmem>>, vector<128x128xbf16>
    %cst_5 = arith.constant dense<0.000000e+00> : vector<128x128xf32>
    %6 = tpu.matmul %4, %5, %cst_5 {dimension_numbers = #tpu.dot_dimension_numbers<[1], [0], [0], [1], [0, 0, 1, 1], [], []>} : vector<128x128xbf16>, vector<128x128xbf16>, vector<128x128xf32> -> vector<128x128xf32>
    %7 = arith.addf %1, %6 : vector<128x128xf32>
    %8 = vector.extract_strided_slice %0 {offsets = [0, 0, 0, 0], sizes = [2, 8, 10, 128], strides = [1, 1, 1, 1]} : vector<2x10x10x128xbf16> to vector<2x8x10x128xbf16>
    %9 = vector.extract_strided_slice %8 {offsets = [0, 0, 1, 0], sizes = [2, 8, 8, 128], strides = [1, 1, 1, 1]} : vector<2x8x10x128xbf16> to vector<2x8x8x128xbf16>
    %10 = vector.shape_cast %9 : vector<2x8x8x128xbf16> to vector<128x128xbf16>
    %c128 = arith.constant 128 : index
    %c0_6 = arith.constant 0 : index
    %11 = vector.load %arg2[%c128, %c0_6] : memref<1152x128xbf16, #tpu.memory_space<vmem>>, vector<128x128xbf16>
    %cst_7 = arith.constant dense<0.000000e+00> : vector<128x128xf32>
    %12 = tpu.matmul %10, %11, %cst_7 {dimension_numbers = #tpu.dot_dimension_numbers<[1], [0], [0], [1], [0, 0, 1, 1], [], []>} : vector<128x128xbf16>, vector<128x128xbf16>, vector<128x128xf32> -> vector<128x128xf32>
    %13 = arith.addf %7, %12 : vector<128x128xf32>
    %14 = vector.extract_strided_slice %0 {offsets = [0, 0, 0, 0], sizes = [2, 8, 10, 128], strides = [1, 1, 1, 1]} : vector<2x10x10x128xbf16> to vector<2x8x10x128xbf16>
    %15 = vector.extract_strided_slice %14 {offsets = [0, 0, 2, 0], sizes = [2, 8, 8, 128], strides = [1, 1, 1, 1]} : vector<2x8x10x128xbf16> to vector<2x8x8x128xbf16>
    %16 = vector.shape_cast %15 : vector<2x8x8x128xbf16> to vector<128x128xbf16>
    %c256 = arith.constant 256 : index
    %c0_8 = arith.constant 0 : index
    %17 = vector.load %arg2[%c256, %c0_8] : memref<1152x128xbf16, #tpu.memory_space<vmem>>, vector<128x128xbf16>
    %cst_9 = arith.constant dense<0.000000e+00> : vector<128x128xf32>
    %18 = tpu.matmul %16, %17, %cst_9 {dimension_numbers = #tpu.dot_dimension_numbers<[1], [0], [0], [1], [0, 0, 1, 1], [], []>} : vector<128x128xbf16>, vector<128x128xbf16>, vector<128x128xf32> -> vector<128x128xf32>
    %19 = arith.addf %13, %18 : vector<128x128xf32>
    %20 = vector.extract_strided_slice %0 {offsets = [0, 1, 0, 0], sizes = [2, 8, 10, 128], strides = [1, 1, 1, 1]} : vector<2x10x10x128xbf16> to vector<2x8x10x128xbf16>
    %21 = vector.extract_strided_slice %20 {offsets = [0, 0, 0, 0], sizes = [2, 8, 8, 128], strides = [1, 1, 1, 1]} : vector<2x8x10x128xbf16> to vector<2x8x8x128xbf16>
    %22 = vector.shape_cast %21 : vector<2x8x8x128xbf16> to vector<128x128xbf16>
    %c384 = arith.constant 384 : index
    %c0_10 = arith.constant 0 : index
    %23 = vector.load %arg2[%c384, %c0_10] : memref<1152x128xbf16, #tpu.memory_space<vmem>>, vector<128x128xbf16>
    %cst_11 = arith.constant dense<0.000000e+00> : vector<128x128xf32>
    %24 = tpu.matmul %22, %23, %cst_11 {dimension_numbers = #tpu.dot_dimension_numbers<[1], [0], [0], [1], [0, 0, 1, 1], [], []>} : vector<128x128xbf16>, vector<128x128xbf16>, vector<128x128xf32> -> vector<128x128xf32>
    %25 = arith.addf %19, %24 : vector<128x128xf32>
    %26 = vector.extract_strided_slice %0 {offsets = [0, 1, 0, 0], sizes = [2, 8, 10, 128], strides = [1, 1, 1, 1]} : vector<2x10x10x128xbf16> to vector<2x8x10x128xbf16>
    %27 = vector.extract_strided_slice %26 {offsets = [0, 0, 1, 0], sizes = [2, 8, 8, 128], strides = [1, 1, 1, 1]} : vector<2x8x10x128xbf16> to vector<2x8x8x128xbf16>
    %28 = vector.shape_cast %27 : vector<2x8x8x128xbf16> to vector<128x128xbf16>
    %c512 = arith.constant 512 : index
    %c0_12 = arith.constant 0 : index
    %29 = vector.load %arg2[%c512, %c0_12] : memref<1152x128xbf16, #tpu.memory_space<vmem>>, vector<128x128xbf16>
    %cst_13 = arith.constant dense<0.000000e+00> : vector<128x128xf32>
    %30 = tpu.matmul %28, %29, %cst_13 {dimension_numbers = #tpu.dot_dimension_numbers<[1], [0], [0], [1], [0, 0, 1, 1], [], []>} : vector<128x128xbf16>, vector<128x128xbf16>, vector<128x128xf32> -> vector<128x128xf32>
    %31 = arith.addf %25, %30 : vector<128x128xf32>
    %32 = vector.extract_strided_slice %0 {offsets = [0, 1, 0, 0], sizes = [2, 8, 10, 128], strides = [1, 1, 1, 1]} : vector<2x10x10x128xbf16> to vector<2x8x10x128xbf16>
    %33 = vector.extract_strided_slice %32 {offsets = [0, 0, 2, 0], sizes = [2, 8, 8, 128], strides = [1, 1, 1, 1]} : vector<2x8x10x128xbf16> to vector<2x8x8x128xbf16>
    %34 = vector.shape_cast %33 : vector<2x8x8x128xbf16> to vector<128x128xbf16>
    %c640 = arith.constant 640 : index
    %c0_14 = arith.constant 0 : index
    %35 = vector.load %arg2[%c640, %c0_14] : memref<1152x128xbf16, #tpu.memory_space<vmem>>, vector<128x128xbf16>
    %cst_15 = arith.constant dense<0.000000e+00> : vector<128x128xf32>
    %36 = tpu.matmul %34, %35, %cst_15 {dimension_numbers = #tpu.dot_dimension_numbers<[1], [0], [0], [1], [0, 0, 1, 1], [], []>} : vector<128x128xbf16>, vector<128x128xbf16>, vector<128x128xf32> -> vector<128x128xf32>
    %37 = arith.addf %31, %36 : vector<128x128xf32>
    %38 = vector.extract_strided_slice %0 {offsets = [0, 2, 0, 0], sizes = [2, 8, 10, 128], strides = [1, 1, 1, 1]} : vector<2x10x10x128xbf16> to vector<2x8x10x128xbf16>
    %39 = vector.extract_strided_slice %38 {offsets = [0, 0, 0, 0], sizes = [2, 8, 8, 128], strides = [1, 1, 1, 1]} : vector<2x8x10x128xbf16> to vector<2x8x8x128xbf16>
    %40 = vector.shape_cast %39 : vector<2x8x8x128xbf16> to vector<128x128xbf16>
    %c768 = arith.constant 768 : index
    %c0_16 = arith.constant 0 : index
    %41 = vector.load %arg2[%c768, %c0_16] : memref<1152x128xbf16, #tpu.memory_space<vmem>>, vector<128x128xbf16>
    %cst_17 = arith.constant dense<0.000000e+00> : vector<128x128xf32>
    %42 = tpu.matmul %40, %41, %cst_17 {dimension_numbers = #tpu.dot_dimension_numbers<[1], [0], [0], [1], [0, 0, 1, 1], [], []>} : vector<128x128xbf16>, vector<128x128xbf16>, vector<128x128xf32> -> vector<128x128xf32>
    %43 = arith.addf %37, %42 : vector<128x128xf32>
    %44 = vector.extract_strided_slice %0 {offsets = [0, 2, 0, 0], sizes = [2, 8, 10, 128], strides = [1, 1, 1, 1]} : vector<2x10x10x128xbf16> to vector<2x8x10x128xbf16>
    %45 = vector.extract_strided_slice %44 {offsets = [0, 0, 1, 0], sizes = [2, 8, 8, 128], strides = [1, 1, 1, 1]} : vector<2x8x10x128xbf16> to vector<2x8x8x128xbf16>
    %46 = vector.shape_cast %45 : vector<2x8x8x128xbf16> to vector<128x128xbf16>
    %c896 = arith.constant 896 : index
    %c0_18 = arith.constant 0 : index
    %47 = vector.load %arg2[%c896, %c0_18] : memref<1152x128xbf16, #tpu.memory_space<vmem>>, vector<128x128xbf16>
    %cst_19 = arith.constant dense<0.000000e+00> : vector<128x128xf32>
    %48 = tpu.matmul %46, %47, %cst_19 {dimension_numbers = #tpu.dot_dimension_numbers<[1], [0], [0], [1], [0, 0, 1, 1], [], []>} : vector<128x128xbf16>, vector<128x128xbf16>, vector<128x128xf32> -> vector<128x128xf32>
    %49 = arith.addf %43, %48 : vector<128x128xf32>
    %50 = vector.extract_strided_slice %0 {offsets = [0, 2, 0, 0], sizes = [2, 8, 10, 128], strides = [1, 1, 1, 1]} : vector<2x10x10x128xbf16> to vector<2x8x10x128xbf16>
    %51 = vector.extract_strided_slice %50 {offsets = [0, 0, 2, 0], sizes = [2, 8, 8, 128], strides = [1, 1, 1, 1]} : vector<2x8x10x128xbf16> to vector<2x8x8x128xbf16>
    %52 = vector.shape_cast %51 : vector<2x8x8x128xbf16> to vector<128x128xbf16>
    %c1024 = arith.constant 1024 : index
    %c0_20 = arith.constant 0 : index
    %53 = vector.load %arg2[%c1024, %c0_20] : memref<1152x128xbf16, #tpu.memory_space<vmem>>, vector<128x128xbf16>
    %cst_21 = arith.constant dense<0.000000e+00> : vector<128x128xf32>
    %54 = tpu.matmul %52, %53, %cst_21 {dimension_numbers = #tpu.dot_dimension_numbers<[1], [0], [0], [1], [0, 0, 1, 1], [], []>} : vector<128x128xbf16>, vector<128x128xbf16>, vector<128x128xf32> -> vector<128x128xf32>
    %55 = arith.addf %49, %54 : vector<128x128xf32>
    %c0_22 = arith.constant 0 : index
    %c0_23 = arith.constant 0 : index
    %56 = vector.load %arg3[%c0_22, %c0_23] : memref<1x128xf32, #tpu.memory_space<vmem>>, vector<1x128xf32>
    %57 = vector.broadcast %56 : vector<1x128xf32> to vector<128x128xf32>
    %58 = arith.mulf %55, %57 : vector<128x128xf32>
    %c0_24 = arith.constant 0 : index
    %c0_25 = arith.constant 0 : index
    %59 = vector.load %arg4[%c0_24, %c0_25] : memref<1x128xf32, #tpu.memory_space<vmem>>, vector<1x128xf32>
    %60 = vector.broadcast %59 : vector<1x128xf32> to vector<128x128xf32>
    %61 = arith.addf %58, %60 : vector<128x128xf32>
    %cst_26 = arith.constant 0.000000e+00 : f32
    %62 = vector.broadcast %cst_26 : f32 to vector<128x128xf32>
    %63 = arith.maximumf %61, %62 : vector<128x128xf32>
    %64 = arith.truncf %63 : vector<128x128xf32> to vector<128x128xbf16>
    %65 = vector.shape_cast %64 : vector<128x128xbf16> to vector<2x8x8x128xbf16>
    %cst_27 = arith.constant 0.000000e+00 : bf16
    %66 = vector.broadcast %cst_27 : bf16 to vector<2x1x8x128xbf16>
    %67 = tpu.concatenate %66, %65, %66 in 1 : vector<2x1x8x128xbf16>, vector<2x8x8x128xbf16>, vector<2x1x8x128xbf16> -> vector<2x10x8x128xbf16>
    %cst_28 = arith.constant 0.000000e+00 : bf16
    %68 = vector.broadcast %cst_28 : bf16 to vector<2x10x1x128xbf16>
    %69 = tpu.concatenate %68, %67, %68 in 2 : vector<2x10x1x128xbf16>, vector<2x10x8x128xbf16>, vector<2x10x1x128xbf16> -> vector<2x10x10x128xbf16>
    %c0_29 = arith.constant 0 : index
    %c0_30 = arith.constant 0 : index
    %c0_31 = arith.constant 0 : index
    %c0_32 = arith.constant 0 : index
    %70 = vector.load %arg5[%c0_29, %c0_30, %c0_31, %c0_32] : memref<2x10x10x128xbf16, #tpu.memory_space<vmem>>, vector<2x10x10x128xbf16>
    tpu.vector_store %arg5[%c0_29, %c0_30, %c0_31, %c0_32], %69 {strides = array<i32>} : memref<2x10x10x128xbf16, #tpu.memory_space<vmem>>, vector<2x10x10x128xbf16>,
    return
  }
  func.func @transform_0(%arg0: i32) -> (i32, i32, i32, i32) {
    %c0_i32 = arith.constant 0 : i32
    %c0_i32_0 = arith.constant 0 : i32
    %c0_i32_1 = arith.constant 0 : i32
    %c0_i32_2 = arith.constant 0 : i32
    return %arg0, %c0_i32, %c0_i32_0, %c0_i32_1 : i32, i32, i32, i32
  }
  func.func @transform_1(%arg0: i32) -> (i32, i32) {
    %c0_i32 = arith.constant 0 : i32
    %c0_i32_0 = arith.constant 0 : i32
    %c0_i32_1 = arith.constant 0 : i32
    return %c0_i32, %c0_i32_0 : i32, i32
  }
  func.func @transform_2(%arg0: i32) -> (i32, i32) {
    %c0_i32 = arith.constant 0 : i32
    %c0_i32_0 = arith.constant 0 : i32
    %c0_i32_1 = arith.constant 0 : i32
    return %c0_i32, %c0_i32_0 : i32, i32
  }
  func.func @transform_3(%arg0: i32) -> (i32, i32) {
    %c0_i32 = arith.constant 0 : i32
    %c0_i32_0 = arith.constant 0 : i32
    %c0_i32_1 = arith.constant 0 : i32
    return %c0_i32, %c0_i32_0 : i32, i32
  }
  func.func @transform_4(%arg0: i32) -> (i32, i32, i32, i32) {
    %c0_i32 = arith.constant 0 : i32
    %c0_i32_0 = arith.constant 0 : i32
    %c0_i32_1 = arith.constant 0 : i32
    %c0_i32_2 = arith.constant 0 : i32
    return %arg0, %c0_i32, %c0_i32_0, %c0_i32_1 : i32, i32, i32, i32
  }
}

module attributes {stable_mosaic.version = 11 : i64} {
  func.func @kernel(%arg0: i32, %arg1: memref<2x10x10x128xbf16, #tpu.memory_space<vmem>>, %arg2: memref<1152x128xbf16, #tpu.memory_space<vmem>>, %arg3: memref<2x8x8x128xf32, #tpu.memory_space<vmem>>, %arg4: memref<2x8x8x128xf32, #tpu.memory_space<vmem>>) attributes {dimension_semantics = [#tpu.dimension_semantics<parallel>], iteration_bounds = array<i64: 1>, scalar_prefetch = 0 : i64, scratch_operands = 0 : i64, tpu.core_type = #tpu.core_type<tc>, window_params = [{transform_indices = @transform_0, window_bounds = array<i64: 2, 10, 10, 128>}, {pipeline_mode = #tpu.pipeline_mode<synchronous>, transform_indices = @transform_1, window_bounds = array<i64: 1152, 128>}, {transform_indices = @transform_2, window_bounds = array<i64: 2, 8, 8, 128>}, {transform_indices = @transform_3, window_bounds = array<i64: 2, 8, 8, 128>}]} {
    %c0 = arith.constant 0 : index
    %c0_0 = arith.constant 0 : index
    %c0_1 = arith.constant 0 : index
    %c0_2 = arith.constant 0 : index
    %0 = vector.load %arg1[%c0, %c0_0, %c0_1, %c0_2] : memref<2x10x10x128xbf16, #tpu.memory_space<vmem>>, vector<2x10x10x128xbf16>
    %cst = arith.constant 0.000000e+00 : f32
    %1 = vector.broadcast %cst : f32 to vector<128x128xf32>
    %2 = vector.extract_strided_slice %0 {offsets = [0, 0, 0, 0], sizes = [2, 8, 10, 128], strides = [1, 1, 1, 1]} : vector<2x10x10x128xbf16> to vector<2x8x10x128xbf16>
    %3 = vector.extract_strided_slice %2 {offsets = [0, 0, 0, 0], sizes = [2, 8, 8, 128], strides = [1, 1, 1, 1]} : vector<2x8x10x128xbf16> to vector<2x8x8x128xbf16>
    %4 = vector.shape_cast %3 : vector<2x8x8x128xbf16> to vector<128x128xbf16>
    %c0_3 = arith.constant 0 : index
    %c0_4 = arith.constant 0 : index
    %5 = vector.load %arg2[%c0_3, %c0_4] : memref<1152x128xbf16, #tpu.memory_space<vmem>>, vector<128x128xbf16>
    %cst_5 = arith.constant dense<0.000000e+00> : vector<128x128xf32>
    %6 = tpu.matmul %4, %5, %cst_5 {dimension_numbers = #tpu.dot_dimension_numbers<[1], [0], [0], [1], [0, 0, 1, 1], [], []>} : vector<128x128xbf16>, vector<128x128xbf16>, vector<128x128xf32> -> vector<128x128xf32>
    %7 = arith.addf %1, %6 : vector<128x128xf32>
    %8 = vector.extract_strided_slice %0 {offsets = [0, 0, 0, 0], sizes = [2, 8, 10, 128], strides = [1, 1, 1, 1]} : vector<2x10x10x128xbf16> to vector<2x8x10x128xbf16>
    %9 = vector.extract_strided_slice %8 {offsets = [0, 0, 1, 0], sizes = [2, 8, 8, 128], strides = [1, 1, 1, 1]} : vector<2x8x10x128xbf16> to vector<2x8x8x128xbf16>
    %10 = vector.shape_cast %9 : vector<2x8x8x128xbf16> to vector<128x128xbf16>
    %c128 = arith.constant 128 : index
    %c0_6 = arith.constant 0 : index
    %11 = vector.load %arg2[%c128, %c0_6] : memref<1152x128xbf16, #tpu.memory_space<vmem>>, vector<128x128xbf16>
    %cst_7 = arith.constant dense<0.000000e+00> : vector<128x128xf32>
    %12 = tpu.matmul %10, %11, %cst_7 {dimension_numbers = #tpu.dot_dimension_numbers<[1], [0], [0], [1], [0, 0, 1, 1], [], []>} : vector<128x128xbf16>, vector<128x128xbf16>, vector<128x128xf32> -> vector<128x128xf32>
    %13 = arith.addf %7, %12 : vector<128x128xf32>
    %14 = vector.extract_strided_slice %0 {offsets = [0, 0, 0, 0], sizes = [2, 8, 10, 128], strides = [1, 1, 1, 1]} : vector<2x10x10x128xbf16> to vector<2x8x10x128xbf16>
    %15 = vector.extract_strided_slice %14 {offsets = [0, 0, 2, 0], sizes = [2, 8, 8, 128], strides = [1, 1, 1, 1]} : vector<2x8x10x128xbf16> to vector<2x8x8x128xbf16>
    %16 = vector.shape_cast %15 : vector<2x8x8x128xbf16> to vector<128x128xbf16>
    %c256 = arith.constant 256 : index
    %c0_8 = arith.constant 0 : index
    %17 = vector.load %arg2[%c256, %c0_8] : memref<1152x128xbf16, #tpu.memory_space<vmem>>, vector<128x128xbf16>
    %cst_9 = arith.constant dense<0.000000e+00> : vector<128x128xf32>
    %18 = tpu.matmul %16, %17, %cst_9 {dimension_numbers = #tpu.dot_dimension_numbers<[1], [0], [0], [1], [0, 0, 1, 1], [], []>} : vector<128x128xbf16>, vector<128x128xbf16>, vector<128x128xf32> -> vector<128x128xf32>
    %19 = arith.addf %13, %18 : vector<128x128xf32>
    %20 = vector.extract_strided_slice %0 {offsets = [0, 1, 0, 0], sizes = [2, 8, 10, 128], strides = [1, 1, 1, 1]} : vector<2x10x10x128xbf16> to vector<2x8x10x128xbf16>
    %21 = vector.extract_strided_slice %20 {offsets = [0, 0, 0, 0], sizes = [2, 8, 8, 128], strides = [1, 1, 1, 1]} : vector<2x8x10x128xbf16> to vector<2x8x8x128xbf16>
    %22 = vector.shape_cast %21 : vector<2x8x8x128xbf16> to vector<128x128xbf16>
    %c384 = arith.constant 384 : index
    %c0_10 = arith.constant 0 : index
    %23 = vector.load %arg2[%c384, %c0_10] : memref<1152x128xbf16, #tpu.memory_space<vmem>>, vector<128x128xbf16>
    %cst_11 = arith.constant dense<0.000000e+00> : vector<128x128xf32>
    %24 = tpu.matmul %22, %23, %cst_11 {dimension_numbers = #tpu.dot_dimension_numbers<[1], [0], [0], [1], [0, 0, 1, 1], [], []>} : vector<128x128xbf16>, vector<128x128xbf16>, vector<128x128xf32> -> vector<128x128xf32>
    %25 = arith.addf %19, %24 : vector<128x128xf32>
    %26 = vector.extract_strided_slice %0 {offsets = [0, 1, 0, 0], sizes = [2, 8, 10, 128], strides = [1, 1, 1, 1]} : vector<2x10x10x128xbf16> to vector<2x8x10x128xbf16>
    %27 = vector.extract_strided_slice %26 {offsets = [0, 0, 1, 0], sizes = [2, 8, 8, 128], strides = [1, 1, 1, 1]} : vector<2x8x10x128xbf16> to vector<2x8x8x128xbf16>
    %28 = vector.shape_cast %27 : vector<2x8x8x128xbf16> to vector<128x128xbf16>
    %c512 = arith.constant 512 : index
    %c0_12 = arith.constant 0 : index
    %29 = vector.load %arg2[%c512, %c0_12] : memref<1152x128xbf16, #tpu.memory_space<vmem>>, vector<128x128xbf16>
    %cst_13 = arith.constant dense<0.000000e+00> : vector<128x128xf32>
    %30 = tpu.matmul %28, %29, %cst_13 {dimension_numbers = #tpu.dot_dimension_numbers<[1], [0], [0], [1], [0, 0, 1, 1], [], []>} : vector<128x128xbf16>, vector<128x128xbf16>, vector<128x128xf32> -> vector<128x128xf32>
    %31 = arith.addf %25, %30 : vector<128x128xf32>
    %32 = vector.extract_strided_slice %0 {offsets = [0, 1, 0, 0], sizes = [2, 8, 10, 128], strides = [1, 1, 1, 1]} : vector<2x10x10x128xbf16> to vector<2x8x10x128xbf16>
    %33 = vector.extract_strided_slice %32 {offsets = [0, 0, 2, 0], sizes = [2, 8, 8, 128], strides = [1, 1, 1, 1]} : vector<2x8x10x128xbf16> to vector<2x8x8x128xbf16>
    %34 = vector.shape_cast %33 : vector<2x8x8x128xbf16> to vector<128x128xbf16>
    %c640 = arith.constant 640 : index
    %c0_14 = arith.constant 0 : index
    %35 = vector.load %arg2[%c640, %c0_14] : memref<1152x128xbf16, #tpu.memory_space<vmem>>, vector<128x128xbf16>
    %cst_15 = arith.constant dense<0.000000e+00> : vector<128x128xf32>
    %36 = tpu.matmul %34, %35, %cst_15 {dimension_numbers = #tpu.dot_dimension_numbers<[1], [0], [0], [1], [0, 0, 1, 1], [], []>} : vector<128x128xbf16>, vector<128x128xbf16>, vector<128x128xf32> -> vector<128x128xf32>
    %37 = arith.addf %31, %36 : vector<128x128xf32>
    %38 = vector.extract_strided_slice %0 {offsets = [0, 2, 0, 0], sizes = [2, 8, 10, 128], strides = [1, 1, 1, 1]} : vector<2x10x10x128xbf16> to vector<2x8x10x128xbf16>
    %39 = vector.extract_strided_slice %38 {offsets = [0, 0, 0, 0], sizes = [2, 8, 8, 128], strides = [1, 1, 1, 1]} : vector<2x8x10x128xbf16> to vector<2x8x8x128xbf16>
    %40 = vector.shape_cast %39 : vector<2x8x8x128xbf16> to vector<128x128xbf16>
    %c768 = arith.constant 768 : index
    %c0_16 = arith.constant 0 : index
    %41 = vector.load %arg2[%c768, %c0_16] : memref<1152x128xbf16, #tpu.memory_space<vmem>>, vector<128x128xbf16>
    %cst_17 = arith.constant dense<0.000000e+00> : vector<128x128xf32>
    %42 = tpu.matmul %40, %41, %cst_17 {dimension_numbers = #tpu.dot_dimension_numbers<[1], [0], [0], [1], [0, 0, 1, 1], [], []>} : vector<128x128xbf16>, vector<128x128xbf16>, vector<128x128xf32> -> vector<128x128xf32>
    %43 = arith.addf %37, %42 : vector<128x128xf32>
    %44 = vector.extract_strided_slice %0 {offsets = [0, 2, 0, 0], sizes = [2, 8, 10, 128], strides = [1, 1, 1, 1]} : vector<2x10x10x128xbf16> to vector<2x8x10x128xbf16>
    %45 = vector.extract_strided_slice %44 {offsets = [0, 0, 1, 0], sizes = [2, 8, 8, 128], strides = [1, 1, 1, 1]} : vector<2x8x10x128xbf16> to vector<2x8x8x128xbf16>
    %46 = vector.shape_cast %45 : vector<2x8x8x128xbf16> to vector<128x128xbf16>
    %c896 = arith.constant 896 : index
    %c0_18 = arith.constant 0 : index
    %47 = vector.load %arg2[%c896, %c0_18] : memref<1152x128xbf16, #tpu.memory_space<vmem>>, vector<128x128xbf16>
    %cst_19 = arith.constant dense<0.000000e+00> : vector<128x128xf32>
    %48 = tpu.matmul %46, %47, %cst_19 {dimension_numbers = #tpu.dot_dimension_numbers<[1], [0], [0], [1], [0, 0, 1, 1], [], []>} : vector<128x128xbf16>, vector<128x128xbf16>, vector<128x128xf32> -> vector<128x128xf32>
    %49 = arith.addf %43, %48 : vector<128x128xf32>
    %50 = vector.extract_strided_slice %0 {offsets = [0, 2, 0, 0], sizes = [2, 8, 10, 128], strides = [1, 1, 1, 1]} : vector<2x10x10x128xbf16> to vector<2x8x10x128xbf16>
    %51 = vector.extract_strided_slice %50 {offsets = [0, 0, 2, 0], sizes = [2, 8, 8, 128], strides = [1, 1, 1, 1]} : vector<2x8x10x128xbf16> to vector<2x8x8x128xbf16>
    %52 = vector.shape_cast %51 : vector<2x8x8x128xbf16> to vector<128x128xbf16>
    %c1024 = arith.constant 1024 : index
    %c0_20 = arith.constant 0 : index
    %53 = vector.load %arg2[%c1024, %c0_20] : memref<1152x128xbf16, #tpu.memory_space<vmem>>, vector<128x128xbf16>
    %cst_21 = arith.constant dense<0.000000e+00> : vector<128x128xf32>
    %54 = tpu.matmul %52, %53, %cst_21 {dimension_numbers = #tpu.dot_dimension_numbers<[1], [0], [0], [1], [0, 0, 1, 1], [], []>} : vector<128x128xbf16>, vector<128x128xbf16>, vector<128x128xf32> -> vector<128x128xf32>
    %55 = arith.addf %49, %54 : vector<128x128xf32>
    %c0_22 = arith.constant 0 : index
    %c0_23 = arith.constant 0 : index
    %c0_24 = arith.constant 0 : index
    %c0_25 = arith.constant 0 : index
    %56 = vector.load %arg3[%c0_22, %c0_23, %c0_24, %c0_25] : memref<2x8x8x128xf32, #tpu.memory_space<vmem>>, vector<2x8x8x128xf32>
    %57 = vector.shape_cast %56 : vector<2x8x8x128xf32> to vector<128x128xf32>
    %58 = arith.addf %55, %57 : vector<128x128xf32>
    %59 = vector.shape_cast %58 : vector<128x128xf32> to vector<2x8x8x128xf32>
    %c0_26 = arith.constant 0 : index
    %c0_27 = arith.constant 0 : index
    %c0_28 = arith.constant 0 : index
    %c0_29 = arith.constant 0 : index
    %60 = vector.load %arg4[%c0_26, %c0_27, %c0_28, %c0_29] : memref<2x8x8x128xf32, #tpu.memory_space<vmem>>, vector<2x8x8x128xf32>
    tpu.vector_store %arg4[%c0_26, %c0_27, %c0_28, %c0_29], %59 {strides = array<i32>} : memref<2x8x8x128xf32, #tpu.memory_space<vmem>>, vector<2x8x8x128xf32>,
    return
  }
  func.func @transform_0(%arg0: i32) -> (i32, i32, i32, i32) {
    %c0_i32 = arith.constant 0 : i32
    %c0_i32_0 = arith.constant 0 : i32
    %c0_i32_1 = arith.constant 0 : i32
    %c0_i32_2 = arith.constant 0 : i32
    return %arg0, %c0_i32, %c0_i32_0, %c0_i32_1 : i32, i32, i32, i32
  }
  func.func @transform_1(%arg0: i32) -> (i32, i32) {
    %c0_i32 = arith.constant 0 : i32
    %c0_i32_0 = arith.constant 0 : i32
    %c0_i32_1 = arith.constant 0 : i32
    return %c0_i32, %c0_i32_0 : i32, i32
  }
  func.func @transform_2(%arg0: i32) -> (i32, i32, i32, i32) {
    %c0_i32 = arith.constant 0 : i32
    %c0_i32_0 = arith.constant 0 : i32
    %c0_i32_1 = arith.constant 0 : i32
    %c0_i32_2 = arith.constant 0 : i32
    return %arg0, %c0_i32, %c0_i32_0, %c0_i32_1 : i32, i32, i32, i32
  }
  func.func @transform_3(%arg0: i32) -> (i32, i32, i32, i32) {
    %c0_i32 = arith.constant 0 : i32
    %c0_i32_0 = arith.constant 0 : i32
    %c0_i32_1 = arith.constant 0 : i32
    %c0_i32_2 = arith.constant 0 : i32
    return %arg0, %c0_i32, %c0_i32_0, %c0_i32_1 : i32, i32, i32, i32
  }
}

</mosaic_0001>

<llo_original>
// kernel: conv_group_forward.5
$region0: #{conv_group_forward.5}
  #allocation0 [shape = 'u32[]', space=smem, size = 0x4, offset = 0x4, fixed_abs, tag = 'smem constant byte address 0x4 - core index']
  #allocation1 [shape = 'u32[144,128]{1,0:T(1,128)}', space=vmem, size = 0x12000, scoped, tag = 'internal scratch']
  %s0 = inlined_call_operand.vmem [shape: bf16[2,10,10,128], index: 0, kind: input, shape index: {}]
  %s1 = inlined_call_operand.vmem [shape: bf16[1152,128], index: 1, kind: input, shape index: {}]
  %s2 = inlined_call_operand.vmem [shape: f32[2,8,8,128], index: 2, kind: input, shape index: {}]
  %s3 = inlined_call_operand.vmem [shape: f32[1,128], index: 3, kind: input, shape index: {}]
  %s4 = inlined_call_operand.vmem [shape: f32[1,128], index: 4, kind: input, shape index: {}]
  %s5 = inlined_call_operand.vmem [shape: f32[2,8,8,128], index: 5, kind: output, shape index: {0}]
  %s6 = inlined_call_operand.vmem [shape: bf16[2,10,10,128], index: 6, kind: output, shape index: {1}]
  %7 = xla_tuple %s5, %s6
  %s8 = sld [smem:[#allocation0]]
  $region38: #{conv_group_forward.5} parent=0
    _
  %s10 = ssub.s32 1, %s8
  %s11 = scalar_select 0, %s10, %s8
  // Predicated region
  $region2: #{conv_group_forward.5} parent=0 // pred_check
    _
  $region3: #{conv_group_forward.5} parent=0 // pred_check_branch
    %13 = sbr.rel (0) target = $region5
  $region4: #{conv_group_forward.5} parent=0 // pred_region
    _
  $region5: #{conv_group_forward.5} parent=0 // pred_fallthru
    _
  // Predicated region
  $region6: #{conv_group_forward.5} parent=0 // pred_check
    _
  $region7: #{conv_group_forward.5} parent=0 // pred_check_branch
    %15 = sbr.rel (0) target = $region9
  $region8: #{conv_group_forward.5} parent=0 // pred_region
    _
  $region9: #{conv_group_forward.5} parent=0 // pred_fallthru
    _
  // Predicated region
  $region10: #{conv_group_forward.5} parent=0 // pred_check
    _
  $region11: #{conv_group_forward.5} parent=0 // pred_check_branch
    %17 = sbr.rel (0) target = $region13
  $region12: #{conv_group_forward.5} parent=0 // pred_region
    _
  $region13: #{conv_group_forward.5} parent=0 // pred_fallthru
    _
  // Predicated region
  $region14: #{conv_group_forward.5} parent=0 // pred_check
    _
  $region15: #{conv_group_forward.5} parent=0 // pred_check_branch
    %19 = sbr.rel (0) target = $region17
  $region16: #{conv_group_forward.5} parent=0 // pred_region
    _
  $region17: #{conv_group_forward.5} parent=0 // pred_fallthru
    _
  // Predicated region
  $region18: #{conv_group_forward.5} parent=0 // pred_check
    _
  $region19: #{conv_group_forward.5} parent=0 // pred_check_branch
    %21 = sbr.rel (0) target = $region21
  $region20: #{conv_group_forward.5} parent=0 // pred_region
    _
  $region21: #{conv_group_forward.5} parent=0 // pred_fallthru
    _
  %v23 = vld [vmem:[%s0] sm:$0xf]
  %v24 = vld [vmem:[%s0 + $0x4] sm:$0x1]
  %v25 = vld [vmem:[%s0 + $0x8] sm:$0xf]
  %v26 = vld [vmem:[%s0 + $0xc] sm:$0x1]
  %v27 = vld [vmem:[%s0 + $0x10] sm:$0xf]
  %v28 = vld [vmem:[%s0 + $0x14] sm:$0x1]
  %v29 = vld [vmem:[%s0 + $0x18] sm:$0xf]
  %v30 = vld [vmem:[%s0 + $0x1c] sm:$0x1]
  %v31 = vld [vmem:[%s0 + $0x20] sm:$0xf]
  %v32 = vld [vmem:[%s0 + $0x24] sm:$0x1]
  %v33 = vld [vmem:[%s0 + $0x28] sm:$0xf]
  %v34 = vld [vmem:[%s0 + $0x2c] sm:$0x1]
  %v35 = vld [vmem:[%s0 + $0x30] sm:$0xf]
  %v36 = vld [vmem:[%s0 + $0x34] sm:$0x1]
  %v37 = vld [vmem:[%s0 + $0x38] sm:$0xf]
  %v38 = vld [vmem:[%s0 + $0x3c] sm:$0x1]
  %v39 = vld [vmem:[%s0 + $0x40] sm:$0xf]
  %v40 = vld [vmem:[%s0 + $0x44] sm:$0x1]
  %v41 = vld [vmem:[%s0 + $0x48] sm:$0xf]
  %v42 = vld [vmem:[%s0 + $0x4c] sm:$0x1]
  %v43 = vld [vmem:[%s0 + $0x50] sm:$0xf]
  %v44 = vld [vmem:[%s0 + $0x54] sm:$0x1]
  %v45 = vld [vmem:[%s0 + $0x58] sm:$0xf]
  %v46 = vld [vmem:[%s0 + $0x5c] sm:$0x1]
  %v47 = vld [vmem:[%s0 + $0x60] sm:$0xf]
  %v48 = vld [vmem:[%s0 + $0x64] sm:$0x1]
  %v49 = vld [vmem:[%s0 + $0x68] sm:$0xf]
  %v50 = vld [vmem:[%s0 + $0x6c] sm:$0x1]
  %v51 = vld [vmem:[%s0 + $0x70] sm:$0xf]
  %v52 = vld [vmem:[%s0 + $0x74] sm:$0x1]
  %v53 = vld [vmem:[%s0 + $0x78] sm:$0xf]
  %v54 = vld [vmem:[%s0 + $0x7c] sm:$0x1]
  %v55 = vld [vmem:[%s0 + $0x80] sm:$0xf]
  %v56 = vld [vmem:[%s0 + $0x84] sm:$0x1]
  %v57 = vld [vmem:[%s0 + $0x88] sm:$0xf]
  %v58 = vld [vmem:[%s0 + $0x8c] sm:$0x1]
  %v59 = vld [vmem:[%s0 + $0x90] sm:$0xf]
  %v60 = vld [vmem:[%s0 + $0x94] sm:$0x1]
  %v61 = vld [vmem:[%s0 + $0x98] sm:$0xf]
  %v62 = vld [vmem:[%s0 + $0x9c] sm:$0x1]
  %v63 = vld [vmem:[%s1] sm:$0xf]
  %v64 = vld [vmem:[%s1 + $0x4] sm:$0xf]
  %v65 = vld [vmem:[%s1 + $0x8] sm:$0xf]
  %v66 = vld [vmem:[%s1 + $0xc] sm:$0xf]
  %v67 = vld [vmem:[%s1 + $0x10] sm:$0xf]
  %v68 = vld [vmem:[%s1 + $0x14] sm:$0xf]
  %v69 = vld [vmem:[%s1 + $0x18] sm:$0xf]
  %v70 = vld [vmem:[%s1 + $0x1c] sm:$0xf]
  %v71 = vld [vmem:[%s1 + $0x20] sm:$0xf]
  %v72 = vld [vmem:[%s1 + $0x24] sm:$0xf]
  %v73 = vld [vmem:[%s1 + $0x28] sm:$0xf]
  %v74 = vld [vmem:[%s1 + $0x2c] sm:$0xf]
  %v75 = vld [vmem:[%s1 + $0x30] sm:$0xf]
  %v76 = vld [vmem:[%s1 + $0x34] sm:$0xf]
  %v77 = vld [vmem:[%s1 + $0x38] sm:$0xf]
  %v78 = vld [vmem:[%s1 + $0x3c] sm:$0xf]
  %vm79 = vsmask.f32 3328
  %vm80 = vsmask.f32 7440
  %vm81 = vmor %vm79, %vm80
  %v83 = vshrl.u32 %v23, 16
  %v85 = vrot.slane %v83, 4
  %v86 = vshll.u32 %v23, 16
  %v88 = vrot.slane %v86, 5
  %v89 = vor.u32 %v85, %v88
  %v90 = vrot.slane %v89, 4
  %v92 = vshll.u32 %v24, 16
  %v94 = vrot.slane %v92, 5
  %v95 = vsel %vm81, %v90, %v94
  %v97 = vshrl.u32 %v25, 16
  %v99 = vrot.slane %v97, 4
  %v100 = vshll.u32 %v25, 16
  %v102 = vrot.slane %v100, 5
  %v103 = vor.u32 %v99, %v102
  %v104 = vrot.slane %v103, 4
  %v106 = vshll.u32 %v26, 16
  %v108 = vrot.slane %v106, 5
  %v109 = vsel %vm81, %v104, %v108
  %v111 = vshrl.u32 %v27, 16
  %v113 = vrot.slane %v111, 4
  %v114 = vshll.u32 %v27, 16
  %v116 = vrot.slane %v114, 5
  %v117 = vor.u32 %v113, %v116
  %v118 = vrot.slane %v117, 4
  %v120 = vshll.u32 %v28, 16
  %v122 = vrot.slane %v120, 5
  %v123 = vsel %vm81, %v118, %v122
  %v125 = vshrl.u32 %v29, 16
  %v127 = vrot.slane %v125, 4
  %v128 = vshll.u32 %v29, 16
  %v130 = vrot.slane %v128, 5
  %v131 = vor.u32 %v127, %v130
  %v132 = vrot.slane %v131, 4
  %v134 = vshll.u32 %v30, 16
  %v136 = vrot.slane %v134, 5
  %v137 = vsel %vm81, %v132, %v136
  %v139 = vshrl.u32 %v31, 16
  %v141 = vrot.slane %v139, 4
  %v142 = vshll.u32 %v31, 16
  %v144 = vrot.slane %v142, 5
  %v145 = vor.u32 %v141, %v144
  %v146 = vrot.slane %v145, 4
  %v148 = vshll.u32 %v32, 16
  %v150 = vrot.slane %v148, 5
  %v151 = vsel %vm81, %v146, %v150
  %v153 = vshrl.u32 %v33, 16
  %v155 = vrot.slane %v153, 4
  %v156 = vshll.u32 %v33, 16
  %v158 = vrot.slane %v156, 5
  %v159 = vor.u32 %v155, %v158
  %v160 = vrot.slane %v159, 4
  %v162 = vshll.u32 %v34, 16
  %v164 = vrot.slane %v162, 5
  %v165 = vsel %vm81, %v160, %v164
  %v167 = vshrl.u32 %v35, 16
  %v169 = vrot.slane %v167, 4
  %v170 = vshll.u32 %v35, 16
  %v172 = vrot.slane %v170, 5
  %v173 = vor.u32 %v169, %v172
  %v174 = vrot.slane %v173, 4
  %v176 = vshll.u32 %v36, 16
  %v178 = vrot.slane %v176, 5
  %v179 = vsel %vm81, %v174, %v178
  %v181 = vshrl.u32 %v37, 16
  %v183 = vrot.slane %v181, 4
  %v184 = vshll.u32 %v37, 16
  %v186 = vrot.slane %v184, 5
  %v187 = vor.u32 %v183, %v186
  %v188 = vrot.slane %v187, 4
  %v190 = vshll.u32 %v38, 16
  %v192 = vrot.slane %v190, 5
  %v193 = vsel %vm81, %v188, %v192
  %v195 = vshrl.u32 %v43, 16
  %v197 = vrot.slane %v195, 4
  %v198 = vshll.u32 %v43, 16
  %v200 = vrot.slane %v198, 5
  %v201 = vor.u32 %v197, %v200
  %v202 = vrot.slane %v201, 4
  %v204 = vshll.u32 %v44, 16
  %v206 = vrot.slane %v204, 5
  %v207 = vsel %vm81, %v202, %v206
  %v209 = vshrl.u32 %v45, 16
  %v211 = vrot.slane %v209, 4
  %v212 = vshll.u32 %v45, 16
  %v214 = vrot.slane %v212, 5
  %v215 = vor.u32 %v211, %v214
  %v216 = vrot.slane %v215, 4
  %v218 = vshll.u32 %v46, 16
  %v220 = vrot.slane %v218, 5
  %v221 = vsel %vm81, %v216, %v220
  %v223 = vshrl.u32 %v47, 16
  %v225 = vrot.slane %v223, 4
  %v226 = vshll.u32 %v47, 16
  %v228 = vrot.slane %v226, 5
  %v229 = vor.u32 %v225, %v228
  %v230 = vrot.slane %v229, 4
  %v232 = vshll.u32 %v48, 16
  %v234 = vrot.slane %v232, 5
  %v235 = vsel %vm81, %v230, %v234
  %v237 = vshrl.u32 %v49, 16
  %v239 = vrot.slane %v237, 4
  %v240 = vshll.u32 %v49, 16
  %v242 = vrot.slane %v240, 5
  %v243 = vor.u32 %v239, %v242
  %v244 = vrot.slane %v243, 4
  %v246 = vshll.u32 %v50, 16
  %v248 = vrot.slane %v246, 5
  %v249 = vsel %vm81, %v244, %v248
  %v251 = vshrl.u32 %v51, 16
  %v253 = vrot.slane %v251, 4
  %v254 = vshll.u32 %v51, 16
  %v256 = vrot.slane %v254, 5
  %v257 = vor.u32 %v253, %v256
  %v258 = vrot.slane %v257, 4
  %v260 = vshll.u32 %v52, 16
  %v262 = vrot.slane %v260, 5
  %v263 = vsel %vm81, %v258, %v262
  %v265 = vshrl.u32 %v53, 16
  %v267 = vrot.slane %v265, 4
  %v268 = vshll.u32 %v53, 16
  %v270 = vrot.slane %v268, 5
  %v271 = vor.u32 %v267, %v270
  %v272 = vrot.slane %v271, 4
  %v274 = vshll.u32 %v54, 16
  %v276 = vrot.slane %v274, 5
  %v277 = vsel %vm81, %v272, %v276
  %v279 = vshrl.u32 %v55, 16
  %v281 = vrot.slane %v279, 4
  %v282 = vshll.u32 %v55, 16
  %v284 = vrot.slane %v282, 5
  %v285 = vor.u32 %v281, %v284
  %v286 = vrot.slane %v285, 4
  %v288 = vshll.u32 %v56, 16
  %v290 = vrot.slane %v288, 5
  %v291 = vsel %vm81, %v286, %v290
  %v293 = vshrl.u32 %v57, 16
  %v295 = vrot.slane %v293, 4
  %v296 = vshll.u32 %v57, 16
  %v298 = vrot.slane %v296, 5
  %v299 = vor.u32 %v295, %v298
  %v300 = vrot.slane %v299, 4
  %v302 = vshll.u32 %v58, 16
  %v304 = vrot.slane %v302, 5
  %v305 = vsel %vm81, %v300, %v304
  %v306 = vld [vmem:[%s1 + $0x40] sm:$0xf]
  %v307 = vld [vmem:[%s1 + $0x44] sm:$0xf]
  %v308 = vld [vmem:[%s1 + $0x48] sm:$0xf]
  %v309 = vld [vmem:[%s1 + $0x4c] sm:$0xf]
  %v310 = vld [vmem:[%s1 + $0x50] sm:$0xf]
  %v311 = vld [vmem:[%s1 + $0x54] sm:$0xf]
  %v312 = vld [vmem:[%s1 + $0x58] sm:$0xf]
  %v313 = vld [vmem:[%s1 + $0x5c] sm:$0xf]
  %v314 = vld [vmem:[%s1 + $0x60] sm:$0xf]
  %v315 = vld [vmem:[%s1 + $0x64] sm:$0xf]
  %v316 = vld [vmem:[%s1 + $0x68] sm:$0xf]
  %v317 = vld [vmem:[%s1 + $0x6c] sm:$0xf]
  %v318 = vld [vmem:[%s1 + $0x70] sm:$0xf]
  %v319 = vld [vmem:[%s1 + $0x74] sm:$0xf]
  %v320 = vld [vmem:[%s1 + $0x78] sm:$0xf]
  %v321 = vld [vmem:[%s1 + $0x7c] sm:$0xf]
  %v322 = vunpack.c.l.b16 %v95
  %v323 = vunpack.c.l.b16 %v109
  %v324 = vunpack.c.l.b16 %v123
  %v325 = vunpack.c.l.b16 %v137
  %v326 = vunpack.c.l.b16 %v151
  %v327 = vunpack.c.l.b16 %v165
  %v328 = vunpack.c.l.b16 %v179
  %v329 = vunpack.c.l.b16 %v193
  %v330 = vunpack.c.l.b16 %v207
  %v331 = vunpack.c.l.b16 %v221
  %v332 = vunpack.c.l.b16 %v235
  %v333 = vunpack.c.l.b16 %v249
  %v334 = vunpack.c.l.b16 %v263
  %v335 = vunpack.c.l.b16 %v277
  %v336 = vunpack.c.l.b16 %v291
  %v337 = vunpack.c.l.b16 %v305
  %v338 = vpack.c.b16 %v323, %v322
  %v339 = vpack.c.b16 %v325, %v324
  %v340 = vpack.c.b16 %v327, %v326
  %v341 = vpack.c.b16 %v329, %v328
  %v342 = vpack.c.b16 %v331, %v330
  %v343 = vpack.c.b16 %v333, %v332
  %v344 = vpack.c.b16 %v335, %v334
  %v345 = vpack.c.b16 %v337, %v336
  %v370 = vunpack.c.l.b16 %v306
  %v371 = vunpack.c.l.b16 %v307
  %v372 = vunpack.c.l.b16 %v308
  %v373 = vunpack.c.l.b16 %v309
  %v374 = vunpack.c.l.b16 %v310
  %v375 = vunpack.c.l.b16 %v311
  %v376 = vunpack.c.l.b16 %v312
  %v377 = vunpack.c.l.b16 %v313
  %v378 = vunpack.c.l.b16 %v314
  %v379 = vunpack.c.l.b16 %v315
  %v380 = vunpack.c.l.b16 %v316
  %v381 = vunpack.c.l.b16 %v317
  %v382 = vunpack.c.l.b16 %v318
  %v383 = vunpack.c.l.b16 %v319
  %v384 = vunpack.c.l.b16 %v320
  %v385 = vunpack.c.l.b16 %v321
  %v386 = vpack.c.b16 %v371, %v370
  %v387 = vpack.c.b16 %v373, %v372
  %v388 = vpack.c.b16 %v375, %v374
  %v389 = vpack.c.b16 %v377, %v376
  %v390 = vpack.c.b16 %v379, %v378
  %v391 = vpack.c.b16 %v381, %v380
  %v392 = vpack.c.b16 %v383, %v382
  %v393 = vpack.c.b16 %v385, %v384
  %402 = vmatprep.subr.bf16.mxu0 0
  %403 = vmatpush1.bf16.msra.mxu0 %v386
  %404 = vmatprep.subr.bf16.mxu0 0
  %405 = vmatpush1.bf16.msra.mxu0 %v387
  %406 = vmatprep.subr.bf16.mxu0 0
  %407 = vmatpush1.bf16.msra.mxu0 %v388
  %408 = vmatprep.subr.bf16.mxu0 0
  %409 = vmatpush1.bf16.msra.mxu0 %v389
  %410 = vmatprep.subr.bf16.mxu0 0
  %411 = vmatpush1.bf16.msra.mxu0 %v390
  %412 = vmatprep.subr.bf16.mxu0 0
  %413 = vmatpush1.bf16.msra.mxu0 %v391
  %414 = vmatprep.subr.bf16.mxu0 0
  %415 = vmatpush1.bf16.msra.mxu0 %v392
  %416 = vmatprep.subr.bf16.mxu0 0
  %417 = vmatpush1.bf16.msra.mxu0 %v393
  %418 = vmatprep.subr.bf16.mxu0 0
  %419 = vmatpush1.bf16.msra.mxu0 0
  %420 = vmatprep.subr.bf16.mxu0 0
  %421 = vmatpush1.bf16.msra.mxu0 0
  %422 = vmatprep.subr.bf16.mxu0 0
  %423 = vmatpush1.bf16.msra.mxu0 0
  %424 = vmatprep.subr.bf16.mxu0 0
  %425 = vmatpush1.bf16.msra.mxu0 0
  %426 = vmatprep.subr.bf16.mxu0 0
  %427 = vmatpush1.bf16.msra.mxu0 0
  %428 = vmatprep.subr.bf16.mxu0 0
  %429 = vmatpush1.bf16.msra.mxu0 0
  %430 = vmatprep.subr.bf16.mxu0 0
  %431 = vmatpush1.bf16.msra.mxu0 0
  %432 = vmatprep.subr.bf16.mxu0 0
  %433 = vmatpush1.bf16.msra.mxu0 0
  %434 = vmatprep.mubr.bf16.mxu0 0
  %435 = vmatmul.mubr.bf16.gmra.mrb[0].mxu0 %v338
  %v436 = vpop.f32.mrb[0].mxu0
  %v437 = vadd.f32 0.0, %v436
  %v438 = vpop.f32.mrb[0].mxu0
  %v439 = vpop.f32.mrb[0].mxu0
  %v440 = vadd.f32 0.0, %v439
  %v441 = vpop.f32.mrb[0].mxu0
  %442 = vmatprep.mubr.bf16.mxu0 0
  %443 = vmatmul.mubr.bf16.gmra.mrb[0].mxu0 %v339
  %v444 = vpop.f32.mrb[0].mxu0
  %v445 = vadd.f32 0.0, %v444
  %v446 = vpop.f32.mrb[0].mxu0
  %v447 = vpop.f32.mrb[0].mxu0
  %v448 = vadd.f32 0.0, %v447
  %v449 = vpop.f32.mrb[0].mxu0
  %450 = vmatprep.mubr.bf16.mxu0 0
  %451 = vmatmul.mubr.bf16.gmra.mrb[0].mxu0 %v340
  %v452 = vpop.f32.mrb[0].mxu0
  %v453 = vadd.f32 0.0, %v452
  %v454 = vpop.f32.mrb[0].mxu0
  %v455 = vpop.f32.mrb[0].mxu0
  %v456 = vadd.f32 0.0, %v455
  %v457 = vpop.f32.mrb[0].mxu0
  %458 = vmatprep.mubr.bf16.mxu0 0
  %459 = vmatmul.mubr.bf16.gmra.mrb[0].mxu0 %v341
  %v460 = vpop.f32.mrb[0].mxu0
  %v461 = vadd.f32 0.0, %v460
  %v462 = vpop.f32.mrb[0].mxu0
  %v463 = vpop.f32.mrb[0].mxu0
  %v464 = vadd.f32 0.0, %v463
  %v465 = vpop.f32.mrb[0].mxu0
  %466 = vmatprep.mubr.bf16.mxu0 0
  %467 = vmatmul.mubr.bf16.gmra.mrb[0].mxu0 %v342
  %v468 = vpop.f32.mrb[0].mxu0
  %v469 = vadd.f32 0.0, %v468
  %v470 = vpop.f32.mrb[0].mxu0
  %v471 = vpop.f32.mrb[0].mxu0
  %v472 = vadd.f32 0.0, %v471
  %v473 = vpop.f32.mrb[0].mxu0
  %474 = vmatprep.mubr.bf16.mxu0 0
  %475 = vmatmul.mubr.bf16.gmra.mrb[0].mxu0 %v343
  %v476 = vpop.f32.mrb[0].mxu0
  %v477 = vadd.f32 0.0, %v476
  %v478 = vpop.f32.mrb[0].mxu0
  %v479 = vpop.f32.mrb[0].mxu0
  %v480 = vadd.f32 0.0, %v479
  %v481 = vpop.f32.mrb[0].mxu0
  %482 = vmatprep.mubr.bf16.mxu0 0
  %483 = vmatmul.mubr.bf16.gmra.mrb[0].mxu0 %v344
  %v484 = vpop.f32.mrb[0].mxu0
  %v485 = vadd.f32 0.0, %v484
  %v486 = vpop.f32.mrb[0].mxu0
  %v487 = vpop.f32.mrb[0].mxu0
  %v488 = vadd.f32 0.0, %v487
  %v489 = vpop.f32.mrb[0].mxu0
  %490 = vmatprep.mubr.bf16.mxu0 0
  %491 = vmatmul.mubr.bf16.gmra.mrb[0].mxu0 %v345
  %v492 = vpop.f32.mrb[0].mxu0
  %v493 = vadd.f32 0.0, %v492
  %v494 = vpop.f32.mrb[0].mxu0
  %v495 = vpop.f32.mrb[0].mxu0
  %v496 = vadd.f32 0.0, %v495
  %v497 = vpop.f32.mrb[0].mxu0
  %498 = vdwg.mxu0
  %v515 = vunpack.c.l.b16 %v23
  %v516 = vunpack.c.l.b16 %v25
  %v517 = vunpack.c.l.b16 %v27
  %v518 = vunpack.c.l.b16 %v29
  %v519 = vunpack.c.l.b16 %v31
  %v520 = vunpack.c.l.b16 %v33
  %v521 = vunpack.c.l.b16 %v35
  %v522 = vunpack.c.l.b16 %v37
  %v523 = vunpack.c.l.b16 %v43
  %v524 = vunpack.c.l.b16 %v45
  %v525 = vunpack.c.l.b16 %v47
  %v526 = vunpack.c.l.b16 %v49
  %v527 = vunpack.c.l.b16 %v51
  %v528 = vunpack.c.l.b16 %v53
  %v529 = vunpack.c.l.b16 %v55
  %v530 = vunpack.c.l.b16 %v57
  %v531 = vpack.c.b16 %v516, %v515
  %v532 = vpack.c.b16 %v518, %v517
  %v533 = vpack.c.b16 %v520, %v519
  %v534 = vpack.c.b16 %v522, %v521
  %v535 = vpack.c.b16 %v524, %v523
  %v536 = vpack.c.b16 %v526, %v525
  %v537 = vpack.c.b16 %v528, %v527
  %v538 = vpack.c.b16 %v530, %v529
  %v563 = vunpack.c.l.b16 %v63
  %v564 = vunpack.c.l.b16 %v64
  %v565 = vunpack.c.l.b16 %v65
  %v566 = vunpack.c.l.b16 %v66
  %v567 = vunpack.c.l.b16 %v67
  %v568 = vunpack.c.l.b16 %v68
  %v569 = vunpack.c.l.b16 %v69
  %v570 = vunpack.c.l.b16 %v70
  %v571 = vunpack.c.l.b16 %v71
  %v572 = vunpack.c.l.b16 %v72
  %v573 = vunpack.c.l.b16 %v73
  %v574 = vunpack.c.l.b16 %v74
  %v575 = vunpack.c.l.b16 %v75
  %v576 = vunpack.c.l.b16 %v76
  %v577 = vunpack.c.l.b16 %v77
  %v578 = vunpack.c.l.b16 %v78
  %v579 = vpack.c.b16 %v564, %v563
  %v580 = vpack.c.b16 %v566, %v565
  %v581 = vpack.c.b16 %v568, %v567
  %v582 = vpack.c.b16 %v570, %v569
  %v583 = vpack.c.b16 %v572, %v571
  %v584 = vpack.c.b16 %v574, %v573
  %v585 = vpack.c.b16 %v576, %v575
  %v586 = vpack.c.b16 %v578, %v577
  %595 = vmatprep.subr.bf16.mxu0 0
  %596 = vmatpush1.bf16.msra.mxu0 %v579
  %597 = vmatprep.subr.bf16.mxu0 0
  %598 = vmatpush1.bf16.msra.mxu0 %v580
  %599 = vmatprep.subr.bf16.mxu0 0
  %600 = vmatpush1.bf16.msra.mxu0 %v581
  %601 = vmatprep.subr.bf16.mxu0 0
  %602 = vmatpush1.bf16.msra.mxu0 %v582
  %603 = vmatprep.subr.bf16.mxu0 0
  %604 = vmatpush1.bf16.msra.mxu0 %v583
  %605 = vmatprep.subr.bf16.mxu0 0
  %606 = vmatpush1.bf16.msra.mxu0 %v584
  %607 = vmatprep.subr.bf16.mxu0 0
  %608 = vmatpush1.bf16.msra.mxu0 %v585
  %609 = vmatprep.subr.bf16.mxu0 0
  %610 = vmatpush1.bf16.msra.mxu0 %v586
  %611 = vmatprep.subr.bf16.mxu0 0
  %612 = vmatpush1.bf16.msra.mxu0 0
  %613 = vmatprep.subr.bf16.mxu0 0
  %614 = vmatpush1.bf16.msra.mxu0 0
  %615 = vmatprep.subr.bf16.mxu0 0
  %616 = vmatpush1.bf16.msra.mxu0 0
  %617 = vmatprep.subr.bf16.mxu0 0
  %618 = vmatpush1.bf16.msra.mxu0 0
  %619 = vmatprep.subr.bf16.mxu0 0
  %620 = vmatpush1.bf16.msra.mxu0 0
  %621 = vmatprep.subr.bf16.mxu0 0
  %622 = vmatpush1.bf16.msra.mxu0 0
  %623 = vmatprep.subr.bf16.mxu0 0
  %624 = vmatpush1.bf16.msra.mxu0 0
  %625 = vmatprep.subr.bf16.mxu0 0
  %626 = vmatpush1.bf16.msra.mxu0 0
  %627 = vmatprep.mubr.bf16.mxu0 0
  %628 = vmatmul.mubr.bf16.gmra.mrb[0].mxu0 %v531
  %v629 = vpop.f32.mrb[0].mxu0
  %v630 = vadd.f32 %v437, %v629
  %v631 = vpop.f32.mrb[0].mxu0
  %v632 = vpop.f32.mrb[0].mxu0
  %v633 = vadd.f32 %v440, %v632
  %v634 = vpop.f32.mrb[0].mxu0
  %635 = vmatprep.mubr.bf16.mxu0 0
  %636 = vmatmul.mubr.bf16.gmra.mrb[0].mxu0 %v532
  %v637 = vpop.f32.mrb[0].mxu0
  %v638 = vadd.f32 %v445, %v637
  %v639 = vpop.f32.mrb[0].mxu0
  %v640 = vpop.f32.mrb[0].mxu0
  %v641 = vadd.f32 %v448, %v640
  %v642 = vpop.f32.mrb[0].mxu0
  %643 = vmatprep.mubr.bf16.mxu0 0
  %644 = vmatmul.mubr.bf16.gmra.mrb[0].mxu0 %v533
  %v645 = vpop.f32.mrb[0].mxu0
  %v646 = vadd.f32 %v453, %v645
  %v647 = vpop.f32.mrb[0].mxu0
  %v648 = vpop.f32.mrb[0].mxu0
  %v649 = vadd.f32 %v456, %v648
  %v650 = vpop.f32.mrb[0].mxu0
  %651 = vmatprep.mubr.bf16.mxu0 0
  %652 = vmatmul.mubr.bf16.gmra.mrb[0].mxu0 %v534
  %v653 = vpop.f32.mrb[0].mxu0
  %v654 = vadd.f32 %v461, %v653
  %v655 = vpop.f32.mrb[0].mxu0
  %v656 = vpop.f32.mrb[0].mxu0
  %v657 = vadd.f32 %v464, %v656
  %v658 = vpop.f32.mrb[0].mxu0
  %659 = vmatprep.mubr.bf16.mxu0 0
  %660 = vmatmul.mubr.bf16.gmra.mrb[0].mxu0 %v535
  %v661 = vpop.f32.mrb[0].mxu0
  %v662 = vadd.f32 %v469, %v661
  %v663 = vpop.f32.mrb[0].mxu0
  %v664 = vpop.f32.mrb[0].mxu0
  %v665 = vadd.f32 %v472, %v664
  %v666 = vpop.f32.mrb[0].mxu0
  %667 = vmatprep.mubr.bf16.mxu0 0
  %668 = vmatmul.mubr.bf16.gmra.mrb[0].mxu0 %v536
  %v669 = vpop.f32.mrb[0].mxu0
  %v670 = vadd.f32 %v477, %v669
  %v671 = vpop.f32.mrb[0].mxu0
  %v672 = vpop.f32.mrb[0].mxu0
  %v673 = vadd.f32 %v480, %v672
  %v674 = vpop.f32.mrb[0].mxu0
  %675 = vmatprep.mubr.bf16.mxu0 0
  %676 = vmatmul.mubr.bf16.gmra.mrb[0].mxu0 %v537
  %v677 = vpop.f32.mrb[0].mxu0
  %v678 = vadd.f32 %v485, %v677
  %v679 = vpop.f32.mrb[0].mxu0
  %v680 = vpop.f32.mrb[0].mxu0
  %v681 = vadd.f32 %v488, %v680
  %v682 = vpop.f32.mrb[0].mxu0
  %683 = vmatprep.mubr.bf16.mxu0 0
  %684 = vmatmul.mubr.bf16.gmra.mrb[0].mxu0 %v538
  %v685 = vpop.f32.mrb[0].mxu0
  %v686 = vadd.f32 %v493, %v685
  %v687 = vpop.f32.mrb[0].mxu0
  %v688 = vpop.f32.mrb[0].mxu0
  %v689 = vadd.f32 %v496, %v688
  %v690 = vpop.f32.mrb[0].mxu0
  %691 = vdwg.mxu0
  %vm708 = vcmask 1042432
  %vm709 = vcmask 1046532
  %vm710 = vmor %vm708, %vm709
  %v711 = vrot.slane %v23, 5
  %v712 = vrot.slane %v711, 4
  %v713 = vrot.slane %v24, 5
  %v714 = vsel %vm710, %v712, %v713
  %v715 = vrot.slane %v25, 5
  %v716 = vrot.slane %v715, 4
  %v717 = vrot.slane %v26, 5
  %v718 = vsel %vm710, %v716, %v717
  %v719 = vrot.slane %v27, 5
  %v720 = vrot.slane %v719, 4
  %v721 = vrot.slane %v28, 5
  %v722 = vsel %vm710, %v720, %v721
  %v723 = vrot.slane %v29, 5
  %v724 = vrot.slane %v723, 4
  %v725 = vrot.slane %v30, 5
  %v726 = vsel %vm710, %v724, %v725
  %v727 = vrot.slane %v31, 5
  %v728 = vrot.slane %v727, 4
  %v729 = vrot.slane %v32, 5
  %v730 = vsel %vm710, %v728, %v729
  %v731 = vrot.slane %v33, 5
  %v732 = vrot.slane %v731, 4
  %v733 = vrot.slane %v34, 5
  %v734 = vsel %vm710, %v732, %v733
  %v735 = vrot.slane %v35, 5
  %v736 = vrot.slane %v735, 4
  %v737 = vrot.slane %v36, 5
  %v738 = vsel %vm710, %v736, %v737
  %v739 = vrot.slane %v37, 5
  %v740 = vrot.slane %v739, 4
  %v741 = vrot.slane %v38, 5
  %v742 = vsel %vm710, %v740, %v741
  %v743 = vrot.slane %v43, 5
  %v744 = vrot.slane %v743, 4
  %v745 = vrot.slane %v44, 5
  %v746 = vsel %vm710, %v744, %v745
  %v747 = vrot.slane %v45, 5
  %v748 = vrot.slane %v747, 4
  %v749 = vrot.slane %v46, 5
  %v750 = vsel %vm710, %v748, %v749
  %v751 = vrot.slane %v47, 5
  %v752 = vrot.slane %v751, 4
  %v753 = vrot.slane %v48, 5
  %v754 = vsel %vm710, %v752, %v753
  %v755 = vrot.slane %v49, 5
  %v756 = vrot.slane %v755, 4
  %v757 = vrot.slane %v50, 5
  %v758 = vsel %vm710, %v756, %v757
  %v759 = vrot.slane %v51, 5
  %v760 = vrot.slane %v759, 4
  %v761 = vrot.slane %v52, 5
  %v762 = vsel %vm710, %v760, %v761
  %v763 = vrot.slane %v53, 5
  %v764 = vrot.slane %v763, 4
  %v765 = vrot.slane %v54, 5
  %v766 = vsel %vm710, %v764, %v765
  %v767 = vrot.slane %v55, 5
  %v768 = vrot.slane %v767, 4
  %v769 = vrot.slane %v56, 5
  %v770 = vsel %vm710, %v768, %v769
  %v771 = vrot.slane %v57, 5
  %v772 = vrot.slane %v771, 4
  %v773 = vrot.slane %v58, 5
  %v774 = vsel %vm710, %v772, %v773
  %v775 = vld [vmem:[%s1 + $0x80] sm:$0xf]
  %v776 = vld [vmem:[%s1 + $0x84] sm:$0xf]
  %v777 = vld [vmem:[%s1 + $0x88] sm:$0xf]
  %v778 = vld [vmem:[%s1 + $0x8c] sm:$0xf]
  %v779 = vld [vmem:[%s1 + $0x90] sm:$0xf]
  %v780 = vld [vmem:[%s1 + $0x94] sm:$0xf]
  %v781 = vld [vmem:[%s1 + $0x98] sm:$0xf]
  %v782 = vld [vmem:[%s1 + $0x9c] sm:$0xf]
  %v783 = vld [vmem:[%s1 + $0xa0] sm:$0xf]
  %v784 = vld [vmem:[%s1 + $0xa4] sm:$0xf]
  %v785 = vld [vmem:[%s1 + $0xa8] sm:$0xf]
  %v786 = vld [vmem:[%s1 + $0xac] sm:$0xf]
  %v787 = vld [vmem:[%s1 + $0xb0] sm:$0xf]
  %v788 = vld [vmem:[%s1 + $0xb4] sm:$0xf]
  %v789 = vld [vmem:[%s1 + $0xb8] sm:$0xf]
  %v790 = vld [vmem:[%s1 + $0xbc] sm:$0xf]
  %v791 = vunpack.c.l.b16 %v714
  %v792 = vunpack.c.l.b16 %v718
  %v793 = vunpack.c.l.b16 %v722
  %v794 = vunpack.c.l.b16 %v726
  %v795 = vunpack.c.l.b16 %v730
  %v796 = vunpack.c.l.b16 %v734
  %v797 = vunpack.c.l.b16 %v738
  %v798 = vunpack.c.l.b16 %v742
  %v799 = vunpack.c.l.b16 %v746
  %v800 = vunpack.c.l.b16 %v750
  %v801 = vunpack.c.l.b16 %v754
  %v802 = vunpack.c.l.b16 %v758
  %v803 = vunpack.c.l.b16 %v762
  %v804 = vunpack.c.l.b16 %v766
  %v805 = vunpack.c.l.b16 %v770
  %v806 = vunpack.c.l.b16 %v774
  %v807 = vpack.c.b16 %v792, %v791
  %v808 = vpack.c.b16 %v794, %v793
  %v809 = vpack.c.b16 %v796, %v795
  %v810 = vpack.c.b16 %v798, %v797
  %v811 = vpack.c.b16 %v800, %v799
  %v812 = vpack.c.b16 %v802, %v801
  %v813 = vpack.c.b16 %v804, %v803
  %v814 = vpack.c.b16 %v806, %v805
  %v839 = vunpack.c.l.b16 %v775
  %v840 = vunpack.c.l.b16 %v776
  %v841 = vunpack.c.l.b16 %v777
  %v842 = vunpack.c.l.b16 %v778
  %v843 = vunpack.c.l.b16 %v779
  %v844 = vunpack.c.l.b16 %v780
  %v845 = vunpack.c.l.b16 %v781
  %v846 = vunpack.c.l.b16 %v782
  %v847 = vunpack.c.l.b16 %v783
  %v848 = vunpack.c.l.b16 %v784
  %v849 = vunpack.c.l.b16 %v785
  %v850 = vunpack.c.l.b16 %v786
  %v851 = vunpack.c.l.b16 %v787
  %v852 = vunpack.c.l.b16 %v788
  %v853 = vunpack.c.l.b16 %v789
  %v854 = vunpack.c.l.b16 %v790
  %v855 = vpack.c.b16 %v840, %v839
  %v856 = vpack.c.b16 %v842, %v841
  %v857 = vpack.c.b16 %v844, %v843
  %v858 = vpack.c.b16 %v846, %v845
  %v859 = vpack.c.b16 %v848, %v847
  %v860 = vpack.c.b16 %v850, %v849
  %v861 = vpack.c.b16 %v852, %v851
  %v862 = vpack.c.b16 %v854, %v853
  %871 = vmatprep.subr.bf16.mxu0 0
  %872 = vmatpush1.bf16.msra.mxu0 %v855
  %873 = vmatprep.subr.bf16.mxu0 0
  %874 = vmatpush1.bf16.msra.mxu0 %v856
  %875 = vmatprep.subr.bf16.mxu0 0
  %876 = vmatpush1.bf16.msra.mxu0 %v857
  %877 = vmatprep.subr.bf16.mxu0 0
  %878 = vmatpush1.bf16.msra.mxu0 %v858
  %879 = vmatprep.subr.bf16.mxu0 0
  %880 = vmatpush1.bf16.msra.mxu0 %v859
  %881 = vmatprep.subr.bf16.mxu0 0
  %882 = vmatpush1.bf16.msra.mxu0 %v860
  %883 = vmatprep.subr.bf16.mxu0 0
  %884 = vmatpush1.bf16.msra.mxu0 %v861
  %885 = vmatprep.subr.bf16.mxu0 0
  %886 = vmatpush1.bf16.msra.mxu0 %v862
  %887 = vmatprep.subr.bf16.mxu0 0
  %888 = vmatpush1.bf16.msra.mxu0 0
  %889 = vmatprep.subr.bf16.mxu0 0
  %890 = vmatpush1.bf16.msra.mxu0 0
  %891 = vmatprep.subr.bf16.mxu0 0
  %892 = vmatpush1.bf16.msra.mxu0 0
  %893 = vmatprep.subr.bf16.mxu0 0
  %894 = vmatpush1.bf16.msra.mxu0 0
  %895 = vmatprep.subr.bf16.mxu0 0
  %896 = vmatpush1.bf16.msra.mxu0 0
  %897 = vmatprep.subr.bf16.mxu0 0
  %898 = vmatpush1.bf16.msra.mxu0 0
  %899 = vmatprep.subr.bf16.mxu0 0
  %900 = vmatpush1.bf16.msra.mxu0 0
  %901 = vmatprep.subr.bf16.mxu0 0
  %902 = vmatpush1.bf16.msra.mxu0 0
  %903 = vmatprep.mubr.bf16.mxu0 0
  %904 = vmatmul.mubr.bf16.gmra.mrb[0].mxu0 %v807
  %v905 = vpop.f32.mrb[0].mxu0
  %v906 = vadd.f32 0.0, %v905
  %v907 = vpop.f32.mrb[0].mxu0
  %v908 = vpop.f32.mrb[0].mxu0
  %v909 = vadd.f32 0.0, %v908
  %v910 = vpop.f32.mrb[0].mxu0
  %911 = vmatprep.mubr.bf16.mxu0 0
  %912 = vmatmul.mubr.bf16.gmra.mrb[0].mxu0 %v808
  %v913 = vpop.f32.mrb[0].mxu0
  %v914 = vadd.f32 0.0, %v913
  %v915 = vpop.f32.mrb[0].mxu0
  %v916 = vpop.f32.mrb[0].mxu0
  %v917 = vadd.f32 0.0, %v916
  %v918 = vpop.f32.mrb[0].mxu0
  %919 = vmatprep.mubr.bf16.mxu0 0
  %920 = vmatmul.mubr.bf16.gmra.mrb[0].mxu0 %v809
  %v921 = vpop.f32.mrb[0].mxu0
  %v922 = vadd.f32 0.0, %v921
  %v923 = vpop.f32.mrb[0].mxu0
  %v924 = vpop.f32.mrb[0].mxu0
  %v925 = vadd.f32 0.0, %v924
  %v926 = vpop.f32.mrb[0].mxu0
  %927 = vmatprep.mubr.bf16.mxu0 0
  %928 = vmatmul.mubr.bf16.gmra.mrb[0].mxu0 %v810
  %v929 = vpop.f32.mrb[0].mxu0
  %v930 = vadd.f32 0.0, %v929
  %v931 = vpop.f32.mrb[0].mxu0
  %v932 = vpop.f32.mrb[0].mxu0
  %v933 = vadd.f32 0.0, %v932
  %v934 = vpop.f32.mrb[0].mxu0
  %935 = vmatprep.mubr.bf16.mxu0 0
  %936 = vmatmul.mubr.bf16.gmra.mrb[0].mxu0 %v811
  %v937 = vpop.f32.mrb[0].mxu0
  %v938 = vadd.f32 0.0, %v937
  %v939 = vpop.f32.mrb[0].mxu0
  %v940 = vpop.f32.mrb[0].mxu0
  %v941 = vadd.f32 0.0, %v940
  %v942 = vpop.f32.mrb[0].mxu0
  %943 = vmatprep.mubr.bf16.mxu0 0
  %944 = vmatmul.mubr.bf16.gmra.mrb[0].mxu0 %v812
  %v945 = vpop.f32.mrb[0].mxu0
  %v946 = vadd.f32 0.0, %v945
  %v947 = vpop.f32.mrb[0].mxu0
  %v948 = vpop.f32.mrb[0].mxu0
  %v949 = vadd.f32 0.0, %v948
  %v950 = vpop.f32.mrb[0].mxu0
  %951 = vmatprep.mubr.bf16.mxu0 0
  %952 = vmatmul.mubr.bf16.gmra.mrb[0].mxu0 %v813
  %v953 = vpop.f32.mrb[0].mxu0
  %v954 = vadd.f32 0.0, %v953
  %v955 = vpop.f32.mrb[0].mxu0
  %v956 = vpop.f32.mrb[0].mxu0
  %v957 = vadd.f32 0.0, %v956
  %v958 = vpop.f32.mrb[0].mxu0
  %959 = vmatprep.mubr.bf16.mxu0 0
  %960 = vmatmul.mubr.bf16.gmra.mrb[0].mxu0 %v814
  %v961 = vpop.f32.mrb[0].mxu0
  %v962 = vadd.f32 0.0, %v961
  %v963 = vpop.f32.mrb[0].mxu0
  %v964 = vpop.f32.mrb[0].mxu0
  %v965 = vadd.f32 0.0, %v964
  %v966 = vpop.f32.mrb[0].mxu0
  %967 = vdwg.mxu0
  %v968 = vadd.f32 %v630, %v906
  %v969 = vadd.f32 %v633, %v909
  %v970 = vadd.f32 %v638, %v914
  %v971 = vadd.f32 %v641, %v917
  %v972 = vadd.f32 %v646, %v922
  %v973 = vadd.f32 %v649, %v925
  %v974 = vadd.f32 %v654, %v930
  %v975 = vadd.f32 %v657, %v933
  %v976 = vadd.f32 %v662, %v938
  %v977 = vadd.f32 %v665, %v941
  %v978 = vadd.f32 %v670, %v946
  %v979 = vadd.f32 %v673, %v949
  %v980 = vadd.f32 %v678, %v954
  %v981 = vadd.f32 %v681, %v957
  %v982 = vadd.f32 %v686, %v962
  %v983 = vadd.f32 %v689, %v965
  %v984 = vld [vmem:[%s1 + $0xc0] sm:$0xf]
  %v985 = vld [vmem:[%s1 + $0xc4] sm:$0xf]
  %v986 = vld [vmem:[%s1 + $0xc8] sm:$0xf]
  %v987 = vld [vmem:[%s1 + $0xcc] sm:$0xf]
  %v988 = vld [vmem:[%s1 + $0xd0] sm:$0xf]
  %v989 = vld [vmem:[%s1 + $0xd4] sm:$0xf]
  %v990 = vld [vmem:[%s1 + $0xd8] sm:$0xf]
  %v991 = vld [vmem:[%s1 + $0xdc] sm:$0xf]
  %v992 = vld [vmem:[%s1 + $0xe0] sm:$0xf]
  %v993 = vld [vmem:[%s1 + $0xe4] sm:$0xf]
  %v994 = vld [vmem:[%s1 + $0xe8] sm:$0xf]
  %v995 = vld [vmem:[%s1 + $0xec] sm:$0xf]
  %v996 = vld [vmem:[%s1 + $0xf0] sm:$0xf]
  %v997 = vld [vmem:[%s1 + $0xf4] sm:$0xf]
  %v998 = vld [vmem:[%s1 + $0xf8] sm:$0xf]
  %v999 = vld [vmem:[%s1 + $0xfc] sm:$0xf]
  %v1002 = vunpack.c.l.b16 %v39
  %v1003 = vunpack.c.l.b16 %v59
  %v1004 = vpack.c.b16 %v517, %v516
  %v1005 = vpack.c.b16 %v519, %v518
  %v1006 = vpack.c.b16 %v521, %v520
  %v1007 = vpack.c.b16 %v1002, %v522
  %v1008 = vpack.c.b16 %v525, %v524
  %v1009 = vpack.c.b16 %v527, %v526
  %v1010 = vpack.c.b16 %v529, %v528
  %v1011 = vpack.c.b16 %v1003, %v530
  %v1036 = vunpack.c.l.b16 %v984
  %v1037 = vunpack.c.l.b16 %v985
  %v1038 = vunpack.c.l.b16 %v986
  %v1039 = vunpack.c.l.b16 %v987
  %v1040 = vunpack.c.l.b16 %v988
  %v1041 = vunpack.c.l.b16 %v989
  %v1042 = vunpack.c.l.b16 %v990
  %v1043 = vunpack.c.l.b16 %v991
  %v1044 = vunpack.c.l.b16 %v992
  %v1045 = vunpack.c.l.b16 %v993
  %v1046 = vunpack.c.l.b16 %v994
  %v1047 = vunpack.c.l.b16 %v995
  %v1048 = vunpack.c.l.b16 %v996
  %v1049 = vunpack.c.l.b16 %v997
  %v1050 = vunpack.c.l.b16 %v998
  %v1051 = vunpack.c.l.b16 %v999
  %v1052 = vpack.c.b16 %v1037, %v1036
  %v1053 = vpack.c.b16 %v1039, %v1038
  %v1054 = vpack.c.b16 %v1041, %v1040
  %v1055 = vpack.c.b16 %v1043, %v1042
  %v1056 = vpack.c.b16 %v1045, %v1044
  %v1057 = vpack.c.b16 %v1047, %v1046
  %v1058 = vpack.c.b16 %v1049, %v1048
  %v1059 = vpack.c.b16 %v1051, %v1050
  %1068 = vmatprep.subr.bf16.mxu0 0
  %1069 = vmatpush1.bf16.msra.mxu0 %v1052
  %1070 = vmatprep.subr.bf16.mxu0 0
  %1071 = vmatpush1.bf16.msra.mxu0 %v1053
  %1072 = vmatprep.subr.bf16.mxu0 0
  %1073 = vmatpush1.bf16.msra.mxu0 %v1054
  %1074 = vmatprep.subr.bf16.mxu0 0
  %1075 = vmatpush1.bf16.msra.mxu0 %v1055
  %1076 = vmatprep.subr.bf16.mxu0 0
  %1077 = vmatpush1.bf16.msra.mxu0 %v1056
  %1078 = vmatprep.subr.bf16.mxu0 0
  %1079 = vmatpush1.bf16.msra.mxu0 %v1057
  %1080 = vmatprep.subr.bf16.mxu0 0
  %1081 = vmatpush1.bf16.msra.mxu0 %v1058
  %1082 = vmatprep.subr.bf16.mxu0 0
  %1083 = vmatpush1.bf16.msra.mxu0 %v1059
  %1084 = vmatprep.subr.bf16.mxu0 0
  %1085 = vmatpush1.bf16.msra.mxu0 0
  %1086 = vmatprep.subr.bf16.mxu0 0
  %1087 = vmatpush1.bf16.msra.mxu0 0
  %1088 = vmatprep.subr.bf16.mxu0 0
  %1089 = vmatpush1.bf16.msra.mxu0 0
  %1090 = vmatprep.subr.bf16.mxu0 0
  %1091 = vmatpush1.bf16.msra.mxu0 0
  %1092 = vmatprep.subr.bf16.mxu0 0
  %1093 = vmatpush1.bf16.msra.mxu0 0
  %1094 = vmatprep.subr.bf16.mxu0 0
  %1095 = vmatpush1.bf16.msra.mxu0 0
  %1096 = vmatprep.subr.bf16.mxu0 0
  %1097 = vmatpush1.bf16.msra.mxu0 0
  %1098 = vmatprep.subr.bf16.mxu0 0
  %1099 = vmatpush1.bf16.msra.mxu0 0
  %1100 = vmatprep.mubr.bf16.mxu0 0
  %1101 = vmatmul.mubr.bf16.gmra.mrb[0].mxu0 %v1004
  %v1102 = vpop.f32.mrb[0].mxu0
  %v1103 = vadd.f32 0.0, %v1102
  %v1104 = vpop.f32.mrb[0].mxu0
  %v1105 = vpop.f32.mrb[0].mxu0
  %v1106 = vadd.f32 0.0, %v1105
  %v1107 = vpop.f32.mrb[0].mxu0
  %1108 = vmatprep.mubr.bf16.mxu0 0
  %1109 = vmatmul.mubr.bf16.gmra.mrb[0].mxu0 %v1005
  %v1110 = vpop.f32.mrb[0].mxu0
  %v1111 = vadd.f32 0.0, %v1110
  %v1112 = vpop.f32.mrb[0].mxu0
  %v1113 = vpop.f32.mrb[0].mxu0
  %v1114 = vadd.f32 0.0, %v1113
  %v1115 = vpop.f32.mrb[0].mxu0
  %1116 = vmatprep.mubr.bf16.mxu0 0
  %1117 = vmatmul.mubr.bf16.gmra.mrb[0].mxu0 %v1006
  %v1118 = vpop.f32.mrb[0].mxu0
  %v1119 = vadd.f32 0.0, %v1118
  %v1120 = vpop.f32.mrb[0].mxu0
  %v1121 = vpop.f32.mrb[0].mxu0
  %v1122 = vadd.f32 0.0, %v1121
  %v1123 = vpop.f32.mrb[0].mxu0
  %1124 = vmatprep.mubr.bf16.mxu0 0
  %1125 = vmatmul.mubr.bf16.gmra.mrb[0].mxu0 %v1007
  %v1126 = vpop.f32.mrb[0].mxu0
  %v1127 = vadd.f32 0.0, %v1126
  %v1128 = vpop.f32.mrb[0].mxu0
  %v1129 = vpop.f32.mrb[0].mxu0
  %v1130 = vadd.f32 0.0, %v1129
  %v1131 = vpop.f32.mrb[0].mxu0
  %1132 = vmatprep.mubr.bf16.mxu0 0
  %1133 = vmatmul.mubr.bf16.gmra.mrb[0].mxu0 %v1008
  %v1134 = vpop.f32.mrb[0].mxu0
  %v1135 = vadd.f32 0.0, %v1134
  %v1136 = vpop.f32.mrb[0].mxu0
  %v1137 = vpop.f32.mrb[0].mxu0
  %v1138 = vadd.f32 0.0, %v1137
  %v1139 = vpop.f32.mrb[0].mxu0
  %1140 = vmatprep.mubr.bf16.mxu0 0
  %1141 = vmatmul.mubr.bf16.gmra.mrb[0].mxu0 %v1009
  %v1142 = vpop.f32.mrb[0].mxu0
  %v1143 = vadd.f32 0.0, %v1142
  %v1144 = vpop.f32.mrb[0].mxu0
  %v1145 = vpop.f32.mrb[0].mxu0
  %v1146 = vadd.f32 0.0, %v1145
  %v1147 = vpop.f32.mrb[0].mxu0
  %1148 = vmatprep.mubr.bf16.mxu0 0
  %1149 = vmatmul.mubr.bf16.gmra.mrb[0].mxu0 %v1010
  %v1150 = vpop.f32.mrb[0].mxu0
  %v1151 = vadd.f32 0.0, %v1150
  %v1152 = vpop.f32.mrb[0].mxu0
  %v1153 = vpop.f32.mrb[0].mxu0
  %v1154 = vadd.f32 0.0, %v1153
  %v1155 = vpop.f32.mrb[0].mxu0
  %1156 = vmatprep.mubr.bf16.mxu0 0
  %1157 = vmatmul.mubr.bf16.gmra.mrb[0].mxu0 %v1011
  %v1158 = vpop.f32.mrb[0].mxu0
  %v1159 = vadd.f32 0.0, %v1158
  %v1160 = vpop.f32.mrb[0].mxu0
  %v1161 = vpop.f32.mrb[0].mxu0
  %v1162 = vadd.f32 0.0, %v1161
  %v1163 = vpop.f32.mrb[0].mxu0
  %1164 = vdwg.mxu0
  %v1165 = vadd.f32 %v968, %v1103
  %v1166 = vadd.f32 %v969, %v1106
  %v1167 = vadd.f32 %v970, %v1111
  %v1168 = vadd.f32 %v971, %v1114
  %v1169 = vadd.f32 %v972, %v1119
  %v1170 = vadd.f32 %v973, %v1122
  %v1171 = vadd.f32 %v974, %v1127
  %v1172 = vadd.f32 %v975, %v1130
  %v1173 = vadd.f32 %v976, %v1135
  %v1174 = vadd.f32 %v977, %v1138
  %v1175 = vadd.f32 %v978, %v1143
  %v1176 = vadd.f32 %v979, %v1146
  %v1177 = vadd.f32 %v980, %v1151
  %v1178 = vadd.f32 %v981, %v1154
  %v1179 = vadd.f32 %v982, %v1159
  %v1180 = vadd.f32 %v983, %v1162
  %v1182 = vshrl.u32 %v39, 16
  %v1184 = vrot.slane %v1182, 4
  %v1185 = vshll.u32 %v39, 16
  %v1187 = vrot.slane %v1185, 5
  %v1188 = vor.u32 %v1184, %v1187
  %v1189 = vrot.slane %v1188, 4
  %v1191 = vshll.u32 %v40, 16
  %v1193 = vrot.slane %v1191, 5
  %v1194 = vsel %vm81, %v1189, %v1193
  %v1196 = vshrl.u32 %v59, 16
  %v1198 = vrot.slane %v1196, 4
  %v1199 = vshll.u32 %v59, 16
  %v1201 = vrot.slane %v1199, 5
  %v1202 = vor.u32 %v1198, %v1201
  %v1203 = vrot.slane %v1202, 4
  %v1205 = vshll.u32 %v60, 16
  %v1207 = vrot.slane %v1205, 5
  %v1208 = vsel %vm81, %v1203, %v1207
  %v1209 = vld [vmem:[%s1 + $0x100] sm:$0xf]
  %v1210 = vld [vmem:[%s1 + $0x104] sm:$0xf]
  %v1211 = vld [vmem:[%s1 + $0x108] sm:$0xf]
  %v1212 = vld [vmem:[%s1 + $0x10c] sm:$0xf]
  %v1213 = vld [vmem:[%s1 + $0x110] sm:$0xf]
  %v1214 = vld [vmem:[%s1 + $0x114] sm:$0xf]
  %v1215 = vld [vmem:[%s1 + $0x118] sm:$0xf]
  %v1216 = vld [vmem:[%s1 + $0x11c] sm:$0xf]
  %v1217 = vld [vmem:[%s1 + $0x120] sm:$0xf]
  %v1218 = vld [vmem:[%s1 + $0x124] sm:$0xf]
  %v1219 = vld [vmem:[%s1 + $0x128] sm:$0xf]
  %v1220 = vld [vmem:[%s1 + $0x12c] sm:$0xf]
  %v1221 = vld [vmem:[%s1 + $0x130] sm:$0xf]
  %v1222 = vld [vmem:[%s1 + $0x134] sm:$0xf]
  %v1223 = vld [vmem:[%s1 + $0x138] sm:$0xf]
  %v1224 = vld [vmem:[%s1 + $0x13c] sm:$0xf]
  %v1225 = vunpack.c.l.b16 %v1194
  %v1226 = vunpack.c.l.b16 %v1208
  %v1227 = vpack.c.b16 %v324, %v323
  %v1228 = vpack.c.b16 %v326, %v325
  %v1229 = vpack.c.b16 %v328, %v327
  %v1230 = vpack.c.b16 %v1225, %v329
  %v1231 = vpack.c.b16 %v332, %v331
  %v1232 = vpack.c.b16 %v334, %v333
  %v1233 = vpack.c.b16 %v336, %v335
  %v1234 = vpack.c.b16 %v1226, %v337
  %v1259 = vunpack.c.l.b16 %v1209
  %v1260 = vunpack.c.l.b16 %v1210
  %v1261 = vunpack.c.l.b16 %v1211
  %v1262 = vunpack.c.l.b16 %v1212
  %v1263 = vunpack.c.l.b16 %v1213
  %v1264 = vunpack.c.l.b16 %v1214
  %v1265 = vunpack.c.l.b16 %v1215
  %v1266 = vunpack.c.l.b16 %v1216
  %v1267 = vunpack.c.l.b16 %v1217
  %v1268 = vunpack.c.l.b16 %v1218
  %v1269 = vunpack.c.l.b16 %v1219
  %v1270 = vunpack.c.l.b16 %v1220
  %v1271 = vunpack.c.l.b16 %v1221
  %v1272 = vunpack.c.l.b16 %v1222
  %v1273 = vunpack.c.l.b16 %v1223
  %v1274 = vunpack.c.l.b16 %v1224
  %v1275 = vpack.c.b16 %v1260, %v1259
  %v1276 = vpack.c.b16 %v1262, %v1261
  %v1277 = vpack.c.b16 %v1264, %v1263
  %v1278 = vpack.c.b16 %v1266, %v1265
  %v1279 = vpack.c.b16 %v1268, %v1267
  %v1280 = vpack.c.b16 %v1270, %v1269
  %v1281 = vpack.c.b16 %v1272, %v1271
  %v1282 = vpack.c.b16 %v1274, %v1273
  %1291 = vmatprep.subr.bf16.mxu0 0
  %1292 = vmatpush1.bf16.msra.mxu0 %v1275
  %1293 = vmatprep.subr.bf16.mxu0 0
  %1294 = vmatpush1.bf16.msra.mxu0 %v1276
  %1295 = vmatprep.subr.bf16.mxu0 0
  %1296 = vmatpush1.bf16.msra.mxu0 %v1277
  %1297 = vmatprep.subr.bf16.mxu0 0
  %1298 = vmatpush1.bf16.msra.mxu0 %v1278
  %1299 = vmatprep.subr.bf16.mxu0 0
  %1300 = vmatpush1.bf16.msra.mxu0 %v1279
  %1301 = vmatprep.subr.bf16.mxu0 0
  %1302 = vmatpush1.bf16.msra.mxu0 %v1280
  %1303 = vmatprep.subr.bf16.mxu0 0
  %1304 = vmatpush1.bf16.msra.mxu0 %v1281
  %1305 = vmatprep.subr.bf16.mxu0 0
  %1306 = vmatpush1.bf16.msra.mxu0 %v1282
  %1307 = vmatprep.subr.bf16.mxu0 0
  %1308 = vmatpush1.bf16.msra.mxu0 0
  %1309 = vmatprep.subr.bf16.mxu0 0
  %1310 = vmatpush1.bf16.msra.mxu0 0
  %1311 = vmatprep.subr.bf16.mxu0 0
  %1312 = vmatpush1.bf16.msra.mxu0 0
  %1313 = vmatprep.subr.bf16.mxu0 0
  %1314 = vmatpush1.bf16.msra.mxu0 0
  %1315 = vmatprep.subr.bf16.mxu0 0
  %1316 = vmatpush1.bf16.msra.mxu0 0
  %1317 = vmatprep.subr.bf16.mxu0 0
  %1318 = vmatpush1.bf16.msra.mxu0 0
  %1319 = vmatprep.subr.bf16.mxu0 0
  %1320 = vmatpush1.bf16.msra.mxu0 0
  %1321 = vmatprep.subr.bf16.mxu0 0
  %1322 = vmatpush1.bf16.msra.mxu0 0
  %1323 = vmatprep.mubr.bf16.mxu0 0
  %1324 = vmatmul.mubr.bf16.gmra.mrb[0].mxu0 %v1227
  %v1325 = vpop.f32.mrb[0].mxu0
  %v1326 = vadd.f32 0.0, %v1325
  %v1327 = vpop.f32.mrb[0].mxu0
  %v1328 = vpop.f32.mrb[0].mxu0
  %v1329 = vadd.f32 0.0, %v1328
  %v1330 = vpop.f32.mrb[0].mxu0
  %1331 = vmatprep.mubr.bf16.mxu0 0
  %1332 = vmatmul.mubr.bf16.gmra.mrb[0].mxu0 %v1228
  %v1333 = vpop.f32.mrb[0].mxu0
  %v1334 = vadd.f32 0.0, %v1333
  %v1335 = vpop.f32.mrb[0].mxu0
  %v1336 = vpop.f32.mrb[0].mxu0
  %v1337 = vadd.f32 0.0, %v1336
  %v1338 = vpop.f32.mrb[0].mxu0
  %1339 = vmatprep.mubr.bf16.mxu0 0
  %1340 = vmatmul.mubr.bf16.gmra.mrb[0].mxu0 %v1229
  %v1341 = vpop.f32.mrb[0].mxu0
  %v1342 = vadd.f32 0.0, %v1341
  %v1343 = vpop.f32.mrb[0].mxu0
  %v1344 = vpop.f32.mrb[0].mxu0
  %v1345 = vadd.f32 0.0, %v1344
  %v1346 = vpop.f32.mrb[0].mxu0
  %1347 = vmatprep.mubr.bf16.mxu0 0
  %1348 = vmatmul.mubr.bf16.gmra.mrb[0].mxu0 %v1230
  %v1349 = vpop.f32.mrb[0].mxu0
  %v1350 = vadd.f32 0.0, %v1349
  %v1351 = vpop.f32.mrb[0].mxu0
  %v1352 = vpop.f32.mrb[0].mxu0
  %v1353 = vadd.f32 0.0, %v1352
  %v1354 = vpop.f32.mrb[0].mxu0
  %1355 = vmatprep.mubr.bf16.mxu0 0
  %1356 = vmatmul.mubr.bf16.gmra.mrb[0].mxu0 %v1231
  %v1357 = vpop.f32.mrb[0].mxu0
  %v1358 = vadd.f32 0.0, %v1357
  %v1359 = vpop.f32.mrb[0].mxu0
  %v1360 = vpop.f32.mrb[0].mxu0
  %v1361 = vadd.f32 0.0, %v1360
  %v1362 = vpop.f32.mrb[0].mxu0
  %1363 = vmatprep.mubr.bf16.mxu0 0
  %1364 = vmatmul.mubr.bf16.gmra.mrb[0].mxu0 %v1232
  %v1365 = vpop.f32.mrb[0].mxu0
  %v1366 = vadd.f32 0.0, %v1365
  %v1367 = vpop.f32.mrb[0].mxu0
  %v1368 = vpop.f32.mrb[0].mxu0
  %v1369 = vadd.f32 0.0, %v1368
  %v1370 = vpop.f32.mrb[0].mxu0
  %1371 = vmatprep.mubr.bf16.mxu0 0
  %1372 = vmatmul.mubr.bf16.gmra.mrb[0].mxu0 %v1233
  %v1373 = vpop.f32.mrb[0].mxu0
  %v1374 = vadd.f32 0.0, %v1373
  %v1375 = vpop.f32.mrb[0].mxu0
  %v1376 = vpop.f32.mrb[0].mxu0
  %v1377 = vadd.f32 0.0, %v1376
  %v1378 = vpop.f32.mrb[0].mxu0
  %1379 = vmatprep.mubr.bf16.mxu0 0
  %1380 = vmatmul.mubr.bf16.gmra.mrb[0].mxu0 %v1234
  %v1381 = vpop.f32.mrb[0].mxu0
  %v1382 = vadd.f32 0.0, %v1381
  %v1383 = vpop.f32.mrb[0].mxu0
  %v1384 = vpop.f32.mrb[0].mxu0
  %v1385 = vadd.f32 0.0, %v1384
  %v1386 = vpop.f32.mrb[0].mxu0
  %1387 = vdwg.mxu0
  %v1388 = vadd.f32 %v1165, %v1326
  %v1389 = vadd.f32 %v1166, %v1329
  %v1390 = vadd.f32 %v1167, %v1334
  %v1391 = vadd.f32 %v1168, %v1337
  %v1392 = vadd.f32 %v1169, %v1342
  %v1393 = vadd.f32 %v1170, %v1345
  %v1394 = vadd.f32 %v1171, %v1350
  %v1395 = vadd.f32 %v1172, %v1353
  %v1396 = vadd.f32 %v1173, %v1358
  %v1397 = vadd.f32 %v1174, %v1361
  %v1398 = vadd.f32 %v1175, %v1366
  %v1399 = vadd.f32 %v1176, %v1369
  %v1400 = vadd.f32 %v1177, %v1374
  %v1401 = vadd.f32 %v1178, %v1377
  %v1402 = vadd.f32 %v1179, %v1382
  %v1403 = vadd.f32 %v1180, %v1385
  %v1406 = vrot.slane %v39, 5
  %v1407 = vrot.slane %v1406, 4
  %v1408 = vrot.slane %v40, 5
  %v1409 = vsel %vm710, %v1407, %v1408
  %v1410 = vrot.slane %v59, 5
  %v1411 = vrot.slane %v1410, 4
  %v1412 = vrot.slane %v60, 5
  %v1413 = vsel %vm710, %v1411, %v1412
  %v1414 = vld [vmem:[%s1 + $0x140] sm:$0xf]
  %v1415 = vld [vmem:[%s1 + $0x144] sm:$0xf]
  %v1416 = vld [vmem:[%s1 + $0x148] sm:$0xf]
  %v1417 = vld [vmem:[%s1 + $0x14c] sm:$0xf]
  %v1418 = vld [vmem:[%s1 + $0x150] sm:$0xf]
  %v1419 = vld [vmem:[%s1 + $0x154] sm:$0xf]
  %v1420 = vld [vmem:[%s1 + $0x158] sm:$0xf]
  %v1421 = vld [vmem:[%s1 + $0x15c] sm:$0xf]
  %v1422 = vld [vmem:[%s1 + $0x160] sm:$0xf]
  %v1423 = vld [vmem:[%s1 + $0x164] sm:$0xf]
  %v1424 = vld [vmem:[%s1 + $0x168] sm:$0xf]
  %v1425 = vld [vmem:[%s1 + $0x16c] sm:$0xf]
  %v1426 = vld [vmem:[%s1 + $0x170] sm:$0xf]
  %v1427 = vld [vmem:[%s1 + $0x174] sm:$0xf]
  %v1428 = vld [vmem:[%s1 + $0x178] sm:$0xf]
  %v1429 = vld [vmem:[%s1 + $0x17c] sm:$0xf]
  %v1430 = vunpack.c.l.b16 %v1409
  %v1431 = vunpack.c.l.b16 %v1413
  %v1432 = vpack.c.b16 %v793, %v792
  %v1433 = vpack.c.b16 %v795, %v794
  %v1434 = vpack.c.b16 %v797, %v796
  %v1435 = vpack.c.b16 %v1430, %v798
  %v1436 = vpack.c.b16 %v801, %v800
  %v1437 = vpack.c.b16 %v803, %v802
  %v1438 = vpack.c.b16 %v805, %v804
  %v1439 = vpack.c.b16 %v1431, %v806
  %v1464 = vunpack.c.l.b16 %v1414
  %v1465 = vunpack.c.l.b16 %v1415
  %v1466 = vunpack.c.l.b16 %v1416
  %v1467 = vunpack.c.l.b16 %v1417
  %v1468 = vunpack.c.l.b16 %v1418
  %v1469 = vunpack.c.l.b16 %v1419
  %v1470 = vunpack.c.l.b16 %v1420
  %v1471 = vunpack.c.l.b16 %v1421
  %v1472 = vunpack.c.l.b16 %v1422
  %v1473 = vunpack.c.l.b16 %v1423
  %v1474 = vunpack.c.l.b16 %v1424
  %v1475 = vunpack.c.l.b16 %v1425
  %v1476 = vunpack.c.l.b16 %v1426
  %v1477 = vunpack.c.l.b16 %v1427
  %v1478 = vunpack.c.l.b16 %v1428
  %v1479 = vunpack.c.l.b16 %v1429
  %v1480 = vpack.c.b16 %v1465, %v1464
  %v1481 = vpack.c.b16 %v1467, %v1466
  %v1482 = vpack.c.b16 %v1469, %v1468
  %v1483 = vpack.c.b16 %v1471, %v1470
  %v1484 = vpack.c.b16 %v1473, %v1472
  %v1485 = vpack.c.b16 %v1475, %v1474
  %v1486 = vpack.c.b16 %v1477, %v1476
  %v1487 = vpack.c.b16 %v1479, %v1478
  %1496 = vmatprep.subr.bf16.mxu0 0
  %1497 = vmatpush1.bf16.msra.mxu0 %v1480
  %1498 = vmatprep.subr.bf16.mxu0 0
  %1499 = vmatpush1.bf16.msra.mxu0 %v1481
  %1500 = vmatprep.subr.bf16.mxu0 0
  %1501 = vmatpush1.bf16.msra.mxu0 %v1482
  %1502 = vmatprep.subr.bf16.mxu0 0
  %1503 = vmatpush1.bf16.msra.mxu0 %v1483
  %1504 = vmatprep.subr.bf16.mxu0 0
  %1505 = vmatpush1.bf16.msra.mxu0 %v1484
  %1506 = vmatprep.subr.bf16.mxu0 0
  %1507 = vmatpush1.bf16.msra.mxu0 %v1485
  %1508 = vmatprep.subr.bf16.mxu0 0
  %1509 = vmatpush1.bf16.msra.mxu0 %v1486
  %1510 = vmatprep.subr.bf16.mxu0 0
  %1511 = vmatpush1.bf16.msra.mxu0 %v1487
  %1512 = vmatprep.subr.bf16.mxu0 0
  %1513 = vmatpush1.bf16.msra.mxu0 0
  %1514 = vmatprep.subr.bf16.mxu0 0
  %1515 = vmatpush1.bf16.msra.mxu0 0
  %1516 = vmatprep.subr.bf16.mxu0 0
  %1517 = vmatpush1.bf16.msra.mxu0 0
  %1518 = vmatprep.subr.bf16.mxu0 0
  %1519 = vmatpush1.bf16.msra.mxu0 0
  %1520 = vmatprep.subr.bf16.mxu0 0
  %1521 = vmatpush1.bf16.msra.mxu0 0
  %1522 = vmatprep.subr.bf16.mxu0 0
  %1523 = vmatpush1.bf16.msra.mxu0 0
  %1524 = vmatprep.subr.bf16.mxu0 0
  %1525 = vmatpush1.bf16.msra.mxu0 0
  %1526 = vmatprep.subr.bf16.mxu0 0
  %1527 = vmatpush1.bf16.msra.mxu0 0
  %1528 = vmatprep.mubr.bf16.mxu0 0
  %1529 = vmatmul.mubr.bf16.gmra.mrb[0].mxu0 %v1432
  %v1530 = vpop.f32.mrb[0].mxu0
  %v1531 = vadd.f32 0.0, %v1530
  %v1532 = vpop.f32.mrb[0].mxu0
  %v1533 = vpop.f32.mrb[0].mxu0
  %v1534 = vadd.f32 0.0, %v1533
  %v1535 = vpop.f32.mrb[0].mxu0
  %1536 = vmatprep.mubr.bf16.mxu0 0
  %1537 = vmatmul.mubr.bf16.gmra.mrb[0].mxu0 %v1433
  %v1538 = vpop.f32.mrb[0].mxu0
  %v1539 = vadd.f32 0.0, %v1538
  %v1540 = vpop.f32.mrb[0].mxu0
  %v1541 = vpop.f32.mrb[0].mxu0
  %v1542 = vadd.f32 0.0, %v1541
  %v1543 = vpop.f32.mrb[0].mxu0
  %1544 = vmatprep.mubr.bf16.mxu0 0
  %1545 = vmatmul.mubr.bf16.gmra.mrb[0].mxu0 %v1434
  %v1546 = vpop.f32.mrb[0].mxu0
  %v1547 = vadd.f32 0.0, %v1546
  %v1548 = vpop.f32.mrb[0].mxu0
  %v1549 = vpop.f32.mrb[0].mxu0
  %v1550 = vadd.f32 0.0, %v1549
  %v1551 = vpop.f32.mrb[0].mxu0
  %1552 = vmatprep.mubr.bf16.mxu0 0
  %1553 = vmatmul.mubr.bf16.gmra.mrb[0].mxu0 %v1435
  %v1554 = vpop.f32.mrb[0].mxu0
  %v1555 = vadd.f32 0.0, %v1554
  %v1556 = vpop.f32.mrb[0].mxu0
  %v1557 = vpop.f32.mrb[0].mxu0
  %v1558 = vadd.f32 0.0, %v1557
  %v1559 = vpop.f32.mrb[0].mxu0
  %1560 = vmatprep.mubr.bf16.mxu0 0
  %1561 = vmatmul.mubr.bf16.gmra.mrb[0].mxu0 %v1436
  %v1562 = vpop.f32.mrb[0].mxu0
  %v1563 = vadd.f32 0.0, %v1562
  %v1564 = vpop.f32.mrb[0].mxu0
  %v1565 = vpop.f32.mrb[0].mxu0
  %v1566 = vadd.f32 0.0, %v1565
  %v1567 = vpop.f32.mrb[0].mxu0
  %1568 = vmatprep.mubr.bf16.mxu0 0
  %1569 = vmatmul.mubr.bf16.gmra.mrb[0].mxu0 %v1437
  %v1570 = vpop.f32.mrb[0].mxu0
  %v1571 = vadd.f32 0.0, %v1570
  %v1572 = vpop.f32.mrb[0].mxu0
  %v1573 = vpop.f32.mrb[0].mxu0
  %v1574 = vadd.f32 0.0, %v1573
  %v1575 = vpop.f32.mrb[0].mxu0
  %1576 = vmatprep.mubr.bf16.mxu0 0
  %1577 = vmatmul.mubr.bf16.gmra.mrb[0].mxu0 %v1438
  %v1578 = vpop.f32.mrb[0].mxu0
  %v1579 = vadd.f32 0.0, %v1578
  %v1580 = vpop.f32.mrb[0].mxu0
  %v1581 = vpop.f32.mrb[0].mxu0
  %v1582 = vadd.f32 0.0, %v1581
  %v1583 = vpop.f32.mrb[0].mxu0
  %1584 = vmatprep.mubr.bf16.mxu0 0
  %1585 = vmatmul.mubr.bf16.gmra.mrb[0].mxu0 %v1439
  %v1586 = vpop.f32.mrb[0].mxu0
  %v1587 = vadd.f32 0.0, %v1586
  %v1588 = vpop.f32.mrb[0].mxu0
  %v1589 = vpop.f32.mrb[0].mxu0
  %v1590 = vadd.f32 0.0, %v1589
  %v1591 = vpop.f32.mrb[0].mxu0
  %1592 = vdwg.mxu0
  %v1593 = vadd.f32 %v1388, %v1531
  %v1594 = vadd.f32 %v1389, %v1534
  %v1595 = vadd.f32 %v1390, %v1539
  %v1596 = vadd.f32 %v1391, %v1542
  %v1597 = vadd.f32 %v1392, %v1547
  %v1598 = vadd.f32 %v1393, %v1550
  %v1599 = vadd.f32 %v1394, %v1555
  %v1600 = vadd.f32 %v1395, %v1558
  %v1601 = vadd.f32 %v1396, %v1563
  %v1602 = vadd.f32 %v1397, %v1566
  %v1603 = vadd.f32 %v1398, %v1571
  %v1604 = vadd.f32 %v1399, %v1574
  %v1605 = vadd.f32 %v1400, %v1579
  %v1606 = vadd.f32 %v1401, %v1582
  %v1607 = vadd.f32 %v1402, %v1587
  %v1608 = vadd.f32 %v1403, %v1590
  %v1609 = vld [vmem:[%s1 + $0x180] sm:$0xf]
  %v1610 = vld [vmem:[%s1 + $0x184] sm:$0xf]
  %v1611 = vld [vmem:[%s1 + $0x188] sm:$0xf]
  %v1612 = vld [vmem:[%s1 + $0x18c] sm:$0xf]
  %v1613 = vld [vmem:[%s1 + $0x190] sm:$0xf]
  %v1614 = vld [vmem:[%s1 + $0x194] sm:$0xf]
  %v1615 = vld [vmem:[%s1 + $0x198] sm:$0xf]
  %v1616 = vld [vmem:[%s1 + $0x19c] sm:$0xf]
  %v1617 = vld [vmem:[%s1 + $0x1a0] sm:$0xf]
  %v1618 = vld [vmem:[%s1 + $0x1a4] sm:$0xf]
  %v1619 = vld [vmem:[%s1 + $0x1a8] sm:$0xf]
  %v1620 = vld [vmem:[%s1 + $0x1ac] sm:$0xf]
  %v1621 = vld [vmem:[%s1 + $0x1b0] sm:$0xf]
  %v1622 = vld [vmem:[%s1 + $0x1b4] sm:$0xf]
  %v1623 = vld [vmem:[%s1 + $0x1b8] sm:$0xf]
  %v1624 = vld [vmem:[%s1 + $0x1bc] sm:$0xf]
  %v1627 = vunpack.c.l.b16 %v41
  %v1628 = vunpack.c.l.b16 %v61
  %v1629 = vpack.c.b16 %v1627, %v1002
  %v1630 = vpack.c.b16 %v1628, %v1003
  %v1649 = vunpack.c.l.b16 %v1609
  %v1650 = vunpack.c.l.b16 %v1610
  %v1651 = vunpack.c.l.b16 %v1611
  %v1652 = vunpack.c.l.b16 %v1612
  %v1653 = vunpack.c.l.b16 %v1613
  %v1654 = vunpack.c.l.b16 %v1614
  %v1655 = vunpack.c.l.b16 %v1615
  %v1656 = vunpack.c.l.b16 %v1616
  %v1657 = vunpack.c.l.b16 %v1617
  %v1658 = vunpack.c.l.b16 %v1618
  %v1659 = vunpack.c.l.b16 %v1619
  %v1660 = vunpack.c.l.b16 %v1620
  %v1661 = vunpack.c.l.b16 %v1621
  %v1662 = vunpack.c.l.b16 %v1622
  %v1663 = vunpack.c.l.b16 %v1623
  %v1664 = vunpack.c.l.b16 %v1624
  %v1665 = vpack.c.b16 %v1650, %v1649
  %v1666 = vpack.c.b16 %v1652, %v1651
  %v1667 = vpack.c.b16 %v1654, %v1653
  %v1668 = vpack.c.b16 %v1656, %v1655
  %v1669 = vpack.c.b16 %v1658, %v1657
  %v1670 = vpack.c.b16 %v1660, %v1659
  %v1671 = vpack.c.b16 %v1662, %v1661
  %v1672 = vpack.c.b16 %v1664, %v1663
  %1681 = vmatprep.subr.bf16.mxu0 0
  %1682 = vmatpush1.bf16.msra.mxu0 %v1665
  %1683 = vmatprep.subr.bf16.mxu0 0
  %1684 = vmatpush1.bf16.msra.mxu0 %v1666
  %1685 = vmatprep.subr.bf16.mxu0 0
  %1686 = vmatpush1.bf16.msra.mxu0 %v1667
  %1687 = vmatprep.subr.bf16.mxu0 0
  %1688 = vmatpush1.bf16.msra.mxu0 %v1668
  %1689 = vmatprep.subr.bf16.mxu0 0
  %1690 = vmatpush1.bf16.msra.mxu0 %v1669
  %1691 = vmatprep.subr.bf16.mxu0 0
  %1692 = vmatpush1.bf16.msra.mxu0 %v1670
  %1693 = vmatprep.subr.bf16.mxu0 0
  %1694 = vmatpush1.bf16.msra.mxu0 %v1671
  %1695 = vmatprep.subr.bf16.mxu0 0
  %1696 = vmatpush1.bf16.msra.mxu0 %v1672
  %1697 = vmatprep.subr.bf16.mxu0 0
  %1698 = vmatpush1.bf16.msra.mxu0 0
  %1699 = vmatprep.subr.bf16.mxu0 0
  %1700 = vmatpush1.bf16.msra.mxu0 0
  %1701 = vmatprep.subr.bf16.mxu0 0
  %1702 = vmatpush1.bf16.msra.mxu0 0
  %1703 = vmatprep.subr.bf16.mxu0 0
  %1704 = vmatpush1.bf16.msra.mxu0 0
  %1705 = vmatprep.subr.bf16.mxu0 0
  %1706 = vmatpush1.bf16.msra.mxu0 0
  %1707 = vmatprep.subr.bf16.mxu0 0
  %1708 = vmatpush1.bf16.msra.mxu0 0
  %1709 = vmatprep.subr.bf16.mxu0 0
  %1710 = vmatpush1.bf16.msra.mxu0 0
  %1711 = vmatprep.subr.bf16.mxu0 0
  %1712 = vmatpush1.bf16.msra.mxu0 0
  %1713 = vmatprep.mubr.bf16.mxu0 0
  %1714 = vmatmul.mubr.bf16.gmra.mrb[0].mxu0 %v532
  %v1715 = vpop.f32.mrb[0].mxu0
  %v1716 = vadd.f32 0.0, %v1715
  %v1717 = vpop.f32.mrb[0].mxu0
  %v1718 = vpop.f32.mrb[0].mxu0
  %v1719 = vadd.f32 0.0, %v1718
  %v1720 = vpop.f32.mrb[0].mxu0
  %1721 = vmatprep.mubr.bf16.mxu0 0
  %1722 = vmatmul.mubr.bf16.gmra.mrb[0].mxu0 %v533
  %v1723 = vpop.f32.mrb[0].mxu0
  %v1724 = vadd.f32 0.0, %v1723
  %v1725 = vpop.f32.mrb[0].mxu0
  %v1726 = vpop.f32.mrb[0].mxu0
  %v1727 = vadd.f32 0.0, %v1726
  %v1728 = vpop.f32.mrb[0].mxu0
  %1729 = vmatprep.mubr.bf16.mxu0 0
  %1730 = vmatmul.mubr.bf16.gmra.mrb[0].mxu0 %v534
  %v1731 = vpop.f32.mrb[0].mxu0
  %v1732 = vadd.f32 0.0, %v1731
  %v1733 = vpop.f32.mrb[0].mxu0
  %v1734 = vpop.f32.mrb[0].mxu0
  %v1735 = vadd.f32 0.0, %v1734
  %v1736 = vpop.f32.mrb[0].mxu0
  %1737 = vmatprep.mubr.bf16.mxu0 0
  %1738 = vmatmul.mubr.bf16.gmra.mrb[0].mxu0 %v1629
  %v1739 = vpop.f32.mrb[0].mxu0
  %v1740 = vadd.f32 0.0, %v1739
  %v1741 = vpop.f32.mrb[0].mxu0
  %v1742 = vpop.f32.mrb[0].mxu0
  %v1743 = vadd.f32 0.0, %v1742
  %v1744 = vpop.f32.mrb[0].mxu0
  %1745 = vmatprep.mubr.bf16.mxu0 0
  %1746 = vmatmul.mubr.bf16.gmra.mrb[0].mxu0 %v536
  %v1747 = vpop.f32.mrb[0].mxu0
  %v1748 = vadd.f32 0.0, %v1747
  %v1749 = vpop.f32.mrb[0].mxu0
  %v1750 = vpop.f32.mrb[0].mxu0
  %v1751 = vadd.f32 0.0, %v1750
  %v1752 = vpop.f32.mrb[0].mxu0
  %1753 = vmatprep.mubr.bf16.mxu0 0
  %1754 = vmatmul.mubr.bf16.gmra.mrb[0].mxu0 %v537
  %v1755 = vpop.f32.mrb[0].mxu0
  %v1756 = vadd.f32 0.0, %v1755
  %v1757 = vpop.f32.mrb[0].mxu0
  %v1758 = vpop.f32.mrb[0].mxu0
  %v1759 = vadd.f32 0.0, %v1758
  %v1760 = vpop.f32.mrb[0].mxu0
  %1761 = vmatprep.mubr.bf16.mxu0 0
  %1762 = vmatmul.mubr.bf16.gmra.mrb[0].mxu0 %v538
  %v1763 = vpop.f32.mrb[0].mxu0
  %v1764 = vadd.f32 0.0, %v1763
  %v1765 = vpop.f32.mrb[0].mxu0
  %v1766 = vpop.f32.mrb[0].mxu0
  %v1767 = vadd.f32 0.0, %v1766
  %v1768 = vpop.f32.mrb[0].mxu0
  %1769 = vmatprep.mubr.bf16.mxu0 0
  %1770 = vmatmul.mubr.bf16.gmra.mrb[0].mxu0 %v1630
  %v1771 = vpop.f32.mrb[0].mxu0
  %v1772 = vadd.f32 0.0, %v1771
  %v1773 = vpop.f32.mrb[0].mxu0
  %v1774 = vpop.f32.mrb[0].mxu0
  %v1775 = vadd.f32 0.0, %v1774
  %v1776 = vpop.f32.mrb[0].mxu0
  %1777 = vdwg.mxu0
  %v1778 = vadd.f32 %v1593, %v1716
  %v1779 = vadd.f32 %v1594, %v1719
  %v1780 = vadd.f32 %v1595, %v1724
  %v1781 = vadd.f32 %v1596, %v1727
  %v1782 = vadd.f32 %v1597, %v1732
  %v1783 = vadd.f32 %v1598, %v1735
  %v1784 = vadd.f32 %v1599, %v1740
  %v1785 = vadd.f32 %v1600, %v1743
  %v1786 = vadd.f32 %v1601, %v1748
  %v1787 = vadd.f32 %v1602, %v1751
  %v1788 = vadd.f32 %v1603, %v1756
  %v1789 = vadd.f32 %v1604, %v1759
  %v1790 = vadd.f32 %v1605, %v1764
  %v1791 = vadd.f32 %v1606, %v1767
  %v1792 = vadd.f32 %v1607, %v1772
  %v1793 = vadd.f32 %v1608, %v1775
  %v1795 = vshrl.u32 %v41, 16
  %v1797 = vrot.slane %v1795, 4
  %v1798 = vshll.u32 %v41, 16
  %v1800 = vrot.slane %v1798, 5
  %v1801 = vor.u32 %v1797, %v1800
  %v1802 = vrot.slane %v1801, 4
  %v1804 = vshll.u32 %v42, 16
  %v1806 = vrot.slane %v1804, 5
  %v1807 = vsel %vm81, %v1802, %v1806
  %v1809 = vshrl.u32 %v61, 16
  %v1811 = vrot.slane %v1809, 4
  %v1812 = vshll.u32 %v61, 16
  %v1814 = vrot.slane %v1812, 5
  %v1815 = vor.u32 %v1811, %v1814
  %v1816 = vrot.slane %v1815, 4
  %v1818 = vshll.u32 %v62, 16
  %v1820 = vrot.slane %v1818, 5
  %v1821 = vsel %vm81, %v1816, %v1820
  %v1822 = vld [vmem:[%s1 + $0x1c0] sm:$0xf]
  %v1823 = vld [vmem:[%s1 + $0x1c4] sm:$0xf]
  %v1824 = vld [vmem:[%s1 + $0x1c8] sm:$0xf]
  %v1825 = vld [vmem:[%s1 + $0x1cc] sm:$0xf]
  %v1826 = vld [vmem:[%s1 + $0x1d0] sm:$0xf]
  %v1827 = vld [vmem:[%s1 + $0x1d4] sm:$0xf]
  %v1828 = vld [vmem:[%s1 + $0x1d8] sm:$0xf]
  %v1829 = vld [vmem:[%s1 + $0x1dc] sm:$0xf]
  %v1830 = vld [vmem:[%s1 + $0x1e0] sm:$0xf]
  %v1831 = vld [vmem:[%s1 + $0x1e4] sm:$0xf]
  %v1832 = vld [vmem:[%s1 + $0x1e8] sm:$0xf]
  %v1833 = vld [vmem:[%s1 + $0x1ec] sm:$0xf]
  %v1834 = vld [vmem:[%s1 + $0x1f0] sm:$0xf]
  %v1835 = vld [vmem:[%s1 + $0x1f4] sm:$0xf]
  %v1836 = vld [vmem:[%s1 + $0x1f8] sm:$0xf]
  %v1837 = vld [vmem:[%s1 + $0x1fc] sm:$0xf]
  %v1838 = vunpack.c.l.b16 %v1807
  %v1839 = vunpack.c.l.b16 %v1821
  %v1840 = vpack.c.b16 %v1838, %v1225
  %v1841 = vpack.c.b16 %v1839, %v1226
  %v1860 = vunpack.c.l.b16 %v1822
  %v1861 = vunpack.c.l.b16 %v1823
  %v1862 = vunpack.c.l.b16 %v1824
  %v1863 = vunpack.c.l.b16 %v1825
  %v1864 = vunpack.c.l.b16 %v1826
  %v1865 = vunpack.c.l.b16 %v1827
  %v1866 = vunpack.c.l.b16 %v1828
  %v1867 = vunpack.c.l.b16 %v1829
  %v1868 = vunpack.c.l.b16 %v1830
  %v1869 = vunpack.c.l.b16 %v1831
  %v1870 = vunpack.c.l.b16 %v1832
  %v1871 = vunpack.c.l.b16 %v1833
  %v1872 = vunpack.c.l.b16 %v1834
  %v1873 = vunpack.c.l.b16 %v1835
  %v1874 = vunpack.c.l.b16 %v1836
  %v1875 = vunpack.c.l.b16 %v1837
  %v1876 = vpack.c.b16 %v1861, %v1860
  %v1877 = vpack.c.b16 %v1863, %v1862
  %v1878 = vpack.c.b16 %v1865, %v1864
  %v1879 = vpack.c.b16 %v1867, %v1866
  %v1880 = vpack.c.b16 %v1869, %v1868
  %v1881 = vpack.c.b16 %v1871, %v1870
  %v1882 = vpack.c.b16 %v1873, %v1872
  %v1883 = vpack.c.b16 %v1875, %v1874
  %1892 = vmatprep.subr.bf16.mxu0 0
  %1893 = vmatpush1.bf16.msra.mxu0 %v1876
  %1894 = vmatprep.subr.bf16.mxu0 0
  %1895 = vmatpush1.bf16.msra.mxu0 %v1877
  %1896 = vmatprep.subr.bf16.mxu0 0
  %1897 = vmatpush1.bf16.msra.mxu0 %v1878
  %1898 = vmatprep.subr.bf16.mxu0 0
  %1899 = vmatpush1.bf16.msra.mxu0 %v1879
  %1900 = vmatprep.subr.bf16.mxu0 0
  %1901 = vmatpush1.bf16.msra.mxu0 %v1880
  %1902 = vmatprep.subr.bf16.mxu0 0
  %1903 = vmatpush1.bf16.msra.mxu0 %v1881
  %1904 = vmatprep.subr.bf16.mxu0 0
  %1905 = vmatpush1.bf16.msra.mxu0 %v1882
  %1906 = vmatprep.subr.bf16.mxu0 0
  %1907 = vmatpush1.bf16.msra.mxu0 %v1883
  %1908 = vmatprep.subr.bf16.mxu0 0
  %1909 = vmatpush1.bf16.msra.mxu0 0
  %1910 = vmatprep.subr.bf16.mxu0 0
  %1911 = vmatpush1.bf16.msra.mxu0 0
  %1912 = vmatprep.subr.bf16.mxu0 0
  %1913 = vmatpush1.bf16.msra.mxu0 0
  %1914 = vmatprep.subr.bf16.mxu0 0
  %1915 = vmatpush1.bf16.msra.mxu0 0
  %1916 = vmatprep.subr.bf16.mxu0 0
  %1917 = vmatpush1.bf16.msra.mxu0 0
  %1918 = vmatprep.subr.bf16.mxu0 0
  %1919 = vmatpush1.bf16.msra.mxu0 0
  %1920 = vmatprep.subr.bf16.mxu0 0
  %1921 = vmatpush1.bf16.msra.mxu0 0
  %1922 = vmatprep.subr.bf16.mxu0 0
  %1923 = vmatpush1.bf16.msra.mxu0 0
  %1924 = vmatprep.mubr.bf16.mxu0 0
  %1925 = vmatmul.mubr.bf16.gmra.mrb[0].mxu0 %v339
  %v1926 = vpop.f32.mrb[0].mxu0
  %v1927 = vadd.f32 0.0, %v1926
  %v1928 = vpop.f32.mrb[0].mxu0
  %v1929 = vpop.f32.mrb[0].mxu0
  %v1930 = vadd.f32 0.0, %v1929
  %v1931 = vpop.f32.mrb[0].mxu0
  %1932 = vmatprep.mubr.bf16.mxu0 0
  %1933 = vmatmul.mubr.bf16.gmra.mrb[0].mxu0 %v340
  %v1934 = vpop.f32.mrb[0].mxu0
  %v1935 = vadd.f32 0.0, %v1934
  %v1936 = vpop.f32.mrb[0].mxu0
  %v1937 = vpop.f32.mrb[0].mxu0
  %v1938 = vadd.f32 0.0, %v1937
  %v1939 = vpop.f32.mrb[0].mxu0
  %1940 = vmatprep.mubr.bf16.mxu0 0
  %1941 = vmatmul.mubr.bf16.gmra.mrb[0].mxu0 %v341
  %v1942 = vpop.f32.mrb[0].mxu0
  %v1943 = vadd.f32 0.0, %v1942
  %v1944 = vpop.f32.mrb[0].mxu0
  %v1945 = vpop.f32.mrb[0].mxu0
  %v1946 = vadd.f32 0.0, %v1945
  %v1947 = vpop.f32.mrb[0].mxu0
  %1948 = vmatprep.mubr.bf16.mxu0 0
  %1949 = vmatmul.mubr.bf16.gmra.mrb[0].mxu0 %v1840
  %v1950 = vpop.f32.mrb[0].mxu0
  %v1951 = vadd.f32 0.0, %v1950
  %v1952 = vpop.f32.mrb[0].mxu0
  %v1953 = vpop.f32.mrb[0].mxu0
  %v1954 = vadd.f32 0.0, %v1953
  %v1955 = vpop.f32.mrb[0].mxu0
  %1956 = vmatprep.mubr.bf16.mxu0 0
  %1957 = vmatmul.mubr.bf16.gmra.mrb[0].mxu0 %v343
  %v1958 = vpop.f32.mrb[0].mxu0
  %v1959 = vadd.f32 0.0, %v1958
  %v1960 = vpop.f32.mrb[0].mxu0
  %v1961 = vpop.f32.mrb[0].mxu0
  %v1962 = vadd.f32 0.0, %v1961
  %v1963 = vpop.f32.mrb[0].mxu0
  %1964 = vmatprep.mubr.bf16.mxu0 0
  %1965 = vmatmul.mubr.bf16.gmra.mrb[0].mxu0 %v344
  %v1966 = vpop.f32.mrb[0].mxu0
  %v1967 = vadd.f32 0.0, %v1966
  %v1968 = vpop.f32.mrb[0].mxu0
  %v1969 = vpop.f32.mrb[0].mxu0
  %v1970 = vadd.f32 0.0, %v1969
  %v1971 = vpop.f32.mrb[0].mxu0
  %1972 = vmatprep.mubr.bf16.mxu0 0
  %1973 = vmatmul.mubr.bf16.gmra.mrb[0].mxu0 %v345
  %v1974 = vpop.f32.mrb[0].mxu0
  %v1975 = vadd.f32 0.0, %v1974
  %v1976 = vpop.f32.mrb[0].mxu0
  %v1977 = vpop.f32.mrb[0].mxu0
  %v1978 = vadd.f32 0.0, %v1977
  %v1979 = vpop.f32.mrb[0].mxu0
  %1980 = vmatprep.mubr.bf16.mxu0 0
  %1981 = vmatmul.mubr.bf16.gmra.mrb[0].mxu0 %v1841
  %v1982 = vpop.f32.mrb[0].mxu0
  %v1983 = vadd.f32 0.0, %v1982
  %v1984 = vpop.f32.mrb[0].mxu0
  %v1985 = vpop.f32.mrb[0].mxu0
  %v1986 = vadd.f32 0.0, %v1985
  %v1987 = vpop.f32.mrb[0].mxu0
  %1988 = vdwg.mxu0
  %v1989 = vadd.f32 %v1778, %v1927
  %v1990 = vadd.f32 %v1779, %v1930
  %v1991 = vadd.f32 %v1780, %v1935
  %v1992 = vadd.f32 %v1781, %v1938
  %v1993 = vadd.f32 %v1782, %v1943
  %v1994 = vadd.f32 %v1783, %v1946
  %v1995 = vadd.f32 %v1784, %v1951
  %v1996 = vadd.f32 %v1785, %v1954
  %v1997 = vadd.f32 %v1786, %v1959
  %v1998 = vadd.f32 %v1787, %v1962
  %v1999 = vadd.f32 %v1788, %v1967
  %v2000 = vadd.f32 %v1789, %v1970
  %v2001 = vadd.f32 %v1790, %v1975
  %v2002 = vadd.f32 %v1791, %v1978
  %v2003 = vadd.f32 %v1792, %v1983
  %v2004 = vadd.f32 %v1793, %v1986
  %v2007 = vrot.slane %v41, 5
  %v2008 = vrot.slane %v2007, 4
  %v2009 = vrot.slane %v42, 5
  %v2010 = vsel %vm710, %v2008, %v2009
  %v2011 = vrot.slane %v61, 5
  %v2012 = vrot.slane %v2011, 4
  %v2013 = vrot.slane %v62, 5
  %v2014 = vsel %vm710, %v2012, %v2013
  %v2015 = vld [vmem:[%s1 + $0x200] sm:$0xf]
  %v2016 = vld [vmem:[%s1 + $0x204] sm:$0xf]
  %v2017 = vld [vmem:[%s1 + $0x208] sm:$0xf]
  %v2018 = vld [vmem:[%s1 + $0x20c] sm:$0xf]
  %v2019 = vld [vmem:[%s1 + $0x210] sm:$0xf]
  %v2020 = vld [vmem:[%s1 + $0x214] sm:$0xf]
  %v2021 = vld [vmem:[%s1 + $0x218] sm:$0xf]
  %v2022 = vld [vmem:[%s1 + $0x21c] sm:$0xf]
  %v2023 = vld [vmem:[%s1 + $0x220] sm:$0xf]
  %v2024 = vld [vmem:[%s1 + $0x224] sm:$0xf]
  %v2025 = vld [vmem:[%s1 + $0x228] sm:$0xf]
  %v2026 = vld [vmem:[%s1 + $0x22c] sm:$0xf]
  %v2027 = vld [vmem:[%s1 + $0x230] sm:$0xf]
  %v2028 = vld [vmem:[%s1 + $0x234] sm:$0xf]
  %v2029 = vld [vmem:[%s1 + $0x238] sm:$0xf]
  %v2030 = vld [vmem:[%s1 + $0x23c] sm:$0xf]
  %v2031 = vunpack.c.l.b16 %v2010
  %v2032 = vunpack.c.l.b16 %v2014
  %v2033 = vpack.c.b16 %v2031, %v1430
  %v2034 = vpack.c.b16 %v2032, %v1431
  %v2053 = vunpack.c.l.b16 %v2015
  %v2054 = vunpack.c.l.b16 %v2016
  %v2055 = vunpack.c.l.b16 %v2017
  %v2056 = vunpack.c.l.b16 %v2018
  %v2057 = vunpack.c.l.b16 %v2019
  %v2058 = vunpack.c.l.b16 %v2020
  %v2059 = vunpack.c.l.b16 %v2021
  %v2060 = vunpack.c.l.b16 %v2022
  %v2061 = vunpack.c.l.b16 %v2023
  %v2062 = vunpack.c.l.b16 %v2024
  %v2063 = vunpack.c.l.b16 %v2025
  %v2064 = vunpack.c.l.b16 %v2026
  %v2065 = vunpack.c.l.b16 %v2027
  %v2066 = vunpack.c.l.b16 %v2028
  %v2067 = vunpack.c.l.b16 %v2029
  %v2068 = vunpack.c.l.b16 %v2030
  %v2069 = vpack.c.b16 %v2054, %v2053
  %v2070 = vpack.c.b16 %v2056, %v2055
  %v2071 = vpack.c.b16 %v2058, %v2057
  %v2072 = vpack.c.b16 %v2060, %v2059
  %v2073 = vpack.c.b16 %v2062, %v2061
  %v2074 = vpack.c.b16 %v2064, %v2063
  %v2075 = vpack.c.b16 %v2066, %v2065
  %v2076 = vpack.c.b16 %v2068, %v2067
  %2085 = vmatprep.subr.bf16.mxu0 0
  %2086 = vmatpush1.bf16.msra.mxu0 %v2069
  %2087 = vmatprep.subr.bf16.mxu0 0
  %2088 = vmatpush1.bf16.msra.mxu0 %v2070
  %2089 = vmatprep.subr.bf16.mxu0 0
  %2090 = vmatpush1.bf16.msra.mxu0 %v2071
  %2091 = vmatprep.subr.bf16.mxu0 0
  %2092 = vmatpush1.bf16.msra.mxu0 %v2072
  %2093 = vmatprep.subr.bf16.mxu0 0
  %2094 = vmatpush1.bf16.msra.mxu0 %v2073
  %2095 = vmatprep.subr.bf16.mxu0 0
  %2096 = vmatpush1.bf16.msra.mxu0 %v2074
  %2097 = vmatprep.subr.bf16.mxu0 0
  %2098 = vmatpush1.bf16.msra.mxu0 %v2075
  %2099 = vmatprep.subr.bf16.mxu0 0
  %2100 = vmatpush1.bf16.msra.mxu0 %v2076
  %2101 = vmatprep.subr.bf16.mxu0 0
  %2102 = vmatpush1.bf16.msra.mxu0 0
  %2103 = vmatprep.subr.bf16.mxu0 0
  %2104 = vmatpush1.bf16.msra.mxu0 0
  %2105 = vmatprep.subr.bf16.mxu0 0
  %2106 = vmatpush1.bf16.msra.mxu0 0
  %2107 = vmatprep.subr.bf16.mxu0 0
  %2108 = vmatpush1.bf16.msra.mxu0 0
  %2109 = vmatprep.subr.bf16.mxu0 0
  %2110 = vmatpush1.bf16.msra.mxu0 0
  %2111 = vmatprep.subr.bf16.mxu0 0
  %2112 = vmatpush1.bf16.msra.mxu0 0
  %2113 = vmatprep.subr.bf16.mxu0 0
  %2114 = vmatpush1.bf16.msra.mxu0 0
  %2115 = vmatprep.subr.bf16.mxu0 0
  %2116 = vmatpush1.bf16.msra.mxu0 0
  %2117 = vmatprep.mubr.bf16.mxu0 0
  %2118 = vmatmul.mubr.bf16.gmra.mrb[0].mxu0 %v808
  %v2119 = vpop.f32.mrb[0].mxu0
  %v2120 = vadd.f32 0.0, %v2119
  %v2121 = vpop.f32.mrb[0].mxu0
  %v2122 = vpop.f32.mrb[0].mxu0
  %v2123 = vadd.f32 0.0, %v2122
  %v2124 = vpop.f32.mrb[0].mxu0
  %2125 = vmatprep.mubr.bf16.mxu0 0
  %2126 = vmatmul.mubr.bf16.gmra.mrb[0].mxu0 %v809
  %v2127 = vpop.f32.mrb[0].mxu0
  %v2128 = vadd.f32 0.0, %v2127
  %v2129 = vpop.f32.mrb[0].mxu0
  %v2130 = vpop.f32.mrb[0].mxu0
  %v2131 = vadd.f32 0.0, %v2130
  %v2132 = vpop.f32.mrb[0].mxu0
  %2133 = vmatprep.mubr.bf16.mxu0 0
  %2134 = vmatmul.mubr.bf16.gmra.mrb[0].mxu0 %v810
  %v2135 = vpop.f32.mrb[0].mxu0
  %v2136 = vadd.f32 0.0, %v2135
  %v2137 = vpop.f32.mrb[0].mxu0
  %v2138 = vpop.f32.mrb[0].mxu0
  %v2139 = vadd.f32 0.0, %v2138
  %v2140 = vpop.f32.mrb[0].mxu0
  %2141 = vmatprep.mubr.bf16.mxu0 0
  %2142 = vmatmul.mubr.bf16.gmra.mrb[0].mxu0 %v2033
  %v2143 = vpop.f32.mrb[0].mxu0
  %v2144 = vadd.f32 0.0, %v2143
  %v2145 = vpop.f32.mrb[0].mxu0
  %v2146 = vpop.f32.mrb[0].mxu0
  %v2147 = vadd.f32 0.0, %v2146
  %v2148 = vpop.f32.mrb[0].mxu0
  %2149 = vmatprep.mubr.bf16.mxu0 0
  %2150 = vmatmul.mubr.bf16.gmra.mrb[0].mxu0 %v812
  %v2151 = vpop.f32.mrb[0].mxu0
  %v2152 = vadd.f32 0.0, %v2151
  %v2153 = vpop.f32.mrb[0].mxu0
  %v2154 = vpop.f32.mrb[0].mxu0
  %v2155 = vadd.f32 0.0, %v2154
  %v2156 = vpop.f32.mrb[0].mxu0
  %2157 = vmatprep.mubr.bf16.mxu0 0
  %2158 = vmatmul.mubr.bf16.gmra.mrb[0].mxu0 %v813
  %v2159 = vpop.f32.mrb[0].mxu0
  %v2160 = vadd.f32 0.0, %v2159
  %v2161 = vpop.f32.mrb[0].mxu0
  %v2162 = vpop.f32.mrb[0].mxu0
  %v2163 = vadd.f32 0.0, %v2162
  %v2164 = vpop.f32.mrb[0].mxu0
  %2165 = vmatprep.mubr.bf16.mxu0 0
  %2166 = vmatmul.mubr.bf16.gmra.mrb[0].mxu0 %v814
  %v2167 = vpop.f32.mrb[0].mxu0
  %v2168 = vadd.f32 0.0, %v2167
  %v2169 = vpop.f32.mrb[0].mxu0
  %v2170 = vpop.f32.mrb[0].mxu0
  %v2171 = vadd.f32 0.0, %v2170
  %v2172 = vpop.f32.mrb[0].mxu0
  %2173 = vmatprep.mubr.bf16.mxu0 0
  %2174 = vmatmul.mubr.bf16.gmra.mrb[0].mxu0 %v2034
  %v2175 = vpop.f32.mrb[0].mxu0
  %v2176 = vadd.f32 0.0, %v2175
  %v2177 = vpop.f32.mrb[0].mxu0
  %v2178 = vpop.f32.mrb[0].mxu0
  %v2179 = vadd.f32 0.0, %v2178
  %v2180 = vpop.f32.mrb[0].mxu0
  %2181 = vdwg.mxu0
  %v2182 = vadd.f32 %v1989, %v2120
  %v2183 = vadd.f32 %v1990, %v2123
  %v2184 = vadd.f32 %v1991, %v2128
  %v2185 = vadd.f32 %v1992, %v2131
  %v2186 = vadd.f32 %v1993, %v2136
  %v2187 = vadd.f32 %v1994, %v2139
  %v2188 = vadd.f32 %v1995, %v2144
  %v2189 = vadd.f32 %v1996, %v2147
  %v2190 = vadd.f32 %v1997, %v2152
  %v2191 = vadd.f32 %v1998, %v2155
  %v2192 = vadd.f32 %v1999, %v2160
  %v2193 = vadd.f32 %v2000, %v2163
  %v2194 = vadd.f32 %v2001, %v2168
  %v2195 = vadd.f32 %v2002, %v2171
  %v2196 = vadd.f32 %v2003, %v2176
  %v2197 = vadd.f32 %v2004, %v2179
  %v2198 = vld [vmem:[%s2] sm:$0xff]
  %v2199 = vld [vmem:[%s2 + $0x8] sm:$0xff]
  %v2200 = vld [vmem:[%s2 + $0x10] sm:$0xff]
  %v2201 = vld [vmem:[%s2 + $0x18] sm:$0xff]
  %v2202 = vld [vmem:[%s2 + $0x20] sm:$0xff]
  %v2203 = vld [vmem:[%s2 + $0x28] sm:$0xff]
  %v2204 = vld [vmem:[%s2 + $0x30] sm:$0xff]
  %v2205 = vld [vmem:[%s2 + $0x38] sm:$0xff]
  %v2206 = vld [vmem:[%s2 + $0x40] sm:$0xff]
  %v2207 = vld [vmem:[%s2 + $0x48] sm:$0xff]
  %v2208 = vld [vmem:[%s2 + $0x50] sm:$0xff]
  %v2209 = vld [vmem:[%s2 + $0x58] sm:$0xff]
  %v2210 = vld [vmem:[%s2 + $0x60] sm:$0xff]
  %v2211 = vld [vmem:[%s2 + $0x68] sm:$0xff]
  %v2212 = vld [vmem:[%s2 + $0x70] sm:$0xff]
  %v2213 = vld [vmem:[%s2 + $0x78] sm:$0xff]
  %v2214 = vadd.f32 %v2182, %v2198
  %v2215 = vadd.f32 %v2183, %v2199
  %v2216 = vadd.f32 %v2184, %v2200
  %v2217 = vadd.f32 %v2185, %v2201
  %v2218 = vadd.f32 %v2186, %v2202
  %v2219 = vadd.f32 %v2187, %v2203
  %v2220 = vadd.f32 %v2188, %v2204
  %v2221 = vadd.f32 %v2189, %v2205
  %v2222 = vadd.f32 %v2190, %v2206
  %v2223 = vadd.f32 %v2191, %v2207
  %v2224 = vadd.f32 %v2192, %v2208
  %v2225 = vadd.f32 %v2193, %v2209
  %v2226 = vadd.f32 %v2194, %v2210
  %v2227 = vadd.f32 %v2195, %v2211
  %v2228 = vadd.f32 %v2196, %v2212
  %v2229 = vadd.f32 %v2197, %v2213
  %2230 = vst [vmem:[%s5] sm:$0xff] %v2214
  %2231 = vst [vmem:[%s5 + $0x8] sm:$0xff] %v2215
  %2232 = vst [vmem:[%s5 + $0x10] sm:$0xff] %v2216
  %2233 = vst [vmem:[%s5 + $0x18] sm:$0xff] %v2217
  %2234 = vst [vmem:[%s5 + $0x20] sm:$0xff] %v2218
  %2235 = vst [vmem:[%s5 + $0x28] sm:$0xff] %v2219
  %2236 = vst [vmem:[%s5 + $0x30] sm:$0xff] %v2220
  %2237 = vst [vmem:[%s5 + $0x38] sm:$0xff] %v2221
  %2238 = vst [vmem:[%s5 + $0x40] sm:$0xff] %v2222
  %2239 = vst [vmem:[%s5 + $0x48] sm:$0xff] %v2223
  %2240 = vst [vmem:[%s5 + $0x50] sm:$0xff] %v2224
  %2241 = vst [vmem:[%s5 + $0x58] sm:$0xff] %v2225
  %2242 = vst [vmem:[%s5 + $0x60] sm:$0xff] %v2226
  %2243 = vst [vmem:[%s5 + $0x68] sm:$0xff] %v2227
  %2244 = vst [vmem:[%s5 + $0x70] sm:$0xff] %v2228
  %2245 = vst [vmem:[%s5 + $0x78] sm:$0xff] %v2229
  %v2246 = vld [vmem:[%s3] sm:$0x1]
  %v2248 = vlaneseq
  %v2249 = vshrl.u32 %v2248, 7
  %v2250 = vsub.s32 0, %v2249
  %v2251 = vrot.slane %v2246, %v2250
  %v2253 = vmul.f32 %v2214, %v2251
  %v2254 = vmul.f32 %v2215, %v2251
  %v2255 = vmul.f32 %v2216, %v2251
  %v2256 = vmul.f32 %v2217, %v2251
  %v2257 = vmul.f32 %v2218, %v2251
  %v2258 = vmul.f32 %v2219, %v2251
  %v2259 = vmul.f32 %v2220, %v2251
  %v2260 = vmul.f32 %v2221, %v2251
  %v2261 = vmul.f32 %v2222, %v2251
  %v2262 = vmul.f32 %v2223, %v2251
  %v2263 = vmul.f32 %v2224, %v2251
  %v2264 = vmul.f32 %v2225, %v2251
  %v2265 = vmul.f32 %v2226, %v2251
  %v2266 = vmul.f32 %v2227, %v2251
  %v2267 = vmul.f32 %v2228, %v2251
  %v2268 = vmul.f32 %v2229, %v2251
  %v2269 = vld [vmem:[%s4] sm:$0x1]
  %v2271 = vlaneseq
  %v2272 = vshrl.u32 %v2271, 7
  %v2273 = vsub.s32 0, %v2272
  %v2274 = vrot.slane %v2269, %v2273
  %v2276 = vadd.f32 %v2253, %v2274
  %v2277 = vadd.f32 %v2254, %v2274
  %v2278 = vadd.f32 %v2255, %v2274
  %v2279 = vadd.f32 %v2256, %v2274
  %v2280 = vadd.f32 %v2257, %v2274
  %v2281 = vadd.f32 %v2258, %v2274
  %v2282 = vadd.f32 %v2259, %v2274
  %v2283 = vadd.f32 %v2260, %v2274
  %v2284 = vadd.f32 %v2261, %v2274
  %v2285 = vadd.f32 %v2262, %v2274
  %v2286 = vadd.f32 %v2263, %v2274
  %v2287 = vadd.f32 %v2264, %v2274
  %v2288 = vadd.f32 %v2265, %v2274
  %v2289 = vadd.f32 %v2266, %v2274
  %v2290 = vadd.f32 %v2267, %v2274
  %v2291 = vadd.f32 %v2268, %v2274
  %v2292 = vmax.f32 %v2276, 0.0
  %v2293 = vmax.f32 %v2277, 0.0
  %v2294 = vmax.f32 %v2278, 0.0
  %v2295 = vmax.f32 %v2279, 0.0
  %v2296 = vmax.f32 %v2280, 0.0
  %v2297 = vmax.f32 %v2281, 0.0
  %v2298 = vmax.f32 %v2282, 0.0
  %v2299 = vmax.f32 %v2283, 0.0
  %v2300 = vmax.f32 %v2284, 0.0
  %v2301 = vmax.f32 %v2285, 0.0
  %v2302 = vmax.f32 %v2286, 0.0
  %v2303 = vmax.f32 %v2287, 0.0
  %v2304 = vmax.f32 %v2288, 0.0
  %v2305 = vmax.f32 %v2289, 0.0
  %v2306 = vmax.f32 %v2290, 0.0
  %v2307 = vmax.f32 %v2291, 0.0
  %v2308 = vpack.c.bf16 %v2293, %v2292
  %v2309 = vpack.c.bf16 %v2295, %v2294
  %v2310 = vpack.c.bf16 %v2297, %v2296
  %v2311 = vpack.c.bf16 %v2299, %v2298
  %v2312 = vpack.c.bf16 %v2301, %v2300
  %v2313 = vpack.c.bf16 %v2303, %v2302
  %v2314 = vpack.c.bf16 %v2305, %v2304
  %v2315 = vpack.c.bf16 %v2307, %v2306
  %v2324 = vunpack.c.l.b16 %v2308
  %v2325 = vunpack.c.h.b16 %v2308
  %v2326 = vunpack.c.l.b16 %v2309
  %v2327 = vunpack.c.h.b16 %v2309
  %v2328 = vunpack.c.l.b16 %v2310
  %v2329 = vunpack.c.h.b16 %v2310
  %v2330 = vunpack.c.l.b16 %v2311
  %v2331 = vunpack.c.h.b16 %v2311
  %v2332 = vunpack.c.l.b16 %v2312
  %v2333 = vunpack.c.h.b16 %v2312
  %v2334 = vunpack.c.l.b16 %v2313
  %v2335 = vunpack.c.h.b16 %v2313
  %v2336 = vunpack.c.l.b16 %v2314
  %v2337 = vunpack.c.h.b16 %v2314
  %v2338 = vunpack.c.l.b16 %v2315
  %v2339 = vunpack.c.h.b16 %v2315
  %v2340 = vpack.c.b16 %v2324, %v2324
  %v2341 = vpack.c.b16 %v2325, %v2325
  %v2342 = vpack.c.b16 %v2326, %v2326
  %v2343 = vpack.c.b16 %v2327, %v2327
  %v2344 = vpack.c.b16 %v2328, %v2328
  %v2345 = vpack.c.b16 %v2329, %v2329
  %v2346 = vpack.c.b16 %v2330, %v2330
  %v2347 = vpack.c.b16 %v2331, %v2331
  %v2348 = vpack.c.b16 %v2332, %v2332
  %v2349 = vpack.c.b16 %v2333, %v2333
  %v2350 = vpack.c.b16 %v2334, %v2334
  %v2351 = vpack.c.b16 %v2335, %v2335
  %v2352 = vpack.c.b16 %v2336, %v2336
  %v2353 = vpack.c.b16 %v2337, %v2337
  %v2354 = vpack.c.b16 %v2338, %v2338
  %v2355 = vpack.c.b16 %v2339, %v2339
  %v2357 = vshrl.u32 0, 16
  %v2359 = vrot.slane %v2357, 7
  %v2360 = vshll.u32 0, 16
  %v2362 = vor.u32 %v2359, %v2360
  %v2364 = vshrl.u32 %v2340, 16
  %v2366 = vrot.slane %v2364, 7
  %v2367 = vshll.u32 %v2340, 16
  %v2369 = vor.u32 %v2366, %v2367
  %v2371 = vshrl.u32 %v2341, 16
  %v2373 = vrot.slane %v2371, 7
  %v2374 = vshll.u32 %v2341, 16
  %v2376 = vor.u32 %v2373, %v2374
  %v2378 = vshrl.u32 %v2342, 16
  %v2380 = vrot.slane %v2378, 7
  %v2381 = vshll.u32 %v2342, 16
  %v2383 = vor.u32 %v2380, %v2381
  %v2385 = vshrl.u32 %v2343, 16
  %v2387 = vrot.slane %v2385, 7
  %v2388 = vshll.u32 %v2343, 16
  %v2390 = vor.u32 %v2387, %v2388
  %v2392 = vshrl.u32 %v2344, 16
  %v2394 = vrot.slane %v2392, 7
  %v2395 = vshll.u32 %v2344, 16
  %v2397 = vor.u32 %v2394, %v2395
  %v2399 = vshrl.u32 %v2345, 16
  %v2401 = vrot.slane %v2399, 7
  %v2402 = vshll.u32 %v2345, 16
  %v2404 = vor.u32 %v2401, %v2402
  %v2406 = vshrl.u32 %v2346, 16
  %v2408 = vrot.slane %v2406, 7
  %v2409 = vshll.u32 %v2346, 16
  %v2411 = vor.u32 %v2408, %v2409
  %v2413 = vshrl.u32 %v2347, 16
  %v2415 = vrot.slane %v2413, 7
  %v2416 = vshll.u32 %v2347, 16
  %v2418 = vor.u32 %v2415, %v2416
  %v2420 = vshrl.u32 %v2348, 16
  %v2422 = vrot.slane %v2420, 7
  %v2423 = vshll.u32 %v2348, 16
  %v2425 = vor.u32 %v2422, %v2423
  %v2427 = vshrl.u32 %v2349, 16
  %v2429 = vrot.slane %v2427, 7
  %v2430 = vshll.u32 %v2349, 16
  %v2432 = vor.u32 %v2429, %v2430
  %v2434 = vshrl.u32 %v2350, 16
  %v2436 = vrot.slane %v2434, 7
  %v2437 = vshll.u32 %v2350, 16
  %v2439 = vor.u32 %v2436, %v2437
  %v2441 = vshrl.u32 %v2351, 16
  %v2443 = vrot.slane %v2441, 7
  %v2444 = vshll.u32 %v2351, 16
  %v2446 = vor.u32 %v2443, %v2444
  %v2448 = vshrl.u32 %v2352, 16
  %v2450 = vrot.slane %v2448, 7
  %v2451 = vshll.u32 %v2352, 16
  %v2453 = vor.u32 %v2450, %v2451
  %v2455 = vshrl.u32 %v2353, 16
  %v2457 = vrot.slane %v2455, 7
  %v2458 = vshll.u32 %v2353, 16
  %v2460 = vor.u32 %v2457, %v2458
  %v2462 = vshrl.u32 %v2354, 16
  %v2464 = vrot.slane %v2462, 7
  %v2465 = vshll.u32 %v2354, 16
  %v2467 = vor.u32 %v2464, %v2465
  %v2469 = vshrl.u32 %v2355, 16
  %v2471 = vrot.slane %v2469, 7
  %v2472 = vshll.u32 %v2355, 16
  %v2474 = vor.u32 %v2471, %v2472
  %vm2492 = vcmask 1040384
  %vm2493 = vsmask.f32 256
  %vm2494 = vmand %vm2492, %vm2493
  %v2495 = vsel %vm2494, 0, %v2362
  %v2496 = vsel %vm2494, 0, %v2369
  %v2497 = vsel %vm2494, 0, %v2376
  %v2498 = vsel %vm2494, 0, %v2383
  %v2499 = vsel %vm2494, 0, %v2390
  %v2500 = vsel %vm2494, 0, %v2397
  %v2501 = vsel %vm2494, 0, %v2404
  %v2502 = vsel %vm2494, 0, %v2411
  %v2503 = vsel %vm2494, 0, %v2418
  %v2504 = vsel %vm2494, 0, %v2425
  %v2505 = vsel %vm2494, 0, %v2432
  %v2506 = vsel %vm2494, 0, %v2439
  %v2507 = vsel %vm2494, 0, %v2446
  %v2508 = vsel %vm2494, 0, %v2453
  %v2509 = vsel %vm2494, 0, %v2460
  %v2510 = vsel %vm2494, 0, %v2467
  %v2511 = vsel %vm2494, 0, %v2474
  %vm2512 = vcmask 1044480
  %vm2513 = vsmask.f32 4352
  %vm2514 = vmand %vm2512, %vm2513
  %v2515 = vsel %vm2514, %v2495, 0
  %v2516 = vsel %vm2514, %v2496, 0
  %v2517 = vsel %vm2514, %v2497, 0
  %v2518 = vsel %vm2514, %v2498, 0
  %v2519 = vsel %vm2514, %v2499, 0
  %v2520 = vsel %vm2514, %v2500, 0
  %v2521 = vsel %vm2514, %v2501, 0
  %v2522 = vsel %vm2514, %v2502, 0
  %v2523 = vsel %vm2514, %v2503, 0
  %v2524 = vsel %vm2514, %v2504, 0
  %v2525 = vsel %vm2514, %v2505, 0
  %v2526 = vsel %vm2514, %v2506, 0
  %v2527 = vsel %vm2514, %v2507, 0
  %v2528 = vsel %vm2514, %v2508, 0
  %v2529 = vsel %vm2514, %v2509, 0
  %v2530 = vsel %vm2514, %v2510, 0
  %v2531 = vsel %vm2514, %v2511, 0
  %v2549 = vunpack.c.l.b16 %v2515
  %v2550 = vunpack.c.h.b16 %v2515
  %v2551 = vunpack.c.l.b16 %v2516
  %v2552 = vunpack.c.h.b16 %v2516
  %v2553 = vunpack.c.l.b16 %v2517
  %v2554 = vunpack.c.h.b16 %v2517
  %v2555 = vunpack.c.l.b16 %v2518
  %v2556 = vunpack.c.h.b16 %v2518
  %v2557 = vunpack.c.l.b16 %v2519
  %v2558 = vunpack.c.h.b16 %v2519
  %v2559 = vunpack.c.l.b16 %v2520
  %v2560 = vunpack.c.h.b16 %v2520
  %v2561 = vunpack.c.l.b16 %v2521
  %v2562 = vunpack.c.h.b16 %v2521
  %v2563 = vunpack.c.l.b16 %v2522
  %v2564 = vunpack.c.h.b16 %v2522
  %v2565 = vunpack.c.l.b16 %v2523
  %v2566 = vunpack.c.h.b16 %v2523
  %v2567 = vunpack.c.l.b16 %v2524
  %v2568 = vunpack.c.h.b16 %v2524
  %v2569 = vunpack.c.l.b16 %v2525
  %v2570 = vunpack.c.h.b16 %v2525
  %v2571 = vunpack.c.l.b16 %v2526
  %v2572 = vunpack.c.h.b16 %v2526
  %v2573 = vunpack.c.l.b16 %v2527
  %v2574 = vunpack.c.h.b16 %v2527
  %v2575 = vunpack.c.l.b16 %v2528
  %v2576 = vunpack.c.h.b16 %v2528
  %v2577 = vunpack.c.l.b16 %v2529
  %v2578 = vunpack.c.h.b16 %v2529
  %v2579 = vunpack.c.l.b16 %v2530
  %v2580 = vunpack.c.h.b16 %v2530
  %v2581 = vunpack.c.l.b16 %v2531
  %v2582 = vunpack.c.h.b16 %v2531
  %v2583 = vpack.c.b16 %v2549, %v2549
  %v2584 = vpack.c.b16 %v2550, %v2550
  %v2585 = vpack.c.b16 %v2551, %v2551
  %v2586 = vpack.c.b16 %v2552, %v2552
  %v2587 = vpack.c.b16 %v2553, %v2553
  %v2588 = vpack.c.b16 %v2554, %v2554
  %v2589 = vpack.c.b16 %v2555, %v2555
  %v2590 = vpack.c.b16 %v2556, %v2556
  %v2591 = vpack.c.b16 %v2557, %v2557
  %v2592 = vpack.c.b16 %v2558, %v2558
  %v2593 = vpack.c.b16 %v2559, %v2559
  %v2594 = vpack.c.b16 %v2560, %v2560
  %v2595 = vpack.c.b16 %v2561, %v2561
  %v2596 = vpack.c.b16 %v2562, %v2562
  %v2597 = vpack.c.b16 %v2563, %v2563
  %v2598 = vpack.c.b16 %v2564, %v2564
  %v2599 = vpack.c.b16 %v2565, %v2565
  %v2600 = vpack.c.b16 %v2566, %v2566
  %v2601 = vpack.c.b16 %v2567, %v2567
  %v2602 = vpack.c.b16 %v2568, %v2568
  %v2603 = vpack.c.b16 %v2569, %v2569
  %v2604 = vpack.c.b16 %v2570, %v2570
  %v2605 = vpack.c.b16 %v2571, %v2571
  %v2606 = vpack.c.b16 %v2572, %v2572
  %v2607 = vpack.c.b16 %v2573, %v2573
  %v2608 = vpack.c.b16 %v2574, %v2574
  %v2609 = vpack.c.b16 %v2575, %v2575
  %v2610 = vpack.c.b16 %v2576, %v2576
  %v2611 = vpack.c.b16 %v2577, %v2577
  %v2612 = vpack.c.b16 %v2578, %v2578
  %v2613 = vpack.c.b16 %v2579, %v2579
  %v2614 = vpack.c.b16 %v2580, %v2580
  %v2615 = vpack.c.b16 %v2581, %v2581
  %v2616 = vpack.c.b16 %v2582, %v2582
  %2651 = vst [vmem:[%s6] sm:$0xf] %v2583
  %2652 = vst [vmem:[%s6 + $0x4] sm:$0x1] %v2584
  %2653 = vst [vmem:[%s6 + $0x8] sm:$0xf] %v2585
  %2654 = vst [vmem:[%s6 + $0xc] sm:$0x1] %v2586
  %2655 = vst [vmem:[%s6 + $0x10] sm:$0xf] %v2587
  %2656 = vst [vmem:[%s6 + $0x14] sm:$0x1] %v2588
  %2657 = vst [vmem:[%s6 + $0x18] sm:$0xf] %v2589
  %2658 = vst [vmem:[%s6 + $0x1c] sm:$0x1] %v2590
  %2659 = vst [vmem:[%s6 + $0x20] sm:$0xf] %v2591
  %2660 = vst [vmem:[%s6 + $0x24] sm:$0x1] %v2592
  %2661 = vst [vmem:[%s6 + $0x28] sm:$0xf] %v2593
  %2662 = vst [vmem:[%s6 + $0x2c] sm:$0x1] %v2594
  %2663 = vst [vmem:[%s6 + $0x30] sm:$0xf] %v2595
  %2664 = vst [vmem:[%s6 + $0x34] sm:$0x1] %v2596
  %2665 = vst [vmem:[%s6 + $0x38] sm:$0xf] %v2597
  %2666 = vst [vmem:[%s6 + $0x3c] sm:$0x1] %v2598
  %2667 = vst [vmem:[%s6 + $0x40] sm:$0xf] %v2599
  %2668 = vst [vmem:[%s6 + $0x44] sm:$0x1] %v2600
  %2669 = vst [vmem:[%s6 + $0x48] sm:$0xf] %v2583
  %2670 = vst [vmem:[%s6 + $0x4c] sm:$0x1] %v2584
  %2671 = vst [vmem:[%s6 + $0x50] sm:$0xf] %v2583
  %2672 = vst [vmem:[%s6 + $0x54] sm:$0x1] %v2584
  %2673 = vst [vmem:[%s6 + $0x58] sm:$0xf] %v2601
  %2674 = vst [vmem:[%s6 + $0x5c] sm:$0x1] %v2602
  %2675 = vst [vmem:[%s6 + $0x60] sm:$0xf] %v2603
  %2676 = vst [vmem:[%s6 + $0x64] sm:$0x1] %v2604
  %2677 = vst [vmem:[%s6 + $0x68] sm:$0xf] %v2605
  %2678 = vst [vmem:[%s6 + $0x6c] sm:$0x1] %v2606
  %2679 = vst [vmem:[%s6 + $0x70] sm:$0xf] %v2607
  %2680 = vst [vmem:[%s6 + $0x74] sm:$0x1] %v2608
  %2681 = vst [vmem:[%s6 + $0x78] sm:$0xf] %v2609
  %2682 = vst [vmem:[%s6 + $0x7c] sm:$0x1] %v2610
  %2683 = vst [vmem:[%s6 + $0x80] sm:$0xf] %v2611
  %2684 = vst [vmem:[%s6 + $0x84] sm:$0x1] %v2612
  %2685 = vst [vmem:[%s6 + $0x88] sm:$0xf] %v2613
  %2686 = vst [vmem:[%s6 + $0x8c] sm:$0x1] %v2614
  %2687 = vst [vmem:[%s6 + $0x90] sm:$0xf] %v2615
  %2688 = vst [vmem:[%s6 + $0x94] sm:$0x1] %v2616
  %2689 = vst [vmem:[%s6 + $0x98] sm:$0xf] %v2583
  %2690 = vst [vmem:[%s6 + $0x9c] sm:$0x1] %v2584
  // Predicated region
  $region22: #{conv_group_forward.5} parent=0 // pred_check
    _
  $region23: #{conv_group_forward.5} parent=0 // pred_check_branch
    %2692 = sbr.rel (0) target = $region25
  $region24: #{conv_group_forward.5} parent=0 // pred_region
    _
  $region25: #{conv_group_forward.5} parent=0 // pred_fallthru
    _
  // Predicated region
  $region26: #{conv_group_forward.5} parent=0 // pred_check
    _
  $region27: #{conv_group_forward.5} parent=0 // pred_check_branch
    %2694 = sbr.rel (0) target = $region29
  $region28: #{conv_group_forward.5} parent=0 // pred_region
    _
  $region29: #{conv_group_forward.5} parent=0 // pred_fallthru
    _
  // Predicated region
  $region30: #{conv_group_forward.5} parent=0 // pred_check
    _
  $region31: #{conv_group_forward.5} parent=0 // pred_check_branch
    %2696 = sbr.rel (0) target = $region33
  $region32: #{conv_group_forward.5} parent=0 // pred_region
    _
  $region33: #{conv_group_forward.5} parent=0 // pred_fallthru
    _
  // Predicated region
  $region34: #{conv_group_forward.5} parent=0 // pred_check
    _
  $region35: #{conv_group_forward.5} parent=0 // pred_check_branch
    %2698 = sbr.rel (0) target = $region37
  $region36: #{conv_group_forward.5} parent=0 // pred_region
    _
  $region37: #{conv_group_forward.5} parent=0 // pred_fallthru
    _

// kernel: conv_group_forward.7
$region0: #{conv_group_forward.7}
  #allocation0 [shape = 'u32[]', space=smem, size = 0x4, offset = 0x4, fixed_abs, tag = 'smem constant byte address 0x4 - core index']
  #allocation1 [shape = 'u32[144,128]{1,0:T(1,128)}', space=vmem, size = 0x12000, scoped, tag = 'internal scratch']
  %s0 = inlined_call_operand.vmem [shape: bf16[2,10,10,128], index: 0, kind: input, shape index: {}]
  %s1 = inlined_call_operand.vmem [shape: bf16[1152,128], index: 1, kind: input, shape index: {}]
  %s2 = inlined_call_operand.vmem [shape: f32[2,8,8,128], index: 2, kind: input, shape index: {}]
  %s3 = inlined_call_operand.vmem [shape: f32[2,8,8,128], index: 3, kind: output, shape index: {}]
  %s4 = sld [smem:[#allocation0]]
  $region22: #{conv_group_forward.7} parent=0
    _
  %s6 = ssub.s32 1, %s4
  %s7 = scalar_select 0, %s6, %s4
  // Predicated region
  $region2: #{conv_group_forward.7} parent=0 // pred_check
    _
  $region3: #{conv_group_forward.7} parent=0 // pred_check_branch
    %9 = sbr.rel (0) target = $region5
  $region4: #{conv_group_forward.7} parent=0 // pred_region
    _
  $region5: #{conv_group_forward.7} parent=0 // pred_fallthru
    _
  // Predicated region
  $region6: #{conv_group_forward.7} parent=0 // pred_check
    _
  $region7: #{conv_group_forward.7} parent=0 // pred_check_branch
    %11 = sbr.rel (0) target = $region9
  $region8: #{conv_group_forward.7} parent=0 // pred_region
    _
  $region9: #{conv_group_forward.7} parent=0 // pred_fallthru
    _
  // Predicated region
  $region10: #{conv_group_forward.7} parent=0 // pred_check
    _
  $region11: #{conv_group_forward.7} parent=0 // pred_check_branch
    %13 = sbr.rel (0) target = $region13
  $region12: #{conv_group_forward.7} parent=0 // pred_region
    _
  $region13: #{conv_group_forward.7} parent=0 // pred_fallthru
    _
  %v15 = vld [vmem:[%s0] sm:$0xf]
  %v16 = vld [vmem:[%s0 + $0x4] sm:$0x1]
  %v17 = vld [vmem:[%s0 + $0x8] sm:$0xf]
  %v18 = vld [vmem:[%s0 + $0xc] sm:$0x1]
  %v19 = vld [vmem:[%s0 + $0x10] sm:$0xf]
  %v20 = vld [vmem:[%s0 + $0x14] sm:$0x1]
  %v21 = vld [vmem:[%s0 + $0x18] sm:$0xf]
  %v22 = vld [vmem:[%s0 + $0x1c] sm:$0x1]
  %v23 = vld [vmem:[%s0 + $0x20] sm:$0xf]
  %v24 = vld [vmem:[%s0 + $0x24] sm:$0x1]
  %v25 = vld [vmem:[%s0 + $0x28] sm:$0xf]
  %v26 = vld [vmem:[%s0 + $0x2c] sm:$0x1]
  %v27 = vld [vmem:[%s0 + $0x30] sm:$0xf]
  %v28 = vld [vmem:[%s0 + $0x34] sm:$0x1]
  %v29 = vld [vmem:[%s0 + $0x38] sm:$0xf]
  %v30 = vld [vmem:[%s0 + $0x3c] sm:$0x1]
  %v31 = vld [vmem:[%s0 + $0x40] sm:$0xf]
  %v32 = vld [vmem:[%s0 + $0x44] sm:$0x1]
  %v33 = vld [vmem:[%s0 + $0x48] sm:$0xf]
  %v34 = vld [vmem:[%s0 + $0x4c] sm:$0x1]
  %v35 = vld [vmem:[%s0 + $0x50] sm:$0xf]
  %v36 = vld [vmem:[%s0 + $0x54] sm:$0x1]
  %v37 = vld [vmem:[%s0 + $0x58] sm:$0xf]
  %v38 = vld [vmem:[%s0 + $0x5c] sm:$0x1]
  %v39 = vld [vmem:[%s0 + $0x60] sm:$0xf]
  %v40 = vld [vmem:[%s0 + $0x64] sm:$0x1]
  %v41 = vld [vmem:[%s0 + $0x68] sm:$0xf]
  %v42 = vld [vmem:[%s0 + $0x6c] sm:$0x1]
  %v43 = vld [vmem:[%s0 + $0x70] sm:$0xf]
  %v44 = vld [vmem:[%s0 + $0x74] sm:$0x1]
  %v45 = vld [vmem:[%s0 + $0x78] sm:$0xf]
  %v46 = vld [vmem:[%s0 + $0x7c] sm:$0x1]
  %v47 = vld [vmem:[%s0 + $0x80] sm:$0xf]
  %v48 = vld [vmem:[%s0 + $0x84] sm:$0x1]
  %v49 = vld [vmem:[%s0 + $0x88] sm:$0xf]
  %v50 = vld [vmem:[%s0 + $0x8c] sm:$0x1]
  %v51 = vld [vmem:[%s0 + $0x90] sm:$0xf]
  %v52 = vld [vmem:[%s0 + $0x94] sm:$0x1]
  %v53 = vld [vmem:[%s0 + $0x98] sm:$0xf]
  %v54 = vld [vmem:[%s0 + $0x9c] sm:$0x1]
  %v55 = vld [vmem:[%s1] sm:$0xf]
  %v56 = vld [vmem:[%s1 + $0x4] sm:$0xf]
  %v57 = vld [vmem:[%s1 + $0x8] sm:$0xf]
  %v58 = vld [vmem:[%s1 + $0xc] sm:$0xf]
  %v59 = vld [vmem:[%s1 + $0x10] sm:$0xf]
  %v60 = vld [vmem:[%s1 + $0x14] sm:$0xf]
  %v61 = vld [vmem:[%s1 + $0x18] sm:$0xf]
  %v62 = vld [vmem:[%s1 + $0x1c] sm:$0xf]
  %v63 = vld [vmem:[%s1 + $0x20] sm:$0xf]
  %v64 = vld [vmem:[%s1 + $0x24] sm:$0xf]
  %v65 = vld [vmem:[%s1 + $0x28] sm:$0xf]
  %v66 = vld [vmem:[%s1 + $0x2c] sm:$0xf]
  %v67 = vld [vmem:[%s1 + $0x30] sm:$0xf]
  %v68 = vld [vmem:[%s1 + $0x34] sm:$0xf]
  %v69 = vld [vmem:[%s1 + $0x38] sm:$0xf]
  %v70 = vld [vmem:[%s1 + $0x3c] sm:$0xf]
  %vm71 = vsmask.f32 3328
  %vm72 = vsmask.f32 7440
  %vm73 = vmor %vm71, %vm72
  %v75 = vshrl.u32 %v15, 16
  %v77 = vrot.slane %v75, 4
  %v78 = vshll.u32 %v15, 16
  %v80 = vrot.slane %v78, 5
  %v81 = vor.u32 %v77, %v80
  %v82 = vrot.slane %v81, 4
  %v84 = vshll.u32 %v16, 16
  %v86 = vrot.slane %v84, 5
  %v87 = vsel %vm73, %v82, %v86
  %v89 = vshrl.u32 %v17, 16
  %v91 = vrot.slane %v89, 4
  %v92 = vshll.u32 %v17, 16
  %v94 = vrot.slane %v92, 5
  %v95 = vor.u32 %v91, %v94
  %v96 = vrot.slane %v95, 4
  %v98 = vshll.u32 %v18, 16
  %v100 = vrot.slane %v98, 5
  %v101 = vsel %vm73, %v96, %v100
  %v103 = vshrl.u32 %v19, 16
  %v105 = vrot.slane %v103, 4
  %v106 = vshll.u32 %v19, 16
  %v108 = vrot.slane %v106, 5
  %v109 = vor.u32 %v105, %v108
  %v110 = vrot.slane %v109, 4
  %v112 = vshll.u32 %v20, 16
  %v114 = vrot.slane %v112, 5
  %v115 = vsel %vm73, %v110, %v114
  %v117 = vshrl.u32 %v21, 16
  %v119 = vrot.slane %v117, 4
  %v120 = vshll.u32 %v21, 16
  %v122 = vrot.slane %v120, 5
  %v123 = vor.u32 %v119, %v122
  %v124 = vrot.slane %v123, 4
  %v126 = vshll.u32 %v22, 16
  %v128 = vrot.slane %v126, 5
  %v129 = vsel %vm73, %v124, %v128
  %v131 = vshrl.u32 %v23, 16
  %v133 = vrot.slane %v131, 4
  %v134 = vshll.u32 %v23, 16
  %v136 = vrot.slane %v134, 5
  %v137 = vor.u32 %v133, %v136
  %v138 = vrot.slane %v137, 4
  %v140 = vshll.u32 %v24, 16
  %v142 = vrot.slane %v140, 5
  %v143 = vsel %vm73, %v138, %v142
  %v145 = vshrl.u32 %v25, 16
  %v147 = vrot.slane %v145, 4
  %v148 = vshll.u32 %v25, 16
  %v150 = vrot.slane %v148, 5
  %v151 = vor.u32 %v147, %v150
  %v152 = vrot.slane %v151, 4
  %v154 = vshll.u32 %v26, 16
  %v156 = vrot.slane %v154, 5
  %v157 = vsel %vm73, %v152, %v156
  %v159 = vshrl.u32 %v27, 16
  %v161 = vrot.slane %v159, 4
  %v162 = vshll.u32 %v27, 16
  %v164 = vrot.slane %v162, 5
  %v165 = vor.u32 %v161, %v164
  %v166 = vrot.slane %v165, 4
  %v168 = vshll.u32 %v28, 16
  %v170 = vrot.slane %v168, 5
  %v171 = vsel %vm73, %v166, %v170
  %v173 = vshrl.u32 %v29, 16
  %v175 = vrot.slane %v173, 4
  %v176 = vshll.u32 %v29, 16
  %v178 = vrot.slane %v176, 5
  %v179 = vor.u32 %v175, %v178
  %v180 = vrot.slane %v179, 4
  %v182 = vshll.u32 %v30, 16
  %v184 = vrot.slane %v182, 5
  %v185 = vsel %vm73, %v180, %v184
  %v187 = vshrl.u32 %v35, 16
  %v189 = vrot.slane %v187, 4
  %v190 = vshll.u32 %v35, 16
  %v192 = vrot.slane %v190, 5
  %v193 = vor.u32 %v189, %v192
  %v194 = vrot.slane %v193, 4
  %v196 = vshll.u32 %v36, 16
  %v198 = vrot.slane %v196, 5
  %v199 = vsel %vm73, %v194, %v198
  %v201 = vshrl.u32 %v37, 16
  %v203 = vrot.slane %v201, 4
  %v204 = vshll.u32 %v37, 16
  %v206 = vrot.slane %v204, 5
  %v207 = vor.u32 %v203, %v206
  %v208 = vrot.slane %v207, 4
  %v210 = vshll.u32 %v38, 16
  %v212 = vrot.slane %v210, 5
  %v213 = vsel %vm73, %v208, %v212
  %v215 = vshrl.u32 %v39, 16
  %v217 = vrot.slane %v215, 4
  %v218 = vshll.u32 %v39, 16
  %v220 = vrot.slane %v218, 5
  %v221 = vor.u32 %v217, %v220
  %v222 = vrot.slane %v221, 4
  %v224 = vshll.u32 %v40, 16
  %v226 = vrot.slane %v224, 5
  %v227 = vsel %vm73, %v222, %v226
  %v229 = vshrl.u32 %v41, 16
  %v231 = vrot.slane %v229, 4
  %v232 = vshll.u32 %v41, 16
  %v234 = vrot.slane %v232, 5
  %v235 = vor.u32 %v231, %v234
  %v236 = vrot.slane %v235, 4
  %v238 = vshll.u32 %v42, 16
  %v240 = vrot.slane %v238, 5
  %v241 = vsel %vm73, %v236, %v240
  %v243 = vshrl.u32 %v43, 16
  %v245 = vrot.slane %v243, 4
  %v246 = vshll.u32 %v43, 16
  %v248 = vrot.slane %v246, 5
  %v249 = vor.u32 %v245, %v248
  %v250 = vrot.slane %v249, 4
  %v252 = vshll.u32 %v44, 16
  %v254 = vrot.slane %v252, 5
  %v255 = vsel %vm73, %v250, %v254
  %v257 = vshrl.u32 %v45, 16
  %v259 = vrot.slane %v257, 4
  %v260 = vshll.u32 %v45, 16
  %v262 = vrot.slane %v260, 5
  %v263 = vor.u32 %v259, %v262
  %v264 = vrot.slane %v263, 4
  %v266 = vshll.u32 %v46, 16
  %v268 = vrot.slane %v266, 5
  %v269 = vsel %vm73, %v264, %v268
  %v271 = vshrl.u32 %v47, 16
  %v273 = vrot.slane %v271, 4
  %v274 = vshll.u32 %v47, 16
  %v276 = vrot.slane %v274, 5
  %v277 = vor.u32 %v273, %v276
  %v278 = vrot.slane %v277, 4
  %v280 = vshll.u32 %v48, 16
  %v282 = vrot.slane %v280, 5
  %v283 = vsel %vm73, %v278, %v282
  %v285 = vshrl.u32 %v49, 16
  %v287 = vrot.slane %v285, 4
  %v288 = vshll.u32 %v49, 16
  %v290 = vrot.slane %v288, 5
  %v291 = vor.u32 %v287, %v290
  %v292 = vrot.slane %v291, 4
  %v294 = vshll.u32 %v50, 16
  %v296 = vrot.slane %v294, 5
  %v297 = vsel %vm73, %v292, %v296
  %v298 = vld [vmem:[%s1 + $0x40] sm:$0xf]
  %v299 = vld [vmem:[%s1 + $0x44] sm:$0xf]
  %v300 = vld [vmem:[%s1 + $0x48] sm:$0xf]
  %v301 = vld [vmem:[%s1 + $0x4c] sm:$0xf]
  %v302 = vld [vmem:[%s1 + $0x50] sm:$0xf]
  %v303 = vld [vmem:[%s1 + $0x54] sm:$0xf]
  %v304 = vld [vmem:[%s1 + $0x58] sm:$0xf]
  %v305 = vld [vmem:[%s1 + $0x5c] sm:$0xf]
  %v306 = vld [vmem:[%s1 + $0x60] sm:$0xf]
  %v307 = vld [vmem:[%s1 + $0x64] sm:$0xf]
  %v308 = vld [vmem:[%s1 + $0x68] sm:$0xf]
  %v309 = vld [vmem:[%s1 + $0x6c] sm:$0xf]
  %v310 = vld [vmem:[%s1 + $0x70] sm:$0xf]
  %v311 = vld [vmem:[%s1 + $0x74] sm:$0xf]
  %v312 = vld [vmem:[%s1 + $0x78] sm:$0xf]
  %v313 = vld [vmem:[%s1 + $0x7c] sm:$0xf]
  %v314 = vunpack.c.l.b16 %v87
  %v315 = vunpack.c.l.b16 %v101
  %v316 = vunpack.c.l.b16 %v115
  %v317 = vunpack.c.l.b16 %v129
  %v318 = vunpack.c.l.b16 %v143
  %v319 = vunpack.c.l.b16 %v157
  %v320 = vunpack.c.l.b16 %v171
  %v321 = vunpack.c.l.b16 %v185
  %v322 = vunpack.c.l.b16 %v199
  %v323 = vunpack.c.l.b16 %v213
  %v324 = vunpack.c.l.b16 %v227
  %v325 = vunpack.c.l.b16 %v241
  %v326 = vunpack.c.l.b16 %v255
  %v327 = vunpack.c.l.b16 %v269
  %v328 = vunpack.c.l.b16 %v283
  %v329 = vunpack.c.l.b16 %v297
  %v330 = vpack.c.b16 %v315, %v314
  %v331 = vpack.c.b16 %v317, %v316
  %v332 = vpack.c.b16 %v319, %v318
  %v333 = vpack.c.b16 %v321, %v320
  %v334 = vpack.c.b16 %v323, %v322
  %v335 = vpack.c.b16 %v325, %v324
  %v336 = vpack.c.b16 %v327, %v326
  %v337 = vpack.c.b16 %v329, %v328
  %v362 = vunpack.c.l.b16 %v298
  %v363 = vunpack.c.l.b16 %v299
  %v364 = vunpack.c.l.b16 %v300
  %v365 = vunpack.c.l.b16 %v301
  %v366 = vunpack.c.l.b16 %v302
  %v367 = vunpack.c.l.b16 %v303
  %v368 = vunpack.c.l.b16 %v304
  %v369 = vunpack.c.l.b16 %v305
  %v370 = vunpack.c.l.b16 %v306
  %v371 = vunpack.c.l.b16 %v307
  %v372 = vunpack.c.l.b16 %v308
  %v373 = vunpack.c.l.b16 %v309
  %v374 = vunpack.c.l.b16 %v310
  %v375 = vunpack.c.l.b16 %v311
  %v376 = vunpack.c.l.b16 %v312
  %v377 = vunpack.c.l.b16 %v313
  %v378 = vpack.c.b16 %v363, %v362
  %v379 = vpack.c.b16 %v365, %v364
  %v380 = vpack.c.b16 %v367, %v366
  %v381 = vpack.c.b16 %v369, %v368
  %v382 = vpack.c.b16 %v371, %v370
  %v383 = vpack.c.b16 %v373, %v372
  %v384 = vpack.c.b16 %v375, %v374
  %v385 = vpack.c.b16 %v377, %v376
  %394 = vmatprep.subr.bf16.mxu0 0
  %395 = vmatpush1.bf16.msra.mxu0 %v378
  %396 = vmatprep.subr.bf16.mxu0 0
  %397 = vmatpush1.bf16.msra.mxu0 %v379
  %398 = vmatprep.subr.bf16.mxu0 0
  %399 = vmatpush1.bf16.msra.mxu0 %v380
  %400 = vmatprep.subr.bf16.mxu0 0
  %401 = vmatpush1.bf16.msra.mxu0 %v381
  %402 = vmatprep.subr.bf16.mxu0 0
  %403 = vmatpush1.bf16.msra.mxu0 %v382
  %404 = vmatprep.subr.bf16.mxu0 0
  %405 = vmatpush1.bf16.msra.mxu0 %v383
  %406 = vmatprep.subr.bf16.mxu0 0
  %407 = vmatpush1.bf16.msra.mxu0 %v384
  %408 = vmatprep.subr.bf16.mxu0 0
  %409 = vmatpush1.bf16.msra.mxu0 %v385
  %410 = vmatprep.subr.bf16.mxu0 0
  %411 = vmatpush1.bf16.msra.mxu0 0
  %412 = vmatprep.subr.bf16.mxu0 0
  %413 = vmatpush1.bf16.msra.mxu0 0
  %414 = vmatprep.subr.bf16.mxu0 0
  %415 = vmatpush1.bf16.msra.mxu0 0
  %416 = vmatprep.subr.bf16.mxu0 0
  %417 = vmatpush1.bf16.msra.mxu0 0
  %418 = vmatprep.subr.bf16.mxu0 0
  %419 = vmatpush1.bf16.msra.mxu0 0
  %420 = vmatprep.subr.bf16.mxu0 0
  %421 = vmatpush1.bf16.msra.mxu0 0
  %422 = vmatprep.subr.bf16.mxu0 0
  %423 = vmatpush1.bf16.msra.mxu0 0
  %424 = vmatprep.subr.bf16.mxu0 0
  %425 = vmatpush1.bf16.msra.mxu0 0
  %426 = vmatprep.mubr.bf16.mxu0 0
  %427 = vmatmul.mubr.bf16.gmra.mrb[0].mxu0 %v330
  %v428 = vpop.f32.mrb[0].mxu0
  %v429 = vadd.f32 0.0, %v428
  %v430 = vpop.f32.mrb[0].mxu0
  %v431 = vpop.f32.mrb[0].mxu0
  %v432 = vadd.f32 0.0, %v431
  %v433 = vpop.f32.mrb[0].mxu0
  %434 = vmatprep.mubr.bf16.mxu0 0
  %435 = vmatmul.mubr.bf16.gmra.mrb[0].mxu0 %v331
  %v436 = vpop.f32.mrb[0].mxu0
  %v437 = vadd.f32 0.0, %v436
  %v438 = vpop.f32.mrb[0].mxu0
  %v439 = vpop.f32.mrb[0].mxu0
  %v440 = vadd.f32 0.0, %v439
  %v441 = vpop.f32.mrb[0].mxu0
  %442 = vmatprep.mubr.bf16.mxu0 0
  %443 = vmatmul.mubr.bf16.gmra.mrb[0].mxu0 %v332
  %v444 = vpop.f32.mrb[0].mxu0
  %v445 = vadd.f32 0.0, %v444
  %v446 = vpop.f32.mrb[0].mxu0
  %v447 = vpop.f32.mrb[0].mxu0
  %v448 = vadd.f32 0.0, %v447
  %v449 = vpop.f32.mrb[0].mxu0
  %450 = vmatprep.mubr.bf16.mxu0 0
  %451 = vmatmul.mubr.bf16.gmra.mrb[0].mxu0 %v333
  %v452 = vpop.f32.mrb[0].mxu0
  %v453 = vadd.f32 0.0, %v452
  %v454 = vpop.f32.mrb[0].mxu0
  %v455 = vpop.f32.mrb[0].mxu0
  %v456 = vadd.f32 0.0, %v455
  %v457 = vpop.f32.mrb[0].mxu0
  %458 = vmatprep.mubr.bf16.mxu0 0
  %459 = vmatmul.mubr.bf16.gmra.mrb[0].mxu0 %v334
  %v460 = vpop.f32.mrb[0].mxu0
  %v461 = vadd.f32 0.0, %v460
  %v462 = vpop.f32.mrb[0].mxu0
  %v463 = vpop.f32.mrb[0].mxu0
  %v464 = vadd.f32 0.0, %v463
  %v465 = vpop.f32.mrb[0].mxu0
  %466 = vmatprep.mubr.bf16.mxu0 0
  %467 = vmatmul.mubr.bf16.gmra.mrb[0].mxu0 %v335
  %v468 = vpop.f32.mrb[0].mxu0
  %v469 = vadd.f32 0.0, %v468
  %v470 = vpop.f32.mrb[0].mxu0
  %v471 = vpop.f32.mrb[0].mxu0
  %v472 = vadd.f32 0.0, %v471
  %v473 = vpop.f32.mrb[0].mxu0
  %474 = vmatprep.mubr.bf16.mxu0 0
  %475 = vmatmul.mubr.bf16.gmra.mrb[0].mxu0 %v336
  %v476 = vpop.f32.mrb[0].mxu0
  %v477 = vadd.f32 0.0, %v476
  %v478 = vpop.f32.mrb[0].mxu0
  %v479 = vpop.f32.mrb[0].mxu0
  %v480 = vadd.f32 0.0, %v479
  %v481 = vpop.f32.mrb[0].mxu0
  %482 = vmatprep.mubr.bf16.mxu0 0
  %483 = vmatmul.mubr.bf16.gmra.mrb[0].mxu0 %v337
  %v484 = vpop.f32.mrb[0].mxu0
  %v485 = vadd.f32 0.0, %v484
  %v486 = vpop.f32.mrb[0].mxu0
  %v487 = vpop.f32.mrb[0].mxu0
  %v488 = vadd.f32 0.0, %v487
  %v489 = vpop.f32.mrb[0].mxu0
  %490 = vdwg.mxu0
  %v507 = vunpack.c.l.b16 %v15
  %v508 = vunpack.c.l.b16 %v17
  %v509 = vunpack.c.l.b16 %v19
  %v510 = vunpack.c.l.b16 %v21
  %v511 = vunpack.c.l.b16 %v23
  %v512 = vunpack.c.l.b16 %v25
  %v513 = vunpack.c.l.b16 %v27
  %v514 = vunpack.c.l.b16 %v29
  %v515 = vunpack.c.l.b16 %v35
  %v516 = vunpack.c.l.b16 %v37
  %v517 = vunpack.c.l.b16 %v39
  %v518 = vunpack.c.l.b16 %v41
  %v519 = vunpack.c.l.b16 %v43
  %v520 = vunpack.c.l.b16 %v45
  %v521 = vunpack.c.l.b16 %v47
  %v522 = vunpack.c.l.b16 %v49
  %v523 = vpack.c.b16 %v508, %v507
  %v524 = vpack.c.b16 %v510, %v509
  %v525 = vpack.c.b16 %v512, %v511
  %v526 = vpack.c.b16 %v514, %v513
  %v527 = vpack.c.b16 %v516, %v515
  %v528 = vpack.c.b16 %v518, %v517
  %v529 = vpack.c.b16 %v520, %v519
  %v530 = vpack.c.b16 %v522, %v521
  %v555 = vunpack.c.l.b16 %v55
  %v556 = vunpack.c.l.b16 %v56
  %v557 = vunpack.c.l.b16 %v57
  %v558 = vunpack.c.l.b16 %v58
  %v559 = vunpack.c.l.b16 %v59
  %v560 = vunpack.c.l.b16 %v60
  %v561 = vunpack.c.l.b16 %v61
  %v562 = vunpack.c.l.b16 %v62
  %v563 = vunpack.c.l.b16 %v63
  %v564 = vunpack.c.l.b16 %v64
  %v565 = vunpack.c.l.b16 %v65
  %v566 = vunpack.c.l.b16 %v66
  %v567 = vunpack.c.l.b16 %v67
  %v568 = vunpack.c.l.b16 %v68
  %v569 = vunpack.c.l.b16 %v69
  %v570 = vunpack.c.l.b16 %v70
  %v571 = vpack.c.b16 %v556, %v555
  %v572 = vpack.c.b16 %v558, %v557
  %v573 = vpack.c.b16 %v560, %v559
  %v574 = vpack.c.b16 %v562, %v561
  %v575 = vpack.c.b16 %v564, %v563
  %v576 = vpack.c.b16 %v566, %v565
  %v577 = vpack.c.b16 %v568, %v567
  %v578 = vpack.c.b16 %v570, %v569
  %587 = vmatprep.subr.bf16.mxu0 0
  %588 = vmatpush1.bf16.msra.mxu0 %v571
  %589 = vmatprep.subr.bf16.mxu0 0
  %590 = vmatpush1.bf16.msra.mxu0 %v572
  %591 = vmatprep.subr.bf16.mxu0 0
  %592 = vmatpush1.bf16.msra.mxu0 %v573
  %593 = vmatprep.subr.bf16.mxu0 0
  %594 = vmatpush1.bf16.msra.mxu0 %v574
  %595 = vmatprep.subr.bf16.mxu0 0
  %596 = vmatpush1.bf16.msra.mxu0 %v575
  %597 = vmatprep.subr.bf16.mxu0 0
  %598 = vmatpush1.bf16.msra.mxu0 %v576
  %599 = vmatprep.subr.bf16.mxu0 0
  %600 = vmatpush1.bf16.msra.mxu0 %v577
  %601 = vmatprep.subr.bf16.mxu0 0
  %602 = vmatpush1.bf16.msra.mxu0 %v578
  %603 = vmatprep.subr.bf16.mxu0 0
  %604 = vmatpush1.bf16.msra.mxu0 0
  %605 = vmatprep.subr.bf16.mxu0 0
  %606 = vmatpush1.bf16.msra.mxu0 0
  %607 = vmatprep.subr.bf16.mxu0 0
  %608 = vmatpush1.bf16.msra.mxu0 0
  %609 = vmatprep.subr.bf16.mxu0 0
  %610 = vmatpush1.bf16.msra.mxu0 0
  %611 = vmatprep.subr.bf16.mxu0 0
  %612 = vmatpush1.bf16.msra.mxu0 0
  %613 = vmatprep.subr.bf16.mxu0 0
  %614 = vmatpush1.bf16.msra.mxu0 0
  %615 = vmatprep.subr.bf16.mxu0 0
  %616 = vmatpush1.bf16.msra.mxu0 0
  %617 = vmatprep.subr.bf16.mxu0 0
  %618 = vmatpush1.bf16.msra.mxu0 0
  %619 = vmatprep.mubr.bf16.mxu0 0
  %620 = vmatmul.mubr.bf16.gmra.mrb[0].mxu0 %v523
  %v621 = vpop.f32.mrb[0].mxu0
  %v622 = vadd.f32 %v429, %v621
  %v623 = vpop.f32.mrb[0].mxu0
  %v624 = vpop.f32.mrb[0].mxu0
  %v625 = vadd.f32 %v432, %v624
  %v626 = vpop.f32.mrb[0].mxu0
  %627 = vmatprep.mubr.bf16.mxu0 0
  %628 = vmatmul.mubr.bf16.gmra.mrb[0].mxu0 %v524
  %v629 = vpop.f32.mrb[0].mxu0
  %v630 = vadd.f32 %v437, %v629
  %v631 = vpop.f32.mrb[0].mxu0
  %v632 = vpop.f32.mrb[0].mxu0
  %v633 = vadd.f32 %v440, %v632
  %v634 = vpop.f32.mrb[0].mxu0
  %635 = vmatprep.mubr.bf16.mxu0 0
  %636 = vmatmul.mubr.bf16.gmra.mrb[0].mxu0 %v525
  %v637 = vpop.f32.mrb[0].mxu0
  %v638 = vadd.f32 %v445, %v637
  %v639 = vpop.f32.mrb[0].mxu0
  %v640 = vpop.f32.mrb[0].mxu0
  %v641 = vadd.f32 %v448, %v640
  %v642 = vpop.f32.mrb[0].mxu0
  %643 = vmatprep.mubr.bf16.mxu0 0
  %644 = vmatmul.mubr.bf16.gmra.mrb[0].mxu0 %v526
  %v645 = vpop.f32.mrb[0].mxu0
  %v646 = vadd.f32 %v453, %v645
  %v647 = vpop.f32.mrb[0].mxu0
  %v648 = vpop.f32.mrb[0].mxu0
  %v649 = vadd.f32 %v456, %v648
  %v650 = vpop.f32.mrb[0].mxu0
  %651 = vmatprep.mubr.bf16.mxu0 0
  %652 = vmatmul.mubr.bf16.gmra.mrb[0].mxu0 %v527
  %v653 = vpop.f32.mrb[0].mxu0
  %v654 = vadd.f32 %v461, %v653
  %v655 = vpop.f32.mrb[0].mxu0
  %v656 = vpop.f32.mrb[0].mxu0
  %v657 = vadd.f32 %v464, %v656
  %v658 = vpop.f32.mrb[0].mxu0
  %659 = vmatprep.mubr.bf16.mxu0 0
  %660 = vmatmul.mubr.bf16.gmra.mrb[0].mxu0 %v528
  %v661 = vpop.f32.mrb[0].mxu0
  %v662 = vadd.f32 %v469, %v661
  %v663 = vpop.f32.mrb[0].mxu0
  %v664 = vpop.f32.mrb[0].mxu0
  %v665 = vadd.f32 %v472, %v664
  %v666 = vpop.f32.mrb[0].mxu0
  %667 = vmatprep.mubr.bf16.mxu0 0
  %668 = vmatmul.mubr.bf16.gmra.mrb[0].mxu0 %v529
  %v669 = vpop.f32.mrb[0].mxu0
  %v670 = vadd.f32 %v477, %v669
  %v671 = vpop.f32.mrb[0].mxu0
  %v672 = vpop.f32.mrb[0].mxu0
  %v673 = vadd.f32 %v480, %v672
  %v674 = vpop.f32.mrb[0].mxu0
  %675 = vmatprep.mubr.bf16.mxu0 0
  %676 = vmatmul.mubr.bf16.gmra.mrb[0].mxu0 %v530
  %v677 = vpop.f32.mrb[0].mxu0
  %v678 = vadd.f32 %v485, %v677
  %v679 = vpop.f32.mrb[0].mxu0
  %v680 = vpop.f32.mrb[0].mxu0
  %v681 = vadd.f32 %v488, %v680
  %v682 = vpop.f32.mrb[0].mxu0
  %683 = vdwg.mxu0
  %vm700 = vcmask 1042432
  %vm701 = vcmask 1046532
  %vm702 = vmor %vm700, %vm701
  %v703 = vrot.slane %v15, 5
  %v704 = vrot.slane %v703, 4
  %v705 = vrot.slane %v16, 5
  %v706 = vsel %vm702, %v704, %v705
  %v707 = vrot.slane %v17, 5
  %v708 = vrot.slane %v707, 4
  %v709 = vrot.slane %v18, 5
  %v710 = vsel %vm702, %v708, %v709
  %v711 = vrot.slane %v19, 5
  %v712 = vrot.slane %v711, 4
  %v713 = vrot.slane %v20, 5
  %v714 = vsel %vm702, %v712, %v713
  %v715 = vrot.slane %v21, 5
  %v716 = vrot.slane %v715, 4
  %v717 = vrot.slane %v22, 5
  %v718 = vsel %vm702, %v716, %v717
  %v719 = vrot.slane %v23, 5
  %v720 = vrot.slane %v719, 4
  %v721 = vrot.slane %v24, 5
  %v722 = vsel %vm702, %v720, %v721
  %v723 = vrot.slane %v25, 5
  %v724 = vrot.slane %v723, 4
  %v725 = vrot.slane %v26, 5
  %v726 = vsel %vm702, %v724, %v725
  %v727 = vrot.slane %v27, 5
  %v728 = vrot.slane %v727, 4
  %v729 = vrot.slane %v28, 5
  %v730 = vsel %vm702, %v728, %v729
  %v731 = vrot.slane %v29, 5
  %v732 = vrot.slane %v731, 4
  %v733 = vrot.slane %v30, 5
  %v734 = vsel %vm702, %v732, %v733
  %v735 = vrot.slane %v35, 5
  %v736 = vrot.slane %v735, 4
  %v737 = vrot.slane %v36, 5
  %v738 = vsel %vm702, %v736, %v737
  %v739 = vrot.slane %v37, 5
  %v740 = vrot.slane %v739, 4
  %v741 = vrot.slane %v38, 5
  %v742 = vsel %vm702, %v740, %v741
  %v743 = vrot.slane %v39, 5
  %v744 = vrot.slane %v743, 4
  %v745 = vrot.slane %v40, 5
  %v746 = vsel %vm702, %v744, %v745
  %v747 = vrot.slane %v41, 5
  %v748 = vrot.slane %v747, 4
  %v749 = vrot.slane %v42, 5
  %v750 = vsel %vm702, %v748, %v749
  %v751 = vrot.slane %v43, 5
  %v752 = vrot.slane %v751, 4
  %v753 = vrot.slane %v44, 5
  %v754 = vsel %vm702, %v752, %v753
  %v755 = vrot.slane %v45, 5
  %v756 = vrot.slane %v755, 4
  %v757 = vrot.slane %v46, 5
  %v758 = vsel %vm702, %v756, %v757
  %v759 = vrot.slane %v47, 5
  %v760 = vrot.slane %v759, 4
  %v761 = vrot.slane %v48, 5
  %v762 = vsel %vm702, %v760, %v761
  %v763 = vrot.slane %v49, 5
  %v764 = vrot.slane %v763, 4
  %v765 = vrot.slane %v50, 5
  %v766 = vsel %vm702, %v764, %v765
  %v767 = vld [vmem:[%s1 + $0x80] sm:$0xf]
  %v768 = vld [vmem:[%s1 + $0x84] sm:$0xf]
  %v769 = vld [vmem:[%s1 + $0x88] sm:$0xf]
  %v770 = vld [vmem:[%s1 + $0x8c] sm:$0xf]
  %v771 = vld [vmem:[%s1 + $0x90] sm:$0xf]
  %v772 = vld [vmem:[%s1 + $0x94] sm:$0xf]
  %v773 = vld [vmem:[%s1 + $0x98] sm:$0xf]
  %v774 = vld [vmem:[%s1 + $0x9c] sm:$0xf]
  %v775 = vld [vmem:[%s1 + $0xa0] sm:$0xf]
  %v776 = vld [vmem:[%s1 + $0xa4] sm:$0xf]
  %v777 = vld [vmem:[%s1 + $0xa8] sm:$0xf]
  %v778 = vld [vmem:[%s1 + $0xac] sm:$0xf]
  %v779 = vld [vmem:[%s1 + $0xb0] sm:$0xf]
  %v780 = vld [vmem:[%s1 + $0xb4] sm:$0xf]
  %v781 = vld [vmem:[%s1 + $0xb8] sm:$0xf]
  %v782 = vld [vmem:[%s1 + $0xbc] sm:$0xf]
  %v783 = vunpack.c.l.b16 %v706
  %v784 = vunpack.c.l.b16 %v710
  %v785 = vunpack.c.l.b16 %v714
  %v786 = vunpack.c.l.b16 %v718
  %v787 = vunpack.c.l.b16 %v722
  %v788 = vunpack.c.l.b16 %v726
  %v789 = vunpack.c.l.b16 %v730
  %v790 = vunpack.c.l.b16 %v734
  %v791 = vunpack.c.l.b16 %v738
  %v792 = vunpack.c.l.b16 %v742
  %v793 = vunpack.c.l.b16 %v746
  %v794 = vunpack.c.l.b16 %v750
  %v795 = vunpack.c.l.b16 %v754
  %v796 = vunpack.c.l.b16 %v758
  %v797 = vunpack.c.l.b16 %v762
  %v798 = vunpack.c.l.b16 %v766
  %v799 = vpack.c.b16 %v784, %v783
  %v800 = vpack.c.b16 %v786, %v785
  %v801 = vpack.c.b16 %v788, %v787
  %v802 = vpack.c.b16 %v790, %v789
  %v803 = vpack.c.b16 %v792, %v791
  %v804 = vpack.c.b16 %v794, %v793
  %v805 = vpack.c.b16 %v796, %v795
  %v806 = vpack.c.b16 %v798, %v797
  %v831 = vunpack.c.l.b16 %v767
  %v832 = vunpack.c.l.b16 %v768
  %v833 = vunpack.c.l.b16 %v769
  %v834 = vunpack.c.l.b16 %v770
  %v835 = vunpack.c.l.b16 %v771
  %v836 = vunpack.c.l.b16 %v772
  %v837 = vunpack.c.l.b16 %v773
  %v838 = vunpack.c.l.b16 %v774
  %v839 = vunpack.c.l.b16 %v775
  %v840 = vunpack.c.l.b16 %v776
  %v841 = vunpack.c.l.b16 %v777
  %v842 = vunpack.c.l.b16 %v778
  %v843 = vunpack.c.l.b16 %v779
  %v844 = vunpack.c.l.b16 %v780
  %v845 = vunpack.c.l.b16 %v781
  %v846 = vunpack.c.l.b16 %v782
  %v847 = vpack.c.b16 %v832, %v831
  %v848 = vpack.c.b16 %v834, %v833
  %v849 = vpack.c.b16 %v836, %v835
  %v850 = vpack.c.b16 %v838, %v837
  %v851 = vpack.c.b16 %v840, %v839
  %v852 = vpack.c.b16 %v842, %v841
  %v853 = vpack.c.b16 %v844, %v843
  %v854 = vpack.c.b16 %v846, %v845
  %863 = vmatprep.subr.bf16.mxu0 0
  %864 = vmatpush1.bf16.msra.mxu0 %v847
  %865 = vmatprep.subr.bf16.mxu0 0
  %866 = vmatpush1.bf16.msra.mxu0 %v848
  %867 = vmatprep.subr.bf16.mxu0 0
  %868 = vmatpush1.bf16.msra.mxu0 %v849
  %869 = vmatprep.subr.bf16.mxu0 0
  %870 = vmatpush1.bf16.msra.mxu0 %v850
  %871 = vmatprep.subr.bf16.mxu0 0
  %872 = vmatpush1.bf16.msra.mxu0 %v851
  %873 = vmatprep.subr.bf16.mxu0 0
  %874 = vmatpush1.bf16.msra.mxu0 %v852
  %875 = vmatprep.subr.bf16.mxu0 0
  %876 = vmatpush1.bf16.msra.mxu0 %v853
  %877 = vmatprep.subr.bf16.mxu0 0
  %878 = vmatpush1.bf16.msra.mxu0 %v854
  %879 = vmatprep.subr.bf16.mxu0 0
  %880 = vmatpush1.bf16.msra.mxu0 0
  %881 = vmatprep.subr.bf16.mxu0 0
  %882 = vmatpush1.bf16.msra.mxu0 0
  %883 = vmatprep.subr.bf16.mxu0 0
  %884 = vmatpush1.bf16.msra.mxu0 0
  %885 = vmatprep.subr.bf16.mxu0 0
  %886 = vmatpush1.bf16.msra.mxu0 0
  %887 = vmatprep.subr.bf16.mxu0 0
  %888 = vmatpush1.bf16.msra.mxu0 0
  %889 = vmatprep.subr.bf16.mxu0 0
  %890 = vmatpush1.bf16.msra.mxu0 0
  %891 = vmatprep.subr.bf16.mxu0 0
  %892 = vmatpush1.bf16.msra.mxu0 0
  %893 = vmatprep.subr.bf16.mxu0 0
  %894 = vmatpush1.bf16.msra.mxu0 0
  %895 = vmatprep.mubr.bf16.mxu0 0
  %896 = vmatmul.mubr.bf16.gmra.mrb[0].mxu0 %v799
  %v897 = vpop.f32.mrb[0].mxu0
  %v898 = vadd.f32 0.0, %v897
  %v899 = vpop.f32.mrb[0].mxu0
  %v900 = vpop.f32.mrb[0].mxu0
  %v901 = vadd.f32 0.0, %v900
  %v902 = vpop.f32.mrb[0].mxu0
  %903 = vmatprep.mubr.bf16.mxu0 0
  %904 = vmatmul.mubr.bf16.gmra.mrb[0].mxu0 %v800
  %v905 = vpop.f32.mrb[0].mxu0
  %v906 = vadd.f32 0.0, %v905
  %v907 = vpop.f32.mrb[0].mxu0
  %v908 = vpop.f32.mrb[0].mxu0
  %v909 = vadd.f32 0.0, %v908
  %v910 = vpop.f32.mrb[0].mxu0
  %911 = vmatprep.mubr.bf16.mxu0 0
  %912 = vmatmul.mubr.bf16.gmra.mrb[0].mxu0 %v801
  %v913 = vpop.f32.mrb[0].mxu0
  %v914 = vadd.f32 0.0, %v913
  %v915 = vpop.f32.mrb[0].mxu0
  %v916 = vpop.f32.mrb[0].mxu0
  %v917 = vadd.f32 0.0, %v916
  %v918 = vpop.f32.mrb[0].mxu0
  %919 = vmatprep.mubr.bf16.mxu0 0
  %920 = vmatmul.mubr.bf16.gmra.mrb[0].mxu0 %v802
  %v921 = vpop.f32.mrb[0].mxu0
  %v922 = vadd.f32 0.0, %v921
  %v923 = vpop.f32.mrb[0].mxu0
  %v924 = vpop.f32.mrb[0].mxu0
  %v925 = vadd.f32 0.0, %v924
  %v926 = vpop.f32.mrb[0].mxu0
  %927 = vmatprep.mubr.bf16.mxu0 0
  %928 = vmatmul.mubr.bf16.gmra.mrb[0].mxu0 %v803
  %v929 = vpop.f32.mrb[0].mxu0
  %v930 = vadd.f32 0.0, %v929
  %v931 = vpop.f32.mrb[0].mxu0
  %v932 = vpop.f32.mrb[0].mxu0
  %v933 = vadd.f32 0.0, %v932
  %v934 = vpop.f32.mrb[0].mxu0
  %935 = vmatprep.mubr.bf16.mxu0 0
  %936 = vmatmul.mubr.bf16.gmra.mrb[0].mxu0 %v804
  %v937 = vpop.f32.mrb[0].mxu0
  %v938 = vadd.f32 0.0, %v937
  %v939 = vpop.f32.mrb[0].mxu0
  %v940 = vpop.f32.mrb[0].mxu0
  %v941 = vadd.f32 0.0, %v940
  %v942 = vpop.f32.mrb[0].mxu0
  %943 = vmatprep.mubr.bf16.mxu0 0
  %944 = vmatmul.mubr.bf16.gmra.mrb[0].mxu0 %v805
  %v945 = vpop.f32.mrb[0].mxu0
  %v946 = vadd.f32 0.0, %v945
  %v947 = vpop.f32.mrb[0].mxu0
  %v948 = vpop.f32.mrb[0].mxu0
  %v949 = vadd.f32 0.0, %v948
  %v950 = vpop.f32.mrb[0].mxu0
  %951 = vmatprep.mubr.bf16.mxu0 0
  %952 = vmatmul.mubr.bf16.gmra.mrb[0].mxu0 %v806
  %v953 = vpop.f32.mrb[0].mxu0
  %v954 = vadd.f32 0.0, %v953
  %v955 = vpop.f32.mrb[0].mxu0
  %v956 = vpop.f32.mrb[0].mxu0
  %v957 = vadd.f32 0.0, %v956
  %v958 = vpop.f32.mrb[0].mxu0
  %959 = vdwg.mxu0
  %v960 = vadd.f32 %v622, %v898
  %v961 = vadd.f32 %v625, %v901
  %v962 = vadd.f32 %v630, %v906
  %v963 = vadd.f32 %v633, %v909
  %v964 = vadd.f32 %v638, %v914
  %v965 = vadd.f32 %v641, %v917
  %v966 = vadd.f32 %v646, %v922
  %v967 = vadd.f32 %v649, %v925
  %v968 = vadd.f32 %v654, %v930
  %v969 = vadd.f32 %v657, %v933
  %v970 = vadd.f32 %v662, %v938
  %v971 = vadd.f32 %v665, %v941
  %v972 = vadd.f32 %v670, %v946
  %v973 = vadd.f32 %v673, %v949
  %v974 = vadd.f32 %v678, %v954
  %v975 = vadd.f32 %v681, %v957
  %v976 = vld [vmem:[%s1 + $0xc0] sm:$0xf]
  %v977 = vld [vmem:[%s1 + $0xc4] sm:$0xf]
  %v978 = vld [vmem:[%s1 + $0xc8] sm:$0xf]
  %v979 = vld [vmem:[%s1 + $0xcc] sm:$0xf]
  %v980 = vld [vmem:[%s1 + $0xd0] sm:$0xf]
  %v981 = vld [vmem:[%s1 + $0xd4] sm:$0xf]
  %v982 = vld [vmem:[%s1 + $0xd8] sm:$0xf]
  %v983 = vld [vmem:[%s1 + $0xdc] sm:$0xf]
  %v984 = vld [vmem:[%s1 + $0xe0] sm:$0xf]
  %v985 = vld [vmem:[%s1 + $0xe4] sm:$0xf]
  %v986 = vld [vmem:[%s1 + $0xe8] sm:$0xf]
  %v987 = vld [vmem:[%s1 + $0xec] sm:$0xf]
  %v988 = vld [vmem:[%s1 + $0xf0] sm:$0xf]
  %v989 = vld [vmem:[%s1 + $0xf4] sm:$0xf]
  %v990 = vld [vmem:[%s1 + $0xf8] sm:$0xf]
  %v991 = vld [vmem:[%s1 + $0xfc] sm:$0xf]
  %v994 = vunpack.c.l.b16 %v31
  %v995 = vunpack.c.l.b16 %v51
  %v996 = vpack.c.b16 %v509, %v508
  %v997 = vpack.c.b16 %v511, %v510
  %v998 = vpack.c.b16 %v513, %v512
  %v999 = vpack.c.b16 %v994, %v514
  %v1000 = vpack.c.b16 %v517, %v516
  %v1001 = vpack.c.b16 %v519, %v518
  %v1002 = vpack.c.b16 %v521, %v520
  %v1003 = vpack.c.b16 %v995, %v522
  %v1028 = vunpack.c.l.b16 %v976
  %v1029 = vunpack.c.l.b16 %v977
  %v1030 = vunpack.c.l.b16 %v978
  %v1031 = vunpack.c.l.b16 %v979
  %v1032 = vunpack.c.l.b16 %v980
  %v1033 = vunpack.c.l.b16 %v981
  %v1034 = vunpack.c.l.b16 %v982
  %v1035 = vunpack.c.l.b16 %v983
  %v1036 = vunpack.c.l.b16 %v984
  %v1037 = vunpack.c.l.b16 %v985
  %v1038 = vunpack.c.l.b16 %v986
  %v1039 = vunpack.c.l.b16 %v987
  %v1040 = vunpack.c.l.b16 %v988
  %v1041 = vunpack.c.l.b16 %v989
  %v1042 = vunpack.c.l.b16 %v990
  %v1043 = vunpack.c.l.b16 %v991
  %v1044 = vpack.c.b16 %v1029, %v1028
  %v1045 = vpack.c.b16 %v1031, %v1030
  %v1046 = vpack.c.b16 %v1033, %v1032
  %v1047 = vpack.c.b16 %v1035, %v1034
  %v1048 = vpack.c.b16 %v1037, %v1036
  %v1049 = vpack.c.b16 %v1039, %v1038
  %v1050 = vpack.c.b16 %v1041, %v1040
  %v1051 = vpack.c.b16 %v1043, %v1042
  %1060 = vmatprep.subr.bf16.mxu0 0
  %1061 = vmatpush1.bf16.msra.mxu0 %v1044
  %1062 = vmatprep.subr.bf16.mxu0 0
  %1063 = vmatpush1.bf16.msra.mxu0 %v1045
  %1064 = vmatprep.subr.bf16.mxu0 0
  %1065 = vmatpush1.bf16.msra.mxu0 %v1046
  %1066 = vmatprep.subr.bf16.mxu0 0
  %1067 = vmatpush1.bf16.msra.mxu0 %v1047
  %1068 = vmatprep.subr.bf16.mxu0 0
  %1069 = vmatpush1.bf16.msra.mxu0 %v1048
  %1070 = vmatprep.subr.bf16.mxu0 0
  %1071 = vmatpush1.bf16.msra.mxu0 %v1049
  %1072 = vmatprep.subr.bf16.mxu0 0
  %1073 = vmatpush1.bf16.msra.mxu0 %v1050
  %1074 = vmatprep.subr.bf16.mxu0 0
  %1075 = vmatpush1.bf16.msra.mxu0 %v1051
  %1076 = vmatprep.subr.bf16.mxu0 0
  %1077 = vmatpush1.bf16.msra.mxu0 0
  %1078 = vmatprep.subr.bf16.mxu0 0
  %1079 = vmatpush1.bf16.msra.mxu0 0
  %1080 = vmatprep.subr.bf16.mxu0 0
  %1081 = vmatpush1.bf16.msra.mxu0 0
  %1082 = vmatprep.subr.bf16.mxu0 0
  %1083 = vmatpush1.bf16.msra.mxu0 0
  %1084 = vmatprep.subr.bf16.mxu0 0
  %1085 = vmatpush1.bf16.msra.mxu0 0
  %1086 = vmatprep.subr.bf16.mxu0 0
  %1087 = vmatpush1.bf16.msra.mxu0 0
  %1088 = vmatprep.subr.bf16.mxu0 0
  %1089 = vmatpush1.bf16.msra.mxu0 0
  %1090 = vmatprep.subr.bf16.mxu0 0
  %1091 = vmatpush1.bf16.msra.mxu0 0
  %1092 = vmatprep.mubr.bf16.mxu0 0
  %1093 = vmatmul.mubr.bf16.gmra.mrb[0].mxu0 %v996
  %v1094 = vpop.f32.mrb[0].mxu0
  %v1095 = vadd.f32 0.0, %v1094
  %v1096 = vpop.f32.mrb[0].mxu0
  %v1097 = vpop.f32.mrb[0].mxu0
  %v1098 = vadd.f32 0.0, %v1097
  %v1099 = vpop.f32.mrb[0].mxu0
  %1100 = vmatprep.mubr.bf16.mxu0 0
  %1101 = vmatmul.mubr.bf16.gmra.mrb[0].mxu0 %v997
  %v1102 = vpop.f32.mrb[0].mxu0
  %v1103 = vadd.f32 0.0, %v1102
  %v1104 = vpop.f32.mrb[0].mxu0
  %v1105 = vpop.f32.mrb[0].mxu0
  %v1106 = vadd.f32 0.0, %v1105
  %v1107 = vpop.f32.mrb[0].mxu0
  %1108 = vmatprep.mubr.bf16.mxu0 0
  %1109 = vmatmul.mubr.bf16.gmra.mrb[0].mxu0 %v998
  %v1110 = vpop.f32.mrb[0].mxu0
  %v1111 = vadd.f32 0.0, %v1110
  %v1112 = vpop.f32.mrb[0].mxu0
  %v1113 = vpop.f32.mrb[0].mxu0
  %v1114 = vadd.f32 0.0, %v1113
  %v1115 = vpop.f32.mrb[0].mxu0
  %1116 = vmatprep.mubr.bf16.mxu0 0
  %1117 = vmatmul.mubr.bf16.gmra.mrb[0].mxu0 %v999
  %v1118 = vpop.f32.mrb[0].mxu0
  %v1119 = vadd.f32 0.0, %v1118
  %v1120 = vpop.f32.mrb[0].mxu0
  %v1121 = vpop.f32.mrb[0].mxu0
  %v1122 = vadd.f32 0.0, %v1121
  %v1123 = vpop.f32.mrb[0].mxu0
  %1124 = vmatprep.mubr.bf16.mxu0 0
  %1125 = vmatmul.mubr.bf16.gmra.mrb[0].mxu0 %v1000
  %v1126 = vpop.f32.mrb[0].mxu0
  %v1127 = vadd.f32 0.0, %v1126
  %v1128 = vpop.f32.mrb[0].mxu0
  %v1129 = vpop.f32.mrb[0].mxu0
  %v1130 = vadd.f32 0.0, %v1129
  %v1131 = vpop.f32.mrb[0].mxu0
  %1132 = vmatprep.mubr.bf16.mxu0 0
  %1133 = vmatmul.mubr.bf16.gmra.mrb[0].mxu0 %v1001
  %v1134 = vpop.f32.mrb[0].mxu0
  %v1135 = vadd.f32 0.0, %v1134
  %v1136 = vpop.f32.mrb[0].mxu0
  %v1137 = vpop.f32.mrb[0].mxu0
  %v1138 = vadd.f32 0.0, %v1137
  %v1139 = vpop.f32.mrb[0].mxu0
  %1140 = vmatprep.mubr.bf16.mxu0 0
  %1141 = vmatmul.mubr.bf16.gmra.mrb[0].mxu0 %v1002
  %v1142 = vpop.f32.mrb[0].mxu0
  %v1143 = vadd.f32 0.0, %v1142
  %v1144 = vpop.f32.mrb[0].mxu0
  %v1145 = vpop.f32.mrb[0].mxu0
  %v1146 = vadd.f32 0.0, %v1145
  %v1147 = vpop.f32.mrb[0].mxu0
  %1148 = vmatprep.mubr.bf16.mxu0 0
  %1149 = vmatmul.mubr.bf16.gmra.mrb[0].mxu0 %v1003
  %v1150 = vpop.f32.mrb[0].mxu0
  %v1151 = vadd.f32 0.0, %v1150
  %v1152 = vpop.f32.mrb[0].mxu0
  %v1153 = vpop.f32.mrb[0].mxu0
  %v1154 = vadd.f32 0.0, %v1153
  %v1155 = vpop.f32.mrb[0].mxu0
  %1156 = vdwg.mxu0
  %v1157 = vadd.f32 %v960, %v1095
  %v1158 = vadd.f32 %v961, %v1098
  %v1159 = vadd.f32 %v962, %v1103
  %v1160 = vadd.f32 %v963, %v1106
  %v1161 = vadd.f32 %v964, %v1111
  %v1162 = vadd.f32 %v965, %v1114
  %v1163 = vadd.f32 %v966, %v1119
  %v1164 = vadd.f32 %v967, %v1122
  %v1165 = vadd.f32 %v968, %v1127
  %v1166 = vadd.f32 %v969, %v1130
  %v1167 = vadd.f32 %v970, %v1135
  %v1168 = vadd.f32 %v971, %v1138
  %v1169 = vadd.f32 %v972, %v1143
  %v1170 = vadd.f32 %v973, %v1146
  %v1171 = vadd.f32 %v974, %v1151
  %v1172 = vadd.f32 %v975, %v1154
  %v1174 = vshrl.u32 %v31, 16
  %v1176 = vrot.slane %v1174, 4
  %v1177 = vshll.u32 %v31, 16
  %v1179 = vrot.slane %v1177, 5
  %v1180 = vor.u32 %v1176, %v1179
  %v1181 = vrot.slane %v1180, 4
  %v1183 = vshll.u32 %v32, 16
  %v1185 = vrot.slane %v1183, 5
  %v1186 = vsel %vm73, %v1181, %v1185
  %v1188 = vshrl.u32 %v51, 16
  %v1190 = vrot.slane %v1188, 4
  %v1191 = vshll.u32 %v51, 16
  %v1193 = vrot.slane %v1191, 5
  %v1194 = vor.u32 %v1190, %v1193
  %v1195 = vrot.slane %v1194, 4
  %v1197 = vshll.u32 %v52, 16
  %v1199 = vrot.slane %v1197, 5
  %v1200 = vsel %vm73, %v1195, %v1199
  %v1201 = vld [vmem:[%s1 + $0x100] sm:$0xf]
  %v1202 = vld [vmem:[%s1 + $0x104] sm:$0xf]
  %v1203 = vld [vmem:[%s1 + $0x108] sm:$0xf]
  %v1204 = vld [vmem:[%s1 + $0x10c] sm:$0xf]
  %v1205 = vld [vmem:[%s1 + $0x110] sm:$0xf]
  %v1206 = vld [vmem:[%s1 + $0x114] sm:$0xf]
  %v1207 = vld [vmem:[%s1 + $0x118] sm:$0xf]
  %v1208 = vld [vmem:[%s1 + $0x11c] sm:$0xf]
  %v1209 = vld [vmem:[%s1 + $0x120] sm:$0xf]
  %v1210 = vld [vmem:[%s1 + $0x124] sm:$0xf]
  %v1211 = vld [vmem:[%s1 + $0x128] sm:$0xf]
  %v1212 = vld [vmem:[%s1 + $0x12c] sm:$0xf]
  %v1213 = vld [vmem:[%s1 + $0x130] sm:$0xf]
  %v1214 = vld [vmem:[%s1 + $0x134] sm:$0xf]
  %v1215 = vld [vmem:[%s1 + $0x138] sm:$0xf]
  %v1216 = vld [vmem:[%s1 + $0x13c] sm:$0xf]
  %v1217 = vunpack.c.l.b16 %v1186
  %v1218 = vunpack.c.l.b16 %v1200
  %v1219 = vpack.c.b16 %v316, %v315
  %v1220 = vpack.c.b16 %v318, %v317
  %v1221 = vpack.c.b16 %v320, %v319
  %v1222 = vpack.c.b16 %v1217, %v321
  %v1223 = vpack.c.b16 %v324, %v323
  %v1224 = vpack.c.b16 %v326, %v325
  %v1225 = vpack.c.b16 %v328, %v327
  %v1226 = vpack.c.b16 %v1218, %v329
  %v1251 = vunpack.c.l.b16 %v1201
  %v1252 = vunpack.c.l.b16 %v1202
  %v1253 = vunpack.c.l.b16 %v1203
  %v1254 = vunpack.c.l.b16 %v1204
  %v1255 = vunpack.c.l.b16 %v1205
  %v1256 = vunpack.c.l.b16 %v1206
  %v1257 = vunpack.c.l.b16 %v1207
  %v1258 = vunpack.c.l.b16 %v1208
  %v1259 = vunpack.c.l.b16 %v1209
  %v1260 = vunpack.c.l.b16 %v1210
  %v1261 = vunpack.c.l.b16 %v1211
  %v1262 = vunpack.c.l.b16 %v1212
  %v1263 = vunpack.c.l.b16 %v1213
  %v1264 = vunpack.c.l.b16 %v1214
  %v1265 = vunpack.c.l.b16 %v1215
  %v1266 = vunpack.c.l.b16 %v1216
  %v1267 = vpack.c.b16 %v1252, %v1251
  %v1268 = vpack.c.b16 %v1254, %v1253
  %v1269 = vpack.c.b16 %v1256, %v1255
  %v1270 = vpack.c.b16 %v1258, %v1257
  %v1271 = vpack.c.b16 %v1260, %v1259
  %v1272 = vpack.c.b16 %v1262, %v1261
  %v1273 = vpack.c.b16 %v1264, %v1263
  %v1274 = vpack.c.b16 %v1266, %v1265
  %1283 = vmatprep.subr.bf16.mxu0 0
  %1284 = vmatpush1.bf16.msra.mxu0 %v1267
  %1285 = vmatprep.subr.bf16.mxu0 0
  %1286 = vmatpush1.bf16.msra.mxu0 %v1268
  %1287 = vmatprep.subr.bf16.mxu0 0
  %1288 = vmatpush1.bf16.msra.mxu0 %v1269
  %1289 = vmatprep.subr.bf16.mxu0 0
  %1290 = vmatpush1.bf16.msra.mxu0 %v1270
  %1291 = vmatprep.subr.bf16.mxu0 0
  %1292 = vmatpush1.bf16.msra.mxu0 %v1271
  %1293 = vmatprep.subr.bf16.mxu0 0
  %1294 = vmatpush1.bf16.msra.mxu0 %v1272
  %1295 = vmatprep.subr.bf16.mxu0 0
  %1296 = vmatpush1.bf16.msra.mxu0 %v1273
  %1297 = vmatprep.subr.bf16.mxu0 0
  %1298 = vmatpush1.bf16.msra.mxu0 %v1274
  %1299 = vmatprep.subr.bf16.mxu0 0
  %1300 = vmatpush1.bf16.msra.mxu0 0
  %1301 = vmatprep.subr.bf16.mxu0 0
  %1302 = vmatpush1.bf16.msra.mxu0 0
  %1303 = vmatprep.subr.bf16.mxu0 0
  %1304 = vmatpush1.bf16.msra.mxu0 0
  %1305 = vmatprep.subr.bf16.mxu0 0
  %1306 = vmatpush1.bf16.msra.mxu0 0
  %1307 = vmatprep.subr.bf16.mxu0 0
  %1308 = vmatpush1.bf16.msra.mxu0 0
  %1309 = vmatprep.subr.bf16.mxu0 0
  %1310 = vmatpush1.bf16.msra.mxu0 0
  %1311 = vmatprep.subr.bf16.mxu0 0
  %1312 = vmatpush1.bf16.msra.mxu0 0
  %1313 = vmatprep.subr.bf16.mxu0 0
  %1314 = vmatpush1.bf16.msra.mxu0 0
  %1315 = vmatprep.mubr.bf16.mxu0 0
  %1316 = vmatmul.mubr.bf16.gmra.mrb[0].mxu0 %v1219
  %v1317 = vpop.f32.mrb[0].mxu0
  %v1318 = vadd.f32 0.0, %v1317
  %v1319 = vpop.f32.mrb[0].mxu0
  %v1320 = vpop.f32.mrb[0].mxu0
  %v1321 = vadd.f32 0.0, %v1320
  %v1322 = vpop.f32.mrb[0].mxu0
  %1323 = vmatprep.mubr.bf16.mxu0 0
  %1324 = vmatmul.mubr.bf16.gmra.mrb[0].mxu0 %v1220
  %v1325 = vpop.f32.mrb[0].mxu0
  %v1326 = vadd.f32 0.0, %v1325
  %v1327 = vpop.f32.mrb[0].mxu0
  %v1328 = vpop.f32.mrb[0].mxu0
  %v1329 = vadd.f32 0.0, %v1328
  %v1330 = vpop.f32.mrb[0].mxu0
  %1331 = vmatprep.mubr.bf16.mxu0 0
  %1332 = vmatmul.mubr.bf16.gmra.mrb[0].mxu0 %v1221
  %v1333 = vpop.f32.mrb[0].mxu0
  %v1334 = vadd.f32 0.0, %v1333
  %v1335 = vpop.f32.mrb[0].mxu0
  %v1336 = vpop.f32.mrb[0].mxu0
  %v1337 = vadd.f32 0.0, %v1336
  %v1338 = vpop.f32.mrb[0].mxu0
  %1339 = vmatprep.mubr.bf16.mxu0 0
  %1340 = vmatmul.mubr.bf16.gmra.mrb[0].mxu0 %v1222
  %v1341 = vpop.f32.mrb[0].mxu0
  %v1342 = vadd.f32 0.0, %v1341
  %v1343 = vpop.f32.mrb[0].mxu0
  %v1344 = vpop.f32.mrb[0].mxu0
  %v1345 = vadd.f32 0.0, %v1344
  %v1346 = vpop.f32.mrb[0].mxu0
  %1347 = vmatprep.mubr.bf16.mxu0 0
  %1348 = vmatmul.mubr.bf16.gmra.mrb[0].mxu0 %v1223
  %v1349 = vpop.f32.mrb[0].mxu0
  %v1350 = vadd.f32 0.0, %v1349
  %v1351 = vpop.f32.mrb[0].mxu0
  %v1352 = vpop.f32.mrb[0].mxu0
  %v1353 = vadd.f32 0.0, %v1352
  %v1354 = vpop.f32.mrb[0].mxu0
  %1355 = vmatprep.mubr.bf16.mxu0 0
  %1356 = vmatmul.mubr.bf16.gmra.mrb[0].mxu0 %v1224
  %v1357 = vpop.f32.mrb[0].mxu0
  %v1358 = vadd.f32 0.0, %v1357
  %v1359 = vpop.f32.mrb[0].mxu0
  %v1360 = vpop.f32.mrb[0].mxu0
  %v1361 = vadd.f32 0.0, %v1360
  %v1362 = vpop.f32.mrb[0].mxu0
  %1363 = vmatprep.mubr.bf16.mxu0 0
  %1364 = vmatmul.mubr.bf16.gmra.mrb[0].mxu0 %v1225
  %v1365 = vpop.f32.mrb[0].mxu0
  %v1366 = vadd.f32 0.0, %v1365
  %v1367 = vpop.f32.mrb[0].mxu0
  %v1368 = vpop.f32.mrb[0].mxu0
  %v1369 = vadd.f32 0.0, %v1368
  %v1370 = vpop.f32.mrb[0].mxu0
  %1371 = vmatprep.mubr.bf16.mxu0 0
  %1372 = vmatmul.mubr.bf16.gmra.mrb[0].mxu0 %v1226
  %v1373 = vpop.f32.mrb[0].mxu0
  %v1374 = vadd.f32 0.0, %v1373
  %v1375 = vpop.f32.mrb[0].mxu0
  %v1376 = vpop.f32.mrb[0].mxu0
  %v1377 = vadd.f32 0.0, %v1376
  %v1378 = vpop.f32.mrb[0].mxu0
  %1379 = vdwg.mxu0
  %v1380 = vadd.f32 %v1157, %v1318
  %v1381 = vadd.f32 %v1158, %v1321
  %v1382 = vadd.f32 %v1159, %v1326
  %v1383 = vadd.f32 %v1160, %v1329
  %v1384 = vadd.f32 %v1161, %v1334
  %v1385 = vadd.f32 %v1162, %v1337
  %v1386 = vadd.f32 %v1163, %v1342
  %v1387 = vadd.f32 %v1164, %v1345
  %v1388 = vadd.f32 %v1165, %v1350
  %v1389 = vadd.f32 %v1166, %v1353
  %v1390 = vadd.f32 %v1167, %v1358
  %v1391 = vadd.f32 %v1168, %v1361
  %v1392 = vadd.f32 %v1169, %v1366
  %v1393 = vadd.f32 %v1170, %v1369
  %v1394 = vadd.f32 %v1171, %v1374
  %v1395 = vadd.f32 %v1172, %v1377
  %v1398 = vrot.slane %v31, 5
  %v1399 = vrot.slane %v1398, 4
  %v1400 = vrot.slane %v32, 5
  %v1401 = vsel %vm702, %v1399, %v1400
  %v1402 = vrot.slane %v51, 5
  %v1403 = vrot.slane %v1402, 4
  %v1404 = vrot.slane %v52, 5
  %v1405 = vsel %vm702, %v1403, %v1404
  %v1406 = vld [vmem:[%s1 + $0x140] sm:$0xf]
  %v1407 = vld [vmem:[%s1 + $0x144] sm:$0xf]
  %v1408 = vld [vmem:[%s1 + $0x148] sm:$0xf]
  %v1409 = vld [vmem:[%s1 + $0x14c] sm:$0xf]
  %v1410 = vld [vmem:[%s1 + $0x150] sm:$0xf]
  %v1411 = vld [vmem:[%s1 + $0x154] sm:$0xf]
  %v1412 = vld [vmem:[%s1 + $0x158] sm:$0xf]
  %v1413 = vld [vmem:[%s1 + $0x15c] sm:$0xf]
  %v1414 = vld [vmem:[%s1 + $0x160] sm:$0xf]
  %v1415 = vld [vmem:[%s1 + $0x164] sm:$0xf]
  %v1416 = vld [vmem:[%s1 + $0x168] sm:$0xf]
  %v1417 = vld [vmem:[%s1 + $0x16c] sm:$0xf]
  %v1418 = vld [vmem:[%s1 + $0x170] sm:$0xf]
  %v1419 = vld [vmem:[%s1 + $0x174] sm:$0xf]
  %v1420 = vld [vmem:[%s1 + $0x178] sm:$0xf]
  %v1421 = vld [vmem:[%s1 + $0x17c] sm:$0xf]
  %v1422 = vunpack.c.l.b16 %v1401
  %v1423 = vunpack.c.l.b16 %v1405
  %v1424 = vpack.c.b16 %v785, %v784
  %v1425 = vpack.c.b16 %v787, %v786
  %v1426 = vpack.c.b16 %v789, %v788
  %v1427 = vpack.c.b16 %v1422, %v790
  %v1428 = vpack.c.b16 %v793, %v792
  %v1429 = vpack.c.b16 %v795, %v794
  %v1430 = vpack.c.b16 %v797, %v796
  %v1431 = vpack.c.b16 %v1423, %v798
  %v1456 = vunpack.c.l.b16 %v1406
  %v1457 = vunpack.c.l.b16 %v1407
  %v1458 = vunpack.c.l.b16 %v1408
  %v1459 = vunpack.c.l.b16 %v1409
  %v1460 = vunpack.c.l.b16 %v1410
  %v1461 = vunpack.c.l.b16 %v1411
  %v1462 = vunpack.c.l.b16 %v1412
  %v1463 = vunpack.c.l.b16 %v1413
  %v1464 = vunpack.c.l.b16 %v1414
  %v1465 = vunpack.c.l.b16 %v1415
  %v1466 = vunpack.c.l.b16 %v1416
  %v1467 = vunpack.c.l.b16 %v1417
  %v1468 = vunpack.c.l.b16 %v1418
  %v1469 = vunpack.c.l.b16 %v1419
  %v1470 = vunpack.c.l.b16 %v1420
  %v1471 = vunpack.c.l.b16 %v1421
  %v1472 = vpack.c.b16 %v1457, %v1456
  %v1473 = vpack.c.b16 %v1459, %v1458
  %v1474 = vpack.c.b16 %v1461, %v1460
  %v1475 = vpack.c.b16 %v1463, %v1462
  %v1476 = vpack.c.b16 %v1465, %v1464
  %v1477 = vpack.c.b16 %v1467, %v1466
  %v1478 = vpack.c.b16 %v1469, %v1468
  %v1479 = vpack.c.b16 %v1471, %v1470
  %1488 = vmatprep.subr.bf16.mxu0 0
  %1489 = vmatpush1.bf16.msra.mxu0 %v1472
  %1490 = vmatprep.subr.bf16.mxu0 0
  %1491 = vmatpush1.bf16.msra.mxu0 %v1473
  %1492 = vmatprep.subr.bf16.mxu0 0
  %1493 = vmatpush1.bf16.msra.mxu0 %v1474
  %1494 = vmatprep.subr.bf16.mxu0 0
  %1495 = vmatpush1.bf16.msra.mxu0 %v1475
  %1496 = vmatprep.subr.bf16.mxu0 0
  %1497 = vmatpush1.bf16.msra.mxu0 %v1476
  %1498 = vmatprep.subr.bf16.mxu0 0
  %1499 = vmatpush1.bf16.msra.mxu0 %v1477
  %1500 = vmatprep.subr.bf16.mxu0 0
  %1501 = vmatpush1.bf16.msra.mxu0 %v1478
  %1502 = vmatprep.subr.bf16.mxu0 0
  %1503 = vmatpush1.bf16.msra.mxu0 %v1479
  %1504 = vmatprep.subr.bf16.mxu0 0
  %1505 = vmatpush1.bf16.msra.mxu0 0
  %1506 = vmatprep.subr.bf16.mxu0 0
  %1507 = vmatpush1.bf16.msra.mxu0 0
  %1508 = vmatprep.subr.bf16.mxu0 0
  %1509 = vmatpush1.bf16.msra.mxu0 0
  %1510 = vmatprep.subr.bf16.mxu0 0
  %1511 = vmatpush1.bf16.msra.mxu0 0
  %1512 = vmatprep.subr.bf16.mxu0 0
  %1513 = vmatpush1.bf16.msra.mxu0 0
  %1514 = vmatprep.subr.bf16.mxu0 0
  %1515 = vmatpush1.bf16.msra.mxu0 0
  %1516 = vmatprep.subr.bf16.mxu0 0
  %1517 = vmatpush1.bf16.msra.mxu0 0
  %1518 = vmatprep.subr.bf16.mxu0 0
  %1519 = vmatpush1.bf16.msra.mxu0 0
  %1520 = vmatprep.mubr.bf16.mxu0 0
  %1521 = vmatmul.mubr.bf16.gmra.mrb[0].mxu0 %v1424
  %v1522 = vpop.f32.mrb[0].mxu0
  %v1523 = vadd.f32 0.0, %v1522
  %v1524 = vpop.f32.mrb[0].mxu0
  %v1525 = vpop.f32.mrb[0].mxu0
  %v1526 = vadd.f32 0.0, %v1525
  %v1527 = vpop.f32.mrb[0].mxu0
  %1528 = vmatprep.mubr.bf16.mxu0 0
  %1529 = vmatmul.mubr.bf16.gmra.mrb[0].mxu0 %v1425
  %v1530 = vpop.f32.mrb[0].mxu0
  %v1531 = vadd.f32 0.0, %v1530
  %v1532 = vpop.f32.mrb[0].mxu0
  %v1533 = vpop.f32.mrb[0].mxu0
  %v1534 = vadd.f32 0.0, %v1533
  %v1535 = vpop.f32.mrb[0].mxu0
  %1536 = vmatprep.mubr.bf16.mxu0 0
  %1537 = vmatmul.mubr.bf16.gmra.mrb[0].mxu0 %v1426
  %v1538 = vpop.f32.mrb[0].mxu0
  %v1539 = vadd.f32 0.0, %v1538
  %v1540 = vpop.f32.mrb[0].mxu0
  %v1541 = vpop.f32.mrb[0].mxu0
  %v1542 = vadd.f32 0.0, %v1541
  %v1543 = vpop.f32.mrb[0].mxu0
  %1544 = vmatprep.mubr.bf16.mxu0 0
  %1545 = vmatmul.mubr.bf16.gmra.mrb[0].mxu0 %v1427
  %v1546 = vpop.f32.mrb[0].mxu0
  %v1547 = vadd.f32 0.0, %v1546
  %v1548 = vpop.f32.mrb[0].mxu0
  %v1549 = vpop.f32.mrb[0].mxu0
  %v1550 = vadd.f32 0.0, %v1549
  %v1551 = vpop.f32.mrb[0].mxu0
  %1552 = vmatprep.mubr.bf16.mxu0 0
  %1553 = vmatmul.mubr.bf16.gmra.mrb[0].mxu0 %v1428
  %v1554 = vpop.f32.mrb[0].mxu0
  %v1555 = vadd.f32 0.0, %v1554
  %v1556 = vpop.f32.mrb[0].mxu0
  %v1557 = vpop.f32.mrb[0].mxu0
  %v1558 = vadd.f32 0.0, %v1557
  %v1559 = vpop.f32.mrb[0].mxu0
  %1560 = vmatprep.mubr.bf16.mxu0 0
  %1561 = vmatmul.mubr.bf16.gmra.mrb[0].mxu0 %v1429
  %v1562 = vpop.f32.mrb[0].mxu0
  %v1563 = vadd.f32 0.0, %v1562
  %v1564 = vpop.f32.mrb[0].mxu0
  %v1565 = vpop.f32.mrb[0].mxu0
  %v1566 = vadd.f32 0.0, %v1565
  %v1567 = vpop.f32.mrb[0].mxu0
  %1568 = vmatprep.mubr.bf16.mxu0 0
  %1569 = vmatmul.mubr.bf16.gmra.mrb[0].mxu0 %v1430
  %v1570 = vpop.f32.mrb[0].mxu0
  %v1571 = vadd.f32 0.0, %v1570
  %v1572 = vpop.f32.mrb[0].mxu0
  %v1573 = vpop.f32.mrb[0].mxu0
  %v1574 = vadd.f32 0.0, %v1573
  %v1575 = vpop.f32.mrb[0].mxu0
  %1576 = vmatprep.mubr.bf16.mxu0 0
  %1577 = vmatmul.mubr.bf16.gmra.mrb[0].mxu0 %v1431
  %v1578 = vpop.f32.mrb[0].mxu0
  %v1579 = vadd.f32 0.0, %v1578
  %v1580 = vpop.f32.mrb[0].mxu0
  %v1581 = vpop.f32.mrb[0].mxu0
  %v1582 = vadd.f32 0.0, %v1581
  %v1583 = vpop.f32.mrb[0].mxu0
  %1584 = vdwg.mxu0
  %v1585 = vadd.f32 %v1380, %v1523
  %v1586 = vadd.f32 %v1381, %v1526
  %v1587 = vadd.f32 %v1382, %v1531
  %v1588 = vadd.f32 %v1383, %v1534
  %v1589 = vadd.f32 %v1384, %v1539
  %v1590 = vadd.f32 %v1385, %v1542
  %v1591 = vadd.f32 %v1386, %v1547
  %v1592 = vadd.f32 %v1387, %v1550
  %v1593 = vadd.f32 %v1388, %v1555
  %v1594 = vadd.f32 %v1389, %v1558
  %v1595 = vadd.f32 %v1390, %v1563
  %v1596 = vadd.f32 %v1391, %v1566
  %v1597 = vadd.f32 %v1392, %v1571
  %v1598 = vadd.f32 %v1393, %v1574
  %v1599 = vadd.f32 %v1394, %v1579
  %v1600 = vadd.f32 %v1395, %v1582
  %v1601 = vld [vmem:[%s1 + $0x180] sm:$0xf]
  %v1602 = vld [vmem:[%s1 + $0x184] sm:$0xf]
  %v1603 = vld [vmem:[%s1 + $0x188] sm:$0xf]
  %v1604 = vld [vmem:[%s1 + $0x18c] sm:$0xf]
  %v1605 = vld [vmem:[%s1 + $0x190] sm:$0xf]
  %v1606 = vld [vmem:[%s1 + $0x194] sm:$0xf]
  %v1607 = vld [vmem:[%s1 + $0x198] sm:$0xf]
  %v1608 = vld [vmem:[%s1 + $0x19c] sm:$0xf]
  %v1609 = vld [vmem:[%s1 + $0x1a0] sm:$0xf]
  %v1610 = vld [vmem:[%s1 + $0x1a4] sm:$0xf]
  %v1611 = vld [vmem:[%s1 + $0x1a8] sm:$0xf]
  %v1612 = vld [vmem:[%s1 + $0x1ac] sm:$0xf]
  %v1613 = vld [vmem:[%s1 + $0x1b0] sm:$0xf]
  %v1614 = vld [vmem:[%s1 + $0x1b4] sm:$0xf]
  %v1615 = vld [vmem:[%s1 + $0x1b8] sm:$0xf]
  %v1616 = vld [vmem:[%s1 + $0x1bc] sm:$0xf]
  %v1619 = vunpack.c.l.b16 %v33
  %v1620 = vunpack.c.l.b16 %v53
  %v1621 = vpack.c.b16 %v1619, %v994
  %v1622 = vpack.c.b16 %v1620, %v995
  %v1641 = vunpack.c.l.b16 %v1601
  %v1642 = vunpack.c.l.b16 %v1602
  %v1643 = vunpack.c.l.b16 %v1603
  %v1644 = vunpack.c.l.b16 %v1604
  %v1645 = vunpack.c.l.b16 %v1605
  %v1646 = vunpack.c.l.b16 %v1606
  %v1647 = vunpack.c.l.b16 %v1607
  %v1648 = vunpack.c.l.b16 %v1608
  %v1649 = vunpack.c.l.b16 %v1609
  %v1650 = vunpack.c.l.b16 %v1610
  %v1651 = vunpack.c.l.b16 %v1611
  %v1652 = vunpack.c.l.b16 %v1612
  %v1653 = vunpack.c.l.b16 %v1613
  %v1654 = vunpack.c.l.b16 %v1614
  %v1655 = vunpack.c.l.b16 %v1615
  %v1656 = vunpack.c.l.b16 %v1616
  %v1657 = vpack.c.b16 %v1642, %v1641
  %v1658 = vpack.c.b16 %v1644, %v1643
  %v1659 = vpack.c.b16 %v1646, %v1645
  %v1660 = vpack.c.b16 %v1648, %v1647
  %v1661 = vpack.c.b16 %v1650, %v1649
  %v1662 = vpack.c.b16 %v1652, %v1651
  %v1663 = vpack.c.b16 %v1654, %v1653
  %v1664 = vpack.c.b16 %v1656, %v1655
  %1673 = vmatprep.subr.bf16.mxu0 0
  %1674 = vmatpush1.bf16.msra.mxu0 %v1657
  %1675 = vmatprep.subr.bf16.mxu0 0
  %1676 = vmatpush1.bf16.msra.mxu0 %v1658
  %1677 = vmatprep.subr.bf16.mxu0 0
  %1678 = vmatpush1.bf16.msra.mxu0 %v1659
  %1679 = vmatprep.subr.bf16.mxu0 0
  %1680 = vmatpush1.bf16.msra.mxu0 %v1660
  %1681 = vmatprep.subr.bf16.mxu0 0
  %1682 = vmatpush1.bf16.msra.mxu0 %v1661
  %1683 = vmatprep.subr.bf16.mxu0 0
  %1684 = vmatpush1.bf16.msra.mxu0 %v1662
  %1685 = vmatprep.subr.bf16.mxu0 0
  %1686 = vmatpush1.bf16.msra.mxu0 %v1663
  %1687 = vmatprep.subr.bf16.mxu0 0
  %1688 = vmatpush1.bf16.msra.mxu0 %v1664
  %1689 = vmatprep.subr.bf16.mxu0 0
  %1690 = vmatpush1.bf16.msra.mxu0 0
  %1691 = vmatprep.subr.bf16.mxu0 0
  %1692 = vmatpush1.bf16.msra.mxu0 0
  %1693 = vmatprep.subr.bf16.mxu0 0
  %1694 = vmatpush1.bf16.msra.mxu0 0
  %1695 = vmatprep.subr.bf16.mxu0 0
  %1696 = vmatpush1.bf16.msra.mxu0 0
  %1697 = vmatprep.subr.bf16.mxu0 0
  %1698 = vmatpush1.bf16.msra.mxu0 0
  %1699 = vmatprep.subr.bf16.mxu0 0
  %1700 = vmatpush1.bf16.msra.mxu0 0
  %1701 = vmatprep.subr.bf16.mxu0 0
  %1702 = vmatpush1.bf16.msra.mxu0 0
  %1703 = vmatprep.subr.bf16.mxu0 0
  %1704 = vmatpush1.bf16.msra.mxu0 0
  %1705 = vmatprep.mubr.bf16.mxu0 0
  %1706 = vmatmul.mubr.bf16.gmra.mrb[0].mxu0 %v524
  %v1707 = vpop.f32.mrb[0].mxu0
  %v1708 = vadd.f32 0.0, %v1707
  %v1709 = vpop.f32.mrb[0].mxu0
  %v1710 = vpop.f32.mrb[0].mxu0
  %v1711 = vadd.f32 0.0, %v1710
  %v1712 = vpop.f32.mrb[0].mxu0
  %1713 = vmatprep.mubr.bf16.mxu0 0
  %1714 = vmatmul.mubr.bf16.gmra.mrb[0].mxu0 %v525
  %v1715 = vpop.f32.mrb[0].mxu0
  %v1716 = vadd.f32 0.0, %v1715
  %v1717 = vpop.f32.mrb[0].mxu0
  %v1718 = vpop.f32.mrb[0].mxu0
  %v1719 = vadd.f32 0.0, %v1718
  %v1720 = vpop.f32.mrb[0].mxu0
  %1721 = vmatprep.mubr.bf16.mxu0 0
  %1722 = vmatmul.mubr.bf16.gmra.mrb[0].mxu0 %v526
  %v1723 = vpop.f32.mrb[0].mxu0
  %v1724 = vadd.f32 0.0, %v1723
  %v1725 = vpop.f32.mrb[0].mxu0
  %v1726 = vpop.f32.mrb[0].mxu0
  %v1727 = vadd.f32 0.0, %v1726
  %v1728 = vpop.f32.mrb[0].mxu0
  %1729 = vmatprep.mubr.bf16.mxu0 0
  %1730 = vmatmul.mubr.bf16.gmra.mrb[0].mxu0 %v1621
  %v1731 = vpop.f32.mrb[0].mxu0
  %v1732 = vadd.f32 0.0, %v1731
  %v1733 = vpop.f32.mrb[0].mxu0
  %v1734 = vpop.f32.mrb[0].mxu0
  %v1735 = vadd.f32 0.0, %v1734
  %v1736 = vpop.f32.mrb[0].mxu0
  %1737 = vmatprep.mubr.bf16.mxu0 0
  %1738 = vmatmul.mubr.bf16.gmra.mrb[0].mxu0 %v528
  %v1739 = vpop.f32.mrb[0].mxu0
  %v1740 = vadd.f32 0.0, %v1739
  %v1741 = vpop.f32.mrb[0].mxu0
  %v1742 = vpop.f32.mrb[0].mxu0
  %v1743 = vadd.f32 0.0, %v1742
  %v1744 = vpop.f32.mrb[0].mxu0
  %1745 = vmatprep.mubr.bf16.mxu0 0
  %1746 = vmatmul.mubr.bf16.gmra.mrb[0].mxu0 %v529
  %v1747 = vpop.f32.mrb[0].mxu0
  %v1748 = vadd.f32 0.0, %v1747
  %v1749 = vpop.f32.mrb[0].mxu0
  %v1750 = vpop.f32.mrb[0].mxu0
  %v1751 = vadd.f32 0.0, %v1750
  %v1752 = vpop.f32.mrb[0].mxu0
  %1753 = vmatprep.mubr.bf16.mxu0 0
  %1754 = vmatmul.mubr.bf16.gmra.mrb[0].mxu0 %v530
  %v1755 = vpop.f32.mrb[0].mxu0
  %v1756 = vadd.f32 0.0, %v1755
  %v1757 = vpop.f32.mrb[0].mxu0
  %v1758 = vpop.f32.mrb[0].mxu0
  %v1759 = vadd.f32 0.0, %v1758
  %v1760 = vpop.f32.mrb[0].mxu0
  %1761 = vmatprep.mubr.bf16.mxu0 0
  %1762 = vmatmul.mubr.bf16.gmra.mrb[0].mxu0 %v1622
  %v1763 = vpop.f32.mrb[0].mxu0
  %v1764 = vadd.f32 0.0, %v1763
  %v1765 = vpop.f32.mrb[0].mxu0
  %v1766 = vpop.f32.mrb[0].mxu0
  %v1767 = vadd.f32 0.0, %v1766
  %v1768 = vpop.f32.mrb[0].mxu0
  %1769 = vdwg.mxu0
  %v1770 = vadd.f32 %v1585, %v1708
  %v1771 = vadd.f32 %v1586, %v1711
  %v1772 = vadd.f32 %v1587, %v1716
  %v1773 = vadd.f32 %v1588, %v1719
  %v1774 = vadd.f32 %v1589, %v1724
  %v1775 = vadd.f32 %v1590, %v1727
  %v1776 = vadd.f32 %v1591, %v1732
  %v1777 = vadd.f32 %v1592, %v1735
  %v1778 = vadd.f32 %v1593, %v1740
  %v1779 = vadd.f32 %v1594, %v1743
  %v1780 = vadd.f32 %v1595, %v1748
  %v1781 = vadd.f32 %v1596, %v1751
  %v1782 = vadd.f32 %v1597, %v1756
  %v1783 = vadd.f32 %v1598, %v1759
  %v1784 = vadd.f32 %v1599, %v1764
  %v1785 = vadd.f32 %v1600, %v1767
  %v1787 = vshrl.u32 %v33, 16
  %v1789 = vrot.slane %v1787, 4
  %v1790 = vshll.u32 %v33, 16
  %v1792 = vrot.slane %v1790, 5
  %v1793 = vor.u32 %v1789, %v1792
  %v1794 = vrot.slane %v1793, 4
  %v1796 = vshll.u32 %v34, 16
  %v1798 = vrot.slane %v1796, 5
  %v1799 = vsel %vm73, %v1794, %v1798
  %v1801 = vshrl.u32 %v53, 16
  %v1803 = vrot.slane %v1801, 4
  %v1804 = vshll.u32 %v53, 16
  %v1806 = vrot.slane %v1804, 5
  %v1807 = vor.u32 %v1803, %v1806
  %v1808 = vrot.slane %v1807, 4
  %v1810 = vshll.u32 %v54, 16
  %v1812 = vrot.slane %v1810, 5
  %v1813 = vsel %vm73, %v1808, %v1812
  %v1814 = vld [vmem:[%s1 + $0x1c0] sm:$0xf]
  %v1815 = vld [vmem:[%s1 + $0x1c4] sm:$0xf]
  %v1816 = vld [vmem:[%s1 + $0x1c8] sm:$0xf]
  %v1817 = vld [vmem:[%s1 + $0x1cc] sm:$0xf]
  %v1818 = vld [vmem:[%s1 + $0x1d0] sm:$0xf]
  %v1819 = vld [vmem:[%s1 + $0x1d4] sm:$0xf]
  %v1820 = vld [vmem:[%s1 + $0x1d8] sm:$0xf]
  %v1821 = vld [vmem:[%s1 + $0x1dc] sm:$0xf]
  %v1822 = vld [vmem:[%s1 + $0x1e0] sm:$0xf]
  %v1823 = vld [vmem:[%s1 + $0x1e4] sm:$0xf]
  %v1824 = vld [vmem:[%s1 + $0x1e8] sm:$0xf]
  %v1825 = vld [vmem:[%s1 + $0x1ec] sm:$0xf]
  %v1826 = vld [vmem:[%s1 + $0x1f0] sm:$0xf]
  %v1827 = vld [vmem:[%s1 + $0x1f4] sm:$0xf]
  %v1828 = vld [vmem:[%s1 + $0x1f8] sm:$0xf]
  %v1829 = vld [vmem:[%s1 + $0x1fc] sm:$0xf]
  %v1830 = vunpack.c.l.b16 %v1799
  %v1831 = vunpack.c.l.b16 %v1813
  %v1832 = vpack.c.b16 %v1830, %v1217
  %v1833 = vpack.c.b16 %v1831, %v1218
  %v1852 = vunpack.c.l.b16 %v1814
  %v1853 = vunpack.c.l.b16 %v1815
  %v1854 = vunpack.c.l.b16 %v1816
  %v1855 = vunpack.c.l.b16 %v1817
  %v1856 = vunpack.c.l.b16 %v1818
  %v1857 = vunpack.c.l.b16 %v1819
  %v1858 = vunpack.c.l.b16 %v1820
  %v1859 = vunpack.c.l.b16 %v1821
  %v1860 = vunpack.c.l.b16 %v1822
  %v1861 = vunpack.c.l.b16 %v1823
  %v1862 = vunpack.c.l.b16 %v1824
  %v1863 = vunpack.c.l.b16 %v1825
  %v1864 = vunpack.c.l.b16 %v1826
  %v1865 = vunpack.c.l.b16 %v1827
  %v1866 = vunpack.c.l.b16 %v1828
  %v1867 = vunpack.c.l.b16 %v1829
  %v1868 = vpack.c.b16 %v1853, %v1852
  %v1869 = vpack.c.b16 %v1855, %v1854
  %v1870 = vpack.c.b16 %v1857, %v1856
  %v1871 = vpack.c.b16 %v1859, %v1858
  %v1872 = vpack.c.b16 %v1861, %v1860
  %v1873 = vpack.c.b16 %v1863, %v1862
  %v1874 = vpack.c.b16 %v1865, %v1864
  %v1875 = vpack.c.b16 %v1867, %v1866
  %1884 = vmatprep.subr.bf16.mxu0 0
  %1885 = vmatpush1.bf16.msra.mxu0 %v1868
  %1886 = vmatprep.subr.bf16.mxu0 0
  %1887 = vmatpush1.bf16.msra.mxu0 %v1869
  %1888 = vmatprep.subr.bf16.mxu0 0
  %1889 = vmatpush1.bf16.msra.mxu0 %v1870
  %1890 = vmatprep.subr.bf16.mxu0 0
  %1891 = vmatpush1.bf16.msra.mxu0 %v1871
  %1892 = vmatprep.subr.bf16.mxu0 0
  %1893 = vmatpush1.bf16.msra.mxu0 %v1872
  %1894 = vmatprep.subr.bf16.mxu0 0
  %1895 = vmatpush1.bf16.msra.mxu0 %v1873
  %1896 = vmatprep.subr.bf16.mxu0 0
  %1897 = vmatpush1.bf16.msra.mxu0 %v1874
  %1898 = vmatprep.subr.bf16.mxu0 0
  %1899 = vmatpush1.bf16.msra.mxu0 %v1875
  %1900 = vmatprep.subr.bf16.mxu0 0
  %1901 = vmatpush1.bf16.msra.mxu0 0
  %1902 = vmatprep.subr.bf16.mxu0 0
  %1903 = vmatpush1.bf16.msra.mxu0 0
  %1904 = vmatprep.subr.bf16.mxu0 0
  %1905 = vmatpush1.bf16.msra.mxu0 0
  %1906 = vmatprep.subr.bf16.mxu0 0
  %1907 = vmatpush1.bf16.msra.mxu0 0
  %1908 = vmatprep.subr.bf16.mxu0 0
  %1909 = vmatpush1.bf16.msra.mxu0 0
  %1910 = vmatprep.subr.bf16.mxu0 0
  %1911 = vmatpush1.bf16.msra.mxu0 0
  %1912 = vmatprep.subr.bf16.mxu0 0
  %1913 = vmatpush1.bf16.msra.mxu0 0
  %1914 = vmatprep.subr.bf16.mxu0 0
  %1915 = vmatpush1.bf16.msra.mxu0 0
  %1916 = vmatprep.mubr.bf16.mxu0 0
  %1917 = vmatmul.mubr.bf16.gmra.mrb[0].mxu0 %v331
  %v1918 = vpop.f32.mrb[0].mxu0
  %v1919 = vadd.f32 0.0, %v1918
  %v1920 = vpop.f32.mrb[0].mxu0
  %v1921 = vpop.f32.mrb[0].mxu0
  %v1922 = vadd.f32 0.0, %v1921
  %v1923 = vpop.f32.mrb[0].mxu0
  %1924 = vmatprep.mubr.bf16.mxu0 0
  %1925 = vmatmul.mubr.bf16.gmra.mrb[0].mxu0 %v332
  %v1926 = vpop.f32.mrb[0].mxu0
  %v1927 = vadd.f32 0.0, %v1926
  %v1928 = vpop.f32.mrb[0].mxu0
  %v1929 = vpop.f32.mrb[0].mxu0
  %v1930 = vadd.f32 0.0, %v1929
  %v1931 = vpop.f32.mrb[0].mxu0
  %1932 = vmatprep.mubr.bf16.mxu0 0
  %1933 = vmatmul.mubr.bf16.gmra.mrb[0].mxu0 %v333
  %v1934 = vpop.f32.mrb[0].mxu0
  %v1935 = vadd.f32 0.0, %v1934
  %v1936 = vpop.f32.mrb[0].mxu0
  %v1937 = vpop.f32.mrb[0].mxu0
  %v1938 = vadd.f32 0.0, %v1937
  %v1939 = vpop.f32.mrb[0].mxu0
  %1940 = vmatprep.mubr.bf16.mxu0 0
  %1941 = vmatmul.mubr.bf16.gmra.mrb[0].mxu0 %v1832
  %v1942 = vpop.f32.mrb[0].mxu0
  %v1943 = vadd.f32 0.0, %v1942
  %v1944 = vpop.f32.mrb[0].mxu0
  %v1945 = vpop.f32.mrb[0].mxu0
  %v1946 = vadd.f32 0.0, %v1945
  %v1947 = vpop.f32.mrb[0].mxu0
  %1948 = vmatprep.mubr.bf16.mxu0 0
  %1949 = vmatmul.mubr.bf16.gmra.mrb[0].mxu0 %v335
  %v1950 = vpop.f32.mrb[0].mxu0
  %v1951 = vadd.f32 0.0, %v1950
  %v1952 = vpop.f32.mrb[0].mxu0
  %v1953 = vpop.f32.mrb[0].mxu0
  %v1954 = vadd.f32 0.0, %v1953
  %v1955 = vpop.f32.mrb[0].mxu0
  %1956 = vmatprep.mubr.bf16.mxu0 0
  %1957 = vmatmul.mubr.bf16.gmra.mrb[0].mxu0 %v336
  %v1958 = vpop.f32.mrb[0].mxu0
  %v1959 = vadd.f32 0.0, %v1958
  %v1960 = vpop.f32.mrb[0].mxu0
  %v1961 = vpop.f32.mrb[0].mxu0
  %v1962 = vadd.f32 0.0, %v1961
  %v1963 = vpop.f32.mrb[0].mxu0
  %1964 = vmatprep.mubr.bf16.mxu0 0
  %1965 = vmatmul.mubr.bf16.gmra.mrb[0].mxu0 %v337
  %v1966 = vpop.f32.mrb[0].mxu0
  %v1967 = vadd.f32 0.0, %v1966
  %v1968 = vpop.f32.mrb[0].mxu0
  %v1969 = vpop.f32.mrb[0].mxu0
  %v1970 = vadd.f32 0.0, %v1969
  %v1971 = vpop.f32.mrb[0].mxu0
  %1972 = vmatprep.mubr.bf16.mxu0 0
  %1973 = vmatmul.mubr.bf16.gmra.mrb[0].mxu0 %v1833
  %v1974 = vpop.f32.mrb[0].mxu0
  %v1975 = vadd.f32 0.0, %v1974
  %v1976 = vpop.f32.mrb[0].mxu0
  %v1977 = vpop.f32.mrb[0].mxu0
  %v1978 = vadd.f32 0.0, %v1977
  %v1979 = vpop.f32.mrb[0].mxu0
  %1980 = vdwg.mxu0
  %v1981 = vadd.f32 %v1770, %v1919
  %v1982 = vadd.f32 %v1771, %v1922
  %v1983 = vadd.f32 %v1772, %v1927
  %v1984 = vadd.f32 %v1773, %v1930
  %v1985 = vadd.f32 %v1774, %v1935
  %v1986 = vadd.f32 %v1775, %v1938
  %v1987 = vadd.f32 %v1776, %v1943
  %v1988 = vadd.f32 %v1777, %v1946
  %v1989 = vadd.f32 %v1778, %v1951
  %v1990 = vadd.f32 %v1779, %v1954
  %v1991 = vadd.f32 %v1780, %v1959
  %v1992 = vadd.f32 %v1781, %v1962
  %v1993 = vadd.f32 %v1782, %v1967
  %v1994 = vadd.f32 %v1783, %v1970
  %v1995 = vadd.f32 %v1784, %v1975
  %v1996 = vadd.f32 %v1785, %v1978
  %v1999 = vrot.slane %v33, 5
  %v2000 = vrot.slane %v1999, 4
  %v2001 = vrot.slane %v34, 5
  %v2002 = vsel %vm702, %v2000, %v2001
  %v2003 = vrot.slane %v53, 5
  %v2004 = vrot.slane %v2003, 4
  %v2005 = vrot.slane %v54, 5
  %v2006 = vsel %vm702, %v2004, %v2005
  %v2007 = vld [vmem:[%s1 + $0x200] sm:$0xf]
  %v2008 = vld [vmem:[%s1 + $0x204] sm:$0xf]
  %v2009 = vld [vmem:[%s1 + $0x208] sm:$0xf]
  %v2010 = vld [vmem:[%s1 + $0x20c] sm:$0xf]
  %v2011 = vld [vmem:[%s1 + $0x210] sm:$0xf]
  %v2012 = vld [vmem:[%s1 + $0x214] sm:$0xf]
  %v2013 = vld [vmem:[%s1 + $0x218] sm:$0xf]
  %v2014 = vld [vmem:[%s1 + $0x21c] sm:$0xf]
  %v2015 = vld [vmem:[%s1 + $0x220] sm:$0xf]
  %v2016 = vld [vmem:[%s1 + $0x224] sm:$0xf]
  %v2017 = vld [vmem:[%s1 + $0x228] sm:$0xf]
  %v2018 = vld [vmem:[%s1 + $0x22c] sm:$0xf]
  %v2019 = vld [vmem:[%s1 + $0x230] sm:$0xf]
  %v2020 = vld [vmem:[%s1 + $0x234] sm:$0xf]
  %v2021 = vld [vmem:[%s1 + $0x238] sm:$0xf]
  %v2022 = vld [vmem:[%s1 + $0x23c] sm:$0xf]
  %v2023 = vunpack.c.l.b16 %v2002
  %v2024 = vunpack.c.l.b16 %v2006
  %v2025 = vpack.c.b16 %v2023, %v1422
  %v2026 = vpack.c.b16 %v2024, %v1423
  %v2045 = vunpack.c.l.b16 %v2007
  %v2046 = vunpack.c.l.b16 %v2008
  %v2047 = vunpack.c.l.b16 %v2009
  %v2048 = vunpack.c.l.b16 %v2010
  %v2049 = vunpack.c.l.b16 %v2011
  %v2050 = vunpack.c.l.b16 %v2012
  %v2051 = vunpack.c.l.b16 %v2013
  %v2052 = vunpack.c.l.b16 %v2014
  %v2053 = vunpack.c.l.b16 %v2015
  %v2054 = vunpack.c.l.b16 %v2016
  %v2055 = vunpack.c.l.b16 %v2017
  %v2056 = vunpack.c.l.b16 %v2018
  %v2057 = vunpack.c.l.b16 %v2019
  %v2058 = vunpack.c.l.b16 %v2020
  %v2059 = vunpack.c.l.b16 %v2021
  %v2060 = vunpack.c.l.b16 %v2022
  %v2061 = vpack.c.b16 %v2046, %v2045
  %v2062 = vpack.c.b16 %v2048, %v2047
  %v2063 = vpack.c.b16 %v2050, %v2049
  %v2064 = vpack.c.b16 %v2052, %v2051
  %v2065 = vpack.c.b16 %v2054, %v2053
  %v2066 = vpack.c.b16 %v2056, %v2055
  %v2067 = vpack.c.b16 %v2058, %v2057
  %v2068 = vpack.c.b16 %v2060, %v2059
  %2077 = vmatprep.subr.bf16.mxu0 0
  %2078 = vmatpush1.bf16.msra.mxu0 %v2061
  %2079 = vmatprep.subr.bf16.mxu0 0
  %2080 = vmatpush1.bf16.msra.mxu0 %v2062
  %2081 = vmatprep.subr.bf16.mxu0 0
  %2082 = vmatpush1.bf16.msra.mxu0 %v2063
  %2083 = vmatprep.subr.bf16.mxu0 0
  %2084 = vmatpush1.bf16.msra.mxu0 %v2064
  %2085 = vmatprep.subr.bf16.mxu0 0
  %2086 = vmatpush1.bf16.msra.mxu0 %v2065
  %2087 = vmatprep.subr.bf16.mxu0 0
  %2088 = vmatpush1.bf16.msra.mxu0 %v2066
  %2089 = vmatprep.subr.bf16.mxu0 0
  %2090 = vmatpush1.bf16.msra.mxu0 %v2067
  %2091 = vmatprep.subr.bf16.mxu0 0
  %2092 = vmatpush1.bf16.msra.mxu0 %v2068
  %2093 = vmatprep.subr.bf16.mxu0 0
  %2094 = vmatpush1.bf16.msra.mxu0 0
  %2095 = vmatprep.subr.bf16.mxu0 0
  %2096 = vmatpush1.bf16.msra.mxu0 0
  %2097 = vmatprep.subr.bf16.mxu0 0
  %2098 = vmatpush1.bf16.msra.mxu0 0
  %2099 = vmatprep.subr.bf16.mxu0 0
  %2100 = vmatpush1.bf16.msra.mxu0 0
  %2101 = vmatprep.subr.bf16.mxu0 0
  %2102 = vmatpush1.bf16.msra.mxu0 0
  %2103 = vmatprep.subr.bf16.mxu0 0
  %2104 = vmatpush1.bf16.msra.mxu0 0
  %2105 = vmatprep.subr.bf16.mxu0 0
  %2106 = vmatpush1.bf16.msra.mxu0 0
  %2107 = vmatprep.subr.bf16.mxu0 0
  %2108 = vmatpush1.bf16.msra.mxu0 0
  %2109 = vmatprep.mubr.bf16.mxu0 0
  %2110 = vmatmul.mubr.bf16.gmra.mrb[0].mxu0 %v800
  %v2111 = vpop.f32.mrb[0].mxu0
  %v2112 = vadd.f32 0.0, %v2111
  %v2113 = vpop.f32.mrb[0].mxu0
  %v2114 = vpop.f32.mrb[0].mxu0
  %v2115 = vadd.f32 0.0, %v2114
  %v2116 = vpop.f32.mrb[0].mxu0
  %2117 = vmatprep.mubr.bf16.mxu0 0
  %2118 = vmatmul.mubr.bf16.gmra.mrb[0].mxu0 %v801
  %v2119 = vpop.f32.mrb[0].mxu0
  %v2120 = vadd.f32 0.0, %v2119
  %v2121 = vpop.f32.mrb[0].mxu0
  %v2122 = vpop.f32.mrb[0].mxu0
  %v2123 = vadd.f32 0.0, %v2122
  %v2124 = vpop.f32.mrb[0].mxu0
  %2125 = vmatprep.mubr.bf16.mxu0 0
  %2126 = vmatmul.mubr.bf16.gmra.mrb[0].mxu0 %v802
  %v2127 = vpop.f32.mrb[0].mxu0
  %v2128 = vadd.f32 0.0, %v2127
  %v2129 = vpop.f32.mrb[0].mxu0
  %v2130 = vpop.f32.mrb[0].mxu0
  %v2131 = vadd.f32 0.0, %v2130
  %v2132 = vpop.f32.mrb[0].mxu0
  %2133 = vmatprep.mubr.bf16.mxu0 0
  %2134 = vmatmul.mubr.bf16.gmra.mrb[0].mxu0 %v2025
  %v2135 = vpop.f32.mrb[0].mxu0
  %v2136 = vadd.f32 0.0, %v2135
  %v2137 = vpop.f32.mrb[0].mxu0
  %v2138 = vpop.f32.mrb[0].mxu0
  %v2139 = vadd.f32 0.0, %v2138
  %v2140 = vpop.f32.mrb[0].mxu0
  %2141 = vmatprep.mubr.bf16.mxu0 0
  %2142 = vmatmul.mubr.bf16.gmra.mrb[0].mxu0 %v804
  %v2143 = vpop.f32.mrb[0].mxu0
  %v2144 = vadd.f32 0.0, %v2143
  %v2145 = vpop.f32.mrb[0].mxu0
  %v2146 = vpop.f32.mrb[0].mxu0
  %v2147 = vadd.f32 0.0, %v2146
  %v2148 = vpop.f32.mrb[0].mxu0
  %2149 = vmatprep.mubr.bf16.mxu0 0
  %2150 = vmatmul.mubr.bf16.gmra.mrb[0].mxu0 %v805
  %v2151 = vpop.f32.mrb[0].mxu0
  %v2152 = vadd.f32 0.0, %v2151
  %v2153 = vpop.f32.mrb[0].mxu0
  %v2154 = vpop.f32.mrb[0].mxu0
  %v2155 = vadd.f32 0.0, %v2154
  %v2156 = vpop.f32.mrb[0].mxu0
  %2157 = vmatprep.mubr.bf16.mxu0 0
  %2158 = vmatmul.mubr.bf16.gmra.mrb[0].mxu0 %v806
  %v2159 = vpop.f32.mrb[0].mxu0
  %v2160 = vadd.f32 0.0, %v2159
  %v2161 = vpop.f32.mrb[0].mxu0
  %v2162 = vpop.f32.mrb[0].mxu0
  %v2163 = vadd.f32 0.0, %v2162
  %v2164 = vpop.f32.mrb[0].mxu0
  %2165 = vmatprep.mubr.bf16.mxu0 0
  %2166 = vmatmul.mubr.bf16.gmra.mrb[0].mxu0 %v2026
  %v2167 = vpop.f32.mrb[0].mxu0
  %v2168 = vadd.f32 0.0, %v2167
  %v2169 = vpop.f32.mrb[0].mxu0
  %v2170 = vpop.f32.mrb[0].mxu0
  %v2171 = vadd.f32 0.0, %v2170
  %v2172 = vpop.f32.mrb[0].mxu0
  %2173 = vdwg.mxu0
  %v2174 = vadd.f32 %v1981, %v2112
  %v2175 = vadd.f32 %v1982, %v2115
  %v2176 = vadd.f32 %v1983, %v2120
  %v2177 = vadd.f32 %v1984, %v2123
  %v2178 = vadd.f32 %v1985, %v2128
  %v2179 = vadd.f32 %v1986, %v2131
  %v2180 = vadd.f32 %v1987, %v2136
  %v2181 = vadd.f32 %v1988, %v2139
  %v2182 = vadd.f32 %v1989, %v2144
  %v2183 = vadd.f32 %v1990, %v2147
  %v2184 = vadd.f32 %v1991, %v2152
  %v2185 = vadd.f32 %v1992, %v2155
  %v2186 = vadd.f32 %v1993, %v2160
  %v2187 = vadd.f32 %v1994, %v2163
  %v2188 = vadd.f32 %v1995, %v2168
  %v2189 = vadd.f32 %v1996, %v2171
  %v2190 = vld [vmem:[%s2] sm:$0xff]
  %v2191 = vld [vmem:[%s2 + $0x8] sm:$0xff]
  %v2192 = vld [vmem:[%s2 + $0x10] sm:$0xff]
  %v2193 = vld [vmem:[%s2 + $0x18] sm:$0xff]
  %v2194 = vld [vmem:[%s2 + $0x20] sm:$0xff]
  %v2195 = vld [vmem:[%s2 + $0x28] sm:$0xff]
  %v2196 = vld [vmem:[%s2 + $0x30] sm:$0xff]
  %v2197 = vld [vmem:[%s2 + $0x38] sm:$0xff]
  %v2198 = vld [vmem:[%s2 + $0x40] sm:$0xff]
  %v2199 = vld [vmem:[%s2 + $0x48] sm:$0xff]
  %v2200 = vld [vmem:[%s2 + $0x50] sm:$0xff]
  %v2201 = vld [vmem:[%s2 + $0x58] sm:$0xff]
  %v2202 = vld [vmem:[%s2 + $0x60] sm:$0xff]
  %v2203 = vld [vmem:[%s2 + $0x68] sm:$0xff]
  %v2204 = vld [vmem:[%s2 + $0x70] sm:$0xff]
  %v2205 = vld [vmem:[%s2 + $0x78] sm:$0xff]
  %v2206 = vadd.f32 %v2174, %v2190
  %v2207 = vadd.f32 %v2175, %v2191
  %v2208 = vadd.f32 %v2176, %v2192
  %v2209 = vadd.f32 %v2177, %v2193
  %v2210 = vadd.f32 %v2178, %v2194
  %v2211 = vadd.f32 %v2179, %v2195
  %v2212 = vadd.f32 %v2180, %v2196
  %v2213 = vadd.f32 %v2181, %v2197
  %v2214 = vadd.f32 %v2182, %v2198
  %v2215 = vadd.f32 %v2183, %v2199
  %v2216 = vadd.f32 %v2184, %v2200
  %v2217 = vadd.f32 %v2185, %v2201
  %v2218 = vadd.f32 %v2186, %v2202
  %v2219 = vadd.f32 %v2187, %v2203
  %v2220 = vadd.f32 %v2188, %v2204
  %v2221 = vadd.f32 %v2189, %v2205
  %2222 = vst [vmem:[%s3] sm:$0xff] %v2206
  %2223 = vst [vmem:[%s3 + $0x8] sm:$0xff] %v2207
  %2224 = vst [vmem:[%s3 + $0x10] sm:$0xff] %v2208
  %2225 = vst [vmem:[%s3 + $0x18] sm:$0xff] %v2209
  %2226 = vst [vmem:[%s3 + $0x20] sm:$0xff] %v2210
  %2227 = vst [vmem:[%s3 + $0x28] sm:$0xff] %v2211
  %2228 = vst [vmem:[%s3 + $0x30] sm:$0xff] %v2212
  %2229 = vst [vmem:[%s3 + $0x38] sm:$0xff] %v2213
  %2230 = vst [vmem:[%s3 + $0x40] sm:$0xff] %v2214
  %2231 = vst [vmem:[%s3 + $0x48] sm:$0xff] %v2215
  %2232 = vst [vmem:[%s3 + $0x50] sm:$0xff] %v2216
  %2233 = vst [vmem:[%s3 + $0x58] sm:$0xff] %v2217
  %2234 = vst [vmem:[%s3 + $0x60] sm:$0xff] %v2218
  %2235 = vst [vmem:[%s3 + $0x68] sm:$0xff] %v2219
  %2236 = vst [vmem:[%s3 + $0x70] sm:$0xff] %v2220
  %2237 = vst [vmem:[%s3 + $0x78] sm:$0xff] %v2221
  // Predicated region
  $region14: #{conv_group_forward.7} parent=0 // pred_check
    _
  $region15: #{conv_group_forward.7} parent=0 // pred_check_branch
    %2239 = sbr.rel (0) target = $region17
  $region16: #{conv_group_forward.7} parent=0 // pred_region
    _
  $region17: #{conv_group_forward.7} parent=0 // pred_fallthru
    _
  // Predicated region
  $region18: #{conv_group_forward.7} parent=0 // pred_check
    _
  $region19: #{conv_group_forward.7} parent=0 // pred_check_branch
    %2241 = sbr.rel (0) target = $region21
  $region20: #{conv_group_forward.7} parent=0 // pred_region
    _
  $region21: #{conv_group_forward.7} parent=0 // pred_fallthru
    _

// kernel: conv_group_forward.6
$region0: #{conv_group_forward.6}
  #allocation0 [shape = 'u32[]', space=smem, size = 0x4, offset = 0x4, fixed_abs, tag = 'smem constant byte address 0x4 - core index']
  #allocation1 [shape = 'u32[144,128]{1,0:T(1,128)}', space=vmem, size = 0x12000, scoped, tag = 'internal scratch']
  %s0 = inlined_call_operand.vmem [shape: bf16[2,10,10,128], index: 0, kind: input, shape index: {}]
  %s1 = inlined_call_operand.vmem [shape: bf16[1152,128], index: 1, kind: input, shape index: {}]
  %s2 = inlined_call_operand.vmem [shape: f32[1,128], index: 2, kind: input, shape index: {}]
  %s3 = inlined_call_operand.vmem [shape: f32[1,128], index: 3, kind: input, shape index: {}]
  %s4 = inlined_call_operand.vmem [shape: bf16[2,10,10,128], index: 4, kind: output, shape index: {}]
  %s5 = sld [smem:[#allocation0]]
  $region26: #{conv_group_forward.6} parent=0
    _
  %s7 = ssub.s32 1, %s5
  %s8 = scalar_select 0, %s7, %s5
  // Predicated region
  $region2: #{conv_group_forward.6} parent=0 // pred_check
    _
  $region3: #{conv_group_forward.6} parent=0 // pred_check_branch
    %10 = sbr.rel (0) target = $region5
  $region4: #{conv_group_forward.6} parent=0 // pred_region
    _
  $region5: #{conv_group_forward.6} parent=0 // pred_fallthru
    _
  // Predicated region
  $region6: #{conv_group_forward.6} parent=0 // pred_check
    _
  $region7: #{conv_group_forward.6} parent=0 // pred_check_branch
    %12 = sbr.rel (0) target = $region9
  $region8: #{conv_group_forward.6} parent=0 // pred_region
    _
  $region9: #{conv_group_forward.6} parent=0 // pred_fallthru
    _
  // Predicated region
  $region10: #{conv_group_forward.6} parent=0 // pred_check
    _
  $region11: #{conv_group_forward.6} parent=0 // pred_check_branch
    %14 = sbr.rel (0) target = $region13
  $region12: #{conv_group_forward.6} parent=0 // pred_region
    _
  $region13: #{conv_group_forward.6} parent=0 // pred_fallthru
    _
  // Predicated region
  $region14: #{conv_group_forward.6} parent=0 // pred_check
    _
  $region15: #{conv_group_forward.6} parent=0 // pred_check_branch
    %16 = sbr.rel (0) target = $region17
  $region16: #{conv_group_forward.6} parent=0 // pred_region
    _
  $region17: #{conv_group_forward.6} parent=0 // pred_fallthru
    _
  %v18 = vld [vmem:[%s0] sm:$0xf]
  %v19 = vld [vmem:[%s0 + $0x4] sm:$0x1]
  %v20 = vld [vmem:[%s0 + $0x8] sm:$0xf]
  %v21 = vld [vmem:[%s0 + $0xc] sm:$0x1]
  %v22 = vld [vmem:[%s0 + $0x10] sm:$0xf]
  %v23 = vld [vmem:[%s0 + $0x14] sm:$0x1]
  %v24 = vld [vmem:[%s0 + $0x18] sm:$0xf]
  %v25 = vld [vmem:[%s0 + $0x1c] sm:$0x1]
  %v26 = vld [vmem:[%s0 + $0x20] sm:$0xf]
  %v27 = vld [vmem:[%s0 + $0x24] sm:$0x1]
  %v28 = vld [vmem:[%s0 + $0x28] sm:$0xf]
  %v29 = vld [vmem:[%s0 + $0x2c] sm:$0x1]
  %v30 = vld [vmem:[%s0 + $0x30] sm:$0xf]
  %v31 = vld [vmem:[%s0 + $0x34] sm:$0x1]
  %v32 = vld [vmem:[%s0 + $0x38] sm:$0xf]
  %v33 = vld [vmem:[%s0 + $0x3c] sm:$0x1]
  %v34 = vld [vmem:[%s0 + $0x40] sm:$0xf]
  %v35 = vld [vmem:[%s0 + $0x44] sm:$0x1]
  %v36 = vld [vmem:[%s0 + $0x48] sm:$0xf]
  %v37 = vld [vmem:[%s0 + $0x4c] sm:$0x1]
  %v38 = vld [vmem:[%s0 + $0x50] sm:$0xf]
  %v39 = vld [vmem:[%s0 + $0x54] sm:$0x1]
  %v40 = vld [vmem:[%s0 + $0x58] sm:$0xf]
  %v41 = vld [vmem:[%s0 + $0x5c] sm:$0x1]
  %v42 = vld [vmem:[%s0 + $0x60] sm:$0xf]
  %v43 = vld [vmem:[%s0 + $0x64] sm:$0x1]
  %v44 = vld [vmem:[%s0 + $0x68] sm:$0xf]
  %v45 = vld [vmem:[%s0 + $0x6c] sm:$0x1]
  %v46 = vld [vmem:[%s0 + $0x70] sm:$0xf]
  %v47 = vld [vmem:[%s0 + $0x74] sm:$0x1]
  %v48 = vld [vmem:[%s0 + $0x78] sm:$0xf]
  %v49 = vld [vmem:[%s0 + $0x7c] sm:$0x1]
  %v50 = vld [vmem:[%s0 + $0x80] sm:$0xf]
  %v51 = vld [vmem:[%s0 + $0x84] sm:$0x1]
  %v52 = vld [vmem:[%s0 + $0x88] sm:$0xf]
  %v53 = vld [vmem:[%s0 + $0x8c] sm:$0x1]
  %v54 = vld [vmem:[%s0 + $0x90] sm:$0xf]
  %v55 = vld [vmem:[%s0 + $0x94] sm:$0x1]
  %v56 = vld [vmem:[%s0 + $0x98] sm:$0xf]
  %v57 = vld [vmem:[%s0 + $0x9c] sm:$0x1]
  %v58 = vld [vmem:[%s1] sm:$0xf]
  %v59 = vld [vmem:[%s1 + $0x4] sm:$0xf]
  %v60 = vld [vmem:[%s1 + $0x8] sm:$0xf]
  %v61 = vld [vmem:[%s1 + $0xc] sm:$0xf]
  %v62 = vld [vmem:[%s1 + $0x10] sm:$0xf]
  %v63 = vld [vmem:[%s1 + $0x14] sm:$0xf]
  %v64 = vld [vmem:[%s1 + $0x18] sm:$0xf]
  %v65 = vld [vmem:[%s1 + $0x1c] sm:$0xf]
  %v66 = vld [vmem:[%s1 + $0x20] sm:$0xf]
  %v67 = vld [vmem:[%s1 + $0x24] sm:$0xf]
  %v68 = vld [vmem:[%s1 + $0x28] sm:$0xf]
  %v69 = vld [vmem:[%s1 + $0x2c] sm:$0xf]
  %v70 = vld [vmem:[%s1 + $0x30] sm:$0xf]
  %v71 = vld [vmem:[%s1 + $0x34] sm:$0xf]
  %v72 = vld [vmem:[%s1 + $0x38] sm:$0xf]
  %v73 = vld [vmem:[%s1 + $0x3c] sm:$0xf]
  %vm74 = vsmask.f32 3328
  %vm75 = vsmask.f32 7440
  %vm76 = vmor %vm74, %vm75
  %v78 = vshrl.u32 %v18, 16
  %v80 = vrot.slane %v78, 4
  %v81 = vshll.u32 %v18, 16
  %v83 = vrot.slane %v81, 5
  %v84 = vor.u32 %v80, %v83
  %v85 = vrot.slane %v84, 4
  %v87 = vshll.u32 %v19, 16
  %v89 = vrot.slane %v87, 5
  %v90 = vsel %vm76, %v85, %v89
  %v92 = vshrl.u32 %v20, 16
  %v94 = vrot.slane %v92, 4
  %v95 = vshll.u32 %v20, 16
  %v97 = vrot.slane %v95, 5
  %v98 = vor.u32 %v94, %v97
  %v99 = vrot.slane %v98, 4
  %v101 = vshll.u32 %v21, 16
  %v103 = vrot.slane %v101, 5
  %v104 = vsel %vm76, %v99, %v103
  %v106 = vshrl.u32 %v22, 16
  %v108 = vrot.slane %v106, 4
  %v109 = vshll.u32 %v22, 16
  %v111 = vrot.slane %v109, 5
  %v112 = vor.u32 %v108, %v111
  %v113 = vrot.slane %v112, 4
  %v115 = vshll.u32 %v23, 16
  %v117 = vrot.slane %v115, 5
  %v118 = vsel %vm76, %v113, %v117
  %v120 = vshrl.u32 %v24, 16
  %v122 = vrot.slane %v120, 4
  %v123 = vshll.u32 %v24, 16
  %v125 = vrot.slane %v123, 5
  %v126 = vor.u32 %v122, %v125
  %v127 = vrot.slane %v126, 4
  %v129 = vshll.u32 %v25, 16
  %v131 = vrot.slane %v129, 5
  %v132 = vsel %vm76, %v127, %v131
  %v134 = vshrl.u32 %v26, 16
  %v136 = vrot.slane %v134, 4
  %v137 = vshll.u32 %v26, 16
  %v139 = vrot.slane %v137, 5
  %v140 = vor.u32 %v136, %v139
  %v141 = vrot.slane %v140, 4
  %v143 = vshll.u32 %v27, 16
  %v145 = vrot.slane %v143, 5
  %v146 = vsel %vm76, %v141, %v145
  %v148 = vshrl.u32 %v28, 16
  %v150 = vrot.slane %v148, 4
  %v151 = vshll.u32 %v28, 16
  %v153 = vrot.slane %v151, 5
  %v154 = vor.u32 %v150, %v153
  %v155 = vrot.slane %v154, 4
  %v157 = vshll.u32 %v29, 16
  %v159 = vrot.slane %v157, 5
  %v160 = vsel %vm76, %v155, %v159
  %v162 = vshrl.u32 %v30, 16
  %v164 = vrot.slane %v162, 4
  %v165 = vshll.u32 %v30, 16
  %v167 = vrot.slane %v165, 5
  %v168 = vor.u32 %v164, %v167
  %v169 = vrot.slane %v168, 4
  %v171 = vshll.u32 %v31, 16
  %v173 = vrot.slane %v171, 5
  %v174 = vsel %vm76, %v169, %v173
  %v176 = vshrl.u32 %v32, 16
  %v178 = vrot.slane %v176, 4
  %v179 = vshll.u32 %v32, 16
  %v181 = vrot.slane %v179, 5
  %v182 = vor.u32 %v178, %v181
  %v183 = vrot.slane %v182, 4
  %v185 = vshll.u32 %v33, 16
  %v187 = vrot.slane %v185, 5
  %v188 = vsel %vm76, %v183, %v187
  %v190 = vshrl.u32 %v38, 16
  %v192 = vrot.slane %v190, 4
  %v193 = vshll.u32 %v38, 16
  %v195 = vrot.slane %v193, 5
  %v196 = vor.u32 %v192, %v195
  %v197 = vrot.slane %v196, 4
  %v199 = vshll.u32 %v39, 16
  %v201 = vrot.slane %v199, 5
  %v202 = vsel %vm76, %v197, %v201
  %v204 = vshrl.u32 %v40, 16
  %v206 = vrot.slane %v204, 4
  %v207 = vshll.u32 %v40, 16
  %v209 = vrot.slane %v207, 5
  %v210 = vor.u32 %v206, %v209
  %v211 = vrot.slane %v210, 4
  %v213 = vshll.u32 %v41, 16
  %v215 = vrot.slane %v213, 5
  %v216 = vsel %vm76, %v211, %v215
  %v218 = vshrl.u32 %v42, 16
  %v220 = vrot.slane %v218, 4
  %v221 = vshll.u32 %v42, 16
  %v223 = vrot.slane %v221, 5
  %v224 = vor.u32 %v220, %v223
  %v225 = vrot.slane %v224, 4
  %v227 = vshll.u32 %v43, 16
  %v229 = vrot.slane %v227, 5
  %v230 = vsel %vm76, %v225, %v229
  %v232 = vshrl.u32 %v44, 16
  %v234 = vrot.slane %v232, 4
  %v235 = vshll.u32 %v44, 16
  %v237 = vrot.slane %v235, 5
  %v238 = vor.u32 %v234, %v237
  %v239 = vrot.slane %v238, 4
  %v241 = vshll.u32 %v45, 16
  %v243 = vrot.slane %v241, 5
  %v244 = vsel %vm76, %v239, %v243
  %v246 = vshrl.u32 %v46, 16
  %v248 = vrot.slane %v246, 4
  %v249 = vshll.u32 %v46, 16
  %v251 = vrot.slane %v249, 5
  %v252 = vor.u32 %v248, %v251
  %v253 = vrot.slane %v252, 4
  %v255 = vshll.u32 %v47, 16
  %v257 = vrot.slane %v255, 5
  %v258 = vsel %vm76, %v253, %v257
  %v260 = vshrl.u32 %v48, 16
  %v262 = vrot.slane %v260, 4
  %v263 = vshll.u32 %v48, 16
  %v265 = vrot.slane %v263, 5
  %v266 = vor.u32 %v262, %v265
  %v267 = vrot.slane %v266, 4
  %v269 = vshll.u32 %v49, 16
  %v271 = vrot.slane %v269, 5
  %v272 = vsel %vm76, %v267, %v271
  %v274 = vshrl.u32 %v50, 16
  %v276 = vrot.slane %v274, 4
  %v277 = vshll.u32 %v50, 16
  %v279 = vrot.slane %v277, 5
  %v280 = vor.u32 %v276, %v279
  %v281 = vrot.slane %v280, 4
  %v283 = vshll.u32 %v51, 16
  %v285 = vrot.slane %v283, 5
  %v286 = vsel %vm76, %v281, %v285
  %v288 = vshrl.u32 %v52, 16
  %v290 = vrot.slane %v288, 4
  %v291 = vshll.u32 %v52, 16
  %v293 = vrot.slane %v291, 5
  %v294 = vor.u32 %v290, %v293
  %v295 = vrot.slane %v294, 4
  %v297 = vshll.u32 %v53, 16
  %v299 = vrot.slane %v297, 5
  %v300 = vsel %vm76, %v295, %v299
  %v301 = vld [vmem:[%s1 + $0x40] sm:$0xf]
  %v302 = vld [vmem:[%s1 + $0x44] sm:$0xf]
  %v303 = vld [vmem:[%s1 + $0x48] sm:$0xf]
  %v304 = vld [vmem:[%s1 + $0x4c] sm:$0xf]
  %v305 = vld [vmem:[%s1 + $0x50] sm:$0xf]
  %v306 = vld [vmem:[%s1 + $0x54] sm:$0xf]
  %v307 = vld [vmem:[%s1 + $0x58] sm:$0xf]
  %v308 = vld [vmem:[%s1 + $0x5c] sm:$0xf]
  %v309 = vld [vmem:[%s1 + $0x60] sm:$0xf]
  %v310 = vld [vmem:[%s1 + $0x64] sm:$0xf]
  %v311 = vld [vmem:[%s1 + $0x68] sm:$0xf]
  %v312 = vld [vmem:[%s1 + $0x6c] sm:$0xf]
  %v313 = vld [vmem:[%s1 + $0x70] sm:$0xf]
  %v314 = vld [vmem:[%s1 + $0x74] sm:$0xf]
  %v315 = vld [vmem:[%s1 + $0x78] sm:$0xf]
  %v316 = vld [vmem:[%s1 + $0x7c] sm:$0xf]
  %v317 = vunpack.c.l.b16 %v90
  %v318 = vunpack.c.l.b16 %v104
  %v319 = vunpack.c.l.b16 %v118
  %v320 = vunpack.c.l.b16 %v132
  %v321 = vunpack.c.l.b16 %v146
  %v322 = vunpack.c.l.b16 %v160
  %v323 = vunpack.c.l.b16 %v174
  %v324 = vunpack.c.l.b16 %v188
  %v325 = vunpack.c.l.b16 %v202
  %v326 = vunpack.c.l.b16 %v216
  %v327 = vunpack.c.l.b16 %v230
  %v328 = vunpack.c.l.b16 %v244
  %v329 = vunpack.c.l.b16 %v258
  %v330 = vunpack.c.l.b16 %v272
  %v331 = vunpack.c.l.b16 %v286
  %v332 = vunpack.c.l.b16 %v300
  %v333 = vpack.c.b16 %v318, %v317
  %v334 = vpack.c.b16 %v320, %v319
  %v335 = vpack.c.b16 %v322, %v321
  %v336 = vpack.c.b16 %v324, %v323
  %v337 = vpack.c.b16 %v326, %v325
  %v338 = vpack.c.b16 %v328, %v327
  %v339 = vpack.c.b16 %v330, %v329
  %v340 = vpack.c.b16 %v332, %v331
  %v365 = vunpack.c.l.b16 %v301
  %v366 = vunpack.c.l.b16 %v302
  %v367 = vunpack.c.l.b16 %v303
  %v368 = vunpack.c.l.b16 %v304
  %v369 = vunpack.c.l.b16 %v305
  %v370 = vunpack.c.l.b16 %v306
  %v371 = vunpack.c.l.b16 %v307
  %v372 = vunpack.c.l.b16 %v308
  %v373 = vunpack.c.l.b16 %v309
  %v374 = vunpack.c.l.b16 %v310
  %v375 = vunpack.c.l.b16 %v311
  %v376 = vunpack.c.l.b16 %v312
  %v377 = vunpack.c.l.b16 %v313
  %v378 = vunpack.c.l.b16 %v314
  %v379 = vunpack.c.l.b16 %v315
  %v380 = vunpack.c.l.b16 %v316
  %v381 = vpack.c.b16 %v366, %v365
  %v382 = vpack.c.b16 %v368, %v367
  %v383 = vpack.c.b16 %v370, %v369
  %v384 = vpack.c.b16 %v372, %v371
  %v385 = vpack.c.b16 %v374, %v373
  %v386 = vpack.c.b16 %v376, %v375
  %v387 = vpack.c.b16 %v378, %v377
  %v388 = vpack.c.b16 %v380, %v379
  %397 = vmatprep.subr.bf16.mxu0 0
  %398 = vmatpush1.bf16.msra.mxu0 %v381
  %399 = vmatprep.subr.bf16.mxu0 0
  %400 = vmatpush1.bf16.msra.mxu0 %v382
  %401 = vmatprep.subr.bf16.mxu0 0
  %402 = vmatpush1.bf16.msra.mxu0 %v383
  %403 = vmatprep.subr.bf16.mxu0 0
  %404 = vmatpush1.bf16.msra.mxu0 %v384
  %405 = vmatprep.subr.bf16.mxu0 0
  %406 = vmatpush1.bf16.msra.mxu0 %v385
  %407 = vmatprep.subr.bf16.mxu0 0
  %408 = vmatpush1.bf16.msra.mxu0 %v386
  %409 = vmatprep.subr.bf16.mxu0 0
  %410 = vmatpush1.bf16.msra.mxu0 %v387
  %411 = vmatprep.subr.bf16.mxu0 0
  %412 = vmatpush1.bf16.msra.mxu0 %v388
  %413 = vmatprep.subr.bf16.mxu0 0
  %414 = vmatpush1.bf16.msra.mxu0 0
  %415 = vmatprep.subr.bf16.mxu0 0
  %416 = vmatpush1.bf16.msra.mxu0 0
  %417 = vmatprep.subr.bf16.mxu0 0
  %418 = vmatpush1.bf16.msra.mxu0 0
  %419 = vmatprep.subr.bf16.mxu0 0
  %420 = vmatpush1.bf16.msra.mxu0 0
  %421 = vmatprep.subr.bf16.mxu0 0
  %422 = vmatpush1.bf16.msra.mxu0 0
  %423 = vmatprep.subr.bf16.mxu0 0
  %424 = vmatpush1.bf16.msra.mxu0 0
  %425 = vmatprep.subr.bf16.mxu0 0
  %426 = vmatpush1.bf16.msra.mxu0 0
  %427 = vmatprep.subr.bf16.mxu0 0
  %428 = vmatpush1.bf16.msra.mxu0 0
  %429 = vmatprep.mubr.bf16.mxu0 0
  %430 = vmatmul.mubr.bf16.gmra.mrb[0].mxu0 %v333
  %v431 = vpop.f32.mrb[0].mxu0
  %v432 = vadd.f32 0.0, %v431
  %v433 = vpop.f32.mrb[0].mxu0
  %v434 = vpop.f32.mrb[0].mxu0
  %v435 = vadd.f32 0.0, %v434
  %v436 = vpop.f32.mrb[0].mxu0
  %437 = vmatprep.mubr.bf16.mxu0 0
  %438 = vmatmul.mubr.bf16.gmra.mrb[0].mxu0 %v334
  %v439 = vpop.f32.mrb[0].mxu0
  %v440 = vadd.f32 0.0, %v439
  %v441 = vpop.f32.mrb[0].mxu0
  %v442 = vpop.f32.mrb[0].mxu0
  %v443 = vadd.f32 0.0, %v442
  %v444 = vpop.f32.mrb[0].mxu0
  %445 = vmatprep.mubr.bf16.mxu0 0
  %446 = vmatmul.mubr.bf16.gmra.mrb[0].mxu0 %v335
  %v447 = vpop.f32.mrb[0].mxu0
  %v448 = vadd.f32 0.0, %v447
  %v449 = vpop.f32.mrb[0].mxu0
  %v450 = vpop.f32.mrb[0].mxu0
  %v451 = vadd.f32 0.0, %v450
  %v452 = vpop.f32.mrb[0].mxu0
  %453 = vmatprep.mubr.bf16.mxu0 0
  %454 = vmatmul.mubr.bf16.gmra.mrb[0].mxu0 %v336
  %v455 = vpop.f32.mrb[0].mxu0
  %v456 = vadd.f32 0.0, %v455
  %v457 = vpop.f32.mrb[0].mxu0
  %v458 = vpop.f32.mrb[0].mxu0
  %v459 = vadd.f32 0.0, %v458
  %v460 = vpop.f32.mrb[0].mxu0
  %461 = vmatprep.mubr.bf16.mxu0 0
  %462 = vmatmul.mubr.bf16.gmra.mrb[0].mxu0 %v337
  %v463 = vpop.f32.mrb[0].mxu0
  %v464 = vadd.f32 0.0, %v463
  %v465 = vpop.f32.mrb[0].mxu0
  %v466 = vpop.f32.mrb[0].mxu0
  %v467 = vadd.f32 0.0, %v466
  %v468 = vpop.f32.mrb[0].mxu0
  %469 = vmatprep.mubr.bf16.mxu0 0
  %470 = vmatmul.mubr.bf16.gmra.mrb[0].mxu0 %v338
  %v471 = vpop.f32.mrb[0].mxu0
  %v472 = vadd.f32 0.0, %v471
  %v473 = vpop.f32.mrb[0].mxu0
  %v474 = vpop.f32.mrb[0].mxu0
  %v475 = vadd.f32 0.0, %v474
  %v476 = vpop.f32.mrb[0].mxu0
  %477 = vmatprep.mubr.bf16.mxu0 0
  %478 = vmatmul.mubr.bf16.gmra.mrb[0].mxu0 %v339
  %v479 = vpop.f32.mrb[0].mxu0
  %v480 = vadd.f32 0.0, %v479
  %v481 = vpop.f32.mrb[0].mxu0
  %v482 = vpop.f32.mrb[0].mxu0
  %v483 = vadd.f32 0.0, %v482
  %v484 = vpop.f32.mrb[0].mxu0
  %485 = vmatprep.mubr.bf16.mxu0 0
  %486 = vmatmul.mubr.bf16.gmra.mrb[0].mxu0 %v340
  %v487 = vpop.f32.mrb[0].mxu0
  %v488 = vadd.f32 0.0, %v487
  %v489 = vpop.f32.mrb[0].mxu0
  %v490 = vpop.f32.mrb[0].mxu0
  %v491 = vadd.f32 0.0, %v490
  %v492 = vpop.f32.mrb[0].mxu0
  %493 = vdwg.mxu0
  %v510 = vunpack.c.l.b16 %v18
  %v511 = vunpack.c.l.b16 %v20
  %v512 = vunpack.c.l.b16 %v22
  %v513 = vunpack.c.l.b16 %v24
  %v514 = vunpack.c.l.b16 %v26
  %v515 = vunpack.c.l.b16 %v28
  %v516 = vunpack.c.l.b16 %v30
  %v517 = vunpack.c.l.b16 %v32
  %v518 = vunpack.c.l.b16 %v38
  %v519 = vunpack.c.l.b16 %v40
  %v520 = vunpack.c.l.b16 %v42
  %v521 = vunpack.c.l.b16 %v44
  %v522 = vunpack.c.l.b16 %v46
  %v523 = vunpack.c.l.b16 %v48
  %v524 = vunpack.c.l.b16 %v50
  %v525 = vunpack.c.l.b16 %v52
  %v526 = vpack.c.b16 %v511, %v510
  %v527 = vpack.c.b16 %v513, %v512
  %v528 = vpack.c.b16 %v515, %v514
  %v529 = vpack.c.b16 %v517, %v516
  %v530 = vpack.c.b16 %v519, %v518
  %v531 = vpack.c.b16 %v521, %v520
  %v532 = vpack.c.b16 %v523, %v522
  %v533 = vpack.c.b16 %v525, %v524
  %v558 = vunpack.c.l.b16 %v58
  %v559 = vunpack.c.l.b16 %v59
  %v560 = vunpack.c.l.b16 %v60
  %v561 = vunpack.c.l.b16 %v61
  %v562 = vunpack.c.l.b16 %v62
  %v563 = vunpack.c.l.b16 %v63
  %v564 = vunpack.c.l.b16 %v64
  %v565 = vunpack.c.l.b16 %v65
  %v566 = vunpack.c.l.b16 %v66
  %v567 = vunpack.c.l.b16 %v67
  %v568 = vunpack.c.l.b16 %v68
  %v569 = vunpack.c.l.b16 %v69
  %v570 = vunpack.c.l.b16 %v70
  %v571 = vunpack.c.l.b16 %v71
  %v572 = vunpack.c.l.b16 %v72
  %v573 = vunpack.c.l.b16 %v73
  %v574 = vpack.c.b16 %v559, %v558
  %v575 = vpack.c.b16 %v561, %v560
  %v576 = vpack.c.b16 %v563, %v562
  %v577 = vpack.c.b16 %v565, %v564
  %v578 = vpack.c.b16 %v567, %v566
  %v579 = vpack.c.b16 %v569, %v568
  %v580 = vpack.c.b16 %v571, %v570
  %v581 = vpack.c.b16 %v573, %v572
  %590 = vmatprep.subr.bf16.mxu0 0
  %591 = vmatpush1.bf16.msra.mxu0 %v574
  %592 = vmatprep.subr.bf16.mxu0 0
  %593 = vmatpush1.bf16.msra.mxu0 %v575
  %594 = vmatprep.subr.bf16.mxu0 0
  %595 = vmatpush1.bf16.msra.mxu0 %v576
  %596 = vmatprep.subr.bf16.mxu0 0
  %597 = vmatpush1.bf16.msra.mxu0 %v577
  %598 = vmatprep.subr.bf16.mxu0 0
  %599 = vmatpush1.bf16.msra.mxu0 %v578
  %600 = vmatprep.subr.bf16.mxu0 0
  %601 = vmatpush1.bf16.msra.mxu0 %v579
  %602 = vmatprep.subr.bf16.mxu0 0
  %603 = vmatpush1.bf16.msra.mxu0 %v580
  %604 = vmatprep.subr.bf16.mxu0 0
  %605 = vmatpush1.bf16.msra.mxu0 %v581
  %606 = vmatprep.subr.bf16.mxu0 0
  %607 = vmatpush1.bf16.msra.mxu0 0
  %608 = vmatprep.subr.bf16.mxu0 0
  %609 = vmatpush1.bf16.msra.mxu0 0
  %610 = vmatprep.subr.bf16.mxu0 0
  %611 = vmatpush1.bf16.msra.mxu0 0
  %612 = vmatprep.subr.bf16.mxu0 0
  %613 = vmatpush1.bf16.msra.mxu0 0
  %614 = vmatprep.subr.bf16.mxu0 0
  %615 = vmatpush1.bf16.msra.mxu0 0
  %616 = vmatprep.subr.bf16.mxu0 0
  %617 = vmatpush1.bf16.msra.mxu0 0
  %618 = vmatprep.subr.bf16.mxu0 0
  %619 = vmatpush1.bf16.msra.mxu0 0
  %620 = vmatprep.subr.bf16.mxu0 0
  %621 = vmatpush1.bf16.msra.mxu0 0
  %622 = vmatprep.mubr.bf16.mxu0 0
  %623 = vmatmul.mubr.bf16.gmra.mrb[0].mxu0 %v526
  %v624 = vpop.f32.mrb[0].mxu0
  %v625 = vadd.f32 %v432, %v624
  %v626 = vpop.f32.mrb[0].mxu0
  %v627 = vpop.f32.mrb[0].mxu0
  %v628 = vadd.f32 %v435, %v627
  %v629 = vpop.f32.mrb[0].mxu0
  %630 = vmatprep.mubr.bf16.mxu0 0
  %631 = vmatmul.mubr.bf16.gmra.mrb[0].mxu0 %v527
  %v632 = vpop.f32.mrb[0].mxu0
  %v633 = vadd.f32 %v440, %v632
  %v634 = vpop.f32.mrb[0].mxu0
  %v635 = vpop.f32.mrb[0].mxu0
  %v636 = vadd.f32 %v443, %v635
  %v637 = vpop.f32.mrb[0].mxu0
  %638 = vmatprep.mubr.bf16.mxu0 0
  %639 = vmatmul.mubr.bf16.gmra.mrb[0].mxu0 %v528
  %v640 = vpop.f32.mrb[0].mxu0
  %v641 = vadd.f32 %v448, %v640
  %v642 = vpop.f32.mrb[0].mxu0
  %v643 = vpop.f32.mrb[0].mxu0
  %v644 = vadd.f32 %v451, %v643
  %v645 = vpop.f32.mrb[0].mxu0
  %646 = vmatprep.mubr.bf16.mxu0 0
  %647 = vmatmul.mubr.bf16.gmra.mrb[0].mxu0 %v529
  %v648 = vpop.f32.mrb[0].mxu0
  %v649 = vadd.f32 %v456, %v648
  %v650 = vpop.f32.mrb[0].mxu0
  %v651 = vpop.f32.mrb[0].mxu0
  %v652 = vadd.f32 %v459, %v651
  %v653 = vpop.f32.mrb[0].mxu0
  %654 = vmatprep.mubr.bf16.mxu0 0
  %655 = vmatmul.mubr.bf16.gmra.mrb[0].mxu0 %v530
  %v656 = vpop.f32.mrb[0].mxu0
  %v657 = vadd.f32 %v464, %v656
  %v658 = vpop.f32.mrb[0].mxu0
  %v659 = vpop.f32.mrb[0].mxu0
  %v660 = vadd.f32 %v467, %v659
  %v661 = vpop.f32.mrb[0].mxu0
  %662 = vmatprep.mubr.bf16.mxu0 0
  %663 = vmatmul.mubr.bf16.gmra.mrb[0].mxu0 %v531
  %v664 = vpop.f32.mrb[0].mxu0
  %v665 = vadd.f32 %v472, %v664
  %v666 = vpop.f32.mrb[0].mxu0
  %v667 = vpop.f32.mrb[0].mxu0
  %v668 = vadd.f32 %v475, %v667
  %v669 = vpop.f32.mrb[0].mxu0
  %670 = vmatprep.mubr.bf16.mxu0 0
  %671 = vmatmul.mubr.bf16.gmra.mrb[0].mxu0 %v532
  %v672 = vpop.f32.mrb[0].mxu0
  %v673 = vadd.f32 %v480, %v672
  %v674 = vpop.f32.mrb[0].mxu0
  %v675 = vpop.f32.mrb[0].mxu0
  %v676 = vadd.f32 %v483, %v675
  %v677 = vpop.f32.mrb[0].mxu0
  %678 = vmatprep.mubr.bf16.mxu0 0
  %679 = vmatmul.mubr.bf16.gmra.mrb[0].mxu0 %v533
  %v680 = vpop.f32.mrb[0].mxu0
  %v681 = vadd.f32 %v488, %v680
  %v682 = vpop.f32.mrb[0].mxu0
  %v683 = vpop.f32.mrb[0].mxu0
  %v684 = vadd.f32 %v491, %v683
  %v685 = vpop.f32.mrb[0].mxu0
  %686 = vdwg.mxu0
  %vm703 = vcmask 1042432
  %vm704 = vcmask 1046532
  %vm705 = vmor %vm703, %vm704
  %v706 = vrot.slane %v18, 5
  %v707 = vrot.slane %v706, 4
  %v708 = vrot.slane %v19, 5
  %v709 = vsel %vm705, %v707, %v708
  %v710 = vrot.slane %v20, 5
  %v711 = vrot.slane %v710, 4
  %v712 = vrot.slane %v21, 5
  %v713 = vsel %vm705, %v711, %v712
  %v714 = vrot.slane %v22, 5
  %v715 = vrot.slane %v714, 4
  %v716 = vrot.slane %v23, 5
  %v717 = vsel %vm705, %v715, %v716
  %v718 = vrot.slane %v24, 5
  %v719 = vrot.slane %v718, 4
  %v720 = vrot.slane %v25, 5
  %v721 = vsel %vm705, %v719, %v720
  %v722 = vrot.slane %v26, 5
  %v723 = vrot.slane %v722, 4
  %v724 = vrot.slane %v27, 5
  %v725 = vsel %vm705, %v723, %v724
  %v726 = vrot.slane %v28, 5
  %v727 = vrot.slane %v726, 4
  %v728 = vrot.slane %v29, 5
  %v729 = vsel %vm705, %v727, %v728
  %v730 = vrot.slane %v30, 5
  %v731 = vrot.slane %v730, 4
  %v732 = vrot.slane %v31, 5
  %v733 = vsel %vm705, %v731, %v732
  %v734 = vrot.slane %v32, 5
  %v735 = vrot.slane %v734, 4
  %v736 = vrot.slane %v33, 5
  %v737 = vsel %vm705, %v735, %v736
  %v738 = vrot.slane %v38, 5
  %v739 = vrot.slane %v738, 4
  %v740 = vrot.slane %v39, 5
  %v741 = vsel %vm705, %v739, %v740
  %v742 = vrot.slane %v40, 5
  %v743 = vrot.slane %v742, 4
  %v744 = vrot.slane %v41, 5
  %v745 = vsel %vm705, %v743, %v744
  %v746 = vrot.slane %v42, 5
  %v747 = vrot.slane %v746, 4
  %v748 = vrot.slane %v43, 5
  %v749 = vsel %vm705, %v747, %v748
  %v750 = vrot.slane %v44, 5
  %v751 = vrot.slane %v750, 4
  %v752 = vrot.slane %v45, 5
  %v753 = vsel %vm705, %v751, %v752
  %v754 = vrot.slane %v46, 5
  %v755 = vrot.slane %v754, 4
  %v756 = vrot.slane %v47, 5
  %v757 = vsel %vm705, %v755, %v756
  %v758 = vrot.slane %v48, 5
  %v759 = vrot.slane %v758, 4
  %v760 = vrot.slane %v49, 5
  %v761 = vsel %vm705, %v759, %v760
  %v762 = vrot.slane %v50, 5
  %v763 = vrot.slane %v762, 4
  %v764 = vrot.slane %v51, 5
  %v765 = vsel %vm705, %v763, %v764
  %v766 = vrot.slane %v52, 5
  %v767 = vrot.slane %v766, 4
  %v768 = vrot.slane %v53, 5
  %v769 = vsel %vm705, %v767, %v768
  %v770 = vld [vmem:[%s1 + $0x80] sm:$0xf]
  %v771 = vld [vmem:[%s1 + $0x84] sm:$0xf]
  %v772 = vld [vmem:[%s1 + $0x88] sm:$0xf]
  %v773 = vld [vmem:[%s1 + $0x8c] sm:$0xf]
  %v774 = vld [vmem:[%s1 + $0x90] sm:$0xf]
  %v775 = vld [vmem:[%s1 + $0x94] sm:$0xf]
  %v776 = vld [vmem:[%s1 + $0x98] sm:$0xf]
  %v777 = vld [vmem:[%s1 + $0x9c] sm:$0xf]
  %v778 = vld [vmem:[%s1 + $0xa0] sm:$0xf]
  %v779 = vld [vmem:[%s1 + $0xa4] sm:$0xf]
  %v780 = vld [vmem:[%s1 + $0xa8] sm:$0xf]
  %v781 = vld [vmem:[%s1 + $0xac] sm:$0xf]
  %v782 = vld [vmem:[%s1 + $0xb0] sm:$0xf]
  %v783 = vld [vmem:[%s1 + $0xb4] sm:$0xf]
  %v784 = vld [vmem:[%s1 + $0xb8] sm:$0xf]
  %v785 = vld [vmem:[%s1 + $0xbc] sm:$0xf]
  %v786 = vunpack.c.l.b16 %v709
  %v787 = vunpack.c.l.b16 %v713
  %v788 = vunpack.c.l.b16 %v717
  %v789 = vunpack.c.l.b16 %v721
  %v790 = vunpack.c.l.b16 %v725
  %v791 = vunpack.c.l.b16 %v729
  %v792 = vunpack.c.l.b16 %v733
  %v793 = vunpack.c.l.b16 %v737
  %v794 = vunpack.c.l.b16 %v741
  %v795 = vunpack.c.l.b16 %v745
  %v796 = vunpack.c.l.b16 %v749
  %v797 = vunpack.c.l.b16 %v753
  %v798 = vunpack.c.l.b16 %v757
  %v799 = vunpack.c.l.b16 %v761
  %v800 = vunpack.c.l.b16 %v765
  %v801 = vunpack.c.l.b16 %v769
  %v802 = vpack.c.b16 %v787, %v786
  %v803 = vpack.c.b16 %v789, %v788
  %v804 = vpack.c.b16 %v791, %v790
  %v805 = vpack.c.b16 %v793, %v792
  %v806 = vpack.c.b16 %v795, %v794
  %v807 = vpack.c.b16 %v797, %v796
  %v808 = vpack.c.b16 %v799, %v798
  %v809 = vpack.c.b16 %v801, %v800
  %v834 = vunpack.c.l.b16 %v770
  %v835 = vunpack.c.l.b16 %v771
  %v836 = vunpack.c.l.b16 %v772
  %v837 = vunpack.c.l.b16 %v773
  %v838 = vunpack.c.l.b16 %v774
  %v839 = vunpack.c.l.b16 %v775
  %v840 = vunpack.c.l.b16 %v776
  %v841 = vunpack.c.l.b16 %v777
  %v842 = vunpack.c.l.b16 %v778
  %v843 = vunpack.c.l.b16 %v779
  %v844 = vunpack.c.l.b16 %v780
  %v845 = vunpack.c.l.b16 %v781
  %v846 = vunpack.c.l.b16 %v782
  %v847 = vunpack.c.l.b16 %v783
  %v848 = vunpack.c.l.b16 %v784
  %v849 = vunpack.c.l.b16 %v785
  %v850 = vpack.c.b16 %v835, %v834
  %v851 = vpack.c.b16 %v837, %v836
  %v852 = vpack.c.b16 %v839, %v838
  %v853 = vpack.c.b16 %v841, %v840
  %v854 = vpack.c.b16 %v843, %v842
  %v855 = vpack.c.b16 %v845, %v844
  %v856 = vpack.c.b16 %v847, %v846
  %v857 = vpack.c.b16 %v849, %v848
  %866 = vmatprep.subr.bf16.mxu0 0
  %867 = vmatpush1.bf16.msra.mxu0 %v850
  %868 = vmatprep.subr.bf16.mxu0 0
  %869 = vmatpush1.bf16.msra.mxu0 %v851
  %870 = vmatprep.subr.bf16.mxu0 0
  %871 = vmatpush1.bf16.msra.mxu0 %v852
  %872 = vmatprep.subr.bf16.mxu0 0
  %873 = vmatpush1.bf16.msra.mxu0 %v853
  %874 = vmatprep.subr.bf16.mxu0 0
  %875 = vmatpush1.bf16.msra.mxu0 %v854
  %876 = vmatprep.subr.bf16.mxu0 0
  %877 = vmatpush1.bf16.msra.mxu0 %v855
  %878 = vmatprep.subr.bf16.mxu0 0
  %879 = vmatpush1.bf16.msra.mxu0 %v856
  %880 = vmatprep.subr.bf16.mxu0 0
  %881 = vmatpush1.bf16.msra.mxu0 %v857
  %882 = vmatprep.subr.bf16.mxu0 0
  %883 = vmatpush1.bf16.msra.mxu0 0
  %884 = vmatprep.subr.bf16.mxu0 0
  %885 = vmatpush1.bf16.msra.mxu0 0
  %886 = vmatprep.subr.bf16.mxu0 0
  %887 = vmatpush1.bf16.msra.mxu0 0
  %888 = vmatprep.subr.bf16.mxu0 0
  %889 = vmatpush1.bf16.msra.mxu0 0
  %890 = vmatprep.subr.bf16.mxu0 0
  %891 = vmatpush1.bf16.msra.mxu0 0
  %892 = vmatprep.subr.bf16.mxu0 0
  %893 = vmatpush1.bf16.msra.mxu0 0
  %894 = vmatprep.subr.bf16.mxu0 0
  %895 = vmatpush1.bf16.msra.mxu0 0
  %896 = vmatprep.subr.bf16.mxu0 0
  %897 = vmatpush1.bf16.msra.mxu0 0
  %898 = vmatprep.mubr.bf16.mxu0 0
  %899 = vmatmul.mubr.bf16.gmra.mrb[0].mxu0 %v802
  %v900 = vpop.f32.mrb[0].mxu0
  %v901 = vadd.f32 0.0, %v900
  %v902 = vpop.f32.mrb[0].mxu0
  %v903 = vpop.f32.mrb[0].mxu0
  %v904 = vadd.f32 0.0, %v903
  %v905 = vpop.f32.mrb[0].mxu0
  %906 = vmatprep.mubr.bf16.mxu0 0
  %907 = vmatmul.mubr.bf16.gmra.mrb[0].mxu0 %v803
  %v908 = vpop.f32.mrb[0].mxu0
  %v909 = vadd.f32 0.0, %v908
  %v910 = vpop.f32.mrb[0].mxu0
  %v911 = vpop.f32.mrb[0].mxu0
  %v912 = vadd.f32 0.0, %v911
  %v913 = vpop.f32.mrb[0].mxu0
  %914 = vmatprep.mubr.bf16.mxu0 0
  %915 = vmatmul.mubr.bf16.gmra.mrb[0].mxu0 %v804
  %v916 = vpop.f32.mrb[0].mxu0
  %v917 = vadd.f32 0.0, %v916
  %v918 = vpop.f32.mrb[0].mxu0
  %v919 = vpop.f32.mrb[0].mxu0
  %v920 = vadd.f32 0.0, %v919
  %v921 = vpop.f32.mrb[0].mxu0
  %922 = vmatprep.mubr.bf16.mxu0 0
  %923 = vmatmul.mubr.bf16.gmra.mrb[0].mxu0 %v805
  %v924 = vpop.f32.mrb[0].mxu0
  %v925 = vadd.f32 0.0, %v924
  %v926 = vpop.f32.mrb[0].mxu0
  %v927 = vpop.f32.mrb[0].mxu0
  %v928 = vadd.f32 0.0, %v927
  %v929 = vpop.f32.mrb[0].mxu0
  %930 = vmatprep.mubr.bf16.mxu0 0
  %931 = vmatmul.mubr.bf16.gmra.mrb[0].mxu0 %v806
  %v932 = vpop.f32.mrb[0].mxu0
  %v933 = vadd.f32 0.0, %v932
  %v934 = vpop.f32.mrb[0].mxu0
  %v935 = vpop.f32.mrb[0].mxu0
  %v936 = vadd.f32 0.0, %v935
  %v937 = vpop.f32.mrb[0].mxu0
  %938 = vmatprep.mubr.bf16.mxu0 0
  %939 = vmatmul.mubr.bf16.gmra.mrb[0].mxu0 %v807
  %v940 = vpop.f32.mrb[0].mxu0
  %v941 = vadd.f32 0.0, %v940
  %v942 = vpop.f32.mrb[0].mxu0
  %v943 = vpop.f32.mrb[0].mxu0
  %v944 = vadd.f32 0.0, %v943
  %v945 = vpop.f32.mrb[0].mxu0
  %946 = vmatprep.mubr.bf16.mxu0 0
  %947 = vmatmul.mubr.bf16.gmra.mrb[0].mxu0 %v808
  %v948 = vpop.f32.mrb[0].mxu0
  %v949 = vadd.f32 0.0, %v948
  %v950 = vpop.f32.mrb[0].mxu0
  %v951 = vpop.f32.mrb[0].mxu0
  %v952 = vadd.f32 0.0, %v951
  %v953 = vpop.f32.mrb[0].mxu0
  %954 = vmatprep.mubr.bf16.mxu0 0
  %955 = vmatmul.mubr.bf16.gmra.mrb[0].mxu0 %v809
  %v956 = vpop.f32.mrb[0].mxu0
  %v957 = vadd.f32 0.0, %v956
  %v958 = vpop.f32.mrb[0].mxu0
  %v959 = vpop.f32.mrb[0].mxu0
  %v960 = vadd.f32 0.0, %v959
  %v961 = vpop.f32.mrb[0].mxu0
  %962 = vdwg.mxu0
  %v963 = vadd.f32 %v625, %v901
  %v964 = vadd.f32 %v628, %v904
  %v965 = vadd.f32 %v633, %v909
  %v966 = vadd.f32 %v636, %v912
  %v967 = vadd.f32 %v641, %v917
  %v968 = vadd.f32 %v644, %v920
  %v969 = vadd.f32 %v649, %v925
  %v970 = vadd.f32 %v652, %v928
  %v971 = vadd.f32 %v657, %v933
  %v972 = vadd.f32 %v660, %v936
  %v973 = vadd.f32 %v665, %v941
  %v974 = vadd.f32 %v668, %v944
  %v975 = vadd.f32 %v673, %v949
  %v976 = vadd.f32 %v676, %v952
  %v977 = vadd.f32 %v681, %v957
  %v978 = vadd.f32 %v684, %v960
  %v979 = vld [vmem:[%s1 + $0xc0] sm:$0xf]
  %v980 = vld [vmem:[%s1 + $0xc4] sm:$0xf]
  %v981 = vld [vmem:[%s1 + $0xc8] sm:$0xf]
  %v982 = vld [vmem:[%s1 + $0xcc] sm:$0xf]
  %v983 = vld [vmem:[%s1 + $0xd0] sm:$0xf]
  %v984 = vld [vmem:[%s1 + $0xd4] sm:$0xf]
  %v985 = vld [vmem:[%s1 + $0xd8] sm:$0xf]
  %v986 = vld [vmem:[%s1 + $0xdc] sm:$0xf]
  %v987 = vld [vmem:[%s1 + $0xe0] sm:$0xf]
  %v988 = vld [vmem:[%s1 + $0xe4] sm:$0xf]
  %v989 = vld [vmem:[%s1 + $0xe8] sm:$0xf]
  %v990 = vld [vmem:[%s1 + $0xec] sm:$0xf]
  %v991 = vld [vmem:[%s1 + $0xf0] sm:$0xf]
  %v992 = vld [vmem:[%s1 + $0xf4] sm:$0xf]
  %v993 = vld [vmem:[%s1 + $0xf8] sm:$0xf]
  %v994 = vld [vmem:[%s1 + $0xfc] sm:$0xf]
  %v997 = vunpack.c.l.b16 %v34
  %v998 = vunpack.c.l.b16 %v54
  %v999 = vpack.c.b16 %v512, %v511
  %v1000 = vpack.c.b16 %v514, %v513
  %v1001 = vpack.c.b16 %v516, %v515
  %v1002 = vpack.c.b16 %v997, %v517
  %v1003 = vpack.c.b16 %v520, %v519
  %v1004 = vpack.c.b16 %v522, %v521
  %v1005 = vpack.c.b16 %v524, %v523
  %v1006 = vpack.c.b16 %v998, %v525
  %v1031 = vunpack.c.l.b16 %v979
  %v1032 = vunpack.c.l.b16 %v980
  %v1033 = vunpack.c.l.b16 %v981
  %v1034 = vunpack.c.l.b16 %v982
  %v1035 = vunpack.c.l.b16 %v983
  %v1036 = vunpack.c.l.b16 %v984
  %v1037 = vunpack.c.l.b16 %v985
  %v1038 = vunpack.c.l.b16 %v986
  %v1039 = vunpack.c.l.b16 %v987
  %v1040 = vunpack.c.l.b16 %v988
  %v1041 = vunpack.c.l.b16 %v989
  %v1042 = vunpack.c.l.b16 %v990
  %v1043 = vunpack.c.l.b16 %v991
  %v1044 = vunpack.c.l.b16 %v992
  %v1045 = vunpack.c.l.b16 %v993
  %v1046 = vunpack.c.l.b16 %v994
  %v1047 = vpack.c.b16 %v1032, %v1031
  %v1048 = vpack.c.b16 %v1034, %v1033
  %v1049 = vpack.c.b16 %v1036, %v1035
  %v1050 = vpack.c.b16 %v1038, %v1037
  %v1051 = vpack.c.b16 %v1040, %v1039
  %v1052 = vpack.c.b16 %v1042, %v1041
  %v1053 = vpack.c.b16 %v1044, %v1043
  %v1054 = vpack.c.b16 %v1046, %v1045
  %1063 = vmatprep.subr.bf16.mxu0 0
  %1064 = vmatpush1.bf16.msra.mxu0 %v1047
  %1065 = vmatprep.subr.bf16.mxu0 0
  %1066 = vmatpush1.bf16.msra.mxu0 %v1048
  %1067 = vmatprep.subr.bf16.mxu0 0
  %1068 = vmatpush1.bf16.msra.mxu0 %v1049
  %1069 = vmatprep.subr.bf16.mxu0 0
  %1070 = vmatpush1.bf16.msra.mxu0 %v1050
  %1071 = vmatprep.subr.bf16.mxu0 0
  %1072 = vmatpush1.bf16.msra.mxu0 %v1051
  %1073 = vmatprep.subr.bf16.mxu0 0
  %1074 = vmatpush1.bf16.msra.mxu0 %v1052
  %1075 = vmatprep.subr.bf16.mxu0 0
  %1076 = vmatpush1.bf16.msra.mxu0 %v1053
  %1077 = vmatprep.subr.bf16.mxu0 0
  %1078 = vmatpush1.bf16.msra.mxu0 %v1054
  %1079 = vmatprep.subr.bf16.mxu0 0
  %1080 = vmatpush1.bf16.msra.mxu0 0
  %1081 = vmatprep.subr.bf16.mxu0 0
  %1082 = vmatpush1.bf16.msra.mxu0 0
  %1083 = vmatprep.subr.bf16.mxu0 0
  %1084 = vmatpush1.bf16.msra.mxu0 0
  %1085 = vmatprep.subr.bf16.mxu0 0
  %1086 = vmatpush1.bf16.msra.mxu0 0
  %1087 = vmatprep.subr.bf16.mxu0 0
  %1088 = vmatpush1.bf16.msra.mxu0 0
  %1089 = vmatprep.subr.bf16.mxu0 0
  %1090 = vmatpush1.bf16.msra.mxu0 0
  %1091 = vmatprep.subr.bf16.mxu0 0
  %1092 = vmatpush1.bf16.msra.mxu0 0
  %1093 = vmatprep.subr.bf16.mxu0 0
  %1094 = vmatpush1.bf16.msra.mxu0 0
  %1095 = vmatprep.mubr.bf16.mxu0 0
  %1096 = vmatmul.mubr.bf16.gmra.mrb[0].mxu0 %v999
  %v1097 = vpop.f32.mrb[0].mxu0
  %v1098 = vadd.f32 0.0, %v1097
  %v1099 = vpop.f32.mrb[0].mxu0
  %v1100 = vpop.f32.mrb[0].mxu0
  %v1101 = vadd.f32 0.0, %v1100
  %v1102 = vpop.f32.mrb[0].mxu0
  %1103 = vmatprep.mubr.bf16.mxu0 0
  %1104 = vmatmul.mubr.bf16.gmra.mrb[0].mxu0 %v1000
  %v1105 = vpop.f32.mrb[0].mxu0
  %v1106 = vadd.f32 0.0, %v1105
  %v1107 = vpop.f32.mrb[0].mxu0
  %v1108 = vpop.f32.mrb[0].mxu0
  %v1109 = vadd.f32 0.0, %v1108
  %v1110 = vpop.f32.mrb[0].mxu0
  %1111 = vmatprep.mubr.bf16.mxu0 0
  %1112 = vmatmul.mubr.bf16.gmra.mrb[0].mxu0 %v1001
  %v1113 = vpop.f32.mrb[0].mxu0
  %v1114 = vadd.f32 0.0, %v1113
  %v1115 = vpop.f32.mrb[0].mxu0
  %v1116 = vpop.f32.mrb[0].mxu0
  %v1117 = vadd.f32 0.0, %v1116
  %v1118 = vpop.f32.mrb[0].mxu0
  %1119 = vmatprep.mubr.bf16.mxu0 0
  %1120 = vmatmul.mubr.bf16.gmra.mrb[0].mxu0 %v1002
  %v1121 = vpop.f32.mrb[0].mxu0
  %v1122 = vadd.f32 0.0, %v1121
  %v1123 = vpop.f32.mrb[0].mxu0
  %v1124 = vpop.f32.mrb[0].mxu0
  %v1125 = vadd.f32 0.0, %v1124
  %v1126 = vpop.f32.mrb[0].mxu0
  %1127 = vmatprep.mubr.bf16.mxu0 0
  %1128 = vmatmul.mubr.bf16.gmra.mrb[0].mxu0 %v1003
  %v1129 = vpop.f32.mrb[0].mxu0
  %v1130 = vadd.f32 0.0, %v1129
  %v1131 = vpop.f32.mrb[0].mxu0
  %v1132 = vpop.f32.mrb[0].mxu0
  %v1133 = vadd.f32 0.0, %v1132
  %v1134 = vpop.f32.mrb[0].mxu0
  %1135 = vmatprep.mubr.bf16.mxu0 0
  %1136 = vmatmul.mubr.bf16.gmra.mrb[0].mxu0 %v1004
  %v1137 = vpop.f32.mrb[0].mxu0
  %v1138 = vadd.f32 0.0, %v1137
  %v1139 = vpop.f32.mrb[0].mxu0
  %v1140 = vpop.f32.mrb[0].mxu0
  %v1141 = vadd.f32 0.0, %v1140
  %v1142 = vpop.f32.mrb[0].mxu0
  %1143 = vmatprep.mubr.bf16.mxu0 0
  %1144 = vmatmul.mubr.bf16.gmra.mrb[0].mxu0 %v1005
  %v1145 = vpop.f32.mrb[0].mxu0
  %v1146 = vadd.f32 0.0, %v1145
  %v1147 = vpop.f32.mrb[0].mxu0
  %v1148 = vpop.f32.mrb[0].mxu0
  %v1149 = vadd.f32 0.0, %v1148
  %v1150 = vpop.f32.mrb[0].mxu0
  %1151 = vmatprep.mubr.bf16.mxu0 0
  %1152 = vmatmul.mubr.bf16.gmra.mrb[0].mxu0 %v1006
  %v1153 = vpop.f32.mrb[0].mxu0
  %v1154 = vadd.f32 0.0, %v1153
  %v1155 = vpop.f32.mrb[0].mxu0
  %v1156 = vpop.f32.mrb[0].mxu0
  %v1157 = vadd.f32 0.0, %v1156
  %v1158 = vpop.f32.mrb[0].mxu0
  %1159 = vdwg.mxu0
  %v1160 = vadd.f32 %v963, %v1098
  %v1161 = vadd.f32 %v964, %v1101
  %v1162 = vadd.f32 %v965, %v1106
  %v1163 = vadd.f32 %v966, %v1109
  %v1164 = vadd.f32 %v967, %v1114
  %v1165 = vadd.f32 %v968, %v1117
  %v1166 = vadd.f32 %v969, %v1122
  %v1167 = vadd.f32 %v970, %v1125
  %v1168 = vadd.f32 %v971, %v1130
  %v1169 = vadd.f32 %v972, %v1133
  %v1170 = vadd.f32 %v973, %v1138
  %v1171 = vadd.f32 %v974, %v1141
  %v1172 = vadd.f32 %v975, %v1146
  %v1173 = vadd.f32 %v976, %v1149
  %v1174 = vadd.f32 %v977, %v1154
  %v1175 = vadd.f32 %v978, %v1157
  %v1177 = vshrl.u32 %v34, 16
  %v1179 = vrot.slane %v1177, 4
  %v1180 = vshll.u32 %v34, 16
  %v1182 = vrot.slane %v1180, 5
  %v1183 = vor.u32 %v1179, %v1182
  %v1184 = vrot.slane %v1183, 4
  %v1186 = vshll.u32 %v35, 16
  %v1188 = vrot.slane %v1186, 5
  %v1189 = vsel %vm76, %v1184, %v1188
  %v1191 = vshrl.u32 %v54, 16
  %v1193 = vrot.slane %v1191, 4
  %v1194 = vshll.u32 %v54, 16
  %v1196 = vrot.slane %v1194, 5
  %v1197 = vor.u32 %v1193, %v1196
  %v1198 = vrot.slane %v1197, 4
  %v1200 = vshll.u32 %v55, 16
  %v1202 = vrot.slane %v1200, 5
  %v1203 = vsel %vm76, %v1198, %v1202
  %v1204 = vld [vmem:[%s1 + $0x100] sm:$0xf]
  %v1205 = vld [vmem:[%s1 + $0x104] sm:$0xf]
  %v1206 = vld [vmem:[%s1 + $0x108] sm:$0xf]
  %v1207 = vld [vmem:[%s1 + $0x10c] sm:$0xf]
  %v1208 = vld [vmem:[%s1 + $0x110] sm:$0xf]
  %v1209 = vld [vmem:[%s1 + $0x114] sm:$0xf]
  %v1210 = vld [vmem:[%s1 + $0x118] sm:$0xf]
  %v1211 = vld [vmem:[%s1 + $0x11c] sm:$0xf]
  %v1212 = vld [vmem:[%s1 + $0x120] sm:$0xf]
  %v1213 = vld [vmem:[%s1 + $0x124] sm:$0xf]
  %v1214 = vld [vmem:[%s1 + $0x128] sm:$0xf]
  %v1215 = vld [vmem:[%s1 + $0x12c] sm:$0xf]
  %v1216 = vld [vmem:[%s1 + $0x130] sm:$0xf]
  %v1217 = vld [vmem:[%s1 + $0x134] sm:$0xf]
  %v1218 = vld [vmem:[%s1 + $0x138] sm:$0xf]
  %v1219 = vld [vmem:[%s1 + $0x13c] sm:$0xf]
  %v1220 = vunpack.c.l.b16 %v1189
  %v1221 = vunpack.c.l.b16 %v1203
  %v1222 = vpack.c.b16 %v319, %v318
  %v1223 = vpack.c.b16 %v321, %v320
  %v1224 = vpack.c.b16 %v323, %v322
  %v1225 = vpack.c.b16 %v1220, %v324
  %v1226 = vpack.c.b16 %v327, %v326
  %v1227 = vpack.c.b16 %v329, %v328
  %v1228 = vpack.c.b16 %v331, %v330
  %v1229 = vpack.c.b16 %v1221, %v332
  %v1254 = vunpack.c.l.b16 %v1204
  %v1255 = vunpack.c.l.b16 %v1205
  %v1256 = vunpack.c.l.b16 %v1206
  %v1257 = vunpack.c.l.b16 %v1207
  %v1258 = vunpack.c.l.b16 %v1208
  %v1259 = vunpack.c.l.b16 %v1209
  %v1260 = vunpack.c.l.b16 %v1210
  %v1261 = vunpack.c.l.b16 %v1211
  %v1262 = vunpack.c.l.b16 %v1212
  %v1263 = vunpack.c.l.b16 %v1213
  %v1264 = vunpack.c.l.b16 %v1214
  %v1265 = vunpack.c.l.b16 %v1215
  %v1266 = vunpack.c.l.b16 %v1216
  %v1267 = vunpack.c.l.b16 %v1217
  %v1268 = vunpack.c.l.b16 %v1218
  %v1269 = vunpack.c.l.b16 %v1219
  %v1270 = vpack.c.b16 %v1255, %v1254
  %v1271 = vpack.c.b16 %v1257, %v1256
  %v1272 = vpack.c.b16 %v1259, %v1258
  %v1273 = vpack.c.b16 %v1261, %v1260
  %v1274 = vpack.c.b16 %v1263, %v1262
  %v1275 = vpack.c.b16 %v1265, %v1264
  %v1276 = vpack.c.b16 %v1267, %v1266
  %v1277 = vpack.c.b16 %v1269, %v1268
  %1286 = vmatprep.subr.bf16.mxu0 0
  %1287 = vmatpush1.bf16.msra.mxu0 %v1270
  %1288 = vmatprep.subr.bf16.mxu0 0
  %1289 = vmatpush1.bf16.msra.mxu0 %v1271
  %1290 = vmatprep.subr.bf16.mxu0 0
  %1291 = vmatpush1.bf16.msra.mxu0 %v1272
  %1292 = vmatprep.subr.bf16.mxu0 0
  %1293 = vmatpush1.bf16.msra.mxu0 %v1273
  %1294 = vmatprep.subr.bf16.mxu0 0
  %1295 = vmatpush1.bf16.msra.mxu0 %v1274
  %1296 = vmatprep.subr.bf16.mxu0 0
  %1297 = vmatpush1.bf16.msra.mxu0 %v1275
  %1298 = vmatprep.subr.bf16.mxu0 0
  %1299 = vmatpush1.bf16.msra.mxu0 %v1276
  %1300 = vmatprep.subr.bf16.mxu0 0
  %1301 = vmatpush1.bf16.msra.mxu0 %v1277
  %1302 = vmatprep.subr.bf16.mxu0 0
  %1303 = vmatpush1.bf16.msra.mxu0 0
  %1304 = vmatprep.subr.bf16.mxu0 0
  %1305 = vmatpush1.bf16.msra.mxu0 0
  %1306 = vmatprep.subr.bf16.mxu0 0
  %1307 = vmatpush1.bf16.msra.mxu0 0
  %1308 = vmatprep.subr.bf16.mxu0 0
  %1309 = vmatpush1.bf16.msra.mxu0 0
  %1310 = vmatprep.subr.bf16.mxu0 0
  %1311 = vmatpush1.bf16.msra.mxu0 0
  %1312 = vmatprep.subr.bf16.mxu0 0
  %1313 = vmatpush1.bf16.msra.mxu0 0
  %1314 = vmatprep.subr.bf16.mxu0 0
  %1315 = vmatpush1.bf16.msra.mxu0 0
  %1316 = vmatprep.subr.bf16.mxu0 0
  %1317 = vmatpush1.bf16.msra.mxu0 0
  %1318 = vmatprep.mubr.bf16.mxu0 0
  %1319 = vmatmul.mubr.bf16.gmra.mrb[0].mxu0 %v1222
  %v1320 = vpop.f32.mrb[0].mxu0
  %v1321 = vadd.f32 0.0, %v1320
  %v1322 = vpop.f32.mrb[0].mxu0
  %v1323 = vpop.f32.mrb[0].mxu0
  %v1324 = vadd.f32 0.0, %v1323
  %v1325 = vpop.f32.mrb[0].mxu0
  %1326 = vmatprep.mubr.bf16.mxu0 0
  %1327 = vmatmul.mubr.bf16.gmra.mrb[0].mxu0 %v1223
  %v1328 = vpop.f32.mrb[0].mxu0
  %v1329 = vadd.f32 0.0, %v1328
  %v1330 = vpop.f32.mrb[0].mxu0
  %v1331 = vpop.f32.mrb[0].mxu0
  %v1332 = vadd.f32 0.0, %v1331
  %v1333 = vpop.f32.mrb[0].mxu0
  %1334 = vmatprep.mubr.bf16.mxu0 0
  %1335 = vmatmul.mubr.bf16.gmra.mrb[0].mxu0 %v1224
  %v1336 = vpop.f32.mrb[0].mxu0
  %v1337 = vadd.f32 0.0, %v1336
  %v1338 = vpop.f32.mrb[0].mxu0
  %v1339 = vpop.f32.mrb[0].mxu0
  %v1340 = vadd.f32 0.0, %v1339
  %v1341 = vpop.f32.mrb[0].mxu0
  %1342 = vmatprep.mubr.bf16.mxu0 0
  %1343 = vmatmul.mubr.bf16.gmra.mrb[0].mxu0 %v1225
  %v1344 = vpop.f32.mrb[0].mxu0
  %v1345 = vadd.f32 0.0, %v1344
  %v1346 = vpop.f32.mrb[0].mxu0
  %v1347 = vpop.f32.mrb[0].mxu0
  %v1348 = vadd.f32 0.0, %v1347
  %v1349 = vpop.f32.mrb[0].mxu0
  %1350 = vmatprep.mubr.bf16.mxu0 0
  %1351 = vmatmul.mubr.bf16.gmra.mrb[0].mxu0 %v1226
  %v1352 = vpop.f32.mrb[0].mxu0
  %v1353 = vadd.f32 0.0, %v1352
  %v1354 = vpop.f32.mrb[0].mxu0
  %v1355 = vpop.f32.mrb[0].mxu0
  %v1356 = vadd.f32 0.0, %v1355
  %v1357 = vpop.f32.mrb[0].mxu0
  %1358 = vmatprep.mubr.bf16.mxu0 0
  %1359 = vmatmul.mubr.bf16.gmra.mrb[0].mxu0 %v1227
  %v1360 = vpop.f32.mrb[0].mxu0
  %v1361 = vadd.f32 0.0, %v1360
  %v1362 = vpop.f32.mrb[0].mxu0
  %v1363 = vpop.f32.mrb[0].mxu0
  %v1364 = vadd.f32 0.0, %v1363
  %v1365 = vpop.f32.mrb[0].mxu0
  %1366 = vmatprep.mubr.bf16.mxu0 0
  %1367 = vmatmul.mubr.bf16.gmra.mrb[0].mxu0 %v1228
  %v1368 = vpop.f32.mrb[0].mxu0
  %v1369 = vadd.f32 0.0, %v1368
  %v1370 = vpop.f32.mrb[0].mxu0
  %v1371 = vpop.f32.mrb[0].mxu0
  %v1372 = vadd.f32 0.0, %v1371
  %v1373 = vpop.f32.mrb[0].mxu0
  %1374 = vmatprep.mubr.bf16.mxu0 0
  %1375 = vmatmul.mubr.bf16.gmra.mrb[0].mxu0 %v1229
  %v1376 = vpop.f32.mrb[0].mxu0
  %v1377 = vadd.f32 0.0, %v1376
  %v1378 = vpop.f32.mrb[0].mxu0
  %v1379 = vpop.f32.mrb[0].mxu0
  %v1380 = vadd.f32 0.0, %v1379
  %v1381 = vpop.f32.mrb[0].mxu0
  %1382 = vdwg.mxu0
  %v1383 = vadd.f32 %v1160, %v1321
  %v1384 = vadd.f32 %v1161, %v1324
  %v1385 = vadd.f32 %v1162, %v1329
  %v1386 = vadd.f32 %v1163, %v1332
  %v1387 = vadd.f32 %v1164, %v1337
  %v1388 = vadd.f32 %v1165, %v1340
  %v1389 = vadd.f32 %v1166, %v1345
  %v1390 = vadd.f32 %v1167, %v1348
  %v1391 = vadd.f32 %v1168, %v1353
  %v1392 = vadd.f32 %v1169, %v1356
  %v1393 = vadd.f32 %v1170, %v1361
  %v1394 = vadd.f32 %v1171, %v1364
  %v1395 = vadd.f32 %v1172, %v1369
  %v1396 = vadd.f32 %v1173, %v1372
  %v1397 = vadd.f32 %v1174, %v1377
  %v1398 = vadd.f32 %v1175, %v1380
  %v1401 = vrot.slane %v34, 5
  %v1402 = vrot.slane %v1401, 4
  %v1403 = vrot.slane %v35, 5
  %v1404 = vsel %vm705, %v1402, %v1403
  %v1405 = vrot.slane %v54, 5
  %v1406 = vrot.slane %v1405, 4
  %v1407 = vrot.slane %v55, 5
  %v1408 = vsel %vm705, %v1406, %v1407
  %v1409 = vld [vmem:[%s1 + $0x140] sm:$0xf]
  %v1410 = vld [vmem:[%s1 + $0x144] sm:$0xf]
  %v1411 = vld [vmem:[%s1 + $0x148] sm:$0xf]
  %v1412 = vld [vmem:[%s1 + $0x14c] sm:$0xf]
  %v1413 = vld [vmem:[%s1 + $0x150] sm:$0xf]
  %v1414 = vld [vmem:[%s1 + $0x154] sm:$0xf]
  %v1415 = vld [vmem:[%s1 + $0x158] sm:$0xf]
  %v1416 = vld [vmem:[%s1 + $0x15c] sm:$0xf]
  %v1417 = vld [vmem:[%s1 + $0x160] sm:$0xf]
  %v1418 = vld [vmem:[%s1 + $0x164] sm:$0xf]
  %v1419 = vld [vmem:[%s1 + $0x168] sm:$0xf]
  %v1420 = vld [vmem:[%s1 + $0x16c] sm:$0xf]
  %v1421 = vld [vmem:[%s1 + $0x170] sm:$0xf]
  %v1422 = vld [vmem:[%s1 + $0x174] sm:$0xf]
  %v1423 = vld [vmem:[%s1 + $0x178] sm:$0xf]
  %v1424 = vld [vmem:[%s1 + $0x17c] sm:$0xf]
  %v1425 = vunpack.c.l.b16 %v1404
  %v1426 = vunpack.c.l.b16 %v1408
  %v1427 = vpack.c.b16 %v788, %v787
  %v1428 = vpack.c.b16 %v790, %v789
  %v1429 = vpack.c.b16 %v792, %v791
  %v1430 = vpack.c.b16 %v1425, %v793
  %v1431 = vpack.c.b16 %v796, %v795
  %v1432 = vpack.c.b16 %v798, %v797
  %v1433 = vpack.c.b16 %v800, %v799
  %v1434 = vpack.c.b16 %v1426, %v801
  %v1459 = vunpack.c.l.b16 %v1409
  %v1460 = vunpack.c.l.b16 %v1410
  %v1461 = vunpack.c.l.b16 %v1411
  %v1462 = vunpack.c.l.b16 %v1412
  %v1463 = vunpack.c.l.b16 %v1413
  %v1464 = vunpack.c.l.b16 %v1414
  %v1465 = vunpack.c.l.b16 %v1415
  %v1466 = vunpack.c.l.b16 %v1416
  %v1467 = vunpack.c.l.b16 %v1417
  %v1468 = vunpack.c.l.b16 %v1418
  %v1469 = vunpack.c.l.b16 %v1419
  %v1470 = vunpack.c.l.b16 %v1420
  %v1471 = vunpack.c.l.b16 %v1421
  %v1472 = vunpack.c.l.b16 %v1422
  %v1473 = vunpack.c.l.b16 %v1423
  %v1474 = vunpack.c.l.b16 %v1424
  %v1475 = vpack.c.b16 %v1460, %v1459
  %v1476 = vpack.c.b16 %v1462, %v1461
  %v1477 = vpack.c.b16 %v1464, %v1463
  %v1478 = vpack.c.b16 %v1466, %v1465
  %v1479 = vpack.c.b16 %v1468, %v1467
  %v1480 = vpack.c.b16 %v1470, %v1469
  %v1481 = vpack.c.b16 %v1472, %v1471
  %v1482 = vpack.c.b16 %v1474, %v1473
  %1491 = vmatprep.subr.bf16.mxu0 0
  %1492 = vmatpush1.bf16.msra.mxu0 %v1475
  %1493 = vmatprep.subr.bf16.mxu0 0
  %1494 = vmatpush1.bf16.msra.mxu0 %v1476
  %1495 = vmatprep.subr.bf16.mxu0 0
  %1496 = vmatpush1.bf16.msra.mxu0 %v1477
  %1497 = vmatprep.subr.bf16.mxu0 0
  %1498 = vmatpush1.bf16.msra.mxu0 %v1478
  %1499 = vmatprep.subr.bf16.mxu0 0
  %1500 = vmatpush1.bf16.msra.mxu0 %v1479
  %1501 = vmatprep.subr.bf16.mxu0 0
  %1502 = vmatpush1.bf16.msra.mxu0 %v1480
  %1503 = vmatprep.subr.bf16.mxu0 0
  %1504 = vmatpush1.bf16.msra.mxu0 %v1481
  %1505 = vmatprep.subr.bf16.mxu0 0
  %1506 = vmatpush1.bf16.msra.mxu0 %v1482
  %1507 = vmatprep.subr.bf16.mxu0 0
  %1508 = vmatpush1.bf16.msra.mxu0 0
  %1509 = vmatprep.subr.bf16.mxu0 0
  %1510 = vmatpush1.bf16.msra.mxu0 0
  %1511 = vmatprep.subr.bf16.mxu0 0
  %1512 = vmatpush1.bf16.msra.mxu0 0
  %1513 = vmatprep.subr.bf16.mxu0 0
  %1514 = vmatpush1.bf16.msra.mxu0 0
  %1515 = vmatprep.subr.bf16.mxu0 0
  %1516 = vmatpush1.bf16.msra.mxu0 0
  %1517 = vmatprep.subr.bf16.mxu0 0
  %1518 = vmatpush1.bf16.msra.mxu0 0
  %1519 = vmatprep.subr.bf16.mxu0 0
  %1520 = vmatpush1.bf16.msra.mxu0 0
  %1521 = vmatprep.subr.bf16.mxu0 0
  %1522 = vmatpush1.bf16.msra.mxu0 0
  %1523 = vmatprep.mubr.bf16.mxu0 0
  %1524 = vmatmul.mubr.bf16.gmra.mrb[0].mxu0 %v1427
  %v1525 = vpop.f32.mrb[0].mxu0
  %v1526 = vadd.f32 0.0, %v1525
  %v1527 = vpop.f32.mrb[0].mxu0
  %v1528 = vpop.f32.mrb[0].mxu0
  %v1529 = vadd.f32 0.0, %v1528
  %v1530 = vpop.f32.mrb[0].mxu0
  %1531 = vmatprep.mubr.bf16.mxu0 0
  %1532 = vmatmul.mubr.bf16.gmra.mrb[0].mxu0 %v1428
  %v1533 = vpop.f32.mrb[0].mxu0
  %v1534 = vadd.f32 0.0, %v1533
  %v1535 = vpop.f32.mrb[0].mxu0
  %v1536 = vpop.f32.mrb[0].mxu0
  %v1537 = vadd.f32 0.0, %v1536
  %v1538 = vpop.f32.mrb[0].mxu0
  %1539 = vmatprep.mubr.bf16.mxu0 0
  %1540 = vmatmul.mubr.bf16.gmra.mrb[0].mxu0 %v1429
  %v1541 = vpop.f32.mrb[0].mxu0
  %v1542 = vadd.f32 0.0, %v1541
  %v1543 = vpop.f32.mrb[0].mxu0
  %v1544 = vpop.f32.mrb[0].mxu0
  %v1545 = vadd.f32 0.0, %v1544
  %v1546 = vpop.f32.mrb[0].mxu0
  %1547 = vmatprep.mubr.bf16.mxu0 0
  %1548 = vmatmul.mubr.bf16.gmra.mrb[0].mxu0 %v1430
  %v1549 = vpop.f32.mrb[0].mxu0
  %v1550 = vadd.f32 0.0, %v1549
  %v1551 = vpop.f32.mrb[0].mxu0
  %v1552 = vpop.f32.mrb[0].mxu0
  %v1553 = vadd.f32 0.0, %v1552
  %v1554 = vpop.f32.mrb[0].mxu0
  %1555 = vmatprep.mubr.bf16.mxu0 0
  %1556 = vmatmul.mubr.bf16.gmra.mrb[0].mxu0 %v1431
  %v1557 = vpop.f32.mrb[0].mxu0
  %v1558 = vadd.f32 0.0, %v1557
  %v1559 = vpop.f32.mrb[0].mxu0
  %v1560 = vpop.f32.mrb[0].mxu0
  %v1561 = vadd.f32 0.0, %v1560
  %v1562 = vpop.f32.mrb[0].mxu0
  %1563 = vmatprep.mubr.bf16.mxu0 0
  %1564 = vmatmul.mubr.bf16.gmra.mrb[0].mxu0 %v1432
  %v1565 = vpop.f32.mrb[0].mxu0
  %v1566 = vadd.f32 0.0, %v1565
  %v1567 = vpop.f32.mrb[0].mxu0
  %v1568 = vpop.f32.mrb[0].mxu0
  %v1569 = vadd.f32 0.0, %v1568
  %v1570 = vpop.f32.mrb[0].mxu0
  %1571 = vmatprep.mubr.bf16.mxu0 0
  %1572 = vmatmul.mubr.bf16.gmra.mrb[0].mxu0 %v1433
  %v1573 = vpop.f32.mrb[0].mxu0
  %v1574 = vadd.f32 0.0, %v1573
  %v1575 = vpop.f32.mrb[0].mxu0
  %v1576 = vpop.f32.mrb[0].mxu0
  %v1577 = vadd.f32 0.0, %v1576
  %v1578 = vpop.f32.mrb[0].mxu0
  %1579 = vmatprep.mubr.bf16.mxu0 0
  %1580 = vmatmul.mubr.bf16.gmra.mrb[0].mxu0 %v1434
  %v1581 = vpop.f32.mrb[0].mxu0
  %v1582 = vadd.f32 0.0, %v1581
  %v1583 = vpop.f32.mrb[0].mxu0
  %v1584 = vpop.f32.mrb[0].mxu0
  %v1585 = vadd.f32 0.0, %v1584
  %v1586 = vpop.f32.mrb[0].mxu0
  %1587 = vdwg.mxu0
  %v1588 = vadd.f32 %v1383, %v1526
  %v1589 = vadd.f32 %v1384, %v1529
  %v1590 = vadd.f32 %v1385, %v1534
  %v1591 = vadd.f32 %v1386, %v1537
  %v1592 = vadd.f32 %v1387, %v1542
  %v1593 = vadd.f32 %v1388, %v1545
  %v1594 = vadd.f32 %v1389, %v1550
  %v1595 = vadd.f32 %v1390, %v1553
  %v1596 = vadd.f32 %v1391, %v1558
  %v1597 = vadd.f32 %v1392, %v1561
  %v1598 = vadd.f32 %v1393, %v1566
  %v1599 = vadd.f32 %v1394, %v1569
  %v1600 = vadd.f32 %v1395, %v1574
  %v1601 = vadd.f32 %v1396, %v1577
  %v1602 = vadd.f32 %v1397, %v1582
  %v1603 = vadd.f32 %v1398, %v1585
  %v1604 = vld [vmem:[%s1 + $0x180] sm:$0xf]
  %v1605 = vld [vmem:[%s1 + $0x184] sm:$0xf]
  %v1606 = vld [vmem:[%s1 + $0x188] sm:$0xf]
  %v1607 = vld [vmem:[%s1 + $0x18c] sm:$0xf]
  %v1608 = vld [vmem:[%s1 + $0x190] sm:$0xf]
  %v1609 = vld [vmem:[%s1 + $0x194] sm:$0xf]
  %v1610 = vld [vmem:[%s1 + $0x198] sm:$0xf]
  %v1611 = vld [vmem:[%s1 + $0x19c] sm:$0xf]
  %v1612 = vld [vmem:[%s1 + $0x1a0] sm:$0xf]
  %v1613 = vld [vmem:[%s1 + $0x1a4] sm:$0xf]
  %v1614 = vld [vmem:[%s1 + $0x1a8] sm:$0xf]
  %v1615 = vld [vmem:[%s1 + $0x1ac] sm:$0xf]
  %v1616 = vld [vmem:[%s1 + $0x1b0] sm:$0xf]
  %v1617 = vld [vmem:[%s1 + $0x1b4] sm:$0xf]
  %v1618 = vld [vmem:[%s1 + $0x1b8] sm:$0xf]
  %v1619 = vld [vmem:[%s1 + $0x1bc] sm:$0xf]
  %v1622 = vunpack.c.l.b16 %v36
  %v1623 = vunpack.c.l.b16 %v56
  %v1624 = vpack.c.b16 %v1622, %v997
  %v1625 = vpack.c.b16 %v1623, %v998
  %v1644 = vunpack.c.l.b16 %v1604
  %v1645 = vunpack.c.l.b16 %v1605
  %v1646 = vunpack.c.l.b16 %v1606
  %v1647 = vunpack.c.l.b16 %v1607
  %v1648 = vunpack.c.l.b16 %v1608
  %v1649 = vunpack.c.l.b16 %v1609
  %v1650 = vunpack.c.l.b16 %v1610
  %v1651 = vunpack.c.l.b16 %v1611
  %v1652 = vunpack.c.l.b16 %v1612
  %v1653 = vunpack.c.l.b16 %v1613
  %v1654 = vunpack.c.l.b16 %v1614
  %v1655 = vunpack.c.l.b16 %v1615
  %v1656 = vunpack.c.l.b16 %v1616
  %v1657 = vunpack.c.l.b16 %v1617
  %v1658 = vunpack.c.l.b16 %v1618
  %v1659 = vunpack.c.l.b16 %v1619
  %v1660 = vpack.c.b16 %v1645, %v1644
  %v1661 = vpack.c.b16 %v1647, %v1646
  %v1662 = vpack.c.b16 %v1649, %v1648
  %v1663 = vpack.c.b16 %v1651, %v1650
  %v1664 = vpack.c.b16 %v1653, %v1652
  %v1665 = vpack.c.b16 %v1655, %v1654
  %v1666 = vpack.c.b16 %v1657, %v1656
  %v1667 = vpack.c.b16 %v1659, %v1658
  %1676 = vmatprep.subr.bf16.mxu0 0
  %1677 = vmatpush1.bf16.msra.mxu0 %v1660
  %1678 = vmatprep.subr.bf16.mxu0 0
  %1679 = vmatpush1.bf16.msra.mxu0 %v1661
  %1680 = vmatprep.subr.bf16.mxu0 0
  %1681 = vmatpush1.bf16.msra.mxu0 %v1662
  %1682 = vmatprep.subr.bf16.mxu0 0
  %1683 = vmatpush1.bf16.msra.mxu0 %v1663
  %1684 = vmatprep.subr.bf16.mxu0 0
  %1685 = vmatpush1.bf16.msra.mxu0 %v1664
  %1686 = vmatprep.subr.bf16.mxu0 0
  %1687 = vmatpush1.bf16.msra.mxu0 %v1665
  %1688 = vmatprep.subr.bf16.mxu0 0
  %1689 = vmatpush1.bf16.msra.mxu0 %v1666
  %1690 = vmatprep.subr.bf16.mxu0 0
  %1691 = vmatpush1.bf16.msra.mxu0 %v1667
  %1692 = vmatprep.subr.bf16.mxu0 0
  %1693 = vmatpush1.bf16.msra.mxu0 0
  %1694 = vmatprep.subr.bf16.mxu0 0
  %1695 = vmatpush1.bf16.msra.mxu0 0
  %1696 = vmatprep.subr.bf16.mxu0 0
  %1697 = vmatpush1.bf16.msra.mxu0 0
  %1698 = vmatprep.subr.bf16.mxu0 0
  %1699 = vmatpush1.bf16.msra.mxu0 0
  %1700 = vmatprep.subr.bf16.mxu0 0
  %1701 = vmatpush1.bf16.msra.mxu0 0
  %1702 = vmatprep.subr.bf16.mxu0 0
  %1703 = vmatpush1.bf16.msra.mxu0 0
  %1704 = vmatprep.subr.bf16.mxu0 0
  %1705 = vmatpush1.bf16.msra.mxu0 0
  %1706 = vmatprep.subr.bf16.mxu0 0
  %1707 = vmatpush1.bf16.msra.mxu0 0
  %1708 = vmatprep.mubr.bf16.mxu0 0
  %1709 = vmatmul.mubr.bf16.gmra.mrb[0].mxu0 %v527
  %v1710 = vpop.f32.mrb[0].mxu0
  %v1711 = vadd.f32 0.0, %v1710
  %v1712 = vpop.f32.mrb[0].mxu0
  %v1713 = vpop.f32.mrb[0].mxu0
  %v1714 = vadd.f32 0.0, %v1713
  %v1715 = vpop.f32.mrb[0].mxu0
  %1716 = vmatprep.mubr.bf16.mxu0 0
  %1717 = vmatmul.mubr.bf16.gmra.mrb[0].mxu0 %v528
  %v1718 = vpop.f32.mrb[0].mxu0
  %v1719 = vadd.f32 0.0, %v1718
  %v1720 = vpop.f32.mrb[0].mxu0
  %v1721 = vpop.f32.mrb[0].mxu0
  %v1722 = vadd.f32 0.0, %v1721
  %v1723 = vpop.f32.mrb[0].mxu0
  %1724 = vmatprep.mubr.bf16.mxu0 0
  %1725 = vmatmul.mubr.bf16.gmra.mrb[0].mxu0 %v529
  %v1726 = vpop.f32.mrb[0].mxu0
  %v1727 = vadd.f32 0.0, %v1726
  %v1728 = vpop.f32.mrb[0].mxu0
  %v1729 = vpop.f32.mrb[0].mxu0
  %v1730 = vadd.f32 0.0, %v1729
  %v1731 = vpop.f32.mrb[0].mxu0
  %1732 = vmatprep.mubr.bf16.mxu0 0
  %1733 = vmatmul.mubr.bf16.gmra.mrb[0].mxu0 %v1624
  %v1734 = vpop.f32.mrb[0].mxu0
  %v1735 = vadd.f32 0.0, %v1734
  %v1736 = vpop.f32.mrb[0].mxu0
  %v1737 = vpop.f32.mrb[0].mxu0
  %v1738 = vadd.f32 0.0, %v1737
  %v1739 = vpop.f32.mrb[0].mxu0
  %1740 = vmatprep.mubr.bf16.mxu0 0
  %1741 = vmatmul.mubr.bf16.gmra.mrb[0].mxu0 %v531
  %v1742 = vpop.f32.mrb[0].mxu0
  %v1743 = vadd.f32 0.0, %v1742
  %v1744 = vpop.f32.mrb[0].mxu0
  %v1745 = vpop.f32.mrb[0].mxu0
  %v1746 = vadd.f32 0.0, %v1745
  %v1747 = vpop.f32.mrb[0].mxu0
  %1748 = vmatprep.mubr.bf16.mxu0 0
  %1749 = vmatmul.mubr.bf16.gmra.mrb[0].mxu0 %v532
  %v1750 = vpop.f32.mrb[0].mxu0
  %v1751 = vadd.f32 0.0, %v1750
  %v1752 = vpop.f32.mrb[0].mxu0
  %v1753 = vpop.f32.mrb[0].mxu0
  %v1754 = vadd.f32 0.0, %v1753
  %v1755 = vpop.f32.mrb[0].mxu0
  %1756 = vmatprep.mubr.bf16.mxu0 0
  %1757 = vmatmul.mubr.bf16.gmra.mrb[0].mxu0 %v533
  %v1758 = vpop.f32.mrb[0].mxu0
  %v1759 = vadd.f32 0.0, %v1758
  %v1760 = vpop.f32.mrb[0].mxu0
  %v1761 = vpop.f32.mrb[0].mxu0
  %v1762 = vadd.f32 0.0, %v1761
  %v1763 = vpop.f32.mrb[0].mxu0
  %1764 = vmatprep.mubr.bf16.mxu0 0
  %1765 = vmatmul.mubr.bf16.gmra.mrb[0].mxu0 %v1625
  %v1766 = vpop.f32.mrb[0].mxu0
  %v1767 = vadd.f32 0.0, %v1766
  %v1768 = vpop.f32.mrb[0].mxu0
  %v1769 = vpop.f32.mrb[0].mxu0
  %v1770 = vadd.f32 0.0, %v1769
  %v1771 = vpop.f32.mrb[0].mxu0
  %1772 = vdwg.mxu0
  %v1773 = vadd.f32 %v1588, %v1711
  %v1774 = vadd.f32 %v1589, %v1714
  %v1775 = vadd.f32 %v1590, %v1719
  %v1776 = vadd.f32 %v1591, %v1722
  %v1777 = vadd.f32 %v1592, %v1727
  %v1778 = vadd.f32 %v1593, %v1730
  %v1779 = vadd.f32 %v1594, %v1735
  %v1780 = vadd.f32 %v1595, %v1738
  %v1781 = vadd.f32 %v1596, %v1743
  %v1782 = vadd.f32 %v1597, %v1746
  %v1783 = vadd.f32 %v1598, %v1751
  %v1784 = vadd.f32 %v1599, %v1754
  %v1785 = vadd.f32 %v1600, %v1759
  %v1786 = vadd.f32 %v1601, %v1762
  %v1787 = vadd.f32 %v1602, %v1767
  %v1788 = vadd.f32 %v1603, %v1770
  %v1790 = vshrl.u32 %v36, 16
  %v1792 = vrot.slane %v1790, 4
  %v1793 = vshll.u32 %v36, 16
  %v1795 = vrot.slane %v1793, 5
  %v1796 = vor.u32 %v1792, %v1795
  %v1797 = vrot.slane %v1796, 4
  %v1799 = vshll.u32 %v37, 16
  %v1801 = vrot.slane %v1799, 5
  %v1802 = vsel %vm76, %v1797, %v1801
  %v1804 = vshrl.u32 %v56, 16
  %v1806 = vrot.slane %v1804, 4
  %v1807 = vshll.u32 %v56, 16
  %v1809 = vrot.slane %v1807, 5
  %v1810 = vor.u32 %v1806, %v1809
  %v1811 = vrot.slane %v1810, 4
  %v1813 = vshll.u32 %v57, 16
  %v1815 = vrot.slane %v1813, 5
  %v1816 = vsel %vm76, %v1811, %v1815
  %v1817 = vld [vmem:[%s1 + $0x1c0] sm:$0xf]
  %v1818 = vld [vmem:[%s1 + $0x1c4] sm:$0xf]
  %v1819 = vld [vmem:[%s1 + $0x1c8] sm:$0xf]
  %v1820 = vld [vmem:[%s1 + $0x1cc] sm:$0xf]
  %v1821 = vld [vmem:[%s1 + $0x1d0] sm:$0xf]
  %v1822 = vld [vmem:[%s1 + $0x1d4] sm:$0xf]
  %v1823 = vld [vmem:[%s1 + $0x1d8] sm:$0xf]
  %v1824 = vld [vmem:[%s1 + $0x1dc] sm:$0xf]
  %v1825 = vld [vmem:[%s1 + $0x1e0] sm:$0xf]
  %v1826 = vld [vmem:[%s1 + $0x1e4] sm:$0xf]
  %v1827 = vld [vmem:[%s1 + $0x1e8] sm:$0xf]
  %v1828 = vld [vmem:[%s1 + $0x1ec] sm:$0xf]
  %v1829 = vld [vmem:[%s1 + $0x1f0] sm:$0xf]
  %v1830 = vld [vmem:[%s1 + $0x1f4] sm:$0xf]
  %v1831 = vld [vmem:[%s1 + $0x1f8] sm:$0xf]
  %v1832 = vld [vmem:[%s1 + $0x1fc] sm:$0xf]
  %v1833 = vunpack.c.l.b16 %v1802
  %v1834 = vunpack.c.l.b16 %v1816
  %v1835 = vpack.c.b16 %v1833, %v1220
  %v1836 = vpack.c.b16 %v1834, %v1221
  %v1855 = vunpack.c.l.b16 %v1817
  %v1856 = vunpack.c.l.b16 %v1818
  %v1857 = vunpack.c.l.b16 %v1819
  %v1858 = vunpack.c.l.b16 %v1820
  %v1859 = vunpack.c.l.b16 %v1821
  %v1860 = vunpack.c.l.b16 %v1822
  %v1861 = vunpack.c.l.b16 %v1823
  %v1862 = vunpack.c.l.b16 %v1824
  %v1863 = vunpack.c.l.b16 %v1825
  %v1864 = vunpack.c.l.b16 %v1826
  %v1865 = vunpack.c.l.b16 %v1827
  %v1866 = vunpack.c.l.b16 %v1828
  %v1867 = vunpack.c.l.b16 %v1829
  %v1868 = vunpack.c.l.b16 %v1830
  %v1869 = vunpack.c.l.b16 %v1831
  %v1870 = vunpack.c.l.b16 %v1832
  %v1871 = vpack.c.b16 %v1856, %v1855
  %v1872 = vpack.c.b16 %v1858, %v1857
  %v1873 = vpack.c.b16 %v1860, %v1859
  %v1874 = vpack.c.b16 %v1862, %v1861
  %v1875 = vpack.c.b16 %v1864, %v1863
  %v1876 = vpack.c.b16 %v1866, %v1865
  %v1877 = vpack.c.b16 %v1868, %v1867
  %v1878 = vpack.c.b16 %v1870, %v1869
  %1887 = vmatprep.subr.bf16.mxu0 0
  %1888 = vmatpush1.bf16.msra.mxu0 %v1871
  %1889 = vmatprep.subr.bf16.mxu0 0
  %1890 = vmatpush1.bf16.msra.mxu0 %v1872
  %1891 = vmatprep.subr.bf16.mxu0 0
  %1892 = vmatpush1.bf16.msra.mxu0 %v1873
  %1893 = vmatprep.subr.bf16.mxu0 0
  %1894 = vmatpush1.bf16.msra.mxu0 %v1874
  %1895 = vmatprep.subr.bf16.mxu0 0
  %1896 = vmatpush1.bf16.msra.mxu0 %v1875
  %1897 = vmatprep.subr.bf16.mxu0 0
  %1898 = vmatpush1.bf16.msra.mxu0 %v1876
  %1899 = vmatprep.subr.bf16.mxu0 0
  %1900 = vmatpush1.bf16.msra.mxu0 %v1877
  %1901 = vmatprep.subr.bf16.mxu0 0
  %1902 = vmatpush1.bf16.msra.mxu0 %v1878
  %1903 = vmatprep.subr.bf16.mxu0 0
  %1904 = vmatpush1.bf16.msra.mxu0 0
  %1905 = vmatprep.subr.bf16.mxu0 0
  %1906 = vmatpush1.bf16.msra.mxu0 0
  %1907 = vmatprep.subr.bf16.mxu0 0
  %1908 = vmatpush1.bf16.msra.mxu0 0
  %1909 = vmatprep.subr.bf16.mxu0 0
  %1910 = vmatpush1.bf16.msra.mxu0 0
  %1911 = vmatprep.subr.bf16.mxu0 0
  %1912 = vmatpush1.bf16.msra.mxu0 0
  %1913 = vmatprep.subr.bf16.mxu0 0
  %1914 = vmatpush1.bf16.msra.mxu0 0
  %1915 = vmatprep.subr.bf16.mxu0 0
  %1916 = vmatpush1.bf16.msra.mxu0 0
  %1917 = vmatprep.subr.bf16.mxu0 0
  %1918 = vmatpush1.bf16.msra.mxu0 0
  %1919 = vmatprep.mubr.bf16.mxu0 0
  %1920 = vmatmul.mubr.bf16.gmra.mrb[0].mxu0 %v334
  %v1921 = vpop.f32.mrb[0].mxu0
  %v1922 = vadd.f32 0.0, %v1921
  %v1923 = vpop.f32.mrb[0].mxu0
  %v1924 = vpop.f32.mrb[0].mxu0
  %v1925 = vadd.f32 0.0, %v1924
  %v1926 = vpop.f32.mrb[0].mxu0
  %1927 = vmatprep.mubr.bf16.mxu0 0
  %1928 = vmatmul.mubr.bf16.gmra.mrb[0].mxu0 %v335
  %v1929 = vpop.f32.mrb[0].mxu0
  %v1930 = vadd.f32 0.0, %v1929
  %v1931 = vpop.f32.mrb[0].mxu0
  %v1932 = vpop.f32.mrb[0].mxu0
  %v1933 = vadd.f32 0.0, %v1932
  %v1934 = vpop.f32.mrb[0].mxu0
  %1935 = vmatprep.mubr.bf16.mxu0 0
  %1936 = vmatmul.mubr.bf16.gmra.mrb[0].mxu0 %v336
  %v1937 = vpop.f32.mrb[0].mxu0
  %v1938 = vadd.f32 0.0, %v1937
  %v1939 = vpop.f32.mrb[0].mxu0
  %v1940 = vpop.f32.mrb[0].mxu0
  %v1941 = vadd.f32 0.0, %v1940
  %v1942 = vpop.f32.mrb[0].mxu0
  %1943 = vmatprep.mubr.bf16.mxu0 0
  %1944 = vmatmul.mubr.bf16.gmra.mrb[0].mxu0 %v1835
  %v1945 = vpop.f32.mrb[0].mxu0
  %v1946 = vadd.f32 0.0, %v1945
  %v1947 = vpop.f32.mrb[0].mxu0
  %v1948 = vpop.f32.mrb[0].mxu0
  %v1949 = vadd.f32 0.0, %v1948
  %v1950 = vpop.f32.mrb[0].mxu0
  %1951 = vmatprep.mubr.bf16.mxu0 0
  %1952 = vmatmul.mubr.bf16.gmra.mrb[0].mxu0 %v338
  %v1953 = vpop.f32.mrb[0].mxu0
  %v1954 = vadd.f32 0.0, %v1953
  %v1955 = vpop.f32.mrb[0].mxu0
  %v1956 = vpop.f32.mrb[0].mxu0
  %v1957 = vadd.f32 0.0, %v1956
  %v1958 = vpop.f32.mrb[0].mxu0
  %1959 = vmatprep.mubr.bf16.mxu0 0
  %1960 = vmatmul.mubr.bf16.gmra.mrb[0].mxu0 %v339
  %v1961 = vpop.f32.mrb[0].mxu0
  %v1962 = vadd.f32 0.0, %v1961
  %v1963 = vpop.f32.mrb[0].mxu0
  %v1964 = vpop.f32.mrb[0].mxu0
  %v1965 = vadd.f32 0.0, %v1964
  %v1966 = vpop.f32.mrb[0].mxu0
  %1967 = vmatprep.mubr.bf16.mxu0 0
  %1968 = vmatmul.mubr.bf16.gmra.mrb[0].mxu0 %v340
  %v1969 = vpop.f32.mrb[0].mxu0
  %v1970 = vadd.f32 0.0, %v1969
  %v1971 = vpop.f32.mrb[0].mxu0
  %v1972 = vpop.f32.mrb[0].mxu0
  %v1973 = vadd.f32 0.0, %v1972
  %v1974 = vpop.f32.mrb[0].mxu0
  %1975 = vmatprep.mubr.bf16.mxu0 0
  %1976 = vmatmul.mubr.bf16.gmra.mrb[0].mxu0 %v1836
  %v1977 = vpop.f32.mrb[0].mxu0
  %v1978 = vadd.f32 0.0, %v1977
  %v1979 = vpop.f32.mrb[0].mxu0
  %v1980 = vpop.f32.mrb[0].mxu0
  %v1981 = vadd.f32 0.0, %v1980
  %v1982 = vpop.f32.mrb[0].mxu0
  %1983 = vdwg.mxu0
  %v1984 = vadd.f32 %v1773, %v1922
  %v1985 = vadd.f32 %v1774, %v1925
  %v1986 = vadd.f32 %v1775, %v1930
  %v1987 = vadd.f32 %v1776, %v1933
  %v1988 = vadd.f32 %v1777, %v1938
  %v1989 = vadd.f32 %v1778, %v1941
  %v1990 = vadd.f32 %v1779, %v1946
  %v1991 = vadd.f32 %v1780, %v1949
  %v1992 = vadd.f32 %v1781, %v1954
  %v1993 = vadd.f32 %v1782, %v1957
  %v1994 = vadd.f32 %v1783, %v1962
  %v1995 = vadd.f32 %v1784, %v1965
  %v1996 = vadd.f32 %v1785, %v1970
  %v1997 = vadd.f32 %v1786, %v1973
  %v1998 = vadd.f32 %v1787, %v1978
  %v1999 = vadd.f32 %v1788, %v1981
  %v2002 = vrot.slane %v36, 5
  %v2003 = vrot.slane %v2002, 4
  %v2004 = vrot.slane %v37, 5
  %v2005 = vsel %vm705, %v2003, %v2004
  %v2006 = vrot.slane %v56, 5
  %v2007 = vrot.slane %v2006, 4
  %v2008 = vrot.slane %v57, 5
  %v2009 = vsel %vm705, %v2007, %v2008
  %v2010 = vld [vmem:[%s1 + $0x200] sm:$0xf]
  %v2011 = vld [vmem:[%s1 + $0x204] sm:$0xf]
  %v2012 = vld [vmem:[%s1 + $0x208] sm:$0xf]
  %v2013 = vld [vmem:[%s1 + $0x20c] sm:$0xf]
  %v2014 = vld [vmem:[%s1 + $0x210] sm:$0xf]
  %v2015 = vld [vmem:[%s1 + $0x214] sm:$0xf]
  %v2016 = vld [vmem:[%s1 + $0x218] sm:$0xf]
  %v2017 = vld [vmem:[%s1 + $0x21c] sm:$0xf]
  %v2018 = vld [vmem:[%s1 + $0x220] sm:$0xf]
  %v2019 = vld [vmem:[%s1 + $0x224] sm:$0xf]
  %v2020 = vld [vmem:[%s1 + $0x228] sm:$0xf]
  %v2021 = vld [vmem:[%s1 + $0x22c] sm:$0xf]
  %v2022 = vld [vmem:[%s1 + $0x230] sm:$0xf]
  %v2023 = vld [vmem:[%s1 + $0x234] sm:$0xf]
  %v2024 = vld [vmem:[%s1 + $0x238] sm:$0xf]
  %v2025 = vld [vmem:[%s1 + $0x23c] sm:$0xf]
  %v2026 = vunpack.c.l.b16 %v2005
  %v2027 = vunpack.c.l.b16 %v2009
  %v2028 = vpack.c.b16 %v2026, %v1425
  %v2029 = vpack.c.b16 %v2027, %v1426
  %v2048 = vunpack.c.l.b16 %v2010
  %v2049 = vunpack.c.l.b16 %v2011
  %v2050 = vunpack.c.l.b16 %v2012
  %v2051 = vunpack.c.l.b16 %v2013
  %v2052 = vunpack.c.l.b16 %v2014
  %v2053 = vunpack.c.l.b16 %v2015
  %v2054 = vunpack.c.l.b16 %v2016
  %v2055 = vunpack.c.l.b16 %v2017
  %v2056 = vunpack.c.l.b16 %v2018
  %v2057 = vunpack.c.l.b16 %v2019
  %v2058 = vunpack.c.l.b16 %v2020
  %v2059 = vunpack.c.l.b16 %v2021
  %v2060 = vunpack.c.l.b16 %v2022
  %v2061 = vunpack.c.l.b16 %v2023
  %v2062 = vunpack.c.l.b16 %v2024
  %v2063 = vunpack.c.l.b16 %v2025
  %v2064 = vpack.c.b16 %v2049, %v2048
  %v2065 = vpack.c.b16 %v2051, %v2050
  %v2066 = vpack.c.b16 %v2053, %v2052
  %v2067 = vpack.c.b16 %v2055, %v2054
  %v2068 = vpack.c.b16 %v2057, %v2056
  %v2069 = vpack.c.b16 %v2059, %v2058
  %v2070 = vpack.c.b16 %v2061, %v2060
  %v2071 = vpack.c.b16 %v2063, %v2062
  %2080 = vmatprep.subr.bf16.mxu0 0
  %2081 = vmatpush1.bf16.msra.mxu0 %v2064
  %2082 = vmatprep.subr.bf16.mxu0 0
  %2083 = vmatpush1.bf16.msra.mxu0 %v2065
  %2084 = vmatprep.subr.bf16.mxu0 0
  %2085 = vmatpush1.bf16.msra.mxu0 %v2066
  %2086 = vmatprep.subr.bf16.mxu0 0
  %2087 = vmatpush1.bf16.msra.mxu0 %v2067
  %2088 = vmatprep.subr.bf16.mxu0 0
  %2089 = vmatpush1.bf16.msra.mxu0 %v2068
  %2090 = vmatprep.subr.bf16.mxu0 0
  %2091 = vmatpush1.bf16.msra.mxu0 %v2069
  %2092 = vmatprep.subr.bf16.mxu0 0
  %2093 = vmatpush1.bf16.msra.mxu0 %v2070
  %2094 = vmatprep.subr.bf16.mxu0 0
  %2095 = vmatpush1.bf16.msra.mxu0 %v2071
  %2096 = vmatprep.subr.bf16.mxu0 0
  %2097 = vmatpush1.bf16.msra.mxu0 0
  %2098 = vmatprep.subr.bf16.mxu0 0
  %2099 = vmatpush1.bf16.msra.mxu0 0
  %2100 = vmatprep.subr.bf16.mxu0 0
  %2101 = vmatpush1.bf16.msra.mxu0 0
  %2102 = vmatprep.subr.bf16.mxu0 0
  %2103 = vmatpush1.bf16.msra.mxu0 0
  %2104 = vmatprep.subr.bf16.mxu0 0
  %2105 = vmatpush1.bf16.msra.mxu0 0
  %2106 = vmatprep.subr.bf16.mxu0 0
  %2107 = vmatpush1.bf16.msra.mxu0 0
  %2108 = vmatprep.subr.bf16.mxu0 0
  %2109 = vmatpush1.bf16.msra.mxu0 0
  %2110 = vmatprep.subr.bf16.mxu0 0
  %2111 = vmatpush1.bf16.msra.mxu0 0
  %2112 = vmatprep.mubr.bf16.mxu0 0
  %2113 = vmatmul.mubr.bf16.gmra.mrb[0].mxu0 %v803
  %v2114 = vpop.f32.mrb[0].mxu0
  %v2115 = vadd.f32 0.0, %v2114
  %v2116 = vpop.f32.mrb[0].mxu0
  %v2117 = vpop.f32.mrb[0].mxu0
  %v2118 = vadd.f32 0.0, %v2117
  %v2119 = vpop.f32.mrb[0].mxu0
  %2120 = vmatprep.mubr.bf16.mxu0 0
  %2121 = vmatmul.mubr.bf16.gmra.mrb[0].mxu0 %v804
  %v2122 = vpop.f32.mrb[0].mxu0
  %v2123 = vadd.f32 0.0, %v2122
  %v2124 = vpop.f32.mrb[0].mxu0
  %v2125 = vpop.f32.mrb[0].mxu0
  %v2126 = vadd.f32 0.0, %v2125
  %v2127 = vpop.f32.mrb[0].mxu0
  %2128 = vmatprep.mubr.bf16.mxu0 0
  %2129 = vmatmul.mubr.bf16.gmra.mrb[0].mxu0 %v805
  %v2130 = vpop.f32.mrb[0].mxu0
  %v2131 = vadd.f32 0.0, %v2130
  %v2132 = vpop.f32.mrb[0].mxu0
  %v2133 = vpop.f32.mrb[0].mxu0
  %v2134 = vadd.f32 0.0, %v2133
  %v2135 = vpop.f32.mrb[0].mxu0
  %2136 = vmatprep.mubr.bf16.mxu0 0
  %2137 = vmatmul.mubr.bf16.gmra.mrb[0].mxu0 %v2028
  %v2138 = vpop.f32.mrb[0].mxu0
  %v2139 = vadd.f32 0.0, %v2138
  %v2140 = vpop.f32.mrb[0].mxu0
  %v2141 = vpop.f32.mrb[0].mxu0
  %v2142 = vadd.f32 0.0, %v2141
  %v2143 = vpop.f32.mrb[0].mxu0
  %2144 = vmatprep.mubr.bf16.mxu0 0
  %2145 = vmatmul.mubr.bf16.gmra.mrb[0].mxu0 %v807
  %v2146 = vpop.f32.mrb[0].mxu0
  %v2147 = vadd.f32 0.0, %v2146
  %v2148 = vpop.f32.mrb[0].mxu0
  %v2149 = vpop.f32.mrb[0].mxu0
  %v2150 = vadd.f32 0.0, %v2149
  %v2151 = vpop.f32.mrb[0].mxu0
  %2152 = vmatprep.mubr.bf16.mxu0 0
  %2153 = vmatmul.mubr.bf16.gmra.mrb[0].mxu0 %v808
  %v2154 = vpop.f32.mrb[0].mxu0
  %v2155 = vadd.f32 0.0, %v2154
  %v2156 = vpop.f32.mrb[0].mxu0
  %v2157 = vpop.f32.mrb[0].mxu0
  %v2158 = vadd.f32 0.0, %v2157
  %v2159 = vpop.f32.mrb[0].mxu0
  %2160 = vmatprep.mubr.bf16.mxu0 0
  %2161 = vmatmul.mubr.bf16.gmra.mrb[0].mxu0 %v809
  %v2162 = vpop.f32.mrb[0].mxu0
  %v2163 = vadd.f32 0.0, %v2162
  %v2164 = vpop.f32.mrb[0].mxu0
  %v2165 = vpop.f32.mrb[0].mxu0
  %v2166 = vadd.f32 0.0, %v2165
  %v2167 = vpop.f32.mrb[0].mxu0
  %2168 = vmatprep.mubr.bf16.mxu0 0
  %2169 = vmatmul.mubr.bf16.gmra.mrb[0].mxu0 %v2029
  %v2170 = vpop.f32.mrb[0].mxu0
  %v2171 = vadd.f32 0.0, %v2170
  %v2172 = vpop.f32.mrb[0].mxu0
  %v2173 = vpop.f32.mrb[0].mxu0
  %v2174 = vadd.f32 0.0, %v2173
  %v2175 = vpop.f32.mrb[0].mxu0
  %2176 = vdwg.mxu0
  %v2177 = vadd.f32 %v1984, %v2115
  %v2178 = vadd.f32 %v1985, %v2118
  %v2179 = vadd.f32 %v1986, %v2123
  %v2180 = vadd.f32 %v1987, %v2126
  %v2181 = vadd.f32 %v1988, %v2131
  %v2182 = vadd.f32 %v1989, %v2134
  %v2183 = vadd.f32 %v1990, %v2139
  %v2184 = vadd.f32 %v1991, %v2142
  %v2185 = vadd.f32 %v1992, %v2147
  %v2186 = vadd.f32 %v1993, %v2150
  %v2187 = vadd.f32 %v1994, %v2155
  %v2188 = vadd.f32 %v1995, %v2158
  %v2189 = vadd.f32 %v1996, %v2163
  %v2190 = vadd.f32 %v1997, %v2166
  %v2191 = vadd.f32 %v1998, %v2171
  %v2192 = vadd.f32 %v1999, %v2174
  %v2193 = vld [vmem:[%s2] sm:$0x1]
  %v2195 = vlaneseq
  %v2196 = vshrl.u32 %v2195, 7
  %v2197 = vsub.s32 0, %v2196
  %v2198 = vrot.slane %v2193, %v2197
  %v2200 = vmul.f32 %v2177, %v2198
  %v2201 = vmul.f32 %v2178, %v2198
  %v2202 = vmul.f32 %v2179, %v2198
  %v2203 = vmul.f32 %v2180, %v2198
  %v2204 = vmul.f32 %v2181, %v2198
  %v2205 = vmul.f32 %v2182, %v2198
  %v2206 = vmul.f32 %v2183, %v2198
  %v2207 = vmul.f32 %v2184, %v2198
  %v2208 = vmul.f32 %v2185, %v2198
  %v2209 = vmul.f32 %v2186, %v2198
  %v2210 = vmul.f32 %v2187, %v2198
  %v2211 = vmul.f32 %v2188, %v2198
  %v2212 = vmul.f32 %v2189, %v2198
  %v2213 = vmul.f32 %v2190, %v2198
  %v2214 = vmul.f32 %v2191, %v2198
  %v2215 = vmul.f32 %v2192, %v2198
  %v2216 = vld [vmem:[%s3] sm:$0x1]
  %v2218 = vlaneseq
  %v2219 = vshrl.u32 %v2218, 7
  %v2220 = vsub.s32 0, %v2219
  %v2221 = vrot.slane %v2216, %v2220
  %v2223 = vadd.f32 %v2200, %v2221
  %v2224 = vadd.f32 %v2201, %v2221
  %v2225 = vadd.f32 %v2202, %v2221
  %v2226 = vadd.f32 %v2203, %v2221
  %v2227 = vadd.f32 %v2204, %v2221
  %v2228 = vadd.f32 %v2205, %v2221
  %v2229 = vadd.f32 %v2206, %v2221
  %v2230 = vadd.f32 %v2207, %v2221
  %v2231 = vadd.f32 %v2208, %v2221
  %v2232 = vadd.f32 %v2209, %v2221
  %v2233 = vadd.f32 %v2210, %v2221
  %v2234 = vadd.f32 %v2211, %v2221
  %v2235 = vadd.f32 %v2212, %v2221
  %v2236 = vadd.f32 %v2213, %v2221
  %v2237 = vadd.f32 %v2214, %v2221
  %v2238 = vadd.f32 %v2215, %v2221
  %v2239 = vmax.f32 %v2223, 0.0
  %v2240 = vmax.f32 %v2224, 0.0
  %v2241 = vmax.f32 %v2225, 0.0
  %v2242 = vmax.f32 %v2226, 0.0
  %v2243 = vmax.f32 %v2227, 0.0
  %v2244 = vmax.f32 %v2228, 0.0
  %v2245 = vmax.f32 %v2229, 0.0
  %v2246 = vmax.f32 %v2230, 0.0
  %v2247 = vmax.f32 %v2231, 0.0
  %v2248 = vmax.f32 %v2232, 0.0
  %v2249 = vmax.f32 %v2233, 0.0
  %v2250 = vmax.f32 %v2234, 0.0
  %v2251 = vmax.f32 %v2235, 0.0
  %v2252 = vmax.f32 %v2236, 0.0
  %v2253 = vmax.f32 %v2237, 0.0
  %v2254 = vmax.f32 %v2238, 0.0
  %v2255 = vpack.c.bf16 %v2240, %v2239
  %v2256 = vpack.c.bf16 %v2242, %v2241
  %v2257 = vpack.c.bf16 %v2244, %v2243
  %v2258 = vpack.c.bf16 %v2246, %v2245
  %v2259 = vpack.c.bf16 %v2248, %v2247
  %v2260 = vpack.c.bf16 %v2250, %v2249
  %v2261 = vpack.c.bf16 %v2252, %v2251
  %v2262 = vpack.c.bf16 %v2254, %v2253
  %v2271 = vunpack.c.l.b16 %v2255
  %v2272 = vunpack.c.h.b16 %v2255
  %v2273 = vunpack.c.l.b16 %v2256
  %v2274 = vunpack.c.h.b16 %v2256
  %v2275 = vunpack.c.l.b16 %v2257
  %v2276 = vunpack.c.h.b16 %v2257
  %v2277 = vunpack.c.l.b16 %v2258
  %v2278 = vunpack.c.h.b16 %v2258
  %v2279 = vunpack.c.l.b16 %v2259
  %v2280 = vunpack.c.h.b16 %v2259
  %v2281 = vunpack.c.l.b16 %v2260
  %v2282 = vunpack.c.h.b16 %v2260
  %v2283 = vunpack.c.l.b16 %v2261
  %v2284 = vunpack.c.h.b16 %v2261
  %v2285 = vunpack.c.l.b16 %v2262
  %v2286 = vunpack.c.h.b16 %v2262
  %v2287 = vpack.c.b16 %v2271, %v2271
  %v2288 = vpack.c.b16 %v2272, %v2272
  %v2289 = vpack.c.b16 %v2273, %v2273
  %v2290 = vpack.c.b16 %v2274, %v2274
  %v2291 = vpack.c.b16 %v2275, %v2275
  %v2292 = vpack.c.b16 %v2276, %v2276
  %v2293 = vpack.c.b16 %v2277, %v2277
  %v2294 = vpack.c.b16 %v2278, %v2278
  %v2295 = vpack.c.b16 %v2279, %v2279
  %v2296 = vpack.c.b16 %v2280, %v2280
  %v2297 = vpack.c.b16 %v2281, %v2281
  %v2298 = vpack.c.b16 %v2282, %v2282
  %v2299 = vpack.c.b16 %v2283, %v2283
  %v2300 = vpack.c.b16 %v2284, %v2284
  %v2301 = vpack.c.b16 %v2285, %v2285
  %v2302 = vpack.c.b16 %v2286, %v2286
  %v2304 = vshrl.u32 0, 16
  %v2306 = vrot.slane %v2304, 7
  %v2307 = vshll.u32 0, 16
  %v2309 = vor.u32 %v2306, %v2307
  %v2311 = vshrl.u32 %v2287, 16
  %v2313 = vrot.slane %v2311, 7
  %v2314 = vshll.u32 %v2287, 16
  %v2316 = vor.u32 %v2313, %v2314
  %v2318 = vshrl.u32 %v2288, 16
  %v2320 = vrot.slane %v2318, 7
  %v2321 = vshll.u32 %v2288, 16
  %v2323 = vor.u32 %v2320, %v2321
  %v2325 = vshrl.u32 %v2289, 16
  %v2327 = vrot.slane %v2325, 7
  %v2328 = vshll.u32 %v2289, 16
  %v2330 = vor.u32 %v2327, %v2328
  %v2332 = vshrl.u32 %v2290, 16
  %v2334 = vrot.slane %v2332, 7
  %v2335 = vshll.u32 %v2290, 16
  %v2337 = vor.u32 %v2334, %v2335
  %v2339 = vshrl.u32 %v2291, 16
  %v2341 = vrot.slane %v2339, 7
  %v2342 = vshll.u32 %v2291, 16
  %v2344 = vor.u32 %v2341, %v2342
  %v2346 = vshrl.u32 %v2292, 16
  %v2348 = vrot.slane %v2346, 7
  %v2349 = vshll.u32 %v2292, 16
  %v2351 = vor.u32 %v2348, %v2349
  %v2353 = vshrl.u32 %v2293, 16
  %v2355 = vrot.slane %v2353, 7
  %v2356 = vshll.u32 %v2293, 16
  %v2358 = vor.u32 %v2355, %v2356
  %v2360 = vshrl.u32 %v2294, 16
  %v2362 = vrot.slane %v2360, 7
  %v2363 = vshll.u32 %v2294, 16
  %v2365 = vor.u32 %v2362, %v2363
  %v2367 = vshrl.u32 %v2295, 16
  %v2369 = vrot.slane %v2367, 7
  %v2370 = vshll.u32 %v2295, 16
  %v2372 = vor.u32 %v2369, %v2370
  %v2374 = vshrl.u32 %v2296, 16
  %v2376 = vrot.slane %v2374, 7
  %v2377 = vshll.u32 %v2296, 16
  %v2379 = vor.u32 %v2376, %v2377
  %v2381 = vshrl.u32 %v2297, 16
  %v2383 = vrot.slane %v2381, 7
  %v2384 = vshll.u32 %v2297, 16
  %v2386 = vor.u32 %v2383, %v2384
  %v2388 = vshrl.u32 %v2298, 16
  %v2390 = vrot.slane %v2388, 7
  %v2391 = vshll.u32 %v2298, 16
  %v2393 = vor.u32 %v2390, %v2391
  %v2395 = vshrl.u32 %v2299, 16
  %v2397 = vrot.slane %v2395, 7
  %v2398 = vshll.u32 %v2299, 16
  %v2400 = vor.u32 %v2397, %v2398
  %v2402 = vshrl.u32 %v2300, 16
  %v2404 = vrot.slane %v2402, 7
  %v2405 = vshll.u32 %v2300, 16
  %v2407 = vor.u32 %v2404, %v2405
  %v2409 = vshrl.u32 %v2301, 16
  %v2411 = vrot.slane %v2409, 7
  %v2412 = vshll.u32 %v2301, 16
  %v2414 = vor.u32 %v2411, %v2412
  %v2416 = vshrl.u32 %v2302, 16
  %v2418 = vrot.slane %v2416, 7
  %v2419 = vshll.u32 %v2302, 16
  %v2421 = vor.u32 %v2418, %v2419
  %vm2439 = vcmask 1040384
  %vm2440 = vsmask.f32 256
  %vm2441 = vmand %vm2439, %vm2440
  %v2442 = vsel %vm2441, 0, %v2309
  %v2443 = vsel %vm2441, 0, %v2316
  %v2444 = vsel %vm2441, 0, %v2323
  %v2445 = vsel %vm2441, 0, %v2330
  %v2446 = vsel %vm2441, 0, %v2337
  %v2447 = vsel %vm2441, 0, %v2344
  %v2448 = vsel %vm2441, 0, %v2351
  %v2449 = vsel %vm2441, 0, %v2358
  %v2450 = vsel %vm2441, 0, %v2365
  %v2451 = vsel %vm2441, 0, %v2372
  %v2452 = vsel %vm2441, 0, %v2379
  %v2453 = vsel %vm2441, 0, %v2386
  %v2454 = vsel %vm2441, 0, %v2393
  %v2455 = vsel %vm2441, 0, %v2400
  %v2456 = vsel %vm2441, 0, %v2407
  %v2457 = vsel %vm2441, 0, %v2414
  %v2458 = vsel %vm2441, 0, %v2421
  %vm2459 = vcmask 1044480
  %vm2460 = vsmask.f32 4352
  %vm2461 = vmand %vm2459, %vm2460
  %v2462 = vsel %vm2461, %v2442, 0
  %v2463 = vsel %vm2461, %v2443, 0
  %v2464 = vsel %vm2461, %v2444, 0
  %v2465 = vsel %vm2461, %v2445, 0
  %v2466 = vsel %vm2461, %v2446, 0
  %v2467 = vsel %vm2461, %v2447, 0
  %v2468 = vsel %vm2461, %v2448, 0
  %v2469 = vsel %vm2461, %v2449, 0
  %v2470 = vsel %vm2461, %v2450, 0
  %v2471 = vsel %vm2461, %v2451, 0
  %v2472 = vsel %vm2461, %v2452, 0
  %v2473 = vsel %vm2461, %v2453, 0
  %v2474 = vsel %vm2461, %v2454, 0
  %v2475 = vsel %vm2461, %v2455, 0
  %v2476 = vsel %vm2461, %v2456, 0
  %v2477 = vsel %vm2461, %v2457, 0
  %v2478 = vsel %vm2461, %v2458, 0
  %v2496 = vunpack.c.l.b16 %v2462
  %v2497 = vunpack.c.h.b16 %v2462
  %v2498 = vunpack.c.l.b16 %v2463
  %v2499 = vunpack.c.h.b16 %v2463
  %v2500 = vunpack.c.l.b16 %v2464
  %v2501 = vunpack.c.h.b16 %v2464
  %v2502 = vunpack.c.l.b16 %v2465
  %v2503 = vunpack.c.h.b16 %v2465
  %v2504 = vunpack.c.l.b16 %v2466
  %v2505 = vunpack.c.h.b16 %v2466
  %v2506 = vunpack.c.l.b16 %v2467
  %v2507 = vunpack.c.h.b16 %v2467
  %v2508 = vunpack.c.l.b16 %v2468
  %v2509 = vunpack.c.h.b16 %v2468
  %v2510 = vunpack.c.l.b16 %v2469
  %v2511 = vunpack.c.h.b16 %v2469
  %v2512 = vunpack.c.l.b16 %v2470
  %v2513 = vunpack.c.h.b16 %v2470
  %v2514 = vunpack.c.l.b16 %v2471
  %v2515 = vunpack.c.h.b16 %v2471
  %v2516 = vunpack.c.l.b16 %v2472
  %v2517 = vunpack.c.h.b16 %v2472
  %v2518 = vunpack.c.l.b16 %v2473
  %v2519 = vunpack.c.h.b16 %v2473
  %v2520 = vunpack.c.l.b16 %v2474
  %v2521 = vunpack.c.h.b16 %v2474
  %v2522 = vunpack.c.l.b16 %v2475
  %v2523 = vunpack.c.h.b16 %v2475
  %v2524 = vunpack.c.l.b16 %v2476
  %v2525 = vunpack.c.h.b16 %v2476
  %v2526 = vunpack.c.l.b16 %v2477
  %v2527 = vunpack.c.h.b16 %v2477
  %v2528 = vunpack.c.l.b16 %v2478
  %v2529 = vunpack.c.h.b16 %v2478
  %v2530 = vpack.c.b16 %v2496, %v2496
  %v2531 = vpack.c.b16 %v2497, %v2497
  %v2532 = vpack.c.b16 %v2498, %v2498
  %v2533 = vpack.c.b16 %v2499, %v2499
  %v2534 = vpack.c.b16 %v2500, %v2500
  %v2535 = vpack.c.b16 %v2501, %v2501
  %v2536 = vpack.c.b16 %v2502, %v2502
  %v2537 = vpack.c.b16 %v2503, %v2503
  %v2538 = vpack.c.b16 %v2504, %v2504
  %v2539 = vpack.c.b16 %v2505, %v2505
  %v2540 = vpack.c.b16 %v2506, %v2506
  %v2541 = vpack.c.b16 %v2507, %v2507
  %v2542 = vpack.c.b16 %v2508, %v2508
  %v2543 = vpack.c.b16 %v2509, %v2509
  %v2544 = vpack.c.b16 %v2510, %v2510
  %v2545 = vpack.c.b16 %v2511, %v2511
  %v2546 = vpack.c.b16 %v2512, %v2512
  %v2547 = vpack.c.b16 %v2513, %v2513
  %v2548 = vpack.c.b16 %v2514, %v2514
  %v2549 = vpack.c.b16 %v2515, %v2515
  %v2550 = vpack.c.b16 %v2516, %v2516
  %v2551 = vpack.c.b16 %v2517, %v2517
  %v2552 = vpack.c.b16 %v2518, %v2518
  %v2553 = vpack.c.b16 %v2519, %v2519
  %v2554 = vpack.c.b16 %v2520, %v2520
  %v2555 = vpack.c.b16 %v2521, %v2521
  %v2556 = vpack.c.b16 %v2522, %v2522
  %v2557 = vpack.c.b16 %v2523, %v2523
  %v2558 = vpack.c.b16 %v2524, %v2524
  %v2559 = vpack.c.b16 %v2525, %v2525
  %v2560 = vpack.c.b16 %v2526, %v2526
  %v2561 = vpack.c.b16 %v2527, %v2527
  %v2562 = vpack.c.b16 %v2528, %v2528
  %v2563 = vpack.c.b16 %v2529, %v2529
  %2598 = vst [vmem:[%s4] sm:$0xf] %v2530
  %2599 = vst [vmem:[%s4 + $0x4] sm:$0x1] %v2531
  %2600 = vst [vmem:[%s4 + $0x8] sm:$0xf] %v2532
  %2601 = vst [vmem:[%s4 + $0xc] sm:$0x1] %v2533
  %2602 = vst [vmem:[%s4 + $0x10] sm:$0xf] %v2534
  %2603 = vst [vmem:[%s4 + $0x14] sm:$0x1] %v2535
  %2604 = vst [vmem:[%s4 + $0x18] sm:$0xf] %v2536
  %2605 = vst [vmem:[%s4 + $0x1c] sm:$0x1] %v2537
  %2606 = vst [vmem:[%s4 + $0x20] sm:$0xf] %v2538
  %2607 = vst [vmem:[%s4 + $0x24] sm:$0x1] %v2539
  %2608 = vst [vmem:[%s4 + $0x28] sm:$0xf] %v2540
  %2609 = vst [vmem:[%s4 + $0x2c] sm:$0x1] %v2541
  %2610 = vst [vmem:[%s4 + $0x30] sm:$0xf] %v2542
  %2611 = vst [vmem:[%s4 + $0x34] sm:$0x1] %v2543
  %2612 = vst [vmem:[%s4 + $0x38] sm:$0xf] %v2544
  %2613 = vst [vmem:[%s4 + $0x3c] sm:$0x1] %v2545
  %2614 = vst [vmem:[%s4 + $0x40] sm:$0xf] %v2546
  %2615 = vst [vmem:[%s4 + $0x44] sm:$0x1] %v2547
  %2616 = vst [vmem:[%s4 + $0x48] sm:$0xf] %v2530
  %2617 = vst [vmem:[%s4 + $0x4c] sm:$0x1] %v2531
  %2618 = vst [vmem:[%s4 + $0x50] sm:$0xf] %v2530
  %2619 = vst [vmem:[%s4 + $0x54] sm:$0x1] %v2531
  %2620 = vst [vmem:[%s4 + $0x58] sm:$0xf] %v2548
  %2621 = vst [vmem:[%s4 + $0x5c] sm:$0x1] %v2549
  %2622 = vst [vmem:[%s4 + $0x60] sm:$0xf] %v2550
  %2623 = vst [vmem:[%s4 + $0x64] sm:$0x1] %v2551
  %2624 = vst [vmem:[%s4 + $0x68] sm:$0xf] %v2552
  %2625 = vst [vmem:[%s4 + $0x6c] sm:$0x1] %v2553
  %2626 = vst [vmem:[%s4 + $0x70] sm:$0xf] %v2554
  %2627 = vst [vmem:[%s4 + $0x74] sm:$0x1] %v2555
  %2628 = vst [vmem:[%s4 + $0x78] sm:$0xf] %v2556
  %2629 = vst [vmem:[%s4 + $0x7c] sm:$0x1] %v2557
  %2630 = vst [vmem:[%s4 + $0x80] sm:$0xf] %v2558
  %2631 = vst [vmem:[%s4 + $0x84] sm:$0x1] %v2559
  %2632 = vst [vmem:[%s4 + $0x88] sm:$0xf] %v2560
  %2633 = vst [vmem:[%s4 + $0x8c] sm:$0x1] %v2561
  %2634 = vst [vmem:[%s4 + $0x90] sm:$0xf] %v2562
  %2635 = vst [vmem:[%s4 + $0x94] sm:$0x1] %v2563
  %2636 = vst [vmem:[%s4 + $0x98] sm:$0xf] %v2530
  %2637 = vst [vmem:[%s4 + $0x9c] sm:$0x1] %v2531
  // Predicated region
  $region18: #{conv_group_forward.6} parent=0 // pred_check
    _
  $region19: #{conv_group_forward.6} parent=0 // pred_check_branch
    %2639 = sbr.rel (0) target = $region21
  $region20: #{conv_group_forward.6} parent=0 // pred_region
    _
  $region21: #{conv_group_forward.6} parent=0 // pred_fallthru
    _
  // Predicated region
  $region22: #{conv_group_forward.6} parent=0 // pred_check
    _
  $region23: #{conv_group_forward.6} parent=0 // pred_check_branch
    %2641 = sbr.rel (0) target = $region25
  $region24: #{conv_group_forward.6} parent=0 // pred_region
    _
  $region25: #{conv_group_forward.6} parent=0 // pred_fallthru
    _

// kernel: conv_group_forward.4
$region0: #{conv_group_forward.4}
  #allocation0 [shape = 'u32[]', space=smem, size = 0x4, offset = 0x4, fixed_abs, tag = 'smem constant byte address 0x4 - core index']
  #allocation1 [shape = 'u32[144,128]{1,0:T(1,128)}', space=vmem, size = 0x12000, scoped, tag = 'internal scratch']
  %s0 = inlined_call_operand.vmem [shape: f32[2,16,16,128], index: 0, kind: input, shape index: {}]
  %s1 = inlined_call_operand.vmem [shape: f32[1,128], index: 1, kind: input, shape index: {}]
  %s2 = inlined_call_operand.vmem [shape: f32[1,128], index: 2, kind: input, shape index: {}]
  %s3 = inlined_call_operand.vmem [shape: bf16[1152,128], index: 3, kind: input, shape index: {}]
  %s4 = inlined_call_operand.vmem [shape: f32[1,128], index: 4, kind: input, shape index: {}]
  %s5 = inlined_call_operand.vmem [shape: f32[1,128], index: 5, kind: input, shape index: {}]
  %s6 = inlined_call_operand.vmem [shape: bf16[128,128], index: 6, kind: input, shape index: {}]
  %s7 = inlined_call_operand.vmem [shape: bf16[2,10,10,128], index: 7, kind: output, shape index: {0}]
  %s8 = inlined_call_operand.vmem [shape: f32[2,8,8,128], index: 8, kind: output, shape index: {1}]
  %9 = xla_tuple %s7, %s8
  %s10 = sld [smem:[#allocation0]]
  $region46: #{conv_group_forward.4} parent=0
    _
  %s12 = ssub.s32 1, %s10
  %s13 = scalar_select 0, %s12, %s10
  // Predicated region
  $region2: #{conv_group_forward.4} parent=0 // pred_check
    _
  $region3: #{conv_group_forward.4} parent=0 // pred_check_branch
    %15 = sbr.rel (0) target = $region5
  $region4: #{conv_group_forward.4} parent=0 // pred_region
    _
  $region5: #{conv_group_forward.4} parent=0 // pred_fallthru
    _
  // Predicated region
  $region6: #{conv_group_forward.4} parent=0 // pred_check
    _
  $region7: #{conv_group_forward.4} parent=0 // pred_check_branch
    %17 = sbr.rel (0) target = $region9
  $region8: #{conv_group_forward.4} parent=0 // pred_region
    _
  $region9: #{conv_group_forward.4} parent=0 // pred_fallthru
    _
  // Predicated region
  $region10: #{conv_group_forward.4} parent=0 // pred_check
    _
  $region11: #{conv_group_forward.4} parent=0 // pred_check_branch
    %19 = sbr.rel (0) target = $region13
  $region12: #{conv_group_forward.4} parent=0 // pred_region
    _
  $region13: #{conv_group_forward.4} parent=0 // pred_fallthru
    _
  // Predicated region
  $region14: #{conv_group_forward.4} parent=0 // pred_check
    _
  $region15: #{conv_group_forward.4} parent=0 // pred_check_branch
    %21 = sbr.rel (0) target = $region17
  $region16: #{conv_group_forward.4} parent=0 // pred_region
    _
  $region17: #{conv_group_forward.4} parent=0 // pred_fallthru
    _
  // Predicated region
  $region18: #{conv_group_forward.4} parent=0 // pred_check
    _
  $region19: #{conv_group_forward.4} parent=0 // pred_check_branch
    %23 = sbr.rel (0) target = $region21
  $region20: #{conv_group_forward.4} parent=0 // pred_region
    _
  $region21: #{conv_group_forward.4} parent=0 // pred_fallthru
    _
  // Predicated region
  $region22: #{conv_group_forward.4} parent=0 // pred_check
    _
  $region23: #{conv_group_forward.4} parent=0 // pred_check_branch
    %25 = sbr.rel (0) target = $region25
  $region24: #{conv_group_forward.4} parent=0 // pred_region
    _
  $region25: #{conv_group_forward.4} parent=0 // pred_fallthru
    _
  // Predicated region
  $region26: #{conv_group_forward.4} parent=0 // pred_check
    _
  $region27: #{conv_group_forward.4} parent=0 // pred_check_branch
    %27 = sbr.rel (0) target = $region29
  $region28: #{conv_group_forward.4} parent=0 // pred_region
    _
  $region29: #{conv_group_forward.4} parent=0 // pred_fallthru
    _
  %v29 = vld [vmem:[%s1] sm:$0x1]
  %v30 = vld [vmem:[%s2] sm:$0x1]
  %v31 = vld [vmem:[%s0] sm:$0xff]
  %v32 = vld [vmem:[%s0 + $0x8] sm:$0xff]
  %v33 = vld [vmem:[%s0 + $0x10] sm:$0xff]
  %v34 = vld [vmem:[%s0 + $0x18] sm:$0xff]
  %v35 = vld [vmem:[%s0 + $0x20] sm:$0xff]
  %v36 = vld [vmem:[%s0 + $0x28] sm:$0xff]
  %v37 = vld [vmem:[%s0 + $0x30] sm:$0xff]
  %v38 = vld [vmem:[%s0 + $0x38] sm:$0xff]
  %v39 = vld [vmem:[%s0 + $0x40] sm:$0xff]
  %v40 = vld [vmem:[%s0 + $0x48] sm:$0xff]
  %v41 = vld [vmem:[%s0 + $0x50] sm:$0xff]
  %v42 = vld [vmem:[%s0 + $0x58] sm:$0xff]
  %v43 = vld [vmem:[%s0 + $0x60] sm:$0xff]
  %v44 = vld [vmem:[%s0 + $0x68] sm:$0xff]
  %v45 = vld [vmem:[%s0 + $0x70] sm:$0xff]
  %v46 = vld [vmem:[%s0 + $0x78] sm:$0xff]
  %v47 = vld [vmem:[%s0 + $0x80] sm:$0xff]
  %v48 = vld [vmem:[%s0 + $0x88] sm:$0xff]
  %v49 = vld [vmem:[%s0 + $0x90] sm:$0xff]
  %v50 = vld [vmem:[%s0 + $0x98] sm:$0xff]
  %v51 = vld [vmem:[%s0 + $0xa0] sm:$0xff]
  %v52 = vld [vmem:[%s0 + $0xa8] sm:$0xff]
  %v53 = vld [vmem:[%s0 + $0xb0] sm:$0xff]
  %v54 = vld [vmem:[%s0 + $0xb8] sm:$0xff]
  %v55 = vld [vmem:[%s0 + $0xc0] sm:$0xff]
  %v56 = vld [vmem:[%s0 + $0xc8] sm:$0xff]
  %v57 = vld [vmem:[%s0 + $0xd0] sm:$0xff]
  %v58 = vld [vmem:[%s0 + $0xd8] sm:$0xff]
  %v59 = vld [vmem:[%s0 + $0xe0] sm:$0xff]
  %v60 = vld [vmem:[%s0 + $0xe8] sm:$0xff]
  %v61 = vld [vmem:[%s0 + $0xf0] sm:$0xff]
  %v62 = vld [vmem:[%s0 + $0xf8] sm:$0xff]
  %v63 = vld [vmem:[%s0 + $0x100] sm:$0xff]
  %v64 = vld [vmem:[%s0 + $0x108] sm:$0xff]
  %v65 = vld [vmem:[%s0 + $0x110] sm:$0xff]
  %v66 = vld [vmem:[%s0 + $0x118] sm:$0xff]
  %v67 = vld [vmem:[%s0 + $0x120] sm:$0xff]
  %v68 = vld [vmem:[%s0 + $0x128] sm:$0xff]
  %v69 = vld [vmem:[%s0 + $0x130] sm:$0xff]
  %v70 = vld [vmem:[%s0 + $0x138] sm:$0xff]
  %v71 = vld [vmem:[%s0 + $0x140] sm:$0xff]
  %v72 = vld [vmem:[%s0 + $0x148] sm:$0xff]
  %v73 = vld [vmem:[%s0 + $0x150] sm:$0xff]
  %v74 = vld [vmem:[%s0 + $0x158] sm:$0xff]
  %v75 = vld [vmem:[%s0 + $0x160] sm:$0xff]
  %v76 = vld [vmem:[%s0 + $0x168] sm:$0xff]
  %v77 = vld [vmem:[%s0 + $0x170] sm:$0xff]
  %v78 = vld [vmem:[%s0 + $0x178] sm:$0xff]
  %v79 = vld [vmem:[%s0 + $0x180] sm:$0xff]
  %v80 = vld [vmem:[%s0 + $0x188] sm:$0xff]
  %v81 = vld [vmem:[%s0 + $0x190] sm:$0xff]
  %v82 = vld [vmem:[%s0 + $0x198] sm:$0xff]
  %v83 = vld [vmem:[%s0 + $0x1a0] sm:$0xff]
  %v84 = vld [vmem:[%s0 + $0x1a8] sm:$0xff]
  %v85 = vld [vmem:[%s0 + $0x1b0] sm:$0xff]
  %v86 = vld [vmem:[%s0 + $0x1b8] sm:$0xff]
  %v87 = vld [vmem:[%s0 + $0x1c0] sm:$0xff]
  %v88 = vld [vmem:[%s0 + $0x1c8] sm:$0xff]
  %v89 = vld [vmem:[%s0 + $0x1d0] sm:$0xff]
  %v90 = vld [vmem:[%s0 + $0x1d8] sm:$0xff]
  %v91 = vld [vmem:[%s0 + $0x1e0] sm:$0xff]
  %v92 = vld [vmem:[%s0 + $0x1e8] sm:$0xff]
  %v93 = vld [vmem:[%s0 + $0x1f0] sm:$0xff]
  %v94 = vld [vmem:[%s0 + $0x1f8] sm:$0xff]
  %v96 = vlaneseq
  %v97 = vshrl.u32 %v96, 7
  %v98 = vsub.s32 0, %v97
  %v99 = vrot.slane %v29, %v98
  %v101 = vmul.f32 %v31, %v99
  %v102 = vmul.f32 %v32, %v99
  %v103 = vmul.f32 %v33, %v99
  %v104 = vmul.f32 %v34, %v99
  %v105 = vmul.f32 %v35, %v99
  %v106 = vmul.f32 %v36, %v99
  %v107 = vmul.f32 %v37, %v99
  %v108 = vmul.f32 %v38, %v99
  %v109 = vmul.f32 %v39, %v99
  %v110 = vmul.f32 %v40, %v99
  %v111 = vmul.f32 %v41, %v99
  %v112 = vmul.f32 %v42, %v99
  %v113 = vmul.f32 %v43, %v99
  %v114 = vmul.f32 %v44, %v99
  %v115 = vmul.f32 %v45, %v99
  %v116 = vmul.f32 %v46, %v99
  %v117 = vmul.f32 %v47, %v99
  %v118 = vmul.f32 %v48, %v99
  %v119 = vmul.f32 %v49, %v99
  %v120 = vmul.f32 %v50, %v99
  %v121 = vmul.f32 %v51, %v99
  %v122 = vmul.f32 %v52, %v99
  %v123 = vmul.f32 %v53, %v99
  %v124 = vmul.f32 %v54, %v99
  %v125 = vmul.f32 %v55, %v99
  %v126 = vmul.f32 %v56, %v99
  %v127 = vmul.f32 %v57, %v99
  %v128 = vmul.f32 %v58, %v99
  %v129 = vmul.f32 %v59, %v99
  %v130 = vmul.f32 %v60, %v99
  %v131 = vmul.f32 %v61, %v99
  %v132 = vmul.f32 %v62, %v99
  %v133 = vmul.f32 %v63, %v99
  %v134 = vmul.f32 %v64, %v99
  %v135 = vmul.f32 %v65, %v99
  %v136 = vmul.f32 %v66, %v99
  %v137 = vmul.f32 %v67, %v99
  %v138 = vmul.f32 %v68, %v99
  %v139 = vmul.f32 %v69, %v99
  %v140 = vmul.f32 %v70, %v99
  %v141 = vmul.f32 %v71, %v99
  %v142 = vmul.f32 %v72, %v99
  %v143 = vmul.f32 %v73, %v99
  %v144 = vmul.f32 %v74, %v99
  %v145 = vmul.f32 %v75, %v99
  %v146 = vmul.f32 %v76, %v99
  %v147 = vmul.f32 %v77, %v99
  %v148 = vmul.f32 %v78, %v99
  %v149 = vmul.f32 %v79, %v99
  %v150 = vmul.f32 %v80, %v99
  %v151 = vmul.f32 %v81, %v99
  %v152 = vmul.f32 %v82, %v99
  %v153 = vmul.f32 %v83, %v99
  %v154 = vmul.f32 %v84, %v99
  %v155 = vmul.f32 %v85, %v99
  %v156 = vmul.f32 %v86, %v99
  %v157 = vmul.f32 %v87, %v99
  %v158 = vmul.f32 %v88, %v99
  %v159 = vmul.f32 %v89, %v99
  %v160 = vmul.f32 %v90, %v99
  %v161 = vmul.f32 %v91, %v99
  %v162 = vmul.f32 %v92, %v99
  %v163 = vmul.f32 %v93, %v99
  %v164 = vmul.f32 %v94, %v99
  %v166 = vlaneseq
  %v167 = vshrl.u32 %v166, 7
  %v168 = vsub.s32 0, %v167
  %v169 = vrot.slane %v30, %v168
  %v171 = vadd.f32 %v101, %v169
  %v172 = vadd.f32 %v102, %v169
  %v173 = vadd.f32 %v103, %v169
  %v174 = vadd.f32 %v104, %v169
  %v175 = vadd.f32 %v105, %v169
  %v176 = vadd.f32 %v106, %v169
  %v177 = vadd.f32 %v107, %v169
  %v178 = vadd.f32 %v108, %v169
  %v179 = vadd.f32 %v109, %v169
  %v180 = vadd.f32 %v110, %v169
  %v181 = vadd.f32 %v111, %v169
  %v182 = vadd.f32 %v112, %v169
  %v183 = vadd.f32 %v113, %v169
  %v184 = vadd.f32 %v114, %v169
  %v185 = vadd.f32 %v115, %v169
  %v186 = vadd.f32 %v116, %v169
  %v187 = vadd.f32 %v117, %v169
  %v188 = vadd.f32 %v118, %v169
  %v189 = vadd.f32 %v119, %v169
  %v190 = vadd.f32 %v120, %v169
  %v191 = vadd.f32 %v121, %v169
  %v192 = vadd.f32 %v122, %v169
  %v193 = vadd.f32 %v123, %v169
  %v194 = vadd.f32 %v124, %v169
  %v195 = vadd.f32 %v125, %v169
  %v196 = vadd.f32 %v126, %v169
  %v197 = vadd.f32 %v127, %v169
  %v198 = vadd.f32 %v128, %v169
  %v199 = vadd.f32 %v129, %v169
  %v200 = vadd.f32 %v130, %v169
  %v201 = vadd.f32 %v131, %v169
  %v202 = vadd.f32 %v132, %v169
  %v203 = vadd.f32 %v133, %v169
  %v204 = vadd.f32 %v134, %v169
  %v205 = vadd.f32 %v135, %v169
  %v206 = vadd.f32 %v136, %v169
  %v207 = vadd.f32 %v137, %v169
  %v208 = vadd.f32 %v138, %v169
  %v209 = vadd.f32 %v139, %v169
  %v210 = vadd.f32 %v140, %v169
  %v211 = vadd.f32 %v141, %v169
  %v212 = vadd.f32 %v142, %v169
  %v213 = vadd.f32 %v143, %v169
  %v214 = vadd.f32 %v144, %v169
  %v215 = vadd.f32 %v145, %v169
  %v216 = vadd.f32 %v146, %v169
  %v217 = vadd.f32 %v147, %v169
  %v218 = vadd.f32 %v148, %v169
  %v219 = vadd.f32 %v149, %v169
  %v220 = vadd.f32 %v150, %v169
  %v221 = vadd.f32 %v151, %v169
  %v222 = vadd.f32 %v152, %v169
  %v223 = vadd.f32 %v153, %v169
  %v224 = vadd.f32 %v154, %v169
  %v225 = vadd.f32 %v155, %v169
  %v226 = vadd.f32 %v156, %v169
  %v227 = vadd.f32 %v157, %v169
  %v228 = vadd.f32 %v158, %v169
  %v229 = vadd.f32 %v159, %v169
  %v230 = vadd.f32 %v160, %v169
  %v231 = vadd.f32 %v161, %v169
  %v232 = vadd.f32 %v162, %v169
  %v233 = vadd.f32 %v163, %v169
  %v234 = vadd.f32 %v164, %v169
  %v235 = vmax.f32 %v171, 0.0
  %v236 = vmax.f32 %v172, 0.0
  %v237 = vmax.f32 %v173, 0.0
  %v238 = vmax.f32 %v174, 0.0
  %v239 = vmax.f32 %v175, 0.0
  %v240 = vmax.f32 %v176, 0.0
  %v241 = vmax.f32 %v177, 0.0
  %v242 = vmax.f32 %v178, 0.0
  %v243 = vmax.f32 %v179, 0.0
  %v244 = vmax.f32 %v180, 0.0
  %v245 = vmax.f32 %v181, 0.0
  %v246 = vmax.f32 %v182, 0.0
  %v247 = vmax.f32 %v183, 0.0
  %v248 = vmax.f32 %v184, 0.0
  %v249 = vmax.f32 %v185, 0.0
  %v250 = vmax.f32 %v186, 0.0
  %v251 = vmax.f32 %v187, 0.0
  %v252 = vmax.f32 %v188, 0.0
  %v253 = vmax.f32 %v189, 0.0
  %v254 = vmax.f32 %v190, 0.0
  %v255 = vmax.f32 %v191, 0.0
  %v256 = vmax.f32 %v192, 0.0
  %v257 = vmax.f32 %v193, 0.0
  %v258 = vmax.f32 %v194, 0.0
  %v259 = vmax.f32 %v195, 0.0
  %v260 = vmax.f32 %v196, 0.0
  %v261 = vmax.f32 %v197, 0.0
  %v262 = vmax.f32 %v198, 0.0
  %v263 = vmax.f32 %v199, 0.0
  %v264 = vmax.f32 %v200, 0.0
  %v265 = vmax.f32 %v201, 0.0
  %v266 = vmax.f32 %v202, 0.0
  %v267 = vmax.f32 %v203, 0.0
  %v268 = vmax.f32 %v204, 0.0
  %v269 = vmax.f32 %v205, 0.0
  %v270 = vmax.f32 %v206, 0.0
  %v271 = vmax.f32 %v207, 0.0
  %v272 = vmax.f32 %v208, 0.0
  %v273 = vmax.f32 %v209, 0.0
  %v274 = vmax.f32 %v210, 0.0
  %v275 = vmax.f32 %v211, 0.0
  %v276 = vmax.f32 %v212, 0.0
  %v277 = vmax.f32 %v213, 0.0
  %v278 = vmax.f32 %v214, 0.0
  %v279 = vmax.f32 %v215, 0.0
  %v280 = vmax.f32 %v216, 0.0
  %v281 = vmax.f32 %v217, 0.0
  %v282 = vmax.f32 %v218, 0.0
  %v283 = vmax.f32 %v219, 0.0
  %v284 = vmax.f32 %v220, 0.0
  %v285 = vmax.f32 %v221, 0.0
  %v286 = vmax.f32 %v222, 0.0
  %v287 = vmax.f32 %v223, 0.0
  %v288 = vmax.f32 %v224, 0.0
  %v289 = vmax.f32 %v225, 0.0
  %v290 = vmax.f32 %v226, 0.0
  %v291 = vmax.f32 %v227, 0.0
  %v292 = vmax.f32 %v228, 0.0
  %v293 = vmax.f32 %v229, 0.0
  %v294 = vmax.f32 %v230, 0.0
  %v295 = vmax.f32 %v231, 0.0
  %v296 = vmax.f32 %v232, 0.0
  %v297 = vmax.f32 %v233, 0.0
  %v298 = vmax.f32 %v234, 0.0
  %v299 = vpack.c.bf16 %v236, %v235
  %v300 = vpack.c.bf16 %v238, %v237
  %v301 = vpack.c.bf16 %v240, %v239
  %v302 = vpack.c.bf16 %v242, %v241
  %v303 = vpack.c.bf16 %v244, %v243
  %v304 = vpack.c.bf16 %v246, %v245
  %v305 = vpack.c.bf16 %v248, %v247
  %v306 = vpack.c.bf16 %v250, %v249
  %v307 = vpack.c.bf16 %v252, %v251
  %v308 = vpack.c.bf16 %v254, %v253
  %v309 = vpack.c.bf16 %v256, %v255
  %v310 = vpack.c.bf16 %v258, %v257
  %v311 = vpack.c.bf16 %v260, %v259
  %v312 = vpack.c.bf16 %v262, %v261
  %v313 = vpack.c.bf16 %v264, %v263
  %v314 = vpack.c.bf16 %v266, %v265
  %v315 = vpack.c.bf16 %v268, %v267
  %v316 = vpack.c.bf16 %v270, %v269
  %v317 = vpack.c.bf16 %v272, %v271
  %v318 = vpack.c.bf16 %v274, %v273
  %v319 = vpack.c.bf16 %v276, %v275
  %v320 = vpack.c.bf16 %v278, %v277
  %v321 = vpack.c.bf16 %v280, %v279
  %v322 = vpack.c.bf16 %v282, %v281
  %v323 = vpack.c.bf16 %v284, %v283
  %v324 = vpack.c.bf16 %v286, %v285
  %v325 = vpack.c.bf16 %v288, %v287
  %v326 = vpack.c.bf16 %v290, %v289
  %v327 = vpack.c.bf16 %v292, %v291
  %v328 = vpack.c.bf16 %v294, %v293
  %v329 = vpack.c.bf16 %v296, %v295
  %v330 = vpack.c.bf16 %v298, %v297
  %v332 = vshrl.u32 0, 16
  %v334 = vrot.slane %v332, 7
  %v335 = vshll.u32 0, 16
  %v337 = vor.u32 %v334, %v335
  %v339 = vshrl.u32 %v299, 16
  %v341 = vrot.slane %v339, 7
  %v342 = vshll.u32 %v299, 16
  %v344 = vor.u32 %v341, %v342
  %v346 = vshrl.u32 %v300, 16
  %v348 = vrot.slane %v346, 7
  %v349 = vshll.u32 %v300, 16
  %v351 = vor.u32 %v348, %v349
  %v353 = vshrl.u32 %v301, 16
  %v355 = vrot.slane %v353, 7
  %v356 = vshll.u32 %v301, 16
  %v358 = vor.u32 %v355, %v356
  %v360 = vshrl.u32 %v302, 16
  %v362 = vrot.slane %v360, 7
  %v363 = vshll.u32 %v302, 16
  %v365 = vor.u32 %v362, %v363
  %v367 = vshrl.u32 %v303, 16
  %v369 = vrot.slane %v367, 7
  %v370 = vshll.u32 %v303, 16
  %v372 = vor.u32 %v369, %v370
  %v374 = vshrl.u32 %v304, 16
  %v376 = vrot.slane %v374, 7
  %v377 = vshll.u32 %v304, 16
  %v379 = vor.u32 %v376, %v377
  %v381 = vshrl.u32 %v305, 16
  %v383 = vrot.slane %v381, 7
  %v384 = vshll.u32 %v305, 16
  %v386 = vor.u32 %v383, %v384
  %v388 = vshrl.u32 %v306, 16
  %v390 = vrot.slane %v388, 7
  %v391 = vshll.u32 %v306, 16
  %v393 = vor.u32 %v390, %v391
  %v395 = vshrl.u32 %v307, 16
  %v397 = vrot.slane %v395, 7
  %v398 = vshll.u32 %v307, 16
  %v400 = vor.u32 %v397, %v398
  %v402 = vshrl.u32 %v308, 16
  %v404 = vrot.slane %v402, 7
  %v405 = vshll.u32 %v308, 16
  %v407 = vor.u32 %v404, %v405
  %v409 = vshrl.u32 %v309, 16
  %v411 = vrot.slane %v409, 7
  %v412 = vshll.u32 %v309, 16
  %v414 = vor.u32 %v411, %v412
  %v416 = vshrl.u32 %v310, 16
  %v418 = vrot.slane %v416, 7
  %v419 = vshll.u32 %v310, 16
  %v421 = vor.u32 %v418, %v419
  %v423 = vshrl.u32 %v311, 16
  %v425 = vrot.slane %v423, 7
  %v426 = vshll.u32 %v311, 16
  %v428 = vor.u32 %v425, %v426
  %v430 = vshrl.u32 %v312, 16
  %v432 = vrot.slane %v430, 7
  %v433 = vshll.u32 %v312, 16
  %v435 = vor.u32 %v432, %v433
  %v437 = vshrl.u32 %v313, 16
  %v439 = vrot.slane %v437, 7
  %v440 = vshll.u32 %v313, 16
  %v442 = vor.u32 %v439, %v440
  %v444 = vshrl.u32 %v314, 16
  %v446 = vrot.slane %v444, 7
  %v447 = vshll.u32 %v314, 16
  %v449 = vor.u32 %v446, %v447
  %v451 = vshrl.u32 %v315, 16
  %v453 = vrot.slane %v451, 7
  %v454 = vshll.u32 %v315, 16
  %v456 = vor.u32 %v453, %v454
  %v458 = vshrl.u32 %v316, 16
  %v460 = vrot.slane %v458, 7
  %v461 = vshll.u32 %v316, 16
  %v463 = vor.u32 %v460, %v461
  %v465 = vshrl.u32 %v317, 16
  %v467 = vrot.slane %v465, 7
  %v468 = vshll.u32 %v317, 16
  %v470 = vor.u32 %v467, %v468
  %v472 = vshrl.u32 %v318, 16
  %v474 = vrot.slane %v472, 7
  %v475 = vshll.u32 %v318, 16
  %v477 = vor.u32 %v474, %v475
  %v479 = vshrl.u32 %v319, 16
  %v481 = vrot.slane %v479, 7
  %v482 = vshll.u32 %v319, 16
  %v484 = vor.u32 %v481, %v482
  %v486 = vshrl.u32 %v320, 16
  %v488 = vrot.slane %v486, 7
  %v489 = vshll.u32 %v320, 16
  %v491 = vor.u32 %v488, %v489
  %v493 = vshrl.u32 %v321, 16
  %v495 = vrot.slane %v493, 7
  %v496 = vshll.u32 %v321, 16
  %v498 = vor.u32 %v495, %v496
  %v500 = vshrl.u32 %v322, 16
  %v502 = vrot.slane %v500, 7
  %v503 = vshll.u32 %v322, 16
  %v505 = vor.u32 %v502, %v503
  %v507 = vshrl.u32 %v323, 16
  %v509 = vrot.slane %v507, 7
  %v510 = vshll.u32 %v323, 16
  %v512 = vor.u32 %v509, %v510
  %v514 = vshrl.u32 %v324, 16
  %v516 = vrot.slane %v514, 7
  %v517 = vshll.u32 %v324, 16
  %v519 = vor.u32 %v516, %v517
  %v521 = vshrl.u32 %v325, 16
  %v523 = vrot.slane %v521, 7
  %v524 = vshll.u32 %v325, 16
  %v526 = vor.u32 %v523, %v524
  %v528 = vshrl.u32 %v326, 16
  %v530 = vrot.slane %v528, 7
  %v531 = vshll.u32 %v326, 16
  %v533 = vor.u32 %v530, %v531
  %v535 = vshrl.u32 %v327, 16
  %v537 = vrot.slane %v535, 7
  %v538 = vshll.u32 %v327, 16
  %v540 = vor.u32 %v537, %v538
  %v542 = vshrl.u32 %v328, 16
  %v544 = vrot.slane %v542, 7
  %v545 = vshll.u32 %v328, 16
  %v547 = vor.u32 %v544, %v545
  %v549 = vshrl.u32 %v329, 16
  %v551 = vrot.slane %v549, 7
  %v552 = vshll.u32 %v329, 16
  %v554 = vor.u32 %v551, %v552
  %v556 = vshrl.u32 %v330, 16
  %v558 = vrot.slane %v556, 7
  %v559 = vshll.u32 %v330, 16
  %v561 = vor.u32 %v558, %v559
  %vm628 = vcmask 1040384
  %vm629 = vsmask.f32 256
  %vm630 = vmand %vm628, %vm629
  %v631 = vsel %vm630, 0, %v337
  %v632 = vsel %vm630, 0, %v344
  %v633 = vsel %vm630, 0, %v351
  %v634 = vsel %vm630, 0, %v358
  %v635 = vsel %vm630, 0, %v365
  %v636 = vsel %vm630, 0, %v372
  %v637 = vsel %vm630, 0, %v379
  %v638 = vsel %vm630, 0, %v386
  %v639 = vsel %vm630, 0, %v393
  %v640 = vsel %vm630, 0, %v400
  %v641 = vsel %vm630, 0, %v407
  %v642 = vsel %vm630, 0, %v414
  %v643 = vsel %vm630, 0, %v421
  %v644 = vsel %vm630, 0, %v428
  %v645 = vsel %vm630, 0, %v435
  %v646 = vsel %vm630, 0, %v442
  %v647 = vsel %vm630, 0, %v449
  %v648 = vsel %vm630, 0, %v456
  %v649 = vsel %vm630, 0, %v463
  %v650 = vsel %vm630, 0, %v470
  %v651 = vsel %vm630, 0, %v477
  %v652 = vsel %vm630, 0, %v484
  %v653 = vsel %vm630, 0, %v491
  %v654 = vsel %vm630, 0, %v498
  %v655 = vsel %vm630, 0, %v505
  %v656 = vsel %vm630, 0, %v512
  %v657 = vsel %vm630, 0, %v519
  %v658 = vsel %vm630, 0, %v526
  %v659 = vsel %vm630, 0, %v533
  %v660 = vsel %vm630, 0, %v540
  %v661 = vsel %vm630, 0, %v547
  %v662 = vsel %vm630, 0, %v554
  %v663 = vsel %vm630, 0, %v561
  %v664 = vsel %vm630, %v334, 0
  %v665 = vsel %vm630, %v341, 0
  %v666 = vsel %vm630, %v348, 0
  %v667 = vsel %vm630, %v355, 0
  %v668 = vsel %vm630, %v362, 0
  %v669 = vsel %vm630, %v369, 0
  %v670 = vsel %vm630, %v376, 0
  %v671 = vsel %vm630, %v383, 0
  %v672 = vsel %vm630, %v390, 0
  %v673 = vsel %vm630, %v397, 0
  %v674 = vsel %vm630, %v404, 0
  %v675 = vsel %vm630, %v411, 0
  %v676 = vsel %vm630, %v418, 0
  %v677 = vsel %vm630, %v425, 0
  %v678 = vsel %vm630, %v432, 0
  %v679 = vsel %vm630, %v439, 0
  %v680 = vsel %vm630, %v446, 0
  %v681 = vsel %vm630, %v453, 0
  %v682 = vsel %vm630, %v460, 0
  %v683 = vsel %vm630, %v467, 0
  %v684 = vsel %vm630, %v474, 0
  %v685 = vsel %vm630, %v481, 0
  %v686 = vsel %vm630, %v488, 0
  %v687 = vsel %vm630, %v495, 0
  %v688 = vsel %vm630, %v502, 0
  %v689 = vsel %vm630, %v509, 0
  %v690 = vsel %vm630, %v516, 0
  %v691 = vsel %vm630, %v523, 0
  %v692 = vsel %vm630, %v530, 0
  %v693 = vsel %vm630, %v537, 0
  %v694 = vsel %vm630, %v544, 0
  %v695 = vsel %vm630, %v551, 0
  %v696 = vsel %vm630, %v558, 0
  %v698 = vshll.u32 %v631, 16
  %v700 = vrot.slane %v698, 1
  %v702 = vshll.u32 %v633, 16
  %v704 = vrot.slane %v702, 1
  %v706 = vshll.u32 %v635, 16
  %v708 = vrot.slane %v706, 1
  %v710 = vshll.u32 %v637, 16
  %v712 = vrot.slane %v710, 1
  %v714 = vshll.u32 %v639, 16
  %v716 = vrot.slane %v714, 1
  %v718 = vshll.u32 %v641, 16
  %v720 = vrot.slane %v718, 1
  %v722 = vshll.u32 %v643, 16
  %v724 = vrot.slane %v722, 1
  %v726 = vshll.u32 %v645, 16
  %v728 = vrot.slane %v726, 1
  %v730 = vshll.u32 %v649, 16
  %v732 = vrot.slane %v730, 1
  %v734 = vshll.u32 %v651, 16
  %v736 = vrot.slane %v734, 1
  %v738 = vshll.u32 %v653, 16
  %v740 = vrot.slane %v738, 1
  %v742 = vshll.u32 %v655, 16
  %v744 = vrot.slane %v742, 1
  %v746 = vshll.u32 %v657, 16
  %v748 = vrot.slane %v746, 1
  %v750 = vshll.u32 %v659, 16
  %v752 = vrot.slane %v750, 1
  %v754 = vshll.u32 %v661, 16
  %v756 = vrot.slane %v754, 1
  %v787 = vrot.slane %v631, 1
  %v788 = vrot.slane %v633, 1
  %v789 = vrot.slane %v635, 1
  %v790 = vrot.slane %v637, 1
  %v791 = vrot.slane %v639, 1
  %v792 = vrot.slane %v641, 1
  %v793 = vrot.slane %v643, 1
  %v794 = vrot.slane %v645, 1
  %v795 = vrot.slane %v649, 1
  %v796 = vrot.slane %v651, 1
  %v797 = vrot.slane %v653, 1
  %v798 = vrot.slane %v655, 1
  %v799 = vrot.slane %v657, 1
  %v800 = vrot.slane %v659, 1
  %v801 = vrot.slane %v661, 1
  %v802 = vrot.slane %v698, 2
  %v803 = vrot.slane %v702, 2
  %v804 = vrot.slane %v706, 2
  %v805 = vrot.slane %v710, 2
  %v806 = vrot.slane %v714, 2
  %v807 = vrot.slane %v718, 2
  %v808 = vrot.slane %v722, 2
  %v809 = vrot.slane %v726, 2
  %v810 = vrot.slane %v730, 2
  %v811 = vrot.slane %v734, 2
  %v812 = vrot.slane %v738, 2
  %v813 = vrot.slane %v742, 2
  %v814 = vrot.slane %v746, 2
  %v815 = vrot.slane %v750, 2
  %v816 = vrot.slane %v754, 2
  %v832 = vrot.slane %v631, 2
  %v833 = vrot.slane %v633, 2
  %v834 = vrot.slane %v635, 2
  %v835 = vrot.slane %v637, 2
  %v836 = vrot.slane %v639, 2
  %v837 = vrot.slane %v641, 2
  %v838 = vrot.slane %v643, 2
  %v839 = vrot.slane %v645, 2
  %v840 = vrot.slane %v649, 2
  %v841 = vrot.slane %v651, 2
  %v842 = vrot.slane %v653, 2
  %v843 = vrot.slane %v655, 2
  %v844 = vrot.slane %v657, 2
  %v845 = vrot.slane %v659, 2
  %v846 = vrot.slane %v661, 2
  %v847 = vrot.slane %v698, 3
  %v848 = vrot.slane %v702, 3
  %v849 = vrot.slane %v706, 3
  %v850 = vrot.slane %v710, 3
  %v851 = vrot.slane %v714, 3
  %v852 = vrot.slane %v718, 3
  %v853 = vrot.slane %v722, 3
  %v854 = vrot.slane %v726, 3
  %v855 = vrot.slane %v730, 3
  %v856 = vrot.slane %v734, 3
  %v857 = vrot.slane %v738, 3
  %v858 = vrot.slane %v742, 3
  %v859 = vrot.slane %v746, 3
  %v860 = vrot.slane %v750, 3
  %v861 = vrot.slane %v754, 3
  %v877 = vrot.slane %v631, 3
  %v878 = vrot.slane %v633, 3
  %v879 = vrot.slane %v635, 3
  %v880 = vrot.slane %v637, 3
  %v881 = vrot.slane %v639, 3
  %v882 = vrot.slane %v641, 3
  %v883 = vrot.slane %v643, 3
  %v884 = vrot.slane %v645, 3
  %v885 = vrot.slane %v649, 3
  %v886 = vrot.slane %v651, 3
  %v887 = vrot.slane %v653, 3
  %v888 = vrot.slane %v655, 3
  %v889 = vrot.slane %v657, 3
  %v890 = vrot.slane %v659, 3
  %v891 = vrot.slane %v661, 3
  %v892 = vrot.slane %v698, 4
  %v893 = vrot.slane %v702, 4
  %v894 = vrot.slane %v706, 4
  %v895 = vrot.slane %v710, 4
  %v896 = vrot.slane %v714, 4
  %v897 = vrot.slane %v718, 4
  %v898 = vrot.slane %v722, 4
  %v899 = vrot.slane %v726, 4
  %v900 = vrot.slane %v730, 4
  %v901 = vrot.slane %v734, 4
  %v902 = vrot.slane %v738, 4
  %v903 = vrot.slane %v742, 4
  %v904 = vrot.slane %v746, 4
  %v905 = vrot.slane %v750, 4
  %v906 = vrot.slane %v754, 4
  %v922 = vsel %vm630, %v631, %v700
  %v923 = vsel %vm630, %v633, %v704
  %v924 = vsel %vm630, %v635, %v708
  %v925 = vsel %vm630, %v637, %v712
  %v926 = vsel %vm630, %v639, %v716
  %v927 = vsel %vm630, %v641, %v720
  %v928 = vsel %vm630, %v643, %v724
  %v929 = vsel %vm630, %v645, %v728
  %v930 = vsel %vm630, %v649, %v732
  %v931 = vsel %vm630, %v651, %v736
  %v932 = vsel %vm630, %v653, %v740
  %v933 = vsel %vm630, %v655, %v744
  %v934 = vsel %vm630, %v657, %v748
  %v935 = vsel %vm630, %v659, %v752
  %v936 = vsel %vm630, %v661, %v756
  %vm937 = vcmask 1040384
  %v940 = vsel %vm937, %v922, %v787
  %v944 = vsel %vm937, %v923, %v788
  %v948 = vsel %vm937, %v924, %v789
  %v952 = vsel %vm937, %v925, %v790
  %v956 = vsel %vm937, %v926, %v791
  %v960 = vsel %vm937, %v927, %v792
  %v964 = vsel %vm937, %v928, %v793
  %v968 = vsel %vm937, %v929, %v794
  %v972 = vsel %vm937, %v930, %v795
  %v976 = vsel %vm937, %v931, %v796
  %v980 = vsel %vm937, %v932, %v797
  %v984 = vsel %vm937, %v933, %v798
  %v988 = vsel %vm937, %v934, %v799
  %v992 = vsel %vm937, %v935, %v800
  %v996 = vsel %vm937, %v936, %v801
  %vm998 = vcmask 1041408
  %vm999 = vsmask.f32 1280
  %vm1000 = vmand %vm998, %vm999
  %v1001 = vsel %vm1000, %v940, %v802
  %v1002 = vsel %vm1000, %v944, %v803
  %v1003 = vsel %vm1000, %v948, %v804
  %v1004 = vsel %vm1000, %v952, %v805
  %v1005 = vsel %vm1000, %v956, %v806
  %v1006 = vsel %vm1000, %v960, %v807
  %v1007 = vsel %vm1000, %v964, %v808
  %v1008 = vsel %vm1000, %v968, %v809
  %v1009 = vsel %vm1000, %v972, %v810
  %v1010 = vsel %vm1000, %v976, %v811
  %v1011 = vsel %vm1000, %v980, %v812
  %v1012 = vsel %vm1000, %v984, %v813
  %v1013 = vsel %vm1000, %v988, %v814
  %v1014 = vsel %vm1000, %v992, %v815
  %v1015 = vsel %vm1000, %v996, %v816
  %vm1016 = vcmask 1041408
  %v1019 = vsel %vm1016, %v1001, %v832
  %v1023 = vsel %vm1016, %v1002, %v833
  %v1027 = vsel %vm1016, %v1003, %v834
  %v1031 = vsel %vm1016, %v1004, %v835
  %v1035 = vsel %vm1016, %v1005, %v836
  %v1039 = vsel %vm1016, %v1006, %v837
  %v1043 = vsel %vm1016, %v1007, %v838
  %v1047 = vsel %vm1016, %v1008, %v839
  %v1051 = vsel %vm1016, %v1009, %v840
  %v1055 = vsel %vm1016, %v1010, %v841
  %v1059 = vsel %vm1016, %v1011, %v842
  %v1063 = vsel %vm1016, %v1012, %v843
  %v1067 = vsel %vm1016, %v1013, %v844
  %v1071 = vsel %vm1016, %v1014, %v845
  %v1075 = vsel %vm1016, %v1015, %v846
  %vm1077 = vcmask 1042432
  %vm1078 = vsmask.f32 2304
  %vm1079 = vmand %vm1077, %vm1078
  %v1080 = vsel %vm1079, %v1019, %v847
  %v1081 = vsel %vm1079, %v1023, %v848
  %v1082 = vsel %vm1079, %v1027, %v849
  %v1083 = vsel %vm1079, %v1031, %v850
  %v1084 = vsel %vm1079, %v1035, %v851
  %v1085 = vsel %vm1079, %v1039, %v852
  %v1086 = vsel %vm1079, %v1043, %v853
  %v1087 = vsel %vm1079, %v1047, %v854
  %v1088 = vsel %vm1079, %v1051, %v855
  %v1089 = vsel %vm1079, %v1055, %v856
  %v1090 = vsel %vm1079, %v1059, %v857
  %v1091 = vsel %vm1079, %v1063, %v858
  %v1092 = vsel %vm1079, %v1067, %v859
  %v1093 = vsel %vm1079, %v1071, %v860
  %v1094 = vsel %vm1079, %v1075, %v861
  %vm1095 = vcmask 1042432
  %v1098 = vsel %vm1095, %v1080, %v877
  %v1102 = vsel %vm1095, %v1081, %v878
  %v1106 = vsel %vm1095, %v1082, %v879
  %v1110 = vsel %vm1095, %v1083, %v880
  %v1114 = vsel %vm1095, %v1084, %v881
  %v1118 = vsel %vm1095, %v1085, %v882
  %v1122 = vsel %vm1095, %v1086, %v883
  %v1126 = vsel %vm1095, %v1087, %v884
  %v1130 = vsel %vm1095, %v1088, %v885
  %v1134 = vsel %vm1095, %v1089, %v886
  %v1138 = vsel %vm1095, %v1090, %v887
  %v1142 = vsel %vm1095, %v1091, %v888
  %v1146 = vsel %vm1095, %v1092, %v889
  %v1150 = vsel %vm1095, %v1093, %v890
  %v1154 = vsel %vm1095, %v1094, %v891
  %vm1156 = vcmask 1043456
  %vm1157 = vsmask.f32 3328
  %vm1158 = vmand %vm1156, %vm1157
  %v1159 = vsel %vm1158, %v1098, %v892
  %v1160 = vsel %vm1158, %v1102, %v893
  %v1161 = vsel %vm1158, %v1106, %v894
  %v1162 = vsel %vm1158, %v1110, %v895
  %v1163 = vsel %vm1158, %v1114, %v896
  %v1164 = vsel %vm1158, %v1118, %v897
  %v1165 = vsel %vm1158, %v1122, %v898
  %v1166 = vsel %vm1158, %v1126, %v899
  %v1167 = vsel %vm1158, %v1130, %v900
  %v1168 = vsel %vm1158, %v1134, %v901
  %v1169 = vsel %vm1158, %v1138, %v902
  %v1170 = vsel %vm1158, %v1142, %v903
  %v1171 = vsel %vm1158, %v1146, %v904
  %v1172 = vsel %vm1158, %v1150, %v905
  %v1173 = vsel %vm1158, %v1154, %v906
  %v1174 = vld [vmem:[%s3] sm:$0xf]
  %v1175 = vld [vmem:[%s3 + $0x4] sm:$0xf]
  %v1176 = vld [vmem:[%s3 + $0x8] sm:$0xf]
  %v1177 = vld [vmem:[%s3 + $0xc] sm:$0xf]
  %v1178 = vld [vmem:[%s3 + $0x10] sm:$0xf]
  %v1179 = vld [vmem:[%s3 + $0x14] sm:$0xf]
  %v1180 = vld [vmem:[%s3 + $0x18] sm:$0xf]
  %v1181 = vld [vmem:[%s3 + $0x1c] sm:$0xf]
  %v1182 = vld [vmem:[%s3 + $0x20] sm:$0xf]
  %v1183 = vld [vmem:[%s3 + $0x24] sm:$0xf]
  %v1184 = vld [vmem:[%s3 + $0x28] sm:$0xf]
  %v1185 = vld [vmem:[%s3 + $0x2c] sm:$0xf]
  %v1186 = vld [vmem:[%s3 + $0x30] sm:$0xf]
  %v1187 = vld [vmem:[%s3 + $0x34] sm:$0xf]
  %v1188 = vld [vmem:[%s3 + $0x38] sm:$0xf]
  %v1189 = vld [vmem:[%s3 + $0x3c] sm:$0xf]
  %v1190 = vshrl.u32 %v631, 16
  %v1192 = vshrl.u32 %v633, 16
  %v1194 = vshrl.u32 %v635, 16
  %v1196 = vshrl.u32 %v637, 16
  %v1198 = vshrl.u32 %v639, 16
  %v1200 = vshrl.u32 %v641, 16
  %v1202 = vshrl.u32 %v643, 16
  %v1204 = vshrl.u32 %v645, 16
  %v1206 = vshrl.u32 %v649, 16
  %v1208 = vshrl.u32 %v651, 16
  %v1210 = vshrl.u32 %v653, 16
  %v1212 = vshrl.u32 %v655, 16
  %v1214 = vshrl.u32 %v657, 16
  %v1216 = vshrl.u32 %v659, 16
  %v1218 = vshrl.u32 %v661, 16
  %v1250 = vrot.slane %v1190, 1
  %v1251 = vrot.slane %v1192, 1
  %v1252 = vrot.slane %v1194, 1
  %v1253 = vrot.slane %v1196, 1
  %v1254 = vrot.slane %v1198, 1
  %v1255 = vrot.slane %v1200, 1
  %v1256 = vrot.slane %v1202, 1
  %v1257 = vrot.slane %v1204, 1
  %v1258 = vrot.slane %v1206, 1
  %v1259 = vrot.slane %v1208, 1
  %v1260 = vrot.slane %v1210, 1
  %v1261 = vrot.slane %v1212, 1
  %v1262 = vrot.slane %v1214, 1
  %v1263 = vrot.slane %v1216, 1
  %v1264 = vrot.slane %v1218, 1
  %v1280 = vrot.slane %v1190, 2
  %v1281 = vrot.slane %v1192, 2
  %v1282 = vrot.slane %v1194, 2
  %v1283 = vrot.slane %v1196, 2
  %v1284 = vrot.slane %v1198, 2
  %v1285 = vrot.slane %v1200, 2
  %v1286 = vrot.slane %v1202, 2
  %v1287 = vrot.slane %v1204, 2
  %v1288 = vrot.slane %v1206, 2
  %v1289 = vrot.slane %v1208, 2
  %v1290 = vrot.slane %v1210, 2
  %v1291 = vrot.slane %v1212, 2
  %v1292 = vrot.slane %v1214, 2
  %v1293 = vrot.slane %v1216, 2
  %v1294 = vrot.slane %v1218, 2
  %v1310 = vrot.slane %v1190, 3
  %v1311 = vrot.slane %v1192, 3
  %v1312 = vrot.slane %v1194, 3
  %v1313 = vrot.slane %v1196, 3
  %v1314 = vrot.slane %v1198, 3
  %v1315 = vrot.slane %v1200, 3
  %v1316 = vrot.slane %v1202, 3
  %v1317 = vrot.slane %v1204, 3
  %v1318 = vrot.slane %v1206, 3
  %v1319 = vrot.slane %v1208, 3
  %v1320 = vrot.slane %v1210, 3
  %v1321 = vrot.slane %v1212, 3
  %v1322 = vrot.slane %v1214, 3
  %v1323 = vrot.slane %v1216, 3
  %v1324 = vrot.slane %v1218, 3
  %v1325 = vrot.slane %v631, 4
  %v1326 = vrot.slane %v633, 4
  %v1327 = vrot.slane %v635, 4
  %v1328 = vrot.slane %v637, 4
  %v1329 = vrot.slane %v639, 4
  %v1330 = vrot.slane %v641, 4
  %v1331 = vrot.slane %v643, 4
  %v1332 = vrot.slane %v645, 4
  %v1333 = vrot.slane %v649, 4
  %v1334 = vrot.slane %v651, 4
  %v1335 = vrot.slane %v653, 4
  %v1336 = vrot.slane %v655, 4
  %v1337 = vrot.slane %v657, 4
  %v1338 = vrot.slane %v659, 4
  %v1339 = vrot.slane %v661, 4
  %v1355 = vsel %vm630, %v1190, %v787
  %v1356 = vsel %vm630, %v1192, %v788
  %v1357 = vsel %vm630, %v1194, %v789
  %v1358 = vsel %vm630, %v1196, %v790
  %v1359 = vsel %vm630, %v1198, %v791
  %v1360 = vsel %vm630, %v1200, %v792
  %v1361 = vsel %vm630, %v1202, %v793
  %v1362 = vsel %vm630, %v1204, %v794
  %v1363 = vsel %vm630, %v1206, %v795
  %v1364 = vsel %vm630, %v1208, %v796
  %v1365 = vsel %vm630, %v1210, %v797
  %v1366 = vsel %vm630, %v1212, %v798
  %v1367 = vsel %vm630, %v1214, %v799
  %v1368 = vsel %vm630, %v1216, %v800
  %v1369 = vsel %vm630, %v1218, %v801
  %v1372 = vsel %vm937, %v1355, %v1250
  %v1376 = vsel %vm937, %v1356, %v1251
  %v1380 = vsel %vm937, %v1357, %v1252
  %v1384 = vsel %vm937, %v1358, %v1253
  %v1388 = vsel %vm937, %v1359, %v1254
  %v1392 = vsel %vm937, %v1360, %v1255
  %v1396 = vsel %vm937, %v1361, %v1256
  %v1400 = vsel %vm937, %v1362, %v1257
  %v1404 = vsel %vm937, %v1363, %v1258
  %v1408 = vsel %vm937, %v1364, %v1259
  %v1412 = vsel %vm937, %v1365, %v1260
  %v1416 = vsel %vm937, %v1366, %v1261
  %v1420 = vsel %vm937, %v1367, %v1262
  %v1424 = vsel %vm937, %v1368, %v1263
  %v1428 = vsel %vm937, %v1369, %v1264
  %v1430 = vsel %vm1000, %v1372, %v832
  %v1431 = vsel %vm1000, %v1376, %v833
  %v1432 = vsel %vm1000, %v1380, %v834
  %v1433 = vsel %vm1000, %v1384, %v835
  %v1434 = vsel %vm1000, %v1388, %v836
  %v1435 = vsel %vm1000, %v1392, %v837
  %v1436 = vsel %vm1000, %v1396, %v838
  %v1437 = vsel %vm1000, %v1400, %v839
  %v1438 = vsel %vm1000, %v1404, %v840
  %v1439 = vsel %vm1000, %v1408, %v841
  %v1440 = vsel %vm1000, %v1412, %v842
  %v1441 = vsel %vm1000, %v1416, %v843
  %v1442 = vsel %vm1000, %v1420, %v844
  %v1443 = vsel %vm1000, %v1424, %v845
  %v1444 = vsel %vm1000, %v1428, %v846
  %v1447 = vsel %vm1016, %v1430, %v1280
  %v1451 = vsel %vm1016, %v1431, %v1281
  %v1455 = vsel %vm1016, %v1432, %v1282
  %v1459 = vsel %vm1016, %v1433, %v1283
  %v1463 = vsel %vm1016, %v1434, %v1284
  %v1467 = vsel %vm1016, %v1435, %v1285
  %v1471 = vsel %vm1016, %v1436, %v1286
  %v1475 = vsel %vm1016, %v1437, %v1287
  %v1479 = vsel %vm1016, %v1438, %v1288
  %v1483 = vsel %vm1016, %v1439, %v1289
  %v1487 = vsel %vm1016, %v1440, %v1290
  %v1491 = vsel %vm1016, %v1441, %v1291
  %v1495 = vsel %vm1016, %v1442, %v1292
  %v1499 = vsel %vm1016, %v1443, %v1293
  %v1503 = vsel %vm1016, %v1444, %v1294
  %v1505 = vsel %vm1079, %v1447, %v877
  %v1506 = vsel %vm1079, %v1451, %v878
  %v1507 = vsel %vm1079, %v1455, %v879
  %v1508 = vsel %vm1079, %v1459, %v880
  %v1509 = vsel %vm1079, %v1463, %v881
  %v1510 = vsel %vm1079, %v1467, %v882
  %v1511 = vsel %vm1079, %v1471, %v883
  %v1512 = vsel %vm1079, %v1475, %v884
  %v1513 = vsel %vm1079, %v1479, %v885
  %v1514 = vsel %vm1079, %v1483, %v886
  %v1515 = vsel %vm1079, %v1487, %v887
  %v1516 = vsel %vm1079, %v1491, %v888
  %v1517 = vsel %vm1079, %v1495, %v889
  %v1518 = vsel %vm1079, %v1499, %v890
  %v1519 = vsel %vm1079, %v1503, %v891
  %v1522 = vsel %vm1095, %v1505, %v1310
  %v1526 = vsel %vm1095, %v1506, %v1311
  %v1530 = vsel %vm1095, %v1507, %v1312
  %v1534 = vsel %vm1095, %v1508, %v1313
  %v1538 = vsel %vm1095, %v1509, %v1314
  %v1542 = vsel %vm1095, %v1510, %v1315
  %v1546 = vsel %vm1095, %v1511, %v1316
  %v1550 = vsel %vm1095, %v1512, %v1317
  %v1554 = vsel %vm1095, %v1513, %v1318
  %v1558 = vsel %vm1095, %v1514, %v1319
  %v1562 = vsel %vm1095, %v1515, %v1320
  %v1566 = vsel %vm1095, %v1516, %v1321
  %v1570 = vsel %vm1095, %v1517, %v1322
  %v1574 = vsel %vm1095, %v1518, %v1323
  %v1578 = vsel %vm1095, %v1519, %v1324
  %v1580 = vsel %vm1158, %v1522, %v1325
  %v1581 = vsel %vm1158, %v1526, %v1326
  %v1582 = vsel %vm1158, %v1530, %v1327
  %v1583 = vsel %vm1158, %v1534, %v1328
  %v1584 = vsel %vm1158, %v1538, %v1329
  %v1585 = vsel %vm1158, %v1542, %v1330
  %v1586 = vsel %vm1158, %v1546, %v1331
  %v1587 = vsel %vm1158, %v1550, %v1332
  %v1588 = vsel %vm1158, %v1554, %v1333
  %v1589 = vsel %vm1158, %v1558, %v1334
  %v1590 = vsel %vm1158, %v1562, %v1335
  %v1591 = vsel %vm1158, %v1566, %v1336
  %v1592 = vsel %vm1158, %v1570, %v1337
  %v1593 = vsel %vm1158, %v1574, %v1338
  %v1594 = vsel %vm1158, %v1578, %v1339
  %v1595 = vld [vmem:[%s3 + $0x40] sm:$0xf]
  %v1596 = vld [vmem:[%s3 + $0x44] sm:$0xf]
  %v1597 = vld [vmem:[%s3 + $0x48] sm:$0xf]
  %v1598 = vld [vmem:[%s3 + $0x4c] sm:$0xf]
  %v1599 = vld [vmem:[%s3 + $0x50] sm:$0xf]
  %v1600 = vld [vmem:[%s3 + $0x54] sm:$0xf]
  %v1601 = vld [vmem:[%s3 + $0x58] sm:$0xf]
  %v1602 = vld [vmem:[%s3 + $0x5c] sm:$0xf]
  %v1603 = vld [vmem:[%s3 + $0x60] sm:$0xf]
  %v1604 = vld [vmem:[%s3 + $0x64] sm:$0xf]
  %v1605 = vld [vmem:[%s3 + $0x68] sm:$0xf]
  %v1606 = vld [vmem:[%s3 + $0x6c] sm:$0xf]
  %v1607 = vld [vmem:[%s3 + $0x70] sm:$0xf]
  %v1608 = vld [vmem:[%s3 + $0x74] sm:$0xf]
  %v1609 = vld [vmem:[%s3 + $0x78] sm:$0xf]
  %v1610 = vld [vmem:[%s3 + $0x7c] sm:$0xf]
  %v1626 = vunpack.c.l.b16 %v1580
  %v1627 = vunpack.c.l.b16 %v1581
  %v1628 = vunpack.c.l.b16 %v1582
  %v1629 = vunpack.c.l.b16 %v1583
  %v1630 = vunpack.c.l.b16 %v1584
  %v1631 = vunpack.c.l.b16 %v1585
  %v1632 = vunpack.c.l.b16 %v1586
  %v1633 = vunpack.c.l.b16 %v1587
  %v1634 = vunpack.c.l.b16 %v1588
  %v1635 = vunpack.c.l.b16 %v1589
  %v1636 = vunpack.c.l.b16 %v1590
  %v1637 = vunpack.c.l.b16 %v1591
  %v1638 = vunpack.c.l.b16 %v1592
  %v1639 = vunpack.c.l.b16 %v1593
  %v1640 = vunpack.c.l.b16 %v1594
  %v1641 = vpack.c.b16 %v1627, %v1626
  %v1642 = vpack.c.b16 %v1629, %v1628
  %v1643 = vpack.c.b16 %v1631, %v1630
  %v1644 = vpack.c.b16 %v1633, %v1632
  %v1645 = vpack.c.b16 %v1634, %v1626
  %v1646 = vpack.c.b16 %v1636, %v1635
  %v1647 = vpack.c.b16 %v1638, %v1637
  %v1648 = vpack.c.b16 %v1640, %v1639
  %v1673 = vunpack.c.l.b16 %v1595
  %v1674 = vunpack.c.l.b16 %v1596
  %v1675 = vunpack.c.l.b16 %v1597
  %v1676 = vunpack.c.l.b16 %v1598
  %v1677 = vunpack.c.l.b16 %v1599
  %v1678 = vunpack.c.l.b16 %v1600
  %v1679 = vunpack.c.l.b16 %v1601
  %v1680 = vunpack.c.l.b16 %v1602
  %v1681 = vunpack.c.l.b16 %v1603
  %v1682 = vunpack.c.l.b16 %v1604
  %v1683 = vunpack.c.l.b16 %v1605
  %v1684 = vunpack.c.l.b16 %v1606
  %v1685 = vunpack.c.l.b16 %v1607
  %v1686 = vunpack.c.l.b16 %v1608
  %v1687 = vunpack.c.l.b16 %v1609
  %v1688 = vunpack.c.l.b16 %v1610
  %v1689 = vpack.c.b16 %v1674, %v1673
  %v1690 = vpack.c.b16 %v1676, %v1675
  %v1691 = vpack.c.b16 %v1678, %v1677
  %v1692 = vpack.c.b16 %v1680, %v1679
  %v1693 = vpack.c.b16 %v1682, %v1681
  %v1694 = vpack.c.b16 %v1684, %v1683
  %v1695 = vpack.c.b16 %v1686, %v1685
  %v1696 = vpack.c.b16 %v1688, %v1687
  %1705 = vmatprep.subr.bf16.mxu0 0
  %1706 = vmatpush1.bf16.msra.mxu0 %v1689
  %1707 = vmatprep.subr.bf16.mxu0 0
  %1708 = vmatpush1.bf16.msra.mxu0 %v1690
  %1709 = vmatprep.subr.bf16.mxu0 0
  %1710 = vmatpush1.bf16.msra.mxu0 %v1691
  %1711 = vmatprep.subr.bf16.mxu0 0
  %1712 = vmatpush1.bf16.msra.mxu0 %v1692
  %1713 = vmatprep.subr.bf16.mxu0 0
  %1714 = vmatpush1.bf16.msra.mxu0 %v1693
  %1715 = vmatprep.subr.bf16.mxu0 0
  %1716 = vmatpush1.bf16.msra.mxu0 %v1694
  %1717 = vmatprep.subr.bf16.mxu0 0
  %1718 = vmatpush1.bf16.msra.mxu0 %v1695
  %1719 = vmatprep.subr.bf16.mxu0 0
  %1720 = vmatpush1.bf16.msra.mxu0 %v1696
  %1721 = vmatprep.subr.bf16.mxu0 0
  %1722 = vmatpush1.bf16.msra.mxu0 0
  %1723 = vmatprep.subr.bf16.mxu0 0
  %1724 = vmatpush1.bf16.msra.mxu0 0
  %1725 = vmatprep.subr.bf16.mxu0 0
  %1726 = vmatpush1.bf16.msra.mxu0 0
  %1727 = vmatprep.subr.bf16.mxu0 0
  %1728 = vmatpush1.bf16.msra.mxu0 0
  %1729 = vmatprep.subr.bf16.mxu0 0
  %1730 = vmatpush1.bf16.msra.mxu0 0
  %1731 = vmatprep.subr.bf16.mxu0 0
  %1732 = vmatpush1.bf16.msra.mxu0 0
  %1733 = vmatprep.subr.bf16.mxu0 0
  %1734 = vmatpush1.bf16.msra.mxu0 0
  %1735 = vmatprep.subr.bf16.mxu0 0
  %1736 = vmatpush1.bf16.msra.mxu0 0
  %1737 = vmatprep.mubr.bf16.mxu0 0
  %1738 = vmatmul.mubr.bf16.gmra.mrb[0].mxu0 %v1641
  %v1739 = vpop.f32.mrb[0].mxu0
  %v1740 = vadd.f32 0.0, %v1739
  %v1741 = vpop.f32.mrb[0].mxu0
  %v1742 = vpop.f32.mrb[0].mxu0
  %v1743 = vadd.f32 0.0, %v1742
  %v1744 = vpop.f32.mrb[0].mxu0
  %1745 = vmatprep.mubr.bf16.mxu0 0
  %1746 = vmatmul.mubr.bf16.gmra.mrb[0].mxu0 %v1642
  %v1747 = vpop.f32.mrb[0].mxu0
  %v1748 = vadd.f32 0.0, %v1747
  %v1749 = vpop.f32.mrb[0].mxu0
  %v1750 = vpop.f32.mrb[0].mxu0
  %v1751 = vadd.f32 0.0, %v1750
  %v1752 = vpop.f32.mrb[0].mxu0
  %1753 = vmatprep.mubr.bf16.mxu0 0
  %1754 = vmatmul.mubr.bf16.gmra.mrb[0].mxu0 %v1643
  %v1755 = vpop.f32.mrb[0].mxu0
  %v1756 = vadd.f32 0.0, %v1755
  %v1757 = vpop.f32.mrb[0].mxu0
  %v1758 = vpop.f32.mrb[0].mxu0
  %v1759 = vadd.f32 0.0, %v1758
  %v1760 = vpop.f32.mrb[0].mxu0
  %1761 = vmatprep.mubr.bf16.mxu0 0
  %1762 = vmatmul.mubr.bf16.gmra.mrb[0].mxu0 %v1644
  %v1763 = vpop.f32.mrb[0].mxu0
  %v1764 = vadd.f32 0.0, %v1763
  %v1765 = vpop.f32.mrb[0].mxu0
  %v1766 = vpop.f32.mrb[0].mxu0
  %v1767 = vadd.f32 0.0, %v1766
  %v1768 = vpop.f32.mrb[0].mxu0
  %1769 = vmatprep.mubr.bf16.mxu0 0
  %1770 = vmatmul.mubr.bf16.gmra.mrb[0].mxu0 %v1645
  %v1771 = vpop.f32.mrb[0].mxu0
  %v1772 = vadd.f32 0.0, %v1771
  %v1773 = vpop.f32.mrb[0].mxu0
  %v1774 = vpop.f32.mrb[0].mxu0
  %v1775 = vadd.f32 0.0, %v1774
  %v1776 = vpop.f32.mrb[0].mxu0
  %1777 = vmatprep.mubr.bf16.mxu0 0
  %1778 = vmatmul.mubr.bf16.gmra.mrb[0].mxu0 %v1646
  %v1779 = vpop.f32.mrb[0].mxu0
  %v1780 = vadd.f32 0.0, %v1779
  %v1781 = vpop.f32.mrb[0].mxu0
  %v1782 = vpop.f32.mrb[0].mxu0
  %v1783 = vadd.f32 0.0, %v1782
  %v1784 = vpop.f32.mrb[0].mxu0
  %1785 = vmatprep.mubr.bf16.mxu0 0
  %1786 = vmatmul.mubr.bf16.gmra.mrb[0].mxu0 %v1647
  %v1787 = vpop.f32.mrb[0].mxu0
  %v1788 = vadd.f32 0.0, %v1787
  %v1789 = vpop.f32.mrb[0].mxu0
  %v1790 = vpop.f32.mrb[0].mxu0
  %v1791 = vadd.f32 0.0, %v1790
  %v1792 = vpop.f32.mrb[0].mxu0
  %1793 = vmatprep.mubr.bf16.mxu0 0
  %1794 = vmatmul.mubr.bf16.gmra.mrb[0].mxu0 %v1648
  %v1795 = vpop.f32.mrb[0].mxu0
  %v1796 = vadd.f32 0.0, %v1795
  %v1797 = vpop.f32.mrb[0].mxu0
  %v1798 = vpop.f32.mrb[0].mxu0
  %v1799 = vadd.f32 0.0, %v1798
  %v1800 = vpop.f32.mrb[0].mxu0
  %1801 = vdwg.mxu0
  %v1817 = vunpack.c.l.b16 %v1159
  %v1818 = vunpack.c.l.b16 %v1160
  %v1819 = vunpack.c.l.b16 %v1161
  %v1820 = vunpack.c.l.b16 %v1162
  %v1821 = vunpack.c.l.b16 %v1163
  %v1822 = vunpack.c.l.b16 %v1164
  %v1823 = vunpack.c.l.b16 %v1165
  %v1824 = vunpack.c.l.b16 %v1166
  %v1825 = vunpack.c.l.b16 %v1167
  %v1826 = vunpack.c.l.b16 %v1168
  %v1827 = vunpack.c.l.b16 %v1169
  %v1828 = vunpack.c.l.b16 %v1170
  %v1829 = vunpack.c.l.b16 %v1171
  %v1830 = vunpack.c.l.b16 %v1172
  %v1831 = vunpack.c.l.b16 %v1173
  %v1832 = vpack.c.b16 %v1818, %v1817
  %v1833 = vpack.c.b16 %v1820, %v1819
  %v1834 = vpack.c.b16 %v1822, %v1821
  %v1835 = vpack.c.b16 %v1824, %v1823
  %v1836 = vpack.c.b16 %v1825, %v1817
  %v1837 = vpack.c.b16 %v1827, %v1826
  %v1838 = vpack.c.b16 %v1829, %v1828
  %v1839 = vpack.c.b16 %v1831, %v1830
  %v1864 = vunpack.c.l.b16 %v1174
  %v1865 = vunpack.c.l.b16 %v1175
  %v1866 = vunpack.c.l.b16 %v1176
  %v1867 = vunpack.c.l.b16 %v1177
  %v1868 = vunpack.c.l.b16 %v1178
  %v1869 = vunpack.c.l.b16 %v1179
  %v1870 = vunpack.c.l.b16 %v1180
  %v1871 = vunpack.c.l.b16 %v1181
  %v1872 = vunpack.c.l.b16 %v1182
  %v1873 = vunpack.c.l.b16 %v1183
  %v1874 = vunpack.c.l.b16 %v1184
  %v1875 = vunpack.c.l.b16 %v1185
  %v1876 = vunpack.c.l.b16 %v1186
  %v1877 = vunpack.c.l.b16 %v1187
  %v1878 = vunpack.c.l.b16 %v1188
  %v1879 = vunpack.c.l.b16 %v1189
  %v1880 = vpack.c.b16 %v1865, %v1864
  %v1881 = vpack.c.b16 %v1867, %v1866
  %v1882 = vpack.c.b16 %v1869, %v1868
  %v1883 = vpack.c.b16 %v1871, %v1870
  %v1884 = vpack.c.b16 %v1873, %v1872
  %v1885 = vpack.c.b16 %v1875, %v1874
  %v1886 = vpack.c.b16 %v1877, %v1876
  %v1887 = vpack.c.b16 %v1879, %v1878
  %1896 = vmatprep.subr.bf16.mxu0 0
  %1897 = vmatpush1.bf16.msra.mxu0 %v1880
  %1898 = vmatprep.subr.bf16.mxu0 0
  %1899 = vmatpush1.bf16.msra.mxu0 %v1881
  %1900 = vmatprep.subr.bf16.mxu0 0
  %1901 = vmatpush1.bf16.msra.mxu0 %v1882
  %1902 = vmatprep.subr.bf16.mxu0 0
  %1903 = vmatpush1.bf16.msra.mxu0 %v1883
  %1904 = vmatprep.subr.bf16.mxu0 0
  %1905 = vmatpush1.bf16.msra.mxu0 %v1884
  %1906 = vmatprep.subr.bf16.mxu0 0
  %1907 = vmatpush1.bf16.msra.mxu0 %v1885
  %1908 = vmatprep.subr.bf16.mxu0 0
  %1909 = vmatpush1.bf16.msra.mxu0 %v1886
  %1910 = vmatprep.subr.bf16.mxu0 0
  %1911 = vmatpush1.bf16.msra.mxu0 %v1887
  %1912 = vmatprep.subr.bf16.mxu0 0
  %1913 = vmatpush1.bf16.msra.mxu0 0
  %1914 = vmatprep.subr.bf16.mxu0 0
  %1915 = vmatpush1.bf16.msra.mxu0 0
  %1916 = vmatprep.subr.bf16.mxu0 0
  %1917 = vmatpush1.bf16.msra.mxu0 0
  %1918 = vmatprep.subr.bf16.mxu0 0
  %1919 = vmatpush1.bf16.msra.mxu0 0
  %1920 = vmatprep.subr.bf16.mxu0 0
  %1921 = vmatpush1.bf16.msra.mxu0 0
  %1922 = vmatprep.subr.bf16.mxu0 0
  %1923 = vmatpush1.bf16.msra.mxu0 0
  %1924 = vmatprep.subr.bf16.mxu0 0
  %1925 = vmatpush1.bf16.msra.mxu0 0
  %1926 = vmatprep.subr.bf16.mxu0 0
  %1927 = vmatpush1.bf16.msra.mxu0 0
  %1928 = vmatprep.mubr.bf16.mxu0 0
  %1929 = vmatmul.mubr.bf16.gmra.mrb[0].mxu0 %v1832
  %v1930 = vpop.f32.mrb[0].mxu0
  %v1931 = vadd.f32 %v1740, %v1930
  %v1932 = vpop.f32.mrb[0].mxu0
  %v1933 = vpop.f32.mrb[0].mxu0
  %v1934 = vadd.f32 %v1743, %v1933
  %v1935 = vpop.f32.mrb[0].mxu0
  %1936 = vmatprep.mubr.bf16.mxu0 0
  %1937 = vmatmul.mubr.bf16.gmra.mrb[0].mxu0 %v1833
  %v1938 = vpop.f32.mrb[0].mxu0
  %v1939 = vadd.f32 %v1748, %v1938
  %v1940 = vpop.f32.mrb[0].mxu0
  %v1941 = vpop.f32.mrb[0].mxu0
  %v1942 = vadd.f32 %v1751, %v1941
  %v1943 = vpop.f32.mrb[0].mxu0
  %1944 = vmatprep.mubr.bf16.mxu0 0
  %1945 = vmatmul.mubr.bf16.gmra.mrb[0].mxu0 %v1834
  %v1946 = vpop.f32.mrb[0].mxu0
  %v1947 = vadd.f32 %v1756, %v1946
  %v1948 = vpop.f32.mrb[0].mxu0
  %v1949 = vpop.f32.mrb[0].mxu0
  %v1950 = vadd.f32 %v1759, %v1949
  %v1951 = vpop.f32.mrb[0].mxu0
  %1952 = vmatprep.mubr.bf16.mxu0 0
  %1953 = vmatmul.mubr.bf16.gmra.mrb[0].mxu0 %v1835
  %v1954 = vpop.f32.mrb[0].mxu0
  %v1955 = vadd.f32 %v1764, %v1954
  %v1956 = vpop.f32.mrb[0].mxu0
  %v1957 = vpop.f32.mrb[0].mxu0
  %v1958 = vadd.f32 %v1767, %v1957
  %v1959 = vpop.f32.mrb[0].mxu0
  %1960 = vmatprep.mubr.bf16.mxu0 0
  %1961 = vmatmul.mubr.bf16.gmra.mrb[0].mxu0 %v1836
  %v1962 = vpop.f32.mrb[0].mxu0
  %v1963 = vadd.f32 %v1772, %v1962
  %v1964 = vpop.f32.mrb[0].mxu0
  %v1965 = vpop.f32.mrb[0].mxu0
  %v1966 = vadd.f32 %v1775, %v1965
  %v1967 = vpop.f32.mrb[0].mxu0
  %1968 = vmatprep.mubr.bf16.mxu0 0
  %1969 = vmatmul.mubr.bf16.gmra.mrb[0].mxu0 %v1837
  %v1970 = vpop.f32.mrb[0].mxu0
  %v1971 = vadd.f32 %v1780, %v1970
  %v1972 = vpop.f32.mrb[0].mxu0
  %v1973 = vpop.f32.mrb[0].mxu0
  %v1974 = vadd.f32 %v1783, %v1973
  %v1975 = vpop.f32.mrb[0].mxu0
  %1976 = vmatprep.mubr.bf16.mxu0 0
  %1977 = vmatmul.mubr.bf16.gmra.mrb[0].mxu0 %v1838
  %v1978 = vpop.f32.mrb[0].mxu0
  %v1979 = vadd.f32 %v1788, %v1978
  %v1980 = vpop.f32.mrb[0].mxu0
  %v1981 = vpop.f32.mrb[0].mxu0
  %v1982 = vadd.f32 %v1791, %v1981
  %v1983 = vpop.f32.mrb[0].mxu0
  %1984 = vmatprep.mubr.bf16.mxu0 0
  %1985 = vmatmul.mubr.bf16.gmra.mrb[0].mxu0 %v1839
  %v1986 = vpop.f32.mrb[0].mxu0
  %v1987 = vadd.f32 %v1796, %v1986
  %v1988 = vpop.f32.mrb[0].mxu0
  %v1989 = vpop.f32.mrb[0].mxu0
  %v1990 = vadd.f32 %v1799, %v1989
  %v1991 = vpop.f32.mrb[0].mxu0
  %1992 = vdwg.mxu0
  %v1994 = vshll.u32 %v664, 16
  %v1996 = vrot.slane %v1994, 5
  %v1998 = vshll.u32 %v666, 16
  %v2000 = vrot.slane %v1998, 5
  %v2002 = vshll.u32 %v668, 16
  %v2004 = vrot.slane %v2002, 5
  %v2006 = vshll.u32 %v670, 16
  %v2008 = vrot.slane %v2006, 5
  %v2010 = vshll.u32 %v672, 16
  %v2012 = vrot.slane %v2010, 5
  %v2014 = vshll.u32 %v674, 16
  %v2016 = vrot.slane %v2014, 5
  %v2018 = vshll.u32 %v676, 16
  %v2020 = vrot.slane %v2018, 5
  %v2022 = vshll.u32 %v678, 16
  %v2024 = vrot.slane %v2022, 5
  %v2026 = vshll.u32 %v682, 16
  %v2028 = vrot.slane %v2026, 5
  %v2030 = vshll.u32 %v684, 16
  %v2032 = vrot.slane %v2030, 5
  %v2034 = vshll.u32 %v686, 16
  %v2036 = vrot.slane %v2034, 5
  %v2038 = vshll.u32 %v688, 16
  %v2040 = vrot.slane %v2038, 5
  %v2042 = vshll.u32 %v690, 16
  %v2044 = vrot.slane %v2042, 5
  %v2046 = vshll.u32 %v692, 16
  %v2048 = vrot.slane %v2046, 5
  %v2050 = vshll.u32 %v694, 16
  %v2052 = vrot.slane %v2050, 5
  %v2068 = vsel %vm630, %v787, %v802
  %v2069 = vsel %vm630, %v788, %v803
  %v2070 = vsel %vm630, %v789, %v804
  %v2071 = vsel %vm630, %v790, %v805
  %v2072 = vsel %vm630, %v791, %v806
  %v2073 = vsel %vm630, %v792, %v807
  %v2074 = vsel %vm630, %v793, %v808
  %v2075 = vsel %vm630, %v794, %v809
  %v2076 = vsel %vm630, %v795, %v810
  %v2077 = vsel %vm630, %v796, %v811
  %v2078 = vsel %vm630, %v797, %v812
  %v2079 = vsel %vm630, %v798, %v813
  %v2080 = vsel %vm630, %v799, %v814
  %v2081 = vsel %vm630, %v800, %v815
  %v2082 = vsel %vm630, %v801, %v816
  %v2084 = vsel %vm937, %v2068, %v832
  %v2087 = vsel %vm937, %v2069, %v833
  %v2090 = vsel %vm937, %v2070, %v834
  %v2093 = vsel %vm937, %v2071, %v835
  %v2096 = vsel %vm937, %v2072, %v836
  %v2099 = vsel %vm937, %v2073, %v837
  %v2102 = vsel %vm937, %v2074, %v838
  %v2105 = vsel %vm937, %v2075, %v839
  %v2108 = vsel %vm937, %v2076, %v840
  %v2111 = vsel %vm937, %v2077, %v841
  %v2114 = vsel %vm937, %v2078, %v842
  %v2117 = vsel %vm937, %v2079, %v843
  %v2120 = vsel %vm937, %v2080, %v844
  %v2123 = vsel %vm937, %v2081, %v845
  %v2126 = vsel %vm937, %v2082, %v846
  %v2128 = vsel %vm1000, %v2084, %v847
  %v2129 = vsel %vm1000, %v2087, %v848
  %v2130 = vsel %vm1000, %v2090, %v849
  %v2131 = vsel %vm1000, %v2093, %v850
  %v2132 = vsel %vm1000, %v2096, %v851
  %v2133 = vsel %vm1000, %v2099, %v852
  %v2134 = vsel %vm1000, %v2102, %v853
  %v2135 = vsel %vm1000, %v2105, %v854
  %v2136 = vsel %vm1000, %v2108, %v855
  %v2137 = vsel %vm1000, %v2111, %v856
  %v2138 = vsel %vm1000, %v2114, %v857
  %v2139 = vsel %vm1000, %v2117, %v858
  %v2140 = vsel %vm1000, %v2120, %v859
  %v2141 = vsel %vm1000, %v2123, %v860
  %v2142 = vsel %vm1000, %v2126, %v861
  %v2144 = vsel %vm1016, %v2128, %v877
  %v2147 = vsel %vm1016, %v2129, %v878
  %v2150 = vsel %vm1016, %v2130, %v879
  %v2153 = vsel %vm1016, %v2131, %v880
  %v2156 = vsel %vm1016, %v2132, %v881
  %v2159 = vsel %vm1016, %v2133, %v882
  %v2162 = vsel %vm1016, %v2134, %v883
  %v2165 = vsel %vm1016, %v2135, %v884
  %v2168 = vsel %vm1016, %v2136, %v885
  %v2171 = vsel %vm1016, %v2137, %v886
  %v2174 = vsel %vm1016, %v2138, %v887
  %v2177 = vsel %vm1016, %v2139, %v888
  %v2180 = vsel %vm1016, %v2140, %v889
  %v2183 = vsel %vm1016, %v2141, %v890
  %v2186 = vsel %vm1016, %v2142, %v891
  %v2188 = vsel %vm1079, %v2144, %v892
  %v2189 = vsel %vm1079, %v2147, %v893
  %v2190 = vsel %vm1079, %v2150, %v894
  %v2191 = vsel %vm1079, %v2153, %v895
  %v2192 = vsel %vm1079, %v2156, %v896
  %v2193 = vsel %vm1079, %v2159, %v897
  %v2194 = vsel %vm1079, %v2162, %v898
  %v2195 = vsel %vm1079, %v2165, %v899
  %v2196 = vsel %vm1079, %v2168, %v900
  %v2197 = vsel %vm1079, %v2171, %v901
  %v2198 = vsel %vm1079, %v2174, %v902
  %v2199 = vsel %vm1079, %v2177, %v903
  %v2200 = vsel %vm1079, %v2180, %v904
  %v2201 = vsel %vm1079, %v2183, %v905
  %v2202 = vsel %vm1079, %v2186, %v906
  %v2205 = vsel %vm1095, %v2188, %v1325
  %v2209 = vsel %vm1095, %v2189, %v1326
  %v2213 = vsel %vm1095, %v2190, %v1327
  %v2217 = vsel %vm1095, %v2191, %v1328
  %v2221 = vsel %vm1095, %v2192, %v1329
  %v2225 = vsel %vm1095, %v2193, %v1330
  %v2229 = vsel %vm1095, %v2194, %v1331
  %v2233 = vsel %vm1095, %v2195, %v1332
  %v2237 = vsel %vm1095, %v2196, %v1333
  %v2241 = vsel %vm1095, %v2197, %v1334
  %v2245 = vsel %vm1095, %v2198, %v1335
  %v2249 = vsel %vm1095, %v2199, %v1336
  %v2253 = vsel %vm1095, %v2200, %v1337
  %v2257 = vsel %vm1095, %v2201, %v1338
  %v2261 = vsel %vm1095, %v2202, %v1339
  %v2263 = vsel %vm1158, %v2205, %v1996
  %v2264 = vsel %vm1158, %v2209, %v2000
  %v2265 = vsel %vm1158, %v2213, %v2004
  %v2266 = vsel %vm1158, %v2217, %v2008
  %v2267 = vsel %vm1158, %v2221, %v2012
  %v2268 = vsel %vm1158, %v2225, %v2016
  %v2269 = vsel %vm1158, %v2229, %v2020
  %v2270 = vsel %vm1158, %v2233, %v2024
  %v2271 = vsel %vm1158, %v2237, %v2028
  %v2272 = vsel %vm1158, %v2241, %v2032
  %v2273 = vsel %vm1158, %v2245, %v2036
  %v2274 = vsel %vm1158, %v2249, %v2040
  %v2275 = vsel %vm1158, %v2253, %v2044
  %v2276 = vsel %vm1158, %v2257, %v2048
  %v2277 = vsel %vm1158, %v2261, %v2052
  %v2278 = vld [vmem:[%s3 + $0x80] sm:$0xf]
  %v2279 = vld [vmem:[%s3 + $0x84] sm:$0xf]
  %v2280 = vld [vmem:[%s3 + $0x88] sm:$0xf]
  %v2281 = vld [vmem:[%s3 + $0x8c] sm:$0xf]
  %v2282 = vld [vmem:[%s3 + $0x90] sm:$0xf]
  %v2283 = vld [vmem:[%s3 + $0x94] sm:$0xf]
  %v2284 = vld [vmem:[%s3 + $0x98] sm:$0xf]
  %v2285 = vld [vmem:[%s3 + $0x9c] sm:$0xf]
  %v2286 = vld [vmem:[%s3 + $0xa0] sm:$0xf]
  %v2287 = vld [vmem:[%s3 + $0xa4] sm:$0xf]
  %v2288 = vld [vmem:[%s3 + $0xa8] sm:$0xf]
  %v2289 = vld [vmem:[%s3 + $0xac] sm:$0xf]
  %v2290 = vld [vmem:[%s3 + $0xb0] sm:$0xf]
  %v2291 = vld [vmem:[%s3 + $0xb4] sm:$0xf]
  %v2292 = vld [vmem:[%s3 + $0xb8] sm:$0xf]
  %v2293 = vld [vmem:[%s3 + $0xbc] sm:$0xf]
  %v2309 = vunpack.c.l.b16 %v2263
  %v2310 = vunpack.c.l.b16 %v2264
  %v2311 = vunpack.c.l.b16 %v2265
  %v2312 = vunpack.c.l.b16 %v2266
  %v2313 = vunpack.c.l.b16 %v2267
  %v2314 = vunpack.c.l.b16 %v2268
  %v2315 = vunpack.c.l.b16 %v2269
  %v2316 = vunpack.c.l.b16 %v2270
  %v2317 = vunpack.c.l.b16 %v2271
  %v2318 = vunpack.c.l.b16 %v2272
  %v2319 = vunpack.c.l.b16 %v2273
  %v2320 = vunpack.c.l.b16 %v2274
  %v2321 = vunpack.c.l.b16 %v2275
  %v2322 = vunpack.c.l.b16 %v2276
  %v2323 = vunpack.c.l.b16 %v2277
  %v2324 = vpack.c.b16 %v2310, %v2309
  %v2325 = vpack.c.b16 %v2312, %v2311
  %v2326 = vpack.c.b16 %v2314, %v2313
  %v2327 = vpack.c.b16 %v2316, %v2315
  %v2328 = vpack.c.b16 %v2317, %v2309
  %v2329 = vpack.c.b16 %v2319, %v2318
  %v2330 = vpack.c.b16 %v2321, %v2320
  %v2331 = vpack.c.b16 %v2323, %v2322
  %v2356 = vunpack.c.l.b16 %v2278
  %v2357 = vunpack.c.l.b16 %v2279
  %v2358 = vunpack.c.l.b16 %v2280
  %v2359 = vunpack.c.l.b16 %v2281
  %v2360 = vunpack.c.l.b16 %v2282
  %v2361 = vunpack.c.l.b16 %v2283
  %v2362 = vunpack.c.l.b16 %v2284
  %v2363 = vunpack.c.l.b16 %v2285
  %v2364 = vunpack.c.l.b16 %v2286
  %v2365 = vunpack.c.l.b16 %v2287
  %v2366 = vunpack.c.l.b16 %v2288
  %v2367 = vunpack.c.l.b16 %v2289
  %v2368 = vunpack.c.l.b16 %v2290
  %v2369 = vunpack.c.l.b16 %v2291
  %v2370 = vunpack.c.l.b16 %v2292
  %v2371 = vunpack.c.l.b16 %v2293
  %v2372 = vpack.c.b16 %v2357, %v2356
  %v2373 = vpack.c.b16 %v2359, %v2358
  %v2374 = vpack.c.b16 %v2361, %v2360
  %v2375 = vpack.c.b16 %v2363, %v2362
  %v2376 = vpack.c.b16 %v2365, %v2364
  %v2377 = vpack.c.b16 %v2367, %v2366
  %v2378 = vpack.c.b16 %v2369, %v2368
  %v2379 = vpack.c.b16 %v2371, %v2370
  %2388 = vmatprep.subr.bf16.mxu0 0
  %2389 = vmatpush1.bf16.msra.mxu0 %v2372
  %2390 = vmatprep.subr.bf16.mxu0 0
  %2391 = vmatpush1.bf16.msra.mxu0 %v2373
  %2392 = vmatprep.subr.bf16.mxu0 0
  %2393 = vmatpush1.bf16.msra.mxu0 %v2374
  %2394 = vmatprep.subr.bf16.mxu0 0
  %2395 = vmatpush1.bf16.msra.mxu0 %v2375
  %2396 = vmatprep.subr.bf16.mxu0 0
  %2397 = vmatpush1.bf16.msra.mxu0 %v2376
  %2398 = vmatprep.subr.bf16.mxu0 0
  %2399 = vmatpush1.bf16.msra.mxu0 %v2377
  %2400 = vmatprep.subr.bf16.mxu0 0
  %2401 = vmatpush1.bf16.msra.mxu0 %v2378
  %2402 = vmatprep.subr.bf16.mxu0 0
  %2403 = vmatpush1.bf16.msra.mxu0 %v2379
  %2404 = vmatprep.subr.bf16.mxu0 0
  %2405 = vmatpush1.bf16.msra.mxu0 0
  %2406 = vmatprep.subr.bf16.mxu0 0
  %2407 = vmatpush1.bf16.msra.mxu0 0
  %2408 = vmatprep.subr.bf16.mxu0 0
  %2409 = vmatpush1.bf16.msra.mxu0 0
  %2410 = vmatprep.subr.bf16.mxu0 0
  %2411 = vmatpush1.bf16.msra.mxu0 0
  %2412 = vmatprep.subr.bf16.mxu0 0
  %2413 = vmatpush1.bf16.msra.mxu0 0
  %2414 = vmatprep.subr.bf16.mxu0 0
  %2415 = vmatpush1.bf16.msra.mxu0 0
  %2416 = vmatprep.subr.bf16.mxu0 0
  %2417 = vmatpush1.bf16.msra.mxu0 0
  %2418 = vmatprep.subr.bf16.mxu0 0
  %2419 = vmatpush1.bf16.msra.mxu0 0
  %2420 = vmatprep.mubr.bf16.mxu0 0
  %2421 = vmatmul.mubr.bf16.gmra.mrb[0].mxu0 %v2324
  %v2422 = vpop.f32.mrb[0].mxu0
  %v2423 = vadd.f32 0.0, %v2422
  %v2424 = vpop.f32.mrb[0].mxu0
  %v2425 = vpop.f32.mrb[0].mxu0
  %v2426 = vadd.f32 0.0, %v2425
  %v2427 = vpop.f32.mrb[0].mxu0
  %2428 = vmatprep.mubr.bf16.mxu0 0
  %2429 = vmatmul.mubr.bf16.gmra.mrb[0].mxu0 %v2325
  %v2430 = vpop.f32.mrb[0].mxu0
  %v2431 = vadd.f32 0.0, %v2430
  %v2432 = vpop.f32.mrb[0].mxu0
  %v2433 = vpop.f32.mrb[0].mxu0
  %v2434 = vadd.f32 0.0, %v2433
  %v2435 = vpop.f32.mrb[0].mxu0
  %2436 = vmatprep.mubr.bf16.mxu0 0
  %2437 = vmatmul.mubr.bf16.gmra.mrb[0].mxu0 %v2326
  %v2438 = vpop.f32.mrb[0].mxu0
  %v2439 = vadd.f32 0.0, %v2438
  %v2440 = vpop.f32.mrb[0].mxu0
  %v2441 = vpop.f32.mrb[0].mxu0
  %v2442 = vadd.f32 0.0, %v2441
  %v2443 = vpop.f32.mrb[0].mxu0
  %2444 = vmatprep.mubr.bf16.mxu0 0
  %2445 = vmatmul.mubr.bf16.gmra.mrb[0].mxu0 %v2327
  %v2446 = vpop.f32.mrb[0].mxu0
  %v2447 = vadd.f32 0.0, %v2446
  %v2448 = vpop.f32.mrb[0].mxu0
  %v2449 = vpop.f32.mrb[0].mxu0
  %v2450 = vadd.f32 0.0, %v2449
  %v2451 = vpop.f32.mrb[0].mxu0
  %2452 = vmatprep.mubr.bf16.mxu0 0
  %2453 = vmatmul.mubr.bf16.gmra.mrb[0].mxu0 %v2328
  %v2454 = vpop.f32.mrb[0].mxu0
  %v2455 = vadd.f32 0.0, %v2454
  %v2456 = vpop.f32.mrb[0].mxu0
  %v2457 = vpop.f32.mrb[0].mxu0
  %v2458 = vadd.f32 0.0, %v2457
  %v2459 = vpop.f32.mrb[0].mxu0
  %2460 = vmatprep.mubr.bf16.mxu0 0
  %2461 = vmatmul.mubr.bf16.gmra.mrb[0].mxu0 %v2329
  %v2462 = vpop.f32.mrb[0].mxu0
  %v2463 = vadd.f32 0.0, %v2462
  %v2464 = vpop.f32.mrb[0].mxu0
  %v2465 = vpop.f32.mrb[0].mxu0
  %v2466 = vadd.f32 0.0, %v2465
  %v2467 = vpop.f32.mrb[0].mxu0
  %2468 = vmatprep.mubr.bf16.mxu0 0
  %2469 = vmatmul.mubr.bf16.gmra.mrb[0].mxu0 %v2330
  %v2470 = vpop.f32.mrb[0].mxu0
  %v2471 = vadd.f32 0.0, %v2470
  %v2472 = vpop.f32.mrb[0].mxu0
  %v2473 = vpop.f32.mrb[0].mxu0
  %v2474 = vadd.f32 0.0, %v2473
  %v2475 = vpop.f32.mrb[0].mxu0
  %2476 = vmatprep.mubr.bf16.mxu0 0
  %2477 = vmatmul.mubr.bf16.gmra.mrb[0].mxu0 %v2331
  %v2478 = vpop.f32.mrb[0].mxu0
  %v2479 = vadd.f32 0.0, %v2478
  %v2480 = vpop.f32.mrb[0].mxu0
  %v2481 = vpop.f32.mrb[0].mxu0
  %v2482 = vadd.f32 0.0, %v2481
  %v2483 = vpop.f32.mrb[0].mxu0
  %2484 = vdwg.mxu0
  %v2485 = vadd.f32 %v1931, %v2423
  %v2486 = vadd.f32 %v1934, %v2426
  %v2487 = vadd.f32 %v1939, %v2431
  %v2488 = vadd.f32 %v1942, %v2434
  %v2489 = vadd.f32 %v1947, %v2439
  %v2490 = vadd.f32 %v1950, %v2442
  %v2491 = vadd.f32 %v1955, %v2447
  %v2492 = vadd.f32 %v1958, %v2450
  %v2493 = vadd.f32 %v1963, %v2455
  %v2494 = vadd.f32 %v1966, %v2458
  %v2495 = vadd.f32 %v1971, %v2463
  %v2496 = vadd.f32 %v1974, %v2466
  %v2497 = vadd.f32 %v1979, %v2471
  %v2498 = vadd.f32 %v1982, %v2474
  %v2499 = vadd.f32 %v1987, %v2479
  %v2500 = vadd.f32 %v1990, %v2482
  %v2502 = vshll.u32 %v632, 16
  %v2504 = vrot.slane %v2502, 1
  %v2506 = vshll.u32 %v634, 16
  %v2508 = vrot.slane %v2506, 1
  %v2510 = vshll.u32 %v636, 16
  %v2512 = vrot.slane %v2510, 1
  %v2514 = vshll.u32 %v638, 16
  %v2516 = vrot.slane %v2514, 1
  %v2518 = vshll.u32 %v640, 16
  %v2520 = vrot.slane %v2518, 1
  %v2522 = vshll.u32 %v642, 16
  %v2524 = vrot.slane %v2522, 1
  %v2526 = vshll.u32 %v644, 16
  %v2528 = vrot.slane %v2526, 1
  %v2530 = vshll.u32 %v646, 16
  %v2532 = vrot.slane %v2530, 1
  %v2534 = vshll.u32 %v648, 16
  %v2536 = vrot.slane %v2534, 1
  %v2538 = vshll.u32 %v650, 16
  %v2540 = vrot.slane %v2538, 1
  %v2542 = vshll.u32 %v652, 16
  %v2544 = vrot.slane %v2542, 1
  %v2546 = vshll.u32 %v654, 16
  %v2548 = vrot.slane %v2546, 1
  %v2550 = vshll.u32 %v656, 16
  %v2552 = vrot.slane %v2550, 1
  %v2554 = vshll.u32 %v658, 16
  %v2556 = vrot.slane %v2554, 1
  %v2558 = vshll.u32 %v660, 16
  %v2560 = vrot.slane %v2558, 1
  %v2562 = vshll.u32 %v662, 16
  %v2564 = vrot.slane %v2562, 1
  %v2597 = vrot.slane %v632, 1
  %v2598 = vrot.slane %v634, 1
  %v2599 = vrot.slane %v636, 1
  %v2600 = vrot.slane %v638, 1
  %v2601 = vrot.slane %v640, 1
  %v2602 = vrot.slane %v642, 1
  %v2603 = vrot.slane %v644, 1
  %v2604 = vrot.slane %v646, 1
  %v2605 = vrot.slane %v648, 1
  %v2606 = vrot.slane %v650, 1
  %v2607 = vrot.slane %v652, 1
  %v2608 = vrot.slane %v654, 1
  %v2609 = vrot.slane %v656, 1
  %v2610 = vrot.slane %v658, 1
  %v2611 = vrot.slane %v660, 1
  %v2612 = vrot.slane %v662, 1
  %v2613 = vrot.slane %v2502, 2
  %v2614 = vrot.slane %v2506, 2
  %v2615 = vrot.slane %v2510, 2
  %v2616 = vrot.slane %v2514, 2
  %v2617 = vrot.slane %v2518, 2
  %v2618 = vrot.slane %v2522, 2
  %v2619 = vrot.slane %v2526, 2
  %v2620 = vrot.slane %v2530, 2
  %v2621 = vrot.slane %v2534, 2
  %v2622 = vrot.slane %v2538, 2
  %v2623 = vrot.slane %v2542, 2
  %v2624 = vrot.slane %v2546, 2
  %v2625 = vrot.slane %v2550, 2
  %v2626 = vrot.slane %v2554, 2
  %v2627 = vrot.slane %v2558, 2
  %v2628 = vrot.slane %v2562, 2
  %v2645 = vrot.slane %v632, 2
  %v2646 = vrot.slane %v634, 2
  %v2647 = vrot.slane %v636, 2
  %v2648 = vrot.slane %v638, 2
  %v2649 = vrot.slane %v640, 2
  %v2650 = vrot.slane %v642, 2
  %v2651 = vrot.slane %v644, 2
  %v2652 = vrot.slane %v646, 2
  %v2653 = vrot.slane %v648, 2
  %v2654 = vrot.slane %v650, 2
  %v2655 = vrot.slane %v652, 2
  %v2656 = vrot.slane %v654, 2
  %v2657 = vrot.slane %v656, 2
  %v2658 = vrot.slane %v658, 2
  %v2659 = vrot.slane %v660, 2
  %v2660 = vrot.slane %v662, 2
  %v2661 = vrot.slane %v2502, 3
  %v2662 = vrot.slane %v2506, 3
  %v2663 = vrot.slane %v2510, 3
  %v2664 = vrot.slane %v2514, 3
  %v2665 = vrot.slane %v2518, 3
  %v2666 = vrot.slane %v2522, 3
  %v2667 = vrot.slane %v2526, 3
  %v2668 = vrot.slane %v2530, 3
  %v2669 = vrot.slane %v2534, 3
  %v2670 = vrot.slane %v2538, 3
  %v2671 = vrot.slane %v2542, 3
  %v2672 = vrot.slane %v2546, 3
  %v2673 = vrot.slane %v2550, 3
  %v2674 = vrot.slane %v2554, 3
  %v2675 = vrot.slane %v2558, 3
  %v2676 = vrot.slane %v2562, 3
  %v2693 = vrot.slane %v632, 3
  %v2694 = vrot.slane %v634, 3
  %v2695 = vrot.slane %v636, 3
  %v2696 = vrot.slane %v638, 3
  %v2697 = vrot.slane %v640, 3
  %v2698 = vrot.slane %v642, 3
  %v2699 = vrot.slane %v644, 3
  %v2700 = vrot.slane %v646, 3
  %v2701 = vrot.slane %v648, 3
  %v2702 = vrot.slane %v650, 3
  %v2703 = vrot.slane %v652, 3
  %v2704 = vrot.slane %v654, 3
  %v2705 = vrot.slane %v656, 3
  %v2706 = vrot.slane %v658, 3
  %v2707 = vrot.slane %v660, 3
  %v2708 = vrot.slane %v662, 3
  %v2709 = vrot.slane %v2502, 4
  %v2710 = vrot.slane %v2506, 4
  %v2711 = vrot.slane %v2510, 4
  %v2712 = vrot.slane %v2514, 4
  %v2713 = vrot.slane %v2518, 4
  %v2714 = vrot.slane %v2522, 4
  %v2715 = vrot.slane %v2526, 4
  %v2716 = vrot.slane %v2530, 4
  %v2717 = vrot.slane %v2534, 4
  %v2718 = vrot.slane %v2538, 4
  %v2719 = vrot.slane %v2542, 4
  %v2720 = vrot.slane %v2546, 4
  %v2721 = vrot.slane %v2550, 4
  %v2722 = vrot.slane %v2554, 4
  %v2723 = vrot.slane %v2558, 4
  %v2724 = vrot.slane %v2562, 4
  %v2741 = vsel %vm630, %v632, %v2504
  %v2742 = vsel %vm630, %v634, %v2508
  %v2743 = vsel %vm630, %v636, %v2512
  %v2744 = vsel %vm630, %v638, %v2516
  %v2745 = vsel %vm630, %v640, %v2520
  %v2746 = vsel %vm630, %v642, %v2524
  %v2747 = vsel %vm630, %v644, %v2528
  %v2748 = vsel %vm630, %v646, %v2532
  %v2749 = vsel %vm630, %v648, %v2536
  %v2750 = vsel %vm630, %v650, %v2540
  %v2751 = vsel %vm630, %v652, %v2544
  %v2752 = vsel %vm630, %v654, %v2548
  %v2753 = vsel %vm630, %v656, %v2552
  %v2754 = vsel %vm630, %v658, %v2556
  %v2755 = vsel %vm630, %v660, %v2560
  %v2756 = vsel %vm630, %v662, %v2564
  %v2759 = vsel %vm937, %v2741, %v2597
  %v2763 = vsel %vm937, %v2742, %v2598
  %v2767 = vsel %vm937, %v2743, %v2599
  %v2771 = vsel %vm937, %v2744, %v2600
  %v2775 = vsel %vm937, %v2745, %v2601
  %v2779 = vsel %vm937, %v2746, %v2602
  %v2783 = vsel %vm937, %v2747, %v2603
  %v2787 = vsel %vm937, %v2748, %v2604
  %v2791 = vsel %vm937, %v2749, %v2605
  %v2795 = vsel %vm937, %v2750, %v2606
  %v2799 = vsel %vm937, %v2751, %v2607
  %v2803 = vsel %vm937, %v2752, %v2608
  %v2807 = vsel %vm937, %v2753, %v2609
  %v2811 = vsel %vm937, %v2754, %v2610
  %v2815 = vsel %vm937, %v2755, %v2611
  %v2819 = vsel %vm937, %v2756, %v2612
  %v2821 = vsel %vm1000, %v2759, %v2613
  %v2822 = vsel %vm1000, %v2763, %v2614
  %v2823 = vsel %vm1000, %v2767, %v2615
  %v2824 = vsel %vm1000, %v2771, %v2616
  %v2825 = vsel %vm1000, %v2775, %v2617
  %v2826 = vsel %vm1000, %v2779, %v2618
  %v2827 = vsel %vm1000, %v2783, %v2619
  %v2828 = vsel %vm1000, %v2787, %v2620
  %v2829 = vsel %vm1000, %v2791, %v2621
  %v2830 = vsel %vm1000, %v2795, %v2622
  %v2831 = vsel %vm1000, %v2799, %v2623
  %v2832 = vsel %vm1000, %v2803, %v2624
  %v2833 = vsel %vm1000, %v2807, %v2625
  %v2834 = vsel %vm1000, %v2811, %v2626
  %v2835 = vsel %vm1000, %v2815, %v2627
  %v2836 = vsel %vm1000, %v2819, %v2628
  %v2839 = vsel %vm1016, %v2821, %v2645
  %v2843 = vsel %vm1016, %v2822, %v2646
  %v2847 = vsel %vm1016, %v2823, %v2647
  %v2851 = vsel %vm1016, %v2824, %v2648
  %v2855 = vsel %vm1016, %v2825, %v2649
  %v2859 = vsel %vm1016, %v2826, %v2650
  %v2863 = vsel %vm1016, %v2827, %v2651
  %v2867 = vsel %vm1016, %v2828, %v2652
  %v2871 = vsel %vm1016, %v2829, %v2653
  %v2875 = vsel %vm1016, %v2830, %v2654
  %v2879 = vsel %vm1016, %v2831, %v2655
  %v2883 = vsel %vm1016, %v2832, %v2656
  %v2887 = vsel %vm1016, %v2833, %v2657
  %v2891 = vsel %vm1016, %v2834, %v2658
  %v2895 = vsel %vm1016, %v2835, %v2659
  %v2899 = vsel %vm1016, %v2836, %v2660
  %v2901 = vsel %vm1079, %v2839, %v2661
  %v2902 = vsel %vm1079, %v2843, %v2662
  %v2903 = vsel %vm1079, %v2847, %v2663
  %v2904 = vsel %vm1079, %v2851, %v2664
  %v2905 = vsel %vm1079, %v2855, %v2665
  %v2906 = vsel %vm1079, %v2859, %v2666
  %v2907 = vsel %vm1079, %v2863, %v2667
  %v2908 = vsel %vm1079, %v2867, %v2668
  %v2909 = vsel %vm1079, %v2871, %v2669
  %v2910 = vsel %vm1079, %v2875, %v2670
  %v2911 = vsel %vm1079, %v2879, %v2671
  %v2912 = vsel %vm1079, %v2883, %v2672
  %v2913 = vsel %vm1079, %v2887, %v2673
  %v2914 = vsel %vm1079, %v2891, %v2674
  %v2915 = vsel %vm1079, %v2895, %v2675
  %v2916 = vsel %vm1079, %v2899, %v2676
  %v2919 = vsel %vm1095, %v2901, %v2693
  %v2923 = vsel %vm1095, %v2902, %v2694
  %v2927 = vsel %vm1095, %v2903, %v2695
  %v2931 = vsel %vm1095, %v2904, %v2696
  %v2935 = vsel %vm1095, %v2905, %v2697
  %v2939 = vsel %vm1095, %v2906, %v2698
  %v2943 = vsel %vm1095, %v2907, %v2699
  %v2947 = vsel %vm1095, %v2908, %v2700
  %v2951 = vsel %vm1095, %v2909, %v2701
  %v2955 = vsel %vm1095, %v2910, %v2702
  %v2959 = vsel %vm1095, %v2911, %v2703
  %v2963 = vsel %vm1095, %v2912, %v2704
  %v2967 = vsel %vm1095, %v2913, %v2705
  %v2971 = vsel %vm1095, %v2914, %v2706
  %v2975 = vsel %vm1095, %v2915, %v2707
  %v2979 = vsel %vm1095, %v2916, %v2708
  %v2981 = vsel %vm1158, %v2919, %v2709
  %v2982 = vsel %vm1158, %v2923, %v2710
  %v2983 = vsel %vm1158, %v2927, %v2711
  %v2984 = vsel %vm1158, %v2931, %v2712
  %v2985 = vsel %vm1158, %v2935, %v2713
  %v2986 = vsel %vm1158, %v2939, %v2714
  %v2987 = vsel %vm1158, %v2943, %v2715
  %v2988 = vsel %vm1158, %v2947, %v2716
  %v2989 = vsel %vm1158, %v2951, %v2717
  %v2990 = vsel %vm1158, %v2955, %v2718
  %v2991 = vsel %vm1158, %v2959, %v2719
  %v2992 = vsel %vm1158, %v2963, %v2720
  %v2993 = vsel %vm1158, %v2967, %v2721
  %v2994 = vsel %vm1158, %v2971, %v2722
  %v2995 = vsel %vm1158, %v2975, %v2723
  %v2996 = vsel %vm1158, %v2979, %v2724
  %v2997 = vld [vmem:[%s3 + $0xc0] sm:$0xf]
  %v2998 = vld [vmem:[%s3 + $0xc4] sm:$0xf]
  %v2999 = vld [vmem:[%s3 + $0xc8] sm:$0xf]
  %v3000 = vld [vmem:[%s3 + $0xcc] sm:$0xf]
  %v3001 = vld [vmem:[%s3 + $0xd0] sm:$0xf]
  %v3002 = vld [vmem:[%s3 + $0xd4] sm:$0xf]
  %v3003 = vld [vmem:[%s3 + $0xd8] sm:$0xf]
  %v3004 = vld [vmem:[%s3 + $0xdc] sm:$0xf]
  %v3005 = vld [vmem:[%s3 + $0xe0] sm:$0xf]
  %v3006 = vld [vmem:[%s3 + $0xe4] sm:$0xf]
  %v3007 = vld [vmem:[%s3 + $0xe8] sm:$0xf]
  %v3008 = vld [vmem:[%s3 + $0xec] sm:$0xf]
  %v3009 = vld [vmem:[%s3 + $0xf0] sm:$0xf]
  %v3010 = vld [vmem:[%s3 + $0xf4] sm:$0xf]
  %v3011 = vld [vmem:[%s3 + $0xf8] sm:$0xf]
  %v3012 = vld [vmem:[%s3 + $0xfc] sm:$0xf]
  %v3029 = vunpack.c.l.b16 %v2981
  %v3030 = vunpack.c.l.b16 %v2982
  %v3031 = vunpack.c.l.b16 %v2983
  %v3032 = vunpack.c.l.b16 %v2984
  %v3033 = vunpack.c.l.b16 %v2985
  %v3034 = vunpack.c.l.b16 %v2986
  %v3035 = vunpack.c.l.b16 %v2987
  %v3036 = vunpack.c.l.b16 %v2988
  %v3037 = vunpack.c.l.b16 %v2989
  %v3038 = vunpack.c.l.b16 %v2990
  %v3039 = vunpack.c.l.b16 %v2991
  %v3040 = vunpack.c.l.b16 %v2992
  %v3041 = vunpack.c.l.b16 %v2993
  %v3042 = vunpack.c.l.b16 %v2994
  %v3043 = vunpack.c.l.b16 %v2995
  %v3044 = vunpack.c.l.b16 %v2996
  %v3045 = vpack.c.b16 %v3030, %v3029
  %v3046 = vpack.c.b16 %v3032, %v3031
  %v3047 = vpack.c.b16 %v3034, %v3033
  %v3048 = vpack.c.b16 %v3036, %v3035
  %v3049 = vpack.c.b16 %v3038, %v3037
  %v3050 = vpack.c.b16 %v3040, %v3039
  %v3051 = vpack.c.b16 %v3042, %v3041
  %v3052 = vpack.c.b16 %v3044, %v3043
  %v3077 = vunpack.c.l.b16 %v2997
  %v3078 = vunpack.c.l.b16 %v2998
  %v3079 = vunpack.c.l.b16 %v2999
  %v3080 = vunpack.c.l.b16 %v3000
  %v3081 = vunpack.c.l.b16 %v3001
  %v3082 = vunpack.c.l.b16 %v3002
  %v3083 = vunpack.c.l.b16 %v3003
  %v3084 = vunpack.c.l.b16 %v3004
  %v3085 = vunpack.c.l.b16 %v3005
  %v3086 = vunpack.c.l.b16 %v3006
  %v3087 = vunpack.c.l.b16 %v3007
  %v3088 = vunpack.c.l.b16 %v3008
  %v3089 = vunpack.c.l.b16 %v3009
  %v3090 = vunpack.c.l.b16 %v3010
  %v3091 = vunpack.c.l.b16 %v3011
  %v3092 = vunpack.c.l.b16 %v3012
  %v3093 = vpack.c.b16 %v3078, %v3077
  %v3094 = vpack.c.b16 %v3080, %v3079
  %v3095 = vpack.c.b16 %v3082, %v3081
  %v3096 = vpack.c.b16 %v3084, %v3083
  %v3097 = vpack.c.b16 %v3086, %v3085
  %v3098 = vpack.c.b16 %v3088, %v3087
  %v3099 = vpack.c.b16 %v3090, %v3089
  %v3100 = vpack.c.b16 %v3092, %v3091
  %3109 = vmatprep.subr.bf16.mxu0 0
  %3110 = vmatpush1.bf16.msra.mxu0 %v3093
  %3111 = vmatprep.subr.bf16.mxu0 0
  %3112 = vmatpush1.bf16.msra.mxu0 %v3094
  %3113 = vmatprep.subr.bf16.mxu0 0
  %3114 = vmatpush1.bf16.msra.mxu0 %v3095
  %3115 = vmatprep.subr.bf16.mxu0 0
  %3116 = vmatpush1.bf16.msra.mxu0 %v3096
  %3117 = vmatprep.subr.bf16.mxu0 0
  %3118 = vmatpush1.bf16.msra.mxu0 %v3097
  %3119 = vmatprep.subr.bf16.mxu0 0
  %3120 = vmatpush1.bf16.msra.mxu0 %v3098
  %3121 = vmatprep.subr.bf16.mxu0 0
  %3122 = vmatpush1.bf16.msra.mxu0 %v3099
  %3123 = vmatprep.subr.bf16.mxu0 0
  %3124 = vmatpush1.bf16.msra.mxu0 %v3100
  %3125 = vmatprep.subr.bf16.mxu0 0
  %3126 = vmatpush1.bf16.msra.mxu0 0
  %3127 = vmatprep.subr.bf16.mxu0 0
  %3128 = vmatpush1.bf16.msra.mxu0 0
  %3129 = vmatprep.subr.bf16.mxu0 0
  %3130 = vmatpush1.bf16.msra.mxu0 0
  %3131 = vmatprep.subr.bf16.mxu0 0
  %3132 = vmatpush1.bf16.msra.mxu0 0
  %3133 = vmatprep.subr.bf16.mxu0 0
  %3134 = vmatpush1.bf16.msra.mxu0 0
  %3135 = vmatprep.subr.bf16.mxu0 0
  %3136 = vmatpush1.bf16.msra.mxu0 0
  %3137 = vmatprep.subr.bf16.mxu0 0
  %3138 = vmatpush1.bf16.msra.mxu0 0
  %3139 = vmatprep.subr.bf16.mxu0 0
  %3140 = vmatpush1.bf16.msra.mxu0 0
  %3141 = vmatprep.mubr.bf16.mxu0 0
  %3142 = vmatmul.mubr.bf16.gmra.mrb[0].mxu0 %v3045
  %v3143 = vpop.f32.mrb[0].mxu0
  %v3144 = vadd.f32 0.0, %v3143
  %v3145 = vpop.f32.mrb[0].mxu0
  %v3146 = vpop.f32.mrb[0].mxu0
  %v3147 = vadd.f32 0.0, %v3146
  %v3148 = vpop.f32.mrb[0].mxu0
  %3149 = vmatprep.mubr.bf16.mxu0 0
  %3150 = vmatmul.mubr.bf16.gmra.mrb[0].mxu0 %v3046
  %v3151 = vpop.f32.mrb[0].mxu0
  %v3152 = vadd.f32 0.0, %v3151
  %v3153 = vpop.f32.mrb[0].mxu0
  %v3154 = vpop.f32.mrb[0].mxu0
  %v3155 = vadd.f32 0.0, %v3154
  %v3156 = vpop.f32.mrb[0].mxu0
  %3157 = vmatprep.mubr.bf16.mxu0 0
  %3158 = vmatmul.mubr.bf16.gmra.mrb[0].mxu0 %v3047
  %v3159 = vpop.f32.mrb[0].mxu0
  %v3160 = vadd.f32 0.0, %v3159
  %v3161 = vpop.f32.mrb[0].mxu0
  %v3162 = vpop.f32.mrb[0].mxu0
  %v3163 = vadd.f32 0.0, %v3162
  %v3164 = vpop.f32.mrb[0].mxu0
  %3165 = vmatprep.mubr.bf16.mxu0 0
  %3166 = vmatmul.mubr.bf16.gmra.mrb[0].mxu0 %v3048
  %v3167 = vpop.f32.mrb[0].mxu0
  %v3168 = vadd.f32 0.0, %v3167
  %v3169 = vpop.f32.mrb[0].mxu0
  %v3170 = vpop.f32.mrb[0].mxu0
  %v3171 = vadd.f32 0.0, %v3170
  %v3172 = vpop.f32.mrb[0].mxu0
  %3173 = vmatprep.mubr.bf16.mxu0 0
  %3174 = vmatmul.mubr.bf16.gmra.mrb[0].mxu0 %v3049
  %v3175 = vpop.f32.mrb[0].mxu0
  %v3176 = vadd.f32 0.0, %v3175
  %v3177 = vpop.f32.mrb[0].mxu0
  %v3178 = vpop.f32.mrb[0].mxu0
  %v3179 = vadd.f32 0.0, %v3178
  %v3180 = vpop.f32.mrb[0].mxu0
  %3181 = vmatprep.mubr.bf16.mxu0 0
  %3182 = vmatmul.mubr.bf16.gmra.mrb[0].mxu0 %v3050
  %v3183 = vpop.f32.mrb[0].mxu0
  %v3184 = vadd.f32 0.0, %v3183
  %v3185 = vpop.f32.mrb[0].mxu0
  %v3186 = vpop.f32.mrb[0].mxu0
  %v3187 = vadd.f32 0.0, %v3186
  %v3188 = vpop.f32.mrb[0].mxu0
  %3189 = vmatprep.mubr.bf16.mxu0 0
  %3190 = vmatmul.mubr.bf16.gmra.mrb[0].mxu0 %v3051
  %v3191 = vpop.f32.mrb[0].mxu0
  %v3192 = vadd.f32 0.0, %v3191
  %v3193 = vpop.f32.mrb[0].mxu0
  %v3194 = vpop.f32.mrb[0].mxu0
  %v3195 = vadd.f32 0.0, %v3194
  %v3196 = vpop.f32.mrb[0].mxu0
  %3197 = vmatprep.mubr.bf16.mxu0 0
  %3198 = vmatmul.mubr.bf16.gmra.mrb[0].mxu0 %v3052
  %v3199 = vpop.f32.mrb[0].mxu0
  %v3200 = vadd.f32 0.0, %v3199
  %v3201 = vpop.f32.mrb[0].mxu0
  %v3202 = vpop.f32.mrb[0].mxu0
  %v3203 = vadd.f32 0.0, %v3202
  %v3204 = vpop.f32.mrb[0].mxu0
  %3205 = vdwg.mxu0
  %v3206 = vadd.f32 %v2485, %v3144
  %v3207 = vadd.f32 %v2486, %v3147
  %v3208 = vadd.f32 %v2487, %v3152
  %v3209 = vadd.f32 %v2488, %v3155
  %v3210 = vadd.f32 %v2489, %v3160
  %v3211 = vadd.f32 %v2490, %v3163
  %v3212 = vadd.f32 %v2491, %v3168
  %v3213 = vadd.f32 %v2492, %v3171
  %v3214 = vadd.f32 %v2493, %v3176
  %v3215 = vadd.f32 %v2494, %v3179
  %v3216 = vadd.f32 %v2495, %v3184
  %v3217 = vadd.f32 %v2496, %v3187
  %v3218 = vadd.f32 %v2497, %v3192
  %v3219 = vadd.f32 %v2498, %v3195
  %v3220 = vadd.f32 %v2499, %v3200
  %v3221 = vadd.f32 %v2500, %v3203
  %v3222 = vshrl.u32 %v632, 16
  %v3224 = vshrl.u32 %v634, 16
  %v3226 = vshrl.u32 %v636, 16
  %v3228 = vshrl.u32 %v638, 16
  %v3230 = vshrl.u32 %v640, 16
  %v3232 = vshrl.u32 %v642, 16
  %v3234 = vshrl.u32 %v644, 16
  %v3236 = vshrl.u32 %v646, 16
  %v3238 = vshrl.u32 %v648, 16
  %v3240 = vshrl.u32 %v650, 16
  %v3242 = vshrl.u32 %v652, 16
  %v3244 = vshrl.u32 %v654, 16
  %v3246 = vshrl.u32 %v656, 16
  %v3248 = vshrl.u32 %v658, 16
  %v3250 = vshrl.u32 %v660, 16
  %v3252 = vshrl.u32 %v662, 16
  %v3286 = vrot.slane %v3222, 1
  %v3287 = vrot.slane %v3224, 1
  %v3288 = vrot.slane %v3226, 1
  %v3289 = vrot.slane %v3228, 1
  %v3290 = vrot.slane %v3230, 1
  %v3291 = vrot.slane %v3232, 1
  %v3292 = vrot.slane %v3234, 1
  %v3293 = vrot.slane %v3236, 1
  %v3294 = vrot.slane %v3238, 1
  %v3295 = vrot.slane %v3240, 1
  %v3296 = vrot.slane %v3242, 1
  %v3297 = vrot.slane %v3244, 1
  %v3298 = vrot.slane %v3246, 1
  %v3299 = vrot.slane %v3248, 1
  %v3300 = vrot.slane %v3250, 1
  %v3301 = vrot.slane %v3252, 1
  %v3318 = vrot.slane %v3222, 2
  %v3319 = vrot.slane %v3224, 2
  %v3320 = vrot.slane %v3226, 2
  %v3321 = vrot.slane %v3228, 2
  %v3322 = vrot.slane %v3230, 2
  %v3323 = vrot.slane %v3232, 2
  %v3324 = vrot.slane %v3234, 2
  %v3325 = vrot.slane %v3236, 2
  %v3326 = vrot.slane %v3238, 2
  %v3327 = vrot.slane %v3240, 2
  %v3328 = vrot.slane %v3242, 2
  %v3329 = vrot.slane %v3244, 2
  %v3330 = vrot.slane %v3246, 2
  %v3331 = vrot.slane %v3248, 2
  %v3332 = vrot.slane %v3250, 2
  %v3333 = vrot.slane %v3252, 2
  %v3350 = vrot.slane %v3222, 3
  %v3351 = vrot.slane %v3224, 3
  %v3352 = vrot.slane %v3226, 3
  %v3353 = vrot.slane %v3228, 3
  %v3354 = vrot.slane %v3230, 3
  %v3355 = vrot.slane %v3232, 3
  %v3356 = vrot.slane %v3234, 3
  %v3357 = vrot.slane %v3236, 3
  %v3358 = vrot.slane %v3238, 3
  %v3359 = vrot.slane %v3240, 3
  %v3360 = vrot.slane %v3242, 3
  %v3361 = vrot.slane %v3244, 3
  %v3362 = vrot.slane %v3246, 3
  %v3363 = vrot.slane %v3248, 3
  %v3364 = vrot.slane %v3250, 3
  %v3365 = vrot.slane %v3252, 3
  %v3366 = vrot.slane %v632, 4
  %v3367 = vrot.slane %v634, 4
  %v3368 = vrot.slane %v636, 4
  %v3369 = vrot.slane %v638, 4
  %v3370 = vrot.slane %v640, 4
  %v3371 = vrot.slane %v642, 4
  %v3372 = vrot.slane %v644, 4
  %v3373 = vrot.slane %v646, 4
  %v3374 = vrot.slane %v648, 4
  %v3375 = vrot.slane %v650, 4
  %v3376 = vrot.slane %v652, 4
  %v3377 = vrot.slane %v654, 4
  %v3378 = vrot.slane %v656, 4
  %v3379 = vrot.slane %v658, 4
  %v3380 = vrot.slane %v660, 4
  %v3381 = vrot.slane %v662, 4
  %v3398 = vsel %vm630, %v3222, %v2597
  %v3399 = vsel %vm630, %v3224, %v2598
  %v3400 = vsel %vm630, %v3226, %v2599
  %v3401 = vsel %vm630, %v3228, %v2600
  %v3402 = vsel %vm630, %v3230, %v2601
  %v3403 = vsel %vm630, %v3232, %v2602
  %v3404 = vsel %vm630, %v3234, %v2603
  %v3405 = vsel %vm630, %v3236, %v2604
  %v3406 = vsel %vm630, %v3238, %v2605
  %v3407 = vsel %vm630, %v3240, %v2606
  %v3408 = vsel %vm630, %v3242, %v2607
  %v3409 = vsel %vm630, %v3244, %v2608
  %v3410 = vsel %vm630, %v3246, %v2609
  %v3411 = vsel %vm630, %v3248, %v2610
  %v3412 = vsel %vm630, %v3250, %v2611
  %v3413 = vsel %vm630, %v3252, %v2612
  %v3416 = vsel %vm937, %v3398, %v3286
  %v3420 = vsel %vm937, %v3399, %v3287
  %v3424 = vsel %vm937, %v3400, %v3288
  %v3428 = vsel %vm937, %v3401, %v3289
  %v3432 = vsel %vm937, %v3402, %v3290
  %v3436 = vsel %vm937, %v3403, %v3291
  %v3440 = vsel %vm937, %v3404, %v3292
  %v3444 = vsel %vm937, %v3405, %v3293
  %v3448 = vsel %vm937, %v3406, %v3294
  %v3452 = vsel %vm937, %v3407, %v3295
  %v3456 = vsel %vm937, %v3408, %v3296
  %v3460 = vsel %vm937, %v3409, %v3297
  %v3464 = vsel %vm937, %v3410, %v3298
  %v3468 = vsel %vm937, %v3411, %v3299
  %v3472 = vsel %vm937, %v3412, %v3300
  %v3476 = vsel %vm937, %v3413, %v3301
  %v3478 = vsel %vm1000, %v3416, %v2645
  %v3479 = vsel %vm1000, %v3420, %v2646
  %v3480 = vsel %vm1000, %v3424, %v2647
  %v3481 = vsel %vm1000, %v3428, %v2648
  %v3482 = vsel %vm1000, %v3432, %v2649
  %v3483 = vsel %vm1000, %v3436, %v2650
  %v3484 = vsel %vm1000, %v3440, %v2651
  %v3485 = vsel %vm1000, %v3444, %v2652
  %v3486 = vsel %vm1000, %v3448, %v2653
  %v3487 = vsel %vm1000, %v3452, %v2654
  %v3488 = vsel %vm1000, %v3456, %v2655
  %v3489 = vsel %vm1000, %v3460, %v2656
  %v3490 = vsel %vm1000, %v3464, %v2657
  %v3491 = vsel %vm1000, %v3468, %v2658
  %v3492 = vsel %vm1000, %v3472, %v2659
  %v3493 = vsel %vm1000, %v3476, %v2660
  %v3496 = vsel %vm1016, %v3478, %v3318
  %v3500 = vsel %vm1016, %v3479, %v3319
  %v3504 = vsel %vm1016, %v3480, %v3320
  %v3508 = vsel %vm1016, %v3481, %v3321
  %v3512 = vsel %vm1016, %v3482, %v3322
  %v3516 = vsel %vm1016, %v3483, %v3323
  %v3520 = vsel %vm1016, %v3484, %v3324
  %v3524 = vsel %vm1016, %v3485, %v3325
  %v3528 = vsel %vm1016, %v3486, %v3326
  %v3532 = vsel %vm1016, %v3487, %v3327
  %v3536 = vsel %vm1016, %v3488, %v3328
  %v3540 = vsel %vm1016, %v3489, %v3329
  %v3544 = vsel %vm1016, %v3490, %v3330
  %v3548 = vsel %vm1016, %v3491, %v3331
  %v3552 = vsel %vm1016, %v3492, %v3332
  %v3556 = vsel %vm1016, %v3493, %v3333
  %v3558 = vsel %vm1079, %v3496, %v2693
  %v3559 = vsel %vm1079, %v3500, %v2694
  %v3560 = vsel %vm1079, %v3504, %v2695
  %v3561 = vsel %vm1079, %v3508, %v2696
  %v3562 = vsel %vm1079, %v3512, %v2697
  %v3563 = vsel %vm1079, %v3516, %v2698
  %v3564 = vsel %vm1079, %v3520, %v2699
  %v3565 = vsel %vm1079, %v3524, %v2700
  %v3566 = vsel %vm1079, %v3528, %v2701
  %v3567 = vsel %vm1079, %v3532, %v2702
  %v3568 = vsel %vm1079, %v3536, %v2703
  %v3569 = vsel %vm1079, %v3540, %v2704
  %v3570 = vsel %vm1079, %v3544, %v2705
  %v3571 = vsel %vm1079, %v3548, %v2706
  %v3572 = vsel %vm1079, %v3552, %v2707
  %v3573 = vsel %vm1079, %v3556, %v2708
  %v3576 = vsel %vm1095, %v3558, %v3350
  %v3580 = vsel %vm1095, %v3559, %v3351
  %v3584 = vsel %vm1095, %v3560, %v3352
  %v3588 = vsel %vm1095, %v3561, %v3353
  %v3592 = vsel %vm1095, %v3562, %v3354
  %v3596 = vsel %vm1095, %v3563, %v3355
  %v3600 = vsel %vm1095, %v3564, %v3356
  %v3604 = vsel %vm1095, %v3565, %v3357
  %v3608 = vsel %vm1095, %v3566, %v3358
  %v3612 = vsel %vm1095, %v3567, %v3359
  %v3616 = vsel %vm1095, %v3568, %v3360
  %v3620 = vsel %vm1095, %v3569, %v3361
  %v3624 = vsel %vm1095, %v3570, %v3362
  %v3628 = vsel %vm1095, %v3571, %v3363
  %v3632 = vsel %vm1095, %v3572, %v3364
  %v3636 = vsel %vm1095, %v3573, %v3365
  %v3638 = vsel %vm1158, %v3576, %v3366
  %v3639 = vsel %vm1158, %v3580, %v3367
  %v3640 = vsel %vm1158, %v3584, %v3368
  %v3641 = vsel %vm1158, %v3588, %v3369
  %v3642 = vsel %vm1158, %v3592, %v3370
  %v3643 = vsel %vm1158, %v3596, %v3371
  %v3644 = vsel %vm1158, %v3600, %v3372
  %v3645 = vsel %vm1158, %v3604, %v3373
  %v3646 = vsel %vm1158, %v3608, %v3374
  %v3647 = vsel %vm1158, %v3612, %v3375
  %v3648 = vsel %vm1158, %v3616, %v3376
  %v3649 = vsel %vm1158, %v3620, %v3377
  %v3650 = vsel %vm1158, %v3624, %v3378
  %v3651 = vsel %vm1158, %v3628, %v3379
  %v3652 = vsel %vm1158, %v3632, %v3380
  %v3653 = vsel %vm1158, %v3636, %v3381
  %v3654 = vld [vmem:[%s3 + $0x100] sm:$0xf]
  %v3655 = vld [vmem:[%s3 + $0x104] sm:$0xf]
  %v3656 = vld [vmem:[%s3 + $0x108] sm:$0xf]
  %v3657 = vld [vmem:[%s3 + $0x10c] sm:$0xf]
  %v3658 = vld [vmem:[%s3 + $0x110] sm:$0xf]
  %v3659 = vld [vmem:[%s3 + $0x114] sm:$0xf]
  %v3660 = vld [vmem:[%s3 + $0x118] sm:$0xf]
  %v3661 = vld [vmem:[%s3 + $0x11c] sm:$0xf]
  %v3662 = vld [vmem:[%s3 + $0x120] sm:$0xf]
  %v3663 = vld [vmem:[%s3 + $0x124] sm:$0xf]
  %v3664 = vld [vmem:[%s3 + $0x128] sm:$0xf]
  %v3665 = vld [vmem:[%s3 + $0x12c] sm:$0xf]
  %v3666 = vld [vmem:[%s3 + $0x130] sm:$0xf]
  %v3667 = vld [vmem:[%s3 + $0x134] sm:$0xf]
  %v3668 = vld [vmem:[%s3 + $0x138] sm:$0xf]
  %v3669 = vld [vmem:[%s3 + $0x13c] sm:$0xf]
  %v3686 = vunpack.c.l.b16 %v3638
  %v3687 = vunpack.c.l.b16 %v3639
  %v3688 = vunpack.c.l.b16 %v3640
  %v3689 = vunpack.c.l.b16 %v3641
  %v3690 = vunpack.c.l.b16 %v3642
  %v3691 = vunpack.c.l.b16 %v3643
  %v3692 = vunpack.c.l.b16 %v3644
  %v3693 = vunpack.c.l.b16 %v3645
  %v3694 = vunpack.c.l.b16 %v3646
  %v3695 = vunpack.c.l.b16 %v3647
  %v3696 = vunpack.c.l.b16 %v3648
  %v3697 = vunpack.c.l.b16 %v3649
  %v3698 = vunpack.c.l.b16 %v3650
  %v3699 = vunpack.c.l.b16 %v3651
  %v3700 = vunpack.c.l.b16 %v3652
  %v3701 = vunpack.c.l.b16 %v3653
  %v3702 = vpack.c.b16 %v3687, %v3686
  %v3703 = vpack.c.b16 %v3689, %v3688
  %v3704 = vpack.c.b16 %v3691, %v3690
  %v3705 = vpack.c.b16 %v3693, %v3692
  %v3706 = vpack.c.b16 %v3695, %v3694
  %v3707 = vpack.c.b16 %v3697, %v3696
  %v3708 = vpack.c.b16 %v3699, %v3698
  %v3709 = vpack.c.b16 %v3701, %v3700
  %v3734 = vunpack.c.l.b16 %v3654
  %v3735 = vunpack.c.l.b16 %v3655
  %v3736 = vunpack.c.l.b16 %v3656
  %v3737 = vunpack.c.l.b16 %v3657
  %v3738 = vunpack.c.l.b16 %v3658
  %v3739 = vunpack.c.l.b16 %v3659
  %v3740 = vunpack.c.l.b16 %v3660
  %v3741 = vunpack.c.l.b16 %v3661
  %v3742 = vunpack.c.l.b16 %v3662
  %v3743 = vunpack.c.l.b16 %v3663
  %v3744 = vunpack.c.l.b16 %v3664
  %v3745 = vunpack.c.l.b16 %v3665
  %v3746 = vunpack.c.l.b16 %v3666
  %v3747 = vunpack.c.l.b16 %v3667
  %v3748 = vunpack.c.l.b16 %v3668
  %v3749 = vunpack.c.l.b16 %v3669
  %v3750 = vpack.c.b16 %v3735, %v3734
  %v3751 = vpack.c.b16 %v3737, %v3736
  %v3752 = vpack.c.b16 %v3739, %v3738
  %v3753 = vpack.c.b16 %v3741, %v3740
  %v3754 = vpack.c.b16 %v3743, %v3742
  %v3755 = vpack.c.b16 %v3745, %v3744
  %v3756 = vpack.c.b16 %v3747, %v3746
  %v3757 = vpack.c.b16 %v3749, %v3748
  %3766 = vmatprep.subr.bf16.mxu0 0
  %3767 = vmatpush1.bf16.msra.mxu0 %v3750
  %3768 = vmatprep.subr.bf16.mxu0 0
  %3769 = vmatpush1.bf16.msra.mxu0 %v3751
  %3770 = vmatprep.subr.bf16.mxu0 0
  %3771 = vmatpush1.bf16.msra.mxu0 %v3752
  %3772 = vmatprep.subr.bf16.mxu0 0
  %3773 = vmatpush1.bf16.msra.mxu0 %v3753
  %3774 = vmatprep.subr.bf16.mxu0 0
  %3775 = vmatpush1.bf16.msra.mxu0 %v3754
  %3776 = vmatprep.subr.bf16.mxu0 0
  %3777 = vmatpush1.bf16.msra.mxu0 %v3755
  %3778 = vmatprep.subr.bf16.mxu0 0
  %3779 = vmatpush1.bf16.msra.mxu0 %v3756
  %3780 = vmatprep.subr.bf16.mxu0 0
  %3781 = vmatpush1.bf16.msra.mxu0 %v3757
  %3782 = vmatprep.subr.bf16.mxu0 0
  %3783 = vmatpush1.bf16.msra.mxu0 0
  %3784 = vmatprep.subr.bf16.mxu0 0
  %3785 = vmatpush1.bf16.msra.mxu0 0
  %3786 = vmatprep.subr.bf16.mxu0 0
  %3787 = vmatpush1.bf16.msra.mxu0 0
  %3788 = vmatprep.subr.bf16.mxu0 0
  %3789 = vmatpush1.bf16.msra.mxu0 0
  %3790 = vmatprep.subr.bf16.mxu0 0
  %3791 = vmatpush1.bf16.msra.mxu0 0
  %3792 = vmatprep.subr.bf16.mxu0 0
  %3793 = vmatpush1.bf16.msra.mxu0 0
  %3794 = vmatprep.subr.bf16.mxu0 0
  %3795 = vmatpush1.bf16.msra.mxu0 0
  %3796 = vmatprep.subr.bf16.mxu0 0
  %3797 = vmatpush1.bf16.msra.mxu0 0
  %3798 = vmatprep.mubr.bf16.mxu0 0
  %3799 = vmatmul.mubr.bf16.gmra.mrb[0].mxu0 %v3702
  %v3800 = vpop.f32.mrb[0].mxu0
  %v3801 = vadd.f32 0.0, %v3800
  %v3802 = vpop.f32.mrb[0].mxu0
  %v3803 = vpop.f32.mrb[0].mxu0
  %v3804 = vadd.f32 0.0, %v3803
  %v3805 = vpop.f32.mrb[0].mxu0
  %3806 = vmatprep.mubr.bf16.mxu0 0
  %3807 = vmatmul.mubr.bf16.gmra.mrb[0].mxu0 %v3703
  %v3808 = vpop.f32.mrb[0].mxu0
  %v3809 = vadd.f32 0.0, %v3808
  %v3810 = vpop.f32.mrb[0].mxu0
  %v3811 = vpop.f32.mrb[0].mxu0
  %v3812 = vadd.f32 0.0, %v3811
  %v3813 = vpop.f32.mrb[0].mxu0
  %3814 = vmatprep.mubr.bf16.mxu0 0
  %3815 = vmatmul.mubr.bf16.gmra.mrb[0].mxu0 %v3704
  %v3816 = vpop.f32.mrb[0].mxu0
  %v3817 = vadd.f32 0.0, %v3816
  %v3818 = vpop.f32.mrb[0].mxu0
  %v3819 = vpop.f32.mrb[0].mxu0
  %v3820 = vadd.f32 0.0, %v3819
  %v3821 = vpop.f32.mrb[0].mxu0
  %3822 = vmatprep.mubr.bf16.mxu0 0
  %3823 = vmatmul.mubr.bf16.gmra.mrb[0].mxu0 %v3705
  %v3824 = vpop.f32.mrb[0].mxu0
  %v3825 = vadd.f32 0.0, %v3824
  %v3826 = vpop.f32.mrb[0].mxu0
  %v3827 = vpop.f32.mrb[0].mxu0
  %v3828 = vadd.f32 0.0, %v3827
  %v3829 = vpop.f32.mrb[0].mxu0
  %3830 = vmatprep.mubr.bf16.mxu0 0
  %3831 = vmatmul.mubr.bf16.gmra.mrb[0].mxu0 %v3706
  %v3832 = vpop.f32.mrb[0].mxu0
  %v3833 = vadd.f32 0.0, %v3832
  %v3834 = vpop.f32.mrb[0].mxu0
  %v3835 = vpop.f32.mrb[0].mxu0
  %v3836 = vadd.f32 0.0, %v3835
  %v3837 = vpop.f32.mrb[0].mxu0
  %3838 = vmatprep.mubr.bf16.mxu0 0
  %3839 = vmatmul.mubr.bf16.gmra.mrb[0].mxu0 %v3707
  %v3840 = vpop.f32.mrb[0].mxu0
  %v3841 = vadd.f32 0.0, %v3840
  %v3842 = vpop.f32.mrb[0].mxu0
  %v3843 = vpop.f32.mrb[0].mxu0
  %v3844 = vadd.f32 0.0, %v3843
  %v3845 = vpop.f32.mrb[0].mxu0
  %3846 = vmatprep.mubr.bf16.mxu0 0
  %3847 = vmatmul.mubr.bf16.gmra.mrb[0].mxu0 %v3708
  %v3848 = vpop.f32.mrb[0].mxu0
  %v3849 = vadd.f32 0.0, %v3848
  %v3850 = vpop.f32.mrb[0].mxu0
  %v3851 = vpop.f32.mrb[0].mxu0
  %v3852 = vadd.f32 0.0, %v3851
  %v3853 = vpop.f32.mrb[0].mxu0
  %3854 = vmatprep.mubr.bf16.mxu0 0
  %3855 = vmatmul.mubr.bf16.gmra.mrb[0].mxu0 %v3709
  %v3856 = vpop.f32.mrb[0].mxu0
  %v3857 = vadd.f32 0.0, %v3856
  %v3858 = vpop.f32.mrb[0].mxu0
  %v3859 = vpop.f32.mrb[0].mxu0
  %v3860 = vadd.f32 0.0, %v3859
  %v3861 = vpop.f32.mrb[0].mxu0
  %3862 = vdwg.mxu0
  %v3863 = vadd.f32 %v3206, %v3801
  %v3864 = vadd.f32 %v3207, %v3804
  %v3865 = vadd.f32 %v3208, %v3809
  %v3866 = vadd.f32 %v3209, %v3812
  %v3867 = vadd.f32 %v3210, %v3817
  %v3868 = vadd.f32 %v3211, %v3820
  %v3869 = vadd.f32 %v3212, %v3825
  %v3870 = vadd.f32 %v3213, %v3828
  %v3871 = vadd.f32 %v3214, %v3833
  %v3872 = vadd.f32 %v3215, %v3836
  %v3873 = vadd.f32 %v3216, %v3841
  %v3874 = vadd.f32 %v3217, %v3844
  %v3875 = vadd.f32 %v3218, %v3849
  %v3876 = vadd.f32 %v3219, %v3852
  %v3877 = vadd.f32 %v3220, %v3857
  %v3878 = vadd.f32 %v3221, %v3860
  %v3880 = vshll.u32 %v665, 16
  %v3882 = vrot.slane %v3880, 5
  %v3884 = vshll.u32 %v667, 16
  %v3886 = vrot.slane %v3884, 5
  %v3888 = vshll.u32 %v669, 16
  %v3890 = vrot.slane %v3888, 5
  %v3892 = vshll.u32 %v671, 16
  %v3894 = vrot.slane %v3892, 5
  %v3896 = vshll.u32 %v673, 16
  %v3898 = vrot.slane %v3896, 5
  %v3900 = vshll.u32 %v675, 16
  %v3902 = vrot.slane %v3900, 5
  %v3904 = vshll.u32 %v677, 16
  %v3906 = vrot.slane %v3904, 5
  %v3908 = vshll.u32 %v679, 16
  %v3910 = vrot.slane %v3908, 5
  %v3912 = vshll.u32 %v681, 16
  %v3914 = vrot.slane %v3912, 5
  %v3916 = vshll.u32 %v683, 16
  %v3918 = vrot.slane %v3916, 5
  %v3920 = vshll.u32 %v685, 16
  %v3922 = vrot.slane %v3920, 5
  %v3924 = vshll.u32 %v687, 16
  %v3926 = vrot.slane %v3924, 5
  %v3928 = vshll.u32 %v689, 16
  %v3930 = vrot.slane %v3928, 5
  %v3932 = vshll.u32 %v691, 16
  %v3934 = vrot.slane %v3932, 5
  %v3936 = vshll.u32 %v693, 16
  %v3938 = vrot.slane %v3936, 5
  %v3940 = vshll.u32 %v695, 16
  %v3942 = vrot.slane %v3940, 5
  %v3959 = vsel %vm630, %v2597, %v2613
  %v3960 = vsel %vm630, %v2598, %v2614
  %v3961 = vsel %vm630, %v2599, %v2615
  %v3962 = vsel %vm630, %v2600, %v2616
  %v3963 = vsel %vm630, %v2601, %v2617
  %v3964 = vsel %vm630, %v2602, %v2618
  %v3965 = vsel %vm630, %v2603, %v2619
  %v3966 = vsel %vm630, %v2604, %v2620
  %v3967 = vsel %vm630, %v2605, %v2621
  %v3968 = vsel %vm630, %v2606, %v2622
  %v3969 = vsel %vm630, %v2607, %v2623
  %v3970 = vsel %vm630, %v2608, %v2624
  %v3971 = vsel %vm630, %v2609, %v2625
  %v3972 = vsel %vm630, %v2610, %v2626
  %v3973 = vsel %vm630, %v2611, %v2627
  %v3974 = vsel %vm630, %v2612, %v2628
  %v3976 = vsel %vm937, %v3959, %v2645
  %v3979 = vsel %vm937, %v3960, %v2646
  %v3982 = vsel %vm937, %v3961, %v2647
  %v3985 = vsel %vm937, %v3962, %v2648
  %v3988 = vsel %vm937, %v3963, %v2649
  %v3991 = vsel %vm937, %v3964, %v2650
  %v3994 = vsel %vm937, %v3965, %v2651
  %v3997 = vsel %vm937, %v3966, %v2652
  %v4000 = vsel %vm937, %v3967, %v2653
  %v4003 = vsel %vm937, %v3968, %v2654
  %v4006 = vsel %vm937, %v3969, %v2655
  %v4009 = vsel %vm937, %v3970, %v2656
  %v4012 = vsel %vm937, %v3971, %v2657
  %v4015 = vsel %vm937, %v3972, %v2658
  %v4018 = vsel %vm937, %v3973, %v2659
  %v4021 = vsel %vm937, %v3974, %v2660
  %v4023 = vsel %vm1000, %v3976, %v2661
  %v4024 = vsel %vm1000, %v3979, %v2662
  %v4025 = vsel %vm1000, %v3982, %v2663
  %v4026 = vsel %vm1000, %v3985, %v2664
  %v4027 = vsel %vm1000, %v3988, %v2665
  %v4028 = vsel %vm1000, %v3991, %v2666
  %v4029 = vsel %vm1000, %v3994, %v2667
  %v4030 = vsel %vm1000, %v3997, %v2668
  %v4031 = vsel %vm1000, %v4000, %v2669
  %v4032 = vsel %vm1000, %v4003, %v2670
  %v4033 = vsel %vm1000, %v4006, %v2671
  %v4034 = vsel %vm1000, %v4009, %v2672
  %v4035 = vsel %vm1000, %v4012, %v2673
  %v4036 = vsel %vm1000, %v4015, %v2674
  %v4037 = vsel %vm1000, %v4018, %v2675
  %v4038 = vsel %vm1000, %v4021, %v2676
  %v4040 = vsel %vm1016, %v4023, %v2693
  %v4043 = vsel %vm1016, %v4024, %v2694
  %v4046 = vsel %vm1016, %v4025, %v2695
  %v4049 = vsel %vm1016, %v4026, %v2696
  %v4052 = vsel %vm1016, %v4027, %v2697
  %v4055 = vsel %vm1016, %v4028, %v2698
  %v4058 = vsel %vm1016, %v4029, %v2699
  %v4061 = vsel %vm1016, %v4030, %v2700
  %v4064 = vsel %vm1016, %v4031, %v2701
  %v4067 = vsel %vm1016, %v4032, %v2702
  %v4070 = vsel %vm1016, %v4033, %v2703
  %v4073 = vsel %vm1016, %v4034, %v2704
  %v4076 = vsel %vm1016, %v4035, %v2705
  %v4079 = vsel %vm1016, %v4036, %v2706
  %v4082 = vsel %vm1016, %v4037, %v2707
  %v4085 = vsel %vm1016, %v4038, %v2708
  %v4087 = vsel %vm1079, %v4040, %v2709
  %v4088 = vsel %vm1079, %v4043, %v2710
  %v4089 = vsel %vm1079, %v4046, %v2711
  %v4090 = vsel %vm1079, %v4049, %v2712
  %v4091 = vsel %vm1079, %v4052, %v2713
  %v4092 = vsel %vm1079, %v4055, %v2714
  %v4093 = vsel %vm1079, %v4058, %v2715
  %v4094 = vsel %vm1079, %v4061, %v2716
  %v4095 = vsel %vm1079, %v4064, %v2717
  %v4096 = vsel %vm1079, %v4067, %v2718
  %v4097 = vsel %vm1079, %v4070, %v2719
  %v4098 = vsel %vm1079, %v4073, %v2720
  %v4099 = vsel %vm1079, %v4076, %v2721
  %v4100 = vsel %vm1079, %v4079, %v2722
  %v4101 = vsel %vm1079, %v4082, %v2723
  %v4102 = vsel %vm1079, %v4085, %v2724
  %v4105 = vsel %vm1095, %v4087, %v3366
  %v4109 = vsel %vm1095, %v4088, %v3367
  %v4113 = vsel %vm1095, %v4089, %v3368
  %v4117 = vsel %vm1095, %v4090, %v3369
  %v4121 = vsel %vm1095, %v4091, %v3370
  %v4125 = vsel %vm1095, %v4092, %v3371
  %v4129 = vsel %vm1095, %v4093, %v3372
  %v4133 = vsel %vm1095, %v4094, %v3373
  %v4137 = vsel %vm1095, %v4095, %v3374
  %v4141 = vsel %vm1095, %v4096, %v3375
  %v4145 = vsel %vm1095, %v4097, %v3376
  %v4149 = vsel %vm1095, %v4098, %v3377
  %v4153 = vsel %vm1095, %v4099, %v3378
  %v4157 = vsel %vm1095, %v4100, %v3379
  %v4161 = vsel %vm1095, %v4101, %v3380
  %v4165 = vsel %vm1095, %v4102, %v3381
  %v4167 = vsel %vm1158, %v4105, %v3882
  %v4168 = vsel %vm1158, %v4109, %v3886
  %v4169 = vsel %vm1158, %v4113, %v3890
  %v4170 = vsel %vm1158, %v4117, %v3894
  %v4171 = vsel %vm1158, %v4121, %v3898
  %v4172 = vsel %vm1158, %v4125, %v3902
  %v4173 = vsel %vm1158, %v4129, %v3906
  %v4174 = vsel %vm1158, %v4133, %v3910
  %v4175 = vsel %vm1158, %v4137, %v3914
  %v4176 = vsel %vm1158, %v4141, %v3918
  %v4177 = vsel %vm1158, %v4145, %v3922
  %v4178 = vsel %vm1158, %v4149, %v3926
  %v4179 = vsel %vm1158, %v4153, %v3930
  %v4180 = vsel %vm1158, %v4157, %v3934
  %v4181 = vsel %vm1158, %v4161, %v3938
  %v4182 = vsel %vm1158, %v4165, %v3942
  %v4183 = vld [vmem:[%s3 + $0x140] sm:$0xf]
  %v4184 = vld [vmem:[%s3 + $0x144] sm:$0xf]
  %v4185 = vld [vmem:[%s3 + $0x148] sm:$0xf]
  %v4186 = vld [vmem:[%s3 + $0x14c] sm:$0xf]
  %v4187 = vld [vmem:[%s3 + $0x150] sm:$0xf]
  %v4188 = vld [vmem:[%s3 + $0x154] sm:$0xf]
  %v4189 = vld [vmem:[%s3 + $0x158] sm:$0xf]
  %v4190 = vld [vmem:[%s3 + $0x15c] sm:$0xf]
  %v4191 = vld [vmem:[%s3 + $0x160] sm:$0xf]
  %v4192 = vld [vmem:[%s3 + $0x164] sm:$0xf]
  %v4193 = vld [vmem:[%s3 + $0x168] sm:$0xf]
  %v4194 = vld [vmem:[%s3 + $0x16c] sm:$0xf]
  %v4195 = vld [vmem:[%s3 + $0x170] sm:$0xf]
  %v4196 = vld [vmem:[%s3 + $0x174] sm:$0xf]
  %v4197 = vld [vmem:[%s3 + $0x178] sm:$0xf]
  %v4198 = vld [vmem:[%s3 + $0x17c] sm:$0xf]
  %v4215 = vunpack.c.l.b16 %v4167
  %v4216 = vunpack.c.l.b16 %v4168
  %v4217 = vunpack.c.l.b16 %v4169
  %v4218 = vunpack.c.l.b16 %v4170
  %v4219 = vunpack.c.l.b16 %v4171
  %v4220 = vunpack.c.l.b16 %v4172
  %v4221 = vunpack.c.l.b16 %v4173
  %v4222 = vunpack.c.l.b16 %v4174
  %v4223 = vunpack.c.l.b16 %v4175
  %v4224 = vunpack.c.l.b16 %v4176
  %v4225 = vunpack.c.l.b16 %v4177
  %v4226 = vunpack.c.l.b16 %v4178
  %v4227 = vunpack.c.l.b16 %v4179
  %v4228 = vunpack.c.l.b16 %v4180
  %v4229 = vunpack.c.l.b16 %v4181
  %v4230 = vunpack.c.l.b16 %v4182
  %v4231 = vpack.c.b16 %v4216, %v4215
  %v4232 = vpack.c.b16 %v4218, %v4217
  %v4233 = vpack.c.b16 %v4220, %v4219
  %v4234 = vpack.c.b16 %v4222, %v4221
  %v4235 = vpack.c.b16 %v4224, %v4223
  %v4236 = vpack.c.b16 %v4226, %v4225
  %v4237 = vpack.c.b16 %v4228, %v4227
  %v4238 = vpack.c.b16 %v4230, %v4229
  %v4263 = vunpack.c.l.b16 %v4183
  %v4264 = vunpack.c.l.b16 %v4184
  %v4265 = vunpack.c.l.b16 %v4185
  %v4266 = vunpack.c.l.b16 %v4186
  %v4267 = vunpack.c.l.b16 %v4187
  %v4268 = vunpack.c.l.b16 %v4188
  %v4269 = vunpack.c.l.b16 %v4189
  %v4270 = vunpack.c.l.b16 %v4190
  %v4271 = vunpack.c.l.b16 %v4191
  %v4272 = vunpack.c.l.b16 %v4192
  %v4273 = vunpack.c.l.b16 %v4193
  %v4274 = vunpack.c.l.b16 %v4194
  %v4275 = vunpack.c.l.b16 %v4195
  %v4276 = vunpack.c.l.b16 %v4196
  %v4277 = vunpack.c.l.b16 %v4197
  %v4278 = vunpack.c.l.b16 %v4198
  %v4279 = vpack.c.b16 %v4264, %v4263
  %v4280 = vpack.c.b16 %v4266, %v4265
  %v4281 = vpack.c.b16 %v4268, %v4267
  %v4282 = vpack.c.b16 %v4270, %v4269
  %v4283 = vpack.c.b16 %v4272, %v4271
  %v4284 = vpack.c.b16 %v4274, %v4273
  %v4285 = vpack.c.b16 %v4276, %v4275
  %v4286 = vpack.c.b16 %v4278, %v4277
  %4295 = vmatprep.subr.bf16.mxu0 0
  %4296 = vmatpush1.bf16.msra.mxu0 %v4279
  %4297 = vmatprep.subr.bf16.mxu0 0
  %4298 = vmatpush1.bf16.msra.mxu0 %v4280
  %4299 = vmatprep.subr.bf16.mxu0 0
  %4300 = vmatpush1.bf16.msra.mxu0 %v4281
  %4301 = vmatprep.subr.bf16.mxu0 0
  %4302 = vmatpush1.bf16.msra.mxu0 %v4282
  %4303 = vmatprep.subr.bf16.mxu0 0
  %4304 = vmatpush1.bf16.msra.mxu0 %v4283
  %4305 = vmatprep.subr.bf16.mxu0 0
  %4306 = vmatpush1.bf16.msra.mxu0 %v4284
  %4307 = vmatprep.subr.bf16.mxu0 0
  %4308 = vmatpush1.bf16.msra.mxu0 %v4285
  %4309 = vmatprep.subr.bf16.mxu0 0
  %4310 = vmatpush1.bf16.msra.mxu0 %v4286
  %4311 = vmatprep.subr.bf16.mxu0 0
  %4312 = vmatpush1.bf16.msra.mxu0 0
  %4313 = vmatprep.subr.bf16.mxu0 0
  %4314 = vmatpush1.bf16.msra.mxu0 0
  %4315 = vmatprep.subr.bf16.mxu0 0
  %4316 = vmatpush1.bf16.msra.mxu0 0
  %4317 = vmatprep.subr.bf16.mxu0 0
  %4318 = vmatpush1.bf16.msra.mxu0 0
  %4319 = vmatprep.subr.bf16.mxu0 0
  %4320 = vmatpush1.bf16.msra.mxu0 0
  %4321 = vmatprep.subr.bf16.mxu0 0
  %4322 = vmatpush1.bf16.msra.mxu0 0
  %4323 = vmatprep.subr.bf16.mxu0 0
  %4324 = vmatpush1.bf16.msra.mxu0 0
  %4325 = vmatprep.subr.bf16.mxu0 0
  %4326 = vmatpush1.bf16.msra.mxu0 0
  %4327 = vmatprep.mubr.bf16.mxu0 0
  %4328 = vmatmul.mubr.bf16.gmra.mrb[0].mxu0 %v4231
  %v4329 = vpop.f32.mrb[0].mxu0
  %v4330 = vadd.f32 0.0, %v4329
  %v4331 = vpop.f32.mrb[0].mxu0
  %v4332 = vpop.f32.mrb[0].mxu0
  %v4333 = vadd.f32 0.0, %v4332
  %v4334 = vpop.f32.mrb[0].mxu0
  %4335 = vmatprep.mubr.bf16.mxu0 0
  %4336 = vmatmul.mubr.bf16.gmra.mrb[0].mxu0 %v4232
  %v4337 = vpop.f32.mrb[0].mxu0
  %v4338 = vadd.f32 0.0, %v4337
  %v4339 = vpop.f32.mrb[0].mxu0
  %v4340 = vpop.f32.mrb[0].mxu0
  %v4341 = vadd.f32 0.0, %v4340
  %v4342 = vpop.f32.mrb[0].mxu0
  %4343 = vmatprep.mubr.bf16.mxu0 0
  %4344 = vmatmul.mubr.bf16.gmra.mrb[0].mxu0 %v4233
  %v4345 = vpop.f32.mrb[0].mxu0
  %v4346 = vadd.f32 0.0, %v4345
  %v4347 = vpop.f32.mrb[0].mxu0
  %v4348 = vpop.f32.mrb[0].mxu0
  %v4349 = vadd.f32 0.0, %v4348
  %v4350 = vpop.f32.mrb[0].mxu0
  %4351 = vmatprep.mubr.bf16.mxu0 0
  %4352 = vmatmul.mubr.bf16.gmra.mrb[0].mxu0 %v4234
  %v4353 = vpop.f32.mrb[0].mxu0
  %v4354 = vadd.f32 0.0, %v4353
  %v4355 = vpop.f32.mrb[0].mxu0
  %v4356 = vpop.f32.mrb[0].mxu0
  %v4357 = vadd.f32 0.0, %v4356
  %v4358 = vpop.f32.mrb[0].mxu0
  %4359 = vmatprep.mubr.bf16.mxu0 0
  %4360 = vmatmul.mubr.bf16.gmra.mrb[0].mxu0 %v4235
  %v4361 = vpop.f32.mrb[0].mxu0
  %v4362 = vadd.f32 0.0, %v4361
  %v4363 = vpop.f32.mrb[0].mxu0
  %v4364 = vpop.f32.mrb[0].mxu0
  %v4365 = vadd.f32 0.0, %v4364
  %v4366 = vpop.f32.mrb[0].mxu0
  %4367 = vmatprep.mubr.bf16.mxu0 0
  %4368 = vmatmul.mubr.bf16.gmra.mrb[0].mxu0 %v4236
  %v4369 = vpop.f32.mrb[0].mxu0
  %v4370 = vadd.f32 0.0, %v4369
  %v4371 = vpop.f32.mrb[0].mxu0
  %v4372 = vpop.f32.mrb[0].mxu0
  %v4373 = vadd.f32 0.0, %v4372
  %v4374 = vpop.f32.mrb[0].mxu0
  %4375 = vmatprep.mubr.bf16.mxu0 0
  %4376 = vmatmul.mubr.bf16.gmra.mrb[0].mxu0 %v4237
  %v4377 = vpop.f32.mrb[0].mxu0
  %v4378 = vadd.f32 0.0, %v4377
  %v4379 = vpop.f32.mrb[0].mxu0
  %v4380 = vpop.f32.mrb[0].mxu0
  %v4381 = vadd.f32 0.0, %v4380
  %v4382 = vpop.f32.mrb[0].mxu0
  %4383 = vmatprep.mubr.bf16.mxu0 0
  %4384 = vmatmul.mubr.bf16.gmra.mrb[0].mxu0 %v4238
  %v4385 = vpop.f32.mrb[0].mxu0
  %v4386 = vadd.f32 0.0, %v4385
  %v4387 = vpop.f32.mrb[0].mxu0
  %v4388 = vpop.f32.mrb[0].mxu0
  %v4389 = vadd.f32 0.0, %v4388
  %v4390 = vpop.f32.mrb[0].mxu0
  %4391 = vdwg.mxu0
  %v4392 = vadd.f32 %v3863, %v4330
  %v4393 = vadd.f32 %v3864, %v4333
  %v4394 = vadd.f32 %v3865, %v4338
  %v4395 = vadd.f32 %v3866, %v4341
  %v4396 = vadd.f32 %v3867, %v4346
  %v4397 = vadd.f32 %v3868, %v4349
  %v4398 = vadd.f32 %v3869, %v4354
  %v4399 = vadd.f32 %v3870, %v4357
  %v4400 = vadd.f32 %v3871, %v4362
  %v4401 = vadd.f32 %v3872, %v4365
  %v4402 = vadd.f32 %v3873, %v4370
  %v4403 = vadd.f32 %v3874, %v4373
  %v4404 = vadd.f32 %v3875, %v4378
  %v4405 = vadd.f32 %v3876, %v4381
  %v4406 = vadd.f32 %v3877, %v4386
  %v4407 = vadd.f32 %v3878, %v4389
  %v4409 = vshll.u32 %v647, 16
  %v4411 = vrot.slane %v4409, 1
  %v4413 = vshll.u32 %v663, 16
  %v4415 = vrot.slane %v4413, 1
  %v4420 = vrot.slane %v647, 1
  %v4421 = vrot.slane %v663, 1
  %v4422 = vrot.slane %v4409, 2
  %v4423 = vrot.slane %v4413, 2
  %v4426 = vrot.slane %v647, 2
  %v4427 = vrot.slane %v663, 2
  %v4428 = vrot.slane %v4409, 3
  %v4429 = vrot.slane %v4413, 3
  %v4432 = vrot.slane %v647, 3
  %v4433 = vrot.slane %v663, 3
  %v4434 = vrot.slane %v4409, 4
  %v4435 = vrot.slane %v4413, 4
  %v4438 = vsel %vm630, %v647, %v4411
  %v4439 = vsel %vm630, %v663, %v4415
  %v4442 = vsel %vm937, %v4438, %v4420
  %v4446 = vsel %vm937, %v4439, %v4421
  %v4448 = vsel %vm1000, %v4442, %v4422
  %v4449 = vsel %vm1000, %v4446, %v4423
  %v4452 = vsel %vm1016, %v4448, %v4426
  %v4456 = vsel %vm1016, %v4449, %v4427
  %v4458 = vsel %vm1079, %v4452, %v4428
  %v4459 = vsel %vm1079, %v4456, %v4429
  %v4462 = vsel %vm1095, %v4458, %v4432
  %v4466 = vsel %vm1095, %v4459, %v4433
  %v4468 = vsel %vm1158, %v4462, %v4434
  %v4469 = vsel %vm1158, %v4466, %v4435
  %v4470 = vld [vmem:[%s3 + $0x180] sm:$0xf]
  %v4471 = vld [vmem:[%s3 + $0x184] sm:$0xf]
  %v4472 = vld [vmem:[%s3 + $0x188] sm:$0xf]
  %v4473 = vld [vmem:[%s3 + $0x18c] sm:$0xf]
  %v4474 = vld [vmem:[%s3 + $0x190] sm:$0xf]
  %v4475 = vld [vmem:[%s3 + $0x194] sm:$0xf]
  %v4476 = vld [vmem:[%s3 + $0x198] sm:$0xf]
  %v4477 = vld [vmem:[%s3 + $0x19c] sm:$0xf]
  %v4478 = vld [vmem:[%s3 + $0x1a0] sm:$0xf]
  %v4479 = vld [vmem:[%s3 + $0x1a4] sm:$0xf]
  %v4480 = vld [vmem:[%s3 + $0x1a8] sm:$0xf]
  %v4481 = vld [vmem:[%s3 + $0x1ac] sm:$0xf]
  %v4482 = vld [vmem:[%s3 + $0x1b0] sm:$0xf]
  %v4483 = vld [vmem:[%s3 + $0x1b4] sm:$0xf]
  %v4484 = vld [vmem:[%s3 + $0x1b8] sm:$0xf]
  %v4485 = vld [vmem:[%s3 + $0x1bc] sm:$0xf]
  %v4488 = vunpack.c.l.b16 %v4468
  %v4489 = vunpack.c.l.b16 %v4469
  %v4490 = vpack.c.b16 %v1819, %v1818
  %v4491 = vpack.c.b16 %v1821, %v1820
  %v4492 = vpack.c.b16 %v1823, %v1822
  %v4493 = vpack.c.b16 %v4488, %v1824
  %v4494 = vpack.c.b16 %v1826, %v1825
  %v4495 = vpack.c.b16 %v1828, %v1827
  %v4496 = vpack.c.b16 %v1830, %v1829
  %v4497 = vpack.c.b16 %v4489, %v1831
  %v4522 = vunpack.c.l.b16 %v4470
  %v4523 = vunpack.c.l.b16 %v4471
  %v4524 = vunpack.c.l.b16 %v4472
  %v4525 = vunpack.c.l.b16 %v4473
  %v4526 = vunpack.c.l.b16 %v4474
  %v4527 = vunpack.c.l.b16 %v4475
  %v4528 = vunpack.c.l.b16 %v4476
  %v4529 = vunpack.c.l.b16 %v4477
  %v4530 = vunpack.c.l.b16 %v4478
  %v4531 = vunpack.c.l.b16 %v4479
  %v4532 = vunpack.c.l.b16 %v4480
  %v4533 = vunpack.c.l.b16 %v4481
  %v4534 = vunpack.c.l.b16 %v4482
  %v4535 = vunpack.c.l.b16 %v4483
  %v4536 = vunpack.c.l.b16 %v4484
  %v4537 = vunpack.c.l.b16 %v4485
  %v4538 = vpack.c.b16 %v4523, %v4522
  %v4539 = vpack.c.b16 %v4525, %v4524
  %v4540 = vpack.c.b16 %v4527, %v4526
  %v4541 = vpack.c.b16 %v4529, %v4528
  %v4542 = vpack.c.b16 %v4531, %v4530
  %v4543 = vpack.c.b16 %v4533, %v4532
  %v4544 = vpack.c.b16 %v4535, %v4534
  %v4545 = vpack.c.b16 %v4537, %v4536
  %4554 = vmatprep.subr.bf16.mxu0 0
  %4555 = vmatpush1.bf16.msra.mxu0 %v4538
  %4556 = vmatprep.subr.bf16.mxu0 0
  %4557 = vmatpush1.bf16.msra.mxu0 %v4539
  %4558 = vmatprep.subr.bf16.mxu0 0
  %4559 = vmatpush1.bf16.msra.mxu0 %v4540
  %4560 = vmatprep.subr.bf16.mxu0 0
  %4561 = vmatpush1.bf16.msra.mxu0 %v4541
  %4562 = vmatprep.subr.bf16.mxu0 0
  %4563 = vmatpush1.bf16.msra.mxu0 %v4542
  %4564 = vmatprep.subr.bf16.mxu0 0
  %4565 = vmatpush1.bf16.msra.mxu0 %v4543
  %4566 = vmatprep.subr.bf16.mxu0 0
  %4567 = vmatpush1.bf16.msra.mxu0 %v4544
  %4568 = vmatprep.subr.bf16.mxu0 0
  %4569 = vmatpush1.bf16.msra.mxu0 %v4545
  %4570 = vmatprep.subr.bf16.mxu0 0
  %4571 = vmatpush1.bf16.msra.mxu0 0
  %4572 = vmatprep.subr.bf16.mxu0 0
  %4573 = vmatpush1.bf16.msra.mxu0 0
  %4574 = vmatprep.subr.bf16.mxu0 0
  %4575 = vmatpush1.bf16.msra.mxu0 0
  %4576 = vmatprep.subr.bf16.mxu0 0
  %4577 = vmatpush1.bf16.msra.mxu0 0
  %4578 = vmatprep.subr.bf16.mxu0 0
  %4579 = vmatpush1.bf16.msra.mxu0 0
  %4580 = vmatprep.subr.bf16.mxu0 0
  %4581 = vmatpush1.bf16.msra.mxu0 0
  %4582 = vmatprep.subr.bf16.mxu0 0
  %4583 = vmatpush1.bf16.msra.mxu0 0
  %4584 = vmatprep.subr.bf16.mxu0 0
  %4585 = vmatpush1.bf16.msra.mxu0 0
  %4586 = vmatprep.mubr.bf16.mxu0 0
  %4587 = vmatmul.mubr.bf16.gmra.mrb[0].mxu0 %v4490
  %v4588 = vpop.f32.mrb[0].mxu0
  %v4589 = vadd.f32 0.0, %v4588
  %v4590 = vpop.f32.mrb[0].mxu0
  %v4591 = vpop.f32.mrb[0].mxu0
  %v4592 = vadd.f32 0.0, %v4591
  %v4593 = vpop.f32.mrb[0].mxu0
  %4594 = vmatprep.mubr.bf16.mxu0 0
  %4595 = vmatmul.mubr.bf16.gmra.mrb[0].mxu0 %v4491
  %v4596 = vpop.f32.mrb[0].mxu0
  %v4597 = vadd.f32 0.0, %v4596
  %v4598 = vpop.f32.mrb[0].mxu0
  %v4599 = vpop.f32.mrb[0].mxu0
  %v4600 = vadd.f32 0.0, %v4599
  %v4601 = vpop.f32.mrb[0].mxu0
  %4602 = vmatprep.mubr.bf16.mxu0 0
  %4603 = vmatmul.mubr.bf16.gmra.mrb[0].mxu0 %v4492
  %v4604 = vpop.f32.mrb[0].mxu0
  %v4605 = vadd.f32 0.0, %v4604
  %v4606 = vpop.f32.mrb[0].mxu0
  %v4607 = vpop.f32.mrb[0].mxu0
  %v4608 = vadd.f32 0.0, %v4607
  %v4609 = vpop.f32.mrb[0].mxu0
  %4610 = vmatprep.mubr.bf16.mxu0 0
  %4611 = vmatmul.mubr.bf16.gmra.mrb[0].mxu0 %v4493
  %v4612 = vpop.f32.mrb[0].mxu0
  %v4613 = vadd.f32 0.0, %v4612
  %v4614 = vpop.f32.mrb[0].mxu0
  %v4615 = vpop.f32.mrb[0].mxu0
  %v4616 = vadd.f32 0.0, %v4615
  %v4617 = vpop.f32.mrb[0].mxu0
  %4618 = vmatprep.mubr.bf16.mxu0 0
  %4619 = vmatmul.mubr.bf16.gmra.mrb[0].mxu0 %v4494
  %v4620 = vpop.f32.mrb[0].mxu0
  %v4621 = vadd.f32 0.0, %v4620
  %v4622 = vpop.f32.mrb[0].mxu0
  %v4623 = vpop.f32.mrb[0].mxu0
  %v4624 = vadd.f32 0.0, %v4623
  %v4625 = vpop.f32.mrb[0].mxu0
  %4626 = vmatprep.mubr.bf16.mxu0 0
  %4627 = vmatmul.mubr.bf16.gmra.mrb[0].mxu0 %v4495
  %v4628 = vpop.f32.mrb[0].mxu0
  %v4629 = vadd.f32 0.0, %v4628
  %v4630 = vpop.f32.mrb[0].mxu0
  %v4631 = vpop.f32.mrb[0].mxu0
  %v4632 = vadd.f32 0.0, %v4631
  %v4633 = vpop.f32.mrb[0].mxu0
  %4634 = vmatprep.mubr.bf16.mxu0 0
  %4635 = vmatmul.mubr.bf16.gmra.mrb[0].mxu0 %v4496
  %v4636 = vpop.f32.mrb[0].mxu0
  %v4637 = vadd.f32 0.0, %v4636
  %v4638 = vpop.f32.mrb[0].mxu0
  %v4639 = vpop.f32.mrb[0].mxu0
  %v4640 = vadd.f32 0.0, %v4639
  %v4641 = vpop.f32.mrb[0].mxu0
  %4642 = vmatprep.mubr.bf16.mxu0 0
  %4643 = vmatmul.mubr.bf16.gmra.mrb[0].mxu0 %v4497
  %v4644 = vpop.f32.mrb[0].mxu0
  %v4645 = vadd.f32 0.0, %v4644
  %v4646 = vpop.f32.mrb[0].mxu0
  %v4647 = vpop.f32.mrb[0].mxu0
  %v4648 = vadd.f32 0.0, %v4647
  %v4649 = vpop.f32.mrb[0].mxu0
  %4650 = vdwg.mxu0
  %v4651 = vadd.f32 %v4392, %v4589
  %v4652 = vadd.f32 %v4393, %v4592
  %v4653 = vadd.f32 %v4394, %v4597
  %v4654 = vadd.f32 %v4395, %v4600
  %v4655 = vadd.f32 %v4396, %v4605
  %v4656 = vadd.f32 %v4397, %v4608
  %v4657 = vadd.f32 %v4398, %v4613
  %v4658 = vadd.f32 %v4399, %v4616
  %v4659 = vadd.f32 %v4400, %v4621
  %v4660 = vadd.f32 %v4401, %v4624
  %v4661 = vadd.f32 %v4402, %v4629
  %v4662 = vadd.f32 %v4403, %v4632
  %v4663 = vadd.f32 %v4404, %v4637
  %v4664 = vadd.f32 %v4405, %v4640
  %v4665 = vadd.f32 %v4406, %v4645
  %v4666 = vadd.f32 %v4407, %v4648
  %v4667 = vshrl.u32 %v647, 16
  %v4669 = vshrl.u32 %v663, 16
  %v4675 = vrot.slane %v4667, 1
  %v4676 = vrot.slane %v4669, 1
  %v4679 = vrot.slane %v4667, 2
  %v4680 = vrot.slane %v4669, 2
  %v4683 = vrot.slane %v4667, 3
  %v4684 = vrot.slane %v4669, 3
  %v4685 = vrot.slane %v647, 4
  %v4686 = vrot.slane %v663, 4
  %v4689 = vsel %vm630, %v4667, %v4420
  %v4690 = vsel %vm630, %v4669, %v4421
  %v4693 = vsel %vm937, %v4689, %v4675
  %v4697 = vsel %vm937, %v4690, %v4676
  %v4699 = vsel %vm1000, %v4693, %v4426
  %v4700 = vsel %vm1000, %v4697, %v4427
  %v4703 = vsel %vm1016, %v4699, %v4679
  %v4707 = vsel %vm1016, %v4700, %v4680
  %v4709 = vsel %vm1079, %v4703, %v4432
  %v4710 = vsel %vm1079, %v4707, %v4433
  %v4713 = vsel %vm1095, %v4709, %v4683
  %v4717 = vsel %vm1095, %v4710, %v4684
  %v4719 = vsel %vm1158, %v4713, %v4685
  %v4720 = vsel %vm1158, %v4717, %v4686
  %v4721 = vld [vmem:[%s3 + $0x1c0] sm:$0xf]
  %v4722 = vld [vmem:[%s3 + $0x1c4] sm:$0xf]
  %v4723 = vld [vmem:[%s3 + $0x1c8] sm:$0xf]
  %v4724 = vld [vmem:[%s3 + $0x1cc] sm:$0xf]
  %v4725 = vld [vmem:[%s3 + $0x1d0] sm:$0xf]
  %v4726 = vld [vmem:[%s3 + $0x1d4] sm:$0xf]
  %v4727 = vld [vmem:[%s3 + $0x1d8] sm:$0xf]
  %v4728 = vld [vmem:[%s3 + $0x1dc] sm:$0xf]
  %v4729 = vld [vmem:[%s3 + $0x1e0] sm:$0xf]
  %v4730 = vld [vmem:[%s3 + $0x1e4] sm:$0xf]
  %v4731 = vld [vmem:[%s3 + $0x1e8] sm:$0xf]
  %v4732 = vld [vmem:[%s3 + $0x1ec] sm:$0xf]
  %v4733 = vld [vmem:[%s3 + $0x1f0] sm:$0xf]
  %v4734 = vld [vmem:[%s3 + $0x1f4] sm:$0xf]
  %v4735 = vld [vmem:[%s3 + $0x1f8] sm:$0xf]
  %v4736 = vld [vmem:[%s3 + $0x1fc] sm:$0xf]
  %v4739 = vunpack.c.l.b16 %v4719
  %v4740 = vunpack.c.l.b16 %v4720
  %v4741 = vpack.c.b16 %v1628, %v1627
  %v4742 = vpack.c.b16 %v1630, %v1629
  %v4743 = vpack.c.b16 %v1632, %v1631
  %v4744 = vpack.c.b16 %v4739, %v1633
  %v4745 = vpack.c.b16 %v1635, %v1634
  %v4746 = vpack.c.b16 %v1637, %v1636
  %v4747 = vpack.c.b16 %v1639, %v1638
  %v4748 = vpack.c.b16 %v4740, %v1640
  %v4773 = vunpack.c.l.b16 %v4721
  %v4774 = vunpack.c.l.b16 %v4722
  %v4775 = vunpack.c.l.b16 %v4723
  %v4776 = vunpack.c.l.b16 %v4724
  %v4777 = vunpack.c.l.b16 %v4725
  %v4778 = vunpack.c.l.b16 %v4726
  %v4779 = vunpack.c.l.b16 %v4727
  %v4780 = vunpack.c.l.b16 %v4728
  %v4781 = vunpack.c.l.b16 %v4729
  %v4782 = vunpack.c.l.b16 %v4730
  %v4783 = vunpack.c.l.b16 %v4731
  %v4784 = vunpack.c.l.b16 %v4732
  %v4785 = vunpack.c.l.b16 %v4733
  %v4786 = vunpack.c.l.b16 %v4734
  %v4787 = vunpack.c.l.b16 %v4735
  %v4788 = vunpack.c.l.b16 %v4736
  %v4789 = vpack.c.b16 %v4774, %v4773
  %v4790 = vpack.c.b16 %v4776, %v4775
  %v4791 = vpack.c.b16 %v4778, %v4777
  %v4792 = vpack.c.b16 %v4780, %v4779
  %v4793 = vpack.c.b16 %v4782, %v4781
  %v4794 = vpack.c.b16 %v4784, %v4783
  %v4795 = vpack.c.b16 %v4786, %v4785
  %v4796 = vpack.c.b16 %v4788, %v4787
  %4805 = vmatprep.subr.bf16.mxu0 0
  %4806 = vmatpush1.bf16.msra.mxu0 %v4789
  %4807 = vmatprep.subr.bf16.mxu0 0
  %4808 = vmatpush1.bf16.msra.mxu0 %v4790
  %4809 = vmatprep.subr.bf16.mxu0 0
  %4810 = vmatpush1.bf16.msra.mxu0 %v4791
  %4811 = vmatprep.subr.bf16.mxu0 0
  %4812 = vmatpush1.bf16.msra.mxu0 %v4792
  %4813 = vmatprep.subr.bf16.mxu0 0
  %4814 = vmatpush1.bf16.msra.mxu0 %v4793
  %4815 = vmatprep.subr.bf16.mxu0 0
  %4816 = vmatpush1.bf16.msra.mxu0 %v4794
  %4817 = vmatprep.subr.bf16.mxu0 0
  %4818 = vmatpush1.bf16.msra.mxu0 %v4795
  %4819 = vmatprep.subr.bf16.mxu0 0
  %4820 = vmatpush1.bf16.msra.mxu0 %v4796
  %4821 = vmatprep.subr.bf16.mxu0 0
  %4822 = vmatpush1.bf16.msra.mxu0 0
  %4823 = vmatprep.subr.bf16.mxu0 0
  %4824 = vmatpush1.bf16.msra.mxu0 0
  %4825 = vmatprep.subr.bf16.mxu0 0
  %4826 = vmatpush1.bf16.msra.mxu0 0
  %4827 = vmatprep.subr.bf16.mxu0 0
  %4828 = vmatpush1.bf16.msra.mxu0 0
  %4829 = vmatprep.subr.bf16.mxu0 0
  %4830 = vmatpush1.bf16.msra.mxu0 0
  %4831 = vmatprep.subr.bf16.mxu0 0
  %4832 = vmatpush1.bf16.msra.mxu0 0
  %4833 = vmatprep.subr.bf16.mxu0 0
  %4834 = vmatpush1.bf16.msra.mxu0 0
  %4835 = vmatprep.subr.bf16.mxu0 0
  %4836 = vmatpush1.bf16.msra.mxu0 0
  %4837 = vmatprep.mubr.bf16.mxu0 0
  %4838 = vmatmul.mubr.bf16.gmra.mrb[0].mxu0 %v4741
  %v4839 = vpop.f32.mrb[0].mxu0
  %v4840 = vadd.f32 0.0, %v4839
  %v4841 = vpop.f32.mrb[0].mxu0
  %v4842 = vpop.f32.mrb[0].mxu0
  %v4843 = vadd.f32 0.0, %v4842
  %v4844 = vpop.f32.mrb[0].mxu0
  %4845 = vmatprep.mubr.bf16.mxu0 0
  %4846 = vmatmul.mubr.bf16.gmra.mrb[0].mxu0 %v4742
  %v4847 = vpop.f32.mrb[0].mxu0
  %v4848 = vadd.f32 0.0, %v4847
  %v4849 = vpop.f32.mrb[0].mxu0
  %v4850 = vpop.f32.mrb[0].mxu0
  %v4851 = vadd.f32 0.0, %v4850
  %v4852 = vpop.f32.mrb[0].mxu0
  %4853 = vmatprep.mubr.bf16.mxu0 0
  %4854 = vmatmul.mubr.bf16.gmra.mrb[0].mxu0 %v4743
  %v4855 = vpop.f32.mrb[0].mxu0
  %v4856 = vadd.f32 0.0, %v4855
  %v4857 = vpop.f32.mrb[0].mxu0
  %v4858 = vpop.f32.mrb[0].mxu0
  %v4859 = vadd.f32 0.0, %v4858
  %v4860 = vpop.f32.mrb[0].mxu0
  %4861 = vmatprep.mubr.bf16.mxu0 0
  %4862 = vmatmul.mubr.bf16.gmra.mrb[0].mxu0 %v4744
  %v4863 = vpop.f32.mrb[0].mxu0
  %v4864 = vadd.f32 0.0, %v4863
  %v4865 = vpop.f32.mrb[0].mxu0
  %v4866 = vpop.f32.mrb[0].mxu0
  %v4867 = vadd.f32 0.0, %v4866
  %v4868 = vpop.f32.mrb[0].mxu0
  %4869 = vmatprep.mubr.bf16.mxu0 0
  %4870 = vmatmul.mubr.bf16.gmra.mrb[0].mxu0 %v4745
  %v4871 = vpop.f32.mrb[0].mxu0
  %v4872 = vadd.f32 0.0, %v4871
  %v4873 = vpop.f32.mrb[0].mxu0
  %v4874 = vpop.f32.mrb[0].mxu0
  %v4875 = vadd.f32 0.0, %v4874
  %v4876 = vpop.f32.mrb[0].mxu0
  %4877 = vmatprep.mubr.bf16.mxu0 0
  %4878 = vmatmul.mubr.bf16.gmra.mrb[0].mxu0 %v4746
  %v4879 = vpop.f32.mrb[0].mxu0
  %v4880 = vadd.f32 0.0, %v4879
  %v4881 = vpop.f32.mrb[0].mxu0
  %v4882 = vpop.f32.mrb[0].mxu0
  %v4883 = vadd.f32 0.0, %v4882
  %v4884 = vpop.f32.mrb[0].mxu0
  %4885 = vmatprep.mubr.bf16.mxu0 0
  %4886 = vmatmul.mubr.bf16.gmra.mrb[0].mxu0 %v4747
  %v4887 = vpop.f32.mrb[0].mxu0
  %v4888 = vadd.f32 0.0, %v4887
  %v4889 = vpop.f32.mrb[0].mxu0
  %v4890 = vpop.f32.mrb[0].mxu0
  %v4891 = vadd.f32 0.0, %v4890
  %v4892 = vpop.f32.mrb[0].mxu0
  %4893 = vmatprep.mubr.bf16.mxu0 0
  %4894 = vmatmul.mubr.bf16.gmra.mrb[0].mxu0 %v4748
  %v4895 = vpop.f32.mrb[0].mxu0
  %v4896 = vadd.f32 0.0, %v4895
  %v4897 = vpop.f32.mrb[0].mxu0
  %v4898 = vpop.f32.mrb[0].mxu0
  %v4899 = vadd.f32 0.0, %v4898
  %v4900 = vpop.f32.mrb[0].mxu0
  %4901 = vdwg.mxu0
  %v4902 = vadd.f32 %v4651, %v4840
  %v4903 = vadd.f32 %v4652, %v4843
  %v4904 = vadd.f32 %v4653, %v4848
  %v4905 = vadd.f32 %v4654, %v4851
  %v4906 = vadd.f32 %v4655, %v4856
  %v4907 = vadd.f32 %v4656, %v4859
  %v4908 = vadd.f32 %v4657, %v4864
  %v4909 = vadd.f32 %v4658, %v4867
  %v4910 = vadd.f32 %v4659, %v4872
  %v4911 = vadd.f32 %v4660, %v4875
  %v4912 = vadd.f32 %v4661, %v4880
  %v4913 = vadd.f32 %v4662, %v4883
  %v4914 = vadd.f32 %v4663, %v4888
  %v4915 = vadd.f32 %v4664, %v4891
  %v4916 = vadd.f32 %v4665, %v4896
  %v4917 = vadd.f32 %v4666, %v4899
  %v4919 = vshll.u32 %v680, 16
  %v4921 = vrot.slane %v4919, 5
  %v4923 = vshll.u32 %v696, 16
  %v4925 = vrot.slane %v4923, 5
  %v4928 = vsel %vm630, %v4420, %v4422
  %v4929 = vsel %vm630, %v4421, %v4423
  %v4931 = vsel %vm937, %v4928, %v4426
  %v4934 = vsel %vm937, %v4929, %v4427
  %v4936 = vsel %vm1000, %v4931, %v4428
  %v4937 = vsel %vm1000, %v4934, %v4429
  %v4939 = vsel %vm1016, %v4936, %v4432
  %v4942 = vsel %vm1016, %v4937, %v4433
  %v4944 = vsel %vm1079, %v4939, %v4434
  %v4945 = vsel %vm1079, %v4942, %v4435
  %v4948 = vsel %vm1095, %v4944, %v4685
  %v4952 = vsel %vm1095, %v4945, %v4686
  %v4954 = vsel %vm1158, %v4948, %v4921
  %v4955 = vsel %vm1158, %v4952, %v4925
  %v4956 = vld [vmem:[%s3 + $0x200] sm:$0xf]
  %v4957 = vld [vmem:[%s3 + $0x204] sm:$0xf]
  %v4958 = vld [vmem:[%s3 + $0x208] sm:$0xf]
  %v4959 = vld [vmem:[%s3 + $0x20c] sm:$0xf]
  %v4960 = vld [vmem:[%s3 + $0x210] sm:$0xf]
  %v4961 = vld [vmem:[%s3 + $0x214] sm:$0xf]
  %v4962 = vld [vmem:[%s3 + $0x218] sm:$0xf]
  %v4963 = vld [vmem:[%s3 + $0x21c] sm:$0xf]
  %v4964 = vld [vmem:[%s3 + $0x220] sm:$0xf]
  %v4965 = vld [vmem:[%s3 + $0x224] sm:$0xf]
  %v4966 = vld [vmem:[%s3 + $0x228] sm:$0xf]
  %v4967 = vld [vmem:[%s3 + $0x22c] sm:$0xf]
  %v4968 = vld [vmem:[%s3 + $0x230] sm:$0xf]
  %v4969 = vld [vmem:[%s3 + $0x234] sm:$0xf]
  %v4970 = vld [vmem:[%s3 + $0x238] sm:$0xf]
  %v4971 = vld [vmem:[%s3 + $0x23c] sm:$0xf]
  %v4974 = vunpack.c.l.b16 %v4954
  %v4975 = vunpack.c.l.b16 %v4955
  %v4976 = vpack.c.b16 %v2311, %v2310
  %v4977 = vpack.c.b16 %v2313, %v2312
  %v4978 = vpack.c.b16 %v2315, %v2314
  %v4979 = vpack.c.b16 %v4974, %v2316
  %v4980 = vpack.c.b16 %v2318, %v2317
  %v4981 = vpack.c.b16 %v2320, %v2319
  %v4982 = vpack.c.b16 %v2322, %v2321
  %v4983 = vpack.c.b16 %v4975, %v2323
  %v5008 = vunpack.c.l.b16 %v4956
  %v5009 = vunpack.c.l.b16 %v4957
  %v5010 = vunpack.c.l.b16 %v4958
  %v5011 = vunpack.c.l.b16 %v4959
  %v5012 = vunpack.c.l.b16 %v4960
  %v5013 = vunpack.c.l.b16 %v4961
  %v5014 = vunpack.c.l.b16 %v4962
  %v5015 = vunpack.c.l.b16 %v4963
  %v5016 = vunpack.c.l.b16 %v4964
  %v5017 = vunpack.c.l.b16 %v4965
  %v5018 = vunpack.c.l.b16 %v4966
  %v5019 = vunpack.c.l.b16 %v4967
  %v5020 = vunpack.c.l.b16 %v4968
  %v5021 = vunpack.c.l.b16 %v4969
  %v5022 = vunpack.c.l.b16 %v4970
  %v5023 = vunpack.c.l.b16 %v4971
  %v5024 = vpack.c.b16 %v5009, %v5008
  %v5025 = vpack.c.b16 %v5011, %v5010
  %v5026 = vpack.c.b16 %v5013, %v5012
  %v5027 = vpack.c.b16 %v5015, %v5014
  %v5028 = vpack.c.b16 %v5017, %v5016
  %v5029 = vpack.c.b16 %v5019, %v5018
  %v5030 = vpack.c.b16 %v5021, %v5020
  %v5031 = vpack.c.b16 %v5023, %v5022
  %5040 = vmatprep.subr.bf16.mxu0 0
  %5041 = vmatpush1.bf16.msra.mxu0 %v5024
  %5042 = vmatprep.subr.bf16.mxu0 0
  %5043 = vmatpush1.bf16.msra.mxu0 %v5025
  %5044 = vmatprep.subr.bf16.mxu0 0
  %5045 = vmatpush1.bf16.msra.mxu0 %v5026
  %5046 = vmatprep.subr.bf16.mxu0 0
  %5047 = vmatpush1.bf16.msra.mxu0 %v5027
  %5048 = vmatprep.subr.bf16.mxu0 0
  %5049 = vmatpush1.bf16.msra.mxu0 %v5028
  %5050 = vmatprep.subr.bf16.mxu0 0
  %5051 = vmatpush1.bf16.msra.mxu0 %v5029
  %5052 = vmatprep.subr.bf16.mxu0 0
  %5053 = vmatpush1.bf16.msra.mxu0 %v5030
  %5054 = vmatprep.subr.bf16.mxu0 0
  %5055 = vmatpush1.bf16.msra.mxu0 %v5031
  %5056 = vmatprep.subr.bf16.mxu0 0
  %5057 = vmatpush1.bf16.msra.mxu0 0
  %5058 = vmatprep.subr.bf16.mxu0 0
  %5059 = vmatpush1.bf16.msra.mxu0 0
  %5060 = vmatprep.subr.bf16.mxu0 0
  %5061 = vmatpush1.bf16.msra.mxu0 0
  %5062 = vmatprep.subr.bf16.mxu0 0
  %5063 = vmatpush1.bf16.msra.mxu0 0
  %5064 = vmatprep.subr.bf16.mxu0 0
  %5065 = vmatpush1.bf16.msra.mxu0 0
  %5066 = vmatprep.subr.bf16.mxu0 0
  %5067 = vmatpush1.bf16.msra.mxu0 0
  %5068 = vmatprep.subr.bf16.mxu0 0
  %5069 = vmatpush1.bf16.msra.mxu0 0
  %5070 = vmatprep.subr.bf16.mxu0 0
  %5071 = vmatpush1.bf16.msra.mxu0 0
  %5072 = vmatprep.mubr.bf16.mxu0 0
  %5073 = vmatmul.mubr.bf16.gmra.mrb[0].mxu0 %v4976
  %v5074 = vpop.f32.mrb[0].mxu0
  %v5075 = vadd.f32 0.0, %v5074
  %v5076 = vpop.f32.mrb[0].mxu0
  %v5077 = vpop.f32.mrb[0].mxu0
  %v5078 = vadd.f32 0.0, %v5077
  %v5079 = vpop.f32.mrb[0].mxu0
  %5080 = vmatprep.mubr.bf16.mxu0 0
  %5081 = vmatmul.mubr.bf16.gmra.mrb[0].mxu0 %v4977
  %v5082 = vpop.f32.mrb[0].mxu0
  %v5083 = vadd.f32 0.0, %v5082
  %v5084 = vpop.f32.mrb[0].mxu0
  %v5085 = vpop.f32.mrb[0].mxu0
  %v5086 = vadd.f32 0.0, %v5085
  %v5087 = vpop.f32.mrb[0].mxu0
  %5088 = vmatprep.mubr.bf16.mxu0 0
  %5089 = vmatmul.mubr.bf16.gmra.mrb[0].mxu0 %v4978
  %v5090 = vpop.f32.mrb[0].mxu0
  %v5091 = vadd.f32 0.0, %v5090
  %v5092 = vpop.f32.mrb[0].mxu0
  %v5093 = vpop.f32.mrb[0].mxu0
  %v5094 = vadd.f32 0.0, %v5093
  %v5095 = vpop.f32.mrb[0].mxu0
  %5096 = vmatprep.mubr.bf16.mxu0 0
  %5097 = vmatmul.mubr.bf16.gmra.mrb[0].mxu0 %v4979
  %v5098 = vpop.f32.mrb[0].mxu0
  %v5099 = vadd.f32 0.0, %v5098
  %v5100 = vpop.f32.mrb[0].mxu0
  %v5101 = vpop.f32.mrb[0].mxu0
  %v5102 = vadd.f32 0.0, %v5101
  %v5103 = vpop.f32.mrb[0].mxu0
  %5104 = vmatprep.mubr.bf16.mxu0 0
  %5105 = vmatmul.mubr.bf16.gmra.mrb[0].mxu0 %v4980
  %v5106 = vpop.f32.mrb[0].mxu0
  %v5107 = vadd.f32 0.0, %v5106
  %v5108 = vpop.f32.mrb[0].mxu0
  %v5109 = vpop.f32.mrb[0].mxu0
  %v5110 = vadd.f32 0.0, %v5109
  %v5111 = vpop.f32.mrb[0].mxu0
  %5112 = vmatprep.mubr.bf16.mxu0 0
  %5113 = vmatmul.mubr.bf16.gmra.mrb[0].mxu0 %v4981
  %v5114 = vpop.f32.mrb[0].mxu0
  %v5115 = vadd.f32 0.0, %v5114
  %v5116 = vpop.f32.mrb[0].mxu0
  %v5117 = vpop.f32.mrb[0].mxu0
  %v5118 = vadd.f32 0.0, %v5117
  %v5119 = vpop.f32.mrb[0].mxu0
  %5120 = vmatprep.mubr.bf16.mxu0 0
  %5121 = vmatmul.mubr.bf16.gmra.mrb[0].mxu0 %v4982
  %v5122 = vpop.f32.mrb[0].mxu0
  %v5123 = vadd.f32 0.0, %v5122
  %v5124 = vpop.f32.mrb[0].mxu0
  %v5125 = vpop.f32.mrb[0].mxu0
  %v5126 = vadd.f32 0.0, %v5125
  %v5127 = vpop.f32.mrb[0].mxu0
  %5128 = vmatprep.mubr.bf16.mxu0 0
  %5129 = vmatmul.mubr.bf16.gmra.mrb[0].mxu0 %v4983
  %v5130 = vpop.f32.mrb[0].mxu0
  %v5131 = vadd.f32 0.0, %v5130
  %v5132 = vpop.f32.mrb[0].mxu0
  %v5133 = vpop.f32.mrb[0].mxu0
  %v5134 = vadd.f32 0.0, %v5133
  %v5135 = vpop.f32.mrb[0].mxu0
  %5136 = vdwg.mxu0
  %v5137 = vadd.f32 %v4902, %v5075
  %v5138 = vadd.f32 %v4903, %v5078
  %v5139 = vadd.f32 %v4904, %v5083
  %v5140 = vadd.f32 %v4905, %v5086
  %v5141 = vadd.f32 %v4906, %v5091
  %v5142 = vadd.f32 %v4907, %v5094
  %v5143 = vadd.f32 %v4908, %v5099
  %v5144 = vadd.f32 %v4909, %v5102
  %v5145 = vadd.f32 %v4910, %v5107
  %v5146 = vadd.f32 %v4911, %v5110
  %v5147 = vadd.f32 %v4912, %v5115
  %v5148 = vadd.f32 %v4913, %v5118
  %v5149 = vadd.f32 %v4914, %v5123
  %v5150 = vadd.f32 %v4915, %v5126
  %v5151 = vadd.f32 %v4916, %v5131
  %v5152 = vadd.f32 %v4917, %v5134
  %v5153 = vld [vmem:[%s4] sm:$0x1]
  %v5155 = vlaneseq
  %v5156 = vshrl.u32 %v5155, 7
  %v5157 = vsub.s32 0, %v5156
  %v5158 = vrot.slane %v5153, %v5157
  %v5160 = vmul.f32 %v5137, %v5158
  %v5161 = vmul.f32 %v5138, %v5158
  %v5162 = vmul.f32 %v5139, %v5158
  %v5163 = vmul.f32 %v5140, %v5158
  %v5164 = vmul.f32 %v5141, %v5158
  %v5165 = vmul.f32 %v5142, %v5158
  %v5166 = vmul.f32 %v5143, %v5158
  %v5167 = vmul.f32 %v5144, %v5158
  %v5168 = vmul.f32 %v5145, %v5158
  %v5169 = vmul.f32 %v5146, %v5158
  %v5170 = vmul.f32 %v5147, %v5158
  %v5171 = vmul.f32 %v5148, %v5158
  %v5172 = vmul.f32 %v5149, %v5158
  %v5173 = vmul.f32 %v5150, %v5158
  %v5174 = vmul.f32 %v5151, %v5158
  %v5175 = vmul.f32 %v5152, %v5158
  %v5176 = vld [vmem:[%s5] sm:$0x1]
  %v5178 = vlaneseq
  %v5179 = vshrl.u32 %v5178, 7
  %v5180 = vsub.s32 0, %v5179
  %v5181 = vrot.slane %v5176, %v5180
  %v5183 = vadd.f32 %v5160, %v5181
  %v5184 = vadd.f32 %v5161, %v5181
  %v5185 = vadd.f32 %v5162, %v5181
  %v5186 = vadd.f32 %v5163, %v5181
  %v5187 = vadd.f32 %v5164, %v5181
  %v5188 = vadd.f32 %v5165, %v5181
  %v5189 = vadd.f32 %v5166, %v5181
  %v5190 = vadd.f32 %v5167, %v5181
  %v5191 = vadd.f32 %v5168, %v5181
  %v5192 = vadd.f32 %v5169, %v5181
  %v5193 = vadd.f32 %v5170, %v5181
  %v5194 = vadd.f32 %v5171, %v5181
  %v5195 = vadd.f32 %v5172, %v5181
  %v5196 = vadd.f32 %v5173, %v5181
  %v5197 = vadd.f32 %v5174, %v5181
  %v5198 = vadd.f32 %v5175, %v5181
  %v5199 = vmax.f32 %v5183, 0.0
  %v5200 = vmax.f32 %v5184, 0.0
  %v5201 = vmax.f32 %v5185, 0.0
  %v5202 = vmax.f32 %v5186, 0.0
  %v5203 = vmax.f32 %v5187, 0.0
  %v5204 = vmax.f32 %v5188, 0.0
  %v5205 = vmax.f32 %v5189, 0.0
  %v5206 = vmax.f32 %v5190, 0.0
  %v5207 = vmax.f32 %v5191, 0.0
  %v5208 = vmax.f32 %v5192, 0.0
  %v5209 = vmax.f32 %v5193, 0.0
  %v5210 = vmax.f32 %v5194, 0.0
  %v5211 = vmax.f32 %v5195, 0.0
  %v5212 = vmax.f32 %v5196, 0.0
  %v5213 = vmax.f32 %v5197, 0.0
  %v5214 = vmax.f32 %v5198, 0.0
  %v5215 = vpack.c.bf16 %v5200, %v5199
  %v5216 = vpack.c.bf16 %v5202, %v5201
  %v5217 = vpack.c.bf16 %v5204, %v5203
  %v5218 = vpack.c.bf16 %v5206, %v5205
  %v5219 = vpack.c.bf16 %v5208, %v5207
  %v5220 = vpack.c.bf16 %v5210, %v5209
  %v5221 = vpack.c.bf16 %v5212, %v5211
  %v5222 = vpack.c.bf16 %v5214, %v5213
  %v5231 = vunpack.c.l.b16 %v5215
  %v5232 = vunpack.c.h.b16 %v5215
  %v5233 = vunpack.c.l.b16 %v5216
  %v5234 = vunpack.c.h.b16 %v5216
  %v5235 = vunpack.c.l.b16 %v5217
  %v5236 = vunpack.c.h.b16 %v5217
  %v5237 = vunpack.c.l.b16 %v5218
  %v5238 = vunpack.c.h.b16 %v5218
  %v5239 = vunpack.c.l.b16 %v5219
  %v5240 = vunpack.c.h.b16 %v5219
  %v5241 = vunpack.c.l.b16 %v5220
  %v5242 = vunpack.c.h.b16 %v5220
  %v5243 = vunpack.c.l.b16 %v5221
  %v5244 = vunpack.c.h.b16 %v5221
  %v5245 = vunpack.c.l.b16 %v5222
  %v5246 = vunpack.c.h.b16 %v5222
  %v5247 = vpack.c.b16 %v5231, %v5231
  %v5248 = vpack.c.b16 %v5232, %v5232
  %v5249 = vpack.c.b16 %v5233, %v5233
  %v5250 = vpack.c.b16 %v5234, %v5234
  %v5251 = vpack.c.b16 %v5235, %v5235
  %v5252 = vpack.c.b16 %v5236, %v5236
  %v5253 = vpack.c.b16 %v5237, %v5237
  %v5254 = vpack.c.b16 %v5238, %v5238
  %v5255 = vpack.c.b16 %v5239, %v5239
  %v5256 = vpack.c.b16 %v5240, %v5240
  %v5257 = vpack.c.b16 %v5241, %v5241
  %v5258 = vpack.c.b16 %v5242, %v5242
  %v5259 = vpack.c.b16 %v5243, %v5243
  %v5260 = vpack.c.b16 %v5244, %v5244
  %v5261 = vpack.c.b16 %v5245, %v5245
  %v5262 = vpack.c.b16 %v5246, %v5246
  %v5264 = vshrl.u32 %v5247, 16
  %v5266 = vrot.slane %v5264, 7
  %v5267 = vshll.u32 %v5247, 16
  %v5269 = vor.u32 %v5266, %v5267
  %v5271 = vshrl.u32 %v5248, 16
  %v5273 = vrot.slane %v5271, 7
  %v5274 = vshll.u32 %v5248, 16
  %v5276 = vor.u32 %v5273, %v5274
  %v5278 = vshrl.u32 %v5249, 16
  %v5280 = vrot.slane %v5278, 7
  %v5281 = vshll.u32 %v5249, 16
  %v5283 = vor.u32 %v5280, %v5281
  %v5285 = vshrl.u32 %v5250, 16
  %v5287 = vrot.slane %v5285, 7
  %v5288 = vshll.u32 %v5250, 16
  %v5290 = vor.u32 %v5287, %v5288
  %v5292 = vshrl.u32 %v5251, 16
  %v5294 = vrot.slane %v5292, 7
  %v5295 = vshll.u32 %v5251, 16
  %v5297 = vor.u32 %v5294, %v5295
  %v5299 = vshrl.u32 %v5252, 16
  %v5301 = vrot.slane %v5299, 7
  %v5302 = vshll.u32 %v5252, 16
  %v5304 = vor.u32 %v5301, %v5302
  %v5306 = vshrl.u32 %v5253, 16
  %v5308 = vrot.slane %v5306, 7
  %v5309 = vshll.u32 %v5253, 16
  %v5311 = vor.u32 %v5308, %v5309
  %v5313 = vshrl.u32 %v5254, 16
  %v5315 = vrot.slane %v5313, 7
  %v5316 = vshll.u32 %v5254, 16
  %v5318 = vor.u32 %v5315, %v5316
  %v5320 = vshrl.u32 %v5255, 16
  %v5322 = vrot.slane %v5320, 7
  %v5323 = vshll.u32 %v5255, 16
  %v5325 = vor.u32 %v5322, %v5323
  %v5327 = vshrl.u32 %v5256, 16
  %v5329 = vrot.slane %v5327, 7
  %v5330 = vshll.u32 %v5256, 16
  %v5332 = vor.u32 %v5329, %v5330
  %v5334 = vshrl.u32 %v5257, 16
  %v5336 = vrot.slane %v5334, 7
  %v5337 = vshll.u32 %v5257, 16
  %v5339 = vor.u32 %v5336, %v5337
  %v5341 = vshrl.u32 %v5258, 16
  %v5343 = vrot.slane %v5341, 7
  %v5344 = vshll.u32 %v5258, 16
  %v5346 = vor.u32 %v5343, %v5344
  %v5348 = vshrl.u32 %v5259, 16
  %v5350 = vrot.slane %v5348, 7
  %v5351 = vshll.u32 %v5259, 16
  %v5353 = vor.u32 %v5350, %v5351
  %v5355 = vshrl.u32 %v5260, 16
  %v5357 = vrot.slane %v5355, 7
  %v5358 = vshll.u32 %v5260, 16
  %v5360 = vor.u32 %v5357, %v5358
  %v5362 = vshrl.u32 %v5261, 16
  %v5364 = vrot.slane %v5362, 7
  %v5365 = vshll.u32 %v5261, 16
  %v5367 = vor.u32 %v5364, %v5365
  %v5369 = vshrl.u32 %v5262, 16
  %v5371 = vrot.slane %v5369, 7
  %v5372 = vshll.u32 %v5262, 16
  %v5374 = vor.u32 %v5371, %v5372
  %v5391 = vsel %vm630, 0, %v5269
  %v5392 = vsel %vm630, 0, %v5276
  %v5393 = vsel %vm630, 0, %v5283
  %v5394 = vsel %vm630, 0, %v5290
  %v5395 = vsel %vm630, 0, %v5297
  %v5396 = vsel %vm630, 0, %v5304
  %v5397 = vsel %vm630, 0, %v5311
  %v5398 = vsel %vm630, 0, %v5318
  %v5399 = vsel %vm630, 0, %v5325
  %v5400 = vsel %vm630, 0, %v5332
  %v5401 = vsel %vm630, 0, %v5339
  %v5402 = vsel %vm630, 0, %v5346
  %v5403 = vsel %vm630, 0, %v5353
  %v5404 = vsel %vm630, 0, %v5360
  %v5405 = vsel %vm630, 0, %v5367
  %v5406 = vsel %vm630, 0, %v5374
  %vm5407 = vcmask 1044480
  %vm5408 = vsmask.f32 4352
  %vm5409 = vmand %vm5407, %vm5408
  %v5410 = vsel %vm5409, %v631, 0
  %v5411 = vsel %vm5409, %v5391, 0
  %v5412 = vsel %vm5409, %v5392, 0
  %v5413 = vsel %vm5409, %v5393, 0
  %v5414 = vsel %vm5409, %v5394, 0
  %v5415 = vsel %vm5409, %v5395, 0
  %v5416 = vsel %vm5409, %v5396, 0
  %v5417 = vsel %vm5409, %v5397, 0
  %v5418 = vsel %vm5409, %v5398, 0
  %v5419 = vsel %vm5409, %v5399, 0
  %v5420 = vsel %vm5409, %v5400, 0
  %v5421 = vsel %vm5409, %v5401, 0
  %v5422 = vsel %vm5409, %v5402, 0
  %v5423 = vsel %vm5409, %v5403, 0
  %v5424 = vsel %vm5409, %v5404, 0
  %v5425 = vsel %vm5409, %v5405, 0
  %v5426 = vsel %vm5409, %v5406, 0
  %v5444 = vunpack.c.l.b16 %v5410
  %v5445 = vunpack.c.h.b16 %v5410
  %v5446 = vunpack.c.l.b16 %v5411
  %v5447 = vunpack.c.h.b16 %v5411
  %v5448 = vunpack.c.l.b16 %v5412
  %v5449 = vunpack.c.h.b16 %v5412
  %v5450 = vunpack.c.l.b16 %v5413
  %v5451 = vunpack.c.h.b16 %v5413
  %v5452 = vunpack.c.l.b16 %v5414
  %v5453 = vunpack.c.h.b16 %v5414
  %v5454 = vunpack.c.l.b16 %v5415
  %v5455 = vunpack.c.h.b16 %v5415
  %v5456 = vunpack.c.l.b16 %v5416
  %v5457 = vunpack.c.h.b16 %v5416
  %v5458 = vunpack.c.l.b16 %v5417
  %v5459 = vunpack.c.h.b16 %v5417
  %v5460 = vunpack.c.l.b16 %v5418
  %v5461 = vunpack.c.h.b16 %v5418
  %v5462 = vunpack.c.l.b16 %v5419
  %v5463 = vunpack.c.h.b16 %v5419
  %v5464 = vunpack.c.l.b16 %v5420
  %v5465 = vunpack.c.h.b16 %v5420
  %v5466 = vunpack.c.l.b16 %v5421
  %v5467 = vunpack.c.h.b16 %v5421
  %v5468 = vunpack.c.l.b16 %v5422
  %v5469 = vunpack.c.h.b16 %v5422
  %v5470 = vunpack.c.l.b16 %v5423
  %v5471 = vunpack.c.h.b16 %v5423
  %v5472 = vunpack.c.l.b16 %v5424
  %v5473 = vunpack.c.h.b16 %v5424
  %v5474 = vunpack.c.l.b16 %v5425
  %v5475 = vunpack.c.h.b16 %v5425
  %v5476 = vunpack.c.l.b16 %v5426
  %v5477 = vunpack.c.h.b16 %v5426
  %v5478 = vpack.c.b16 %v5444, %v5444
  %v5479 = vpack.c.b16 %v5445, %v5445
  %v5480 = vpack.c.b16 %v5446, %v5446
  %v5481 = vpack.c.b16 %v5447, %v5447
  %v5482 = vpack.c.b16 %v5448, %v5448
  %v5483 = vpack.c.b16 %v5449, %v5449
  %v5484 = vpack.c.b16 %v5450, %v5450
  %v5485 = vpack.c.b16 %v5451, %v5451
  %v5486 = vpack.c.b16 %v5452, %v5452
  %v5487 = vpack.c.b16 %v5453, %v5453
  %v5488 = vpack.c.b16 %v5454, %v5454
  %v5489 = vpack.c.b16 %v5455, %v5455
  %v5490 = vpack.c.b16 %v5456, %v5456
  %v5491 = vpack.c.b16 %v5457, %v5457
  %v5492 = vpack.c.b16 %v5458, %v5458
  %v5493 = vpack.c.b16 %v5459, %v5459
  %v5494 = vpack.c.b16 %v5460, %v5460
  %v5495 = vpack.c.b16 %v5461, %v5461
  %v5496 = vpack.c.b16 %v5462, %v5462
  %v5497 = vpack.c.b16 %v5463, %v5463
  %v5498 = vpack.c.b16 %v5464, %v5464
  %v5499 = vpack.c.b16 %v5465, %v5465
  %v5500 = vpack.c.b16 %v5466, %v5466
  %v5501 = vpack.c.b16 %v5467, %v5467
  %v5502 = vpack.c.b16 %v5468, %v5468
  %v5503 = vpack.c.b16 %v5469, %v5469
  %v5504 = vpack.c.b16 %v5470, %v5470
  %v5505 = vpack.c.b16 %v5471, %v5471
  %v5506 = vpack.c.b16 %v5472, %v5472
  %v5507 = vpack.c.b16 %v5473, %v5473
  %v5508 = vpack.c.b16 %v5474, %v5474
  %v5509 = vpack.c.b16 %v5475, %v5475
  %v5510 = vpack.c.b16 %v5476, %v5476
  %v5511 = vpack.c.b16 %v5477, %v5477
  %5546 = vst [vmem:[%s7] sm:$0xf] %v5478
  %5547 = vst [vmem:[%s7 + $0x4] sm:$0x1] %v5479
  %5548 = vst [vmem:[%s7 + $0x8] sm:$0xf] %v5480
  %5549 = vst [vmem:[%s7 + $0xc] sm:$0x1] %v5481
  %5550 = vst [vmem:[%s7 + $0x10] sm:$0xf] %v5482
  %5551 = vst [vmem:[%s7 + $0x14] sm:$0x1] %v5483
  %5552 = vst [vmem:[%s7 + $0x18] sm:$0xf] %v5484
  %5553 = vst [vmem:[%s7 + $0x1c] sm:$0x1] %v5485
  %5554 = vst [vmem:[%s7 + $0x20] sm:$0xf] %v5486
  %5555 = vst [vmem:[%s7 + $0x24] sm:$0x1] %v5487
  %5556 = vst [vmem:[%s7 + $0x28] sm:$0xf] %v5488
  %5557 = vst [vmem:[%s7 + $0x2c] sm:$0x1] %v5489
  %5558 = vst [vmem:[%s7 + $0x30] sm:$0xf] %v5490
  %5559 = vst [vmem:[%s7 + $0x34] sm:$0x1] %v5491
  %5560 = vst [vmem:[%s7 + $0x38] sm:$0xf] %v5492
  %5561 = vst [vmem:[%s7 + $0x3c] sm:$0x1] %v5493
  %5562 = vst [vmem:[%s7 + $0x40] sm:$0xf] %v5494
  %5563 = vst [vmem:[%s7 + $0x44] sm:$0x1] %v5495
  %5564 = vst [vmem:[%s7 + $0x48] sm:$0xf] %v5478
  %5565 = vst [vmem:[%s7 + $0x4c] sm:$0x1] %v5479
  %5566 = vst [vmem:[%s7 + $0x50] sm:$0xf] %v5478
  %5567 = vst [vmem:[%s7 + $0x54] sm:$0x1] %v5479
  %5568 = vst [vmem:[%s7 + $0x58] sm:$0xf] %v5496
  %5569 = vst [vmem:[%s7 + $0x5c] sm:$0x1] %v5497
  %5570 = vst [vmem:[%s7 + $0x60] sm:$0xf] %v5498
  %5571 = vst [vmem:[%s7 + $0x64] sm:$0x1] %v5499
  %5572 = vst [vmem:[%s7 + $0x68] sm:$0xf] %v5500
  %5573 = vst [vmem:[%s7 + $0x6c] sm:$0x1] %v5501
  %5574 = vst [vmem:[%s7 + $0x70] sm:$0xf] %v5502
  %5575 = vst [vmem:[%s7 + $0x74] sm:$0x1] %v5503
  %5576 = vst [vmem:[%s7 + $0x78] sm:$0xf] %v5504
  %5577 = vst [vmem:[%s7 + $0x7c] sm:$0x1] %v5505
  %5578 = vst [vmem:[%s7 + $0x80] sm:$0xf] %v5506
  %5579 = vst [vmem:[%s7 + $0x84] sm:$0x1] %v5507
  %5580 = vst [vmem:[%s7 + $0x88] sm:$0xf] %v5508
  %5581 = vst [vmem:[%s7 + $0x8c] sm:$0x1] %v5509
  %5582 = vst [vmem:[%s7 + $0x90] sm:$0xf] %v5510
  %5583 = vst [vmem:[%s7 + $0x94] sm:$0x1] %v5511
  %5584 = vst [vmem:[%s7 + $0x98] sm:$0xf] %v5478
  %5585 = vst [vmem:[%s7 + $0x9c] sm:$0x1] %v5479
  %v5586 = vld [vmem:[%s6] sm:$0xf]
  %v5587 = vld [vmem:[%s6 + $0x4] sm:$0xf]
  %v5588 = vld [vmem:[%s6 + $0x8] sm:$0xf]
  %v5589 = vld [vmem:[%s6 + $0xc] sm:$0xf]
  %v5590 = vld [vmem:[%s6 + $0x10] sm:$0xf]
  %v5591 = vld [vmem:[%s6 + $0x14] sm:$0xf]
  %v5592 = vld [vmem:[%s6 + $0x18] sm:$0xf]
  %v5593 = vld [vmem:[%s6 + $0x1c] sm:$0xf]
  %v5594 = vld [vmem:[%s6 + $0x20] sm:$0xf]
  %v5595 = vld [vmem:[%s6 + $0x24] sm:$0xf]
  %v5596 = vld [vmem:[%s6 + $0x28] sm:$0xf]
  %v5597 = vld [vmem:[%s6 + $0x2c] sm:$0xf]
  %v5598 = vld [vmem:[%s6 + $0x30] sm:$0xf]
  %v5599 = vld [vmem:[%s6 + $0x34] sm:$0xf]
  %v5600 = vld [vmem:[%s6 + $0x38] sm:$0xf]
  %v5601 = vld [vmem:[%s6 + $0x3c] sm:$0xf]
  %v5618 = vunpack.c.l.b16 %v5586
  %v5619 = vunpack.c.l.b16 %v5587
  %v5620 = vunpack.c.l.b16 %v5588
  %v5621 = vunpack.c.l.b16 %v5589
  %v5622 = vunpack.c.l.b16 %v5590
  %v5623 = vunpack.c.l.b16 %v5591
  %v5624 = vunpack.c.l.b16 %v5592
  %v5625 = vunpack.c.l.b16 %v5593
  %v5626 = vunpack.c.l.b16 %v5594
  %v5627 = vunpack.c.l.b16 %v5595
  %v5628 = vunpack.c.l.b16 %v5596
  %v5629 = vunpack.c.l.b16 %v5597
  %v5630 = vunpack.c.l.b16 %v5598
  %v5631 = vunpack.c.l.b16 %v5599
  %v5632 = vunpack.c.l.b16 %v5600
  %v5633 = vunpack.c.l.b16 %v5601
  %v5634 = vpack.c.b16 %v5619, %v5618
  %v5635 = vpack.c.b16 %v5621, %v5620
  %v5636 = vpack.c.b16 %v5623, %v5622
  %v5637 = vpack.c.b16 %v5625, %v5624
  %v5638 = vpack.c.b16 %v5627, %v5626
  %v5639 = vpack.c.b16 %v5629, %v5628
  %v5640 = vpack.c.b16 %v5631, %v5630
  %v5641 = vpack.c.b16 %v5633, %v5632
  %5650 = vmatprep.subr.bf16.mxu0 0
  %5651 = vmatpush1.bf16.msra.mxu0 %v5634
  %5652 = vmatprep.subr.bf16.mxu0 0
  %5653 = vmatpush1.bf16.msra.mxu0 %v5635
  %5654 = vmatprep.subr.bf16.mxu0 0
  %5655 = vmatpush1.bf16.msra.mxu0 %v5636
  %5656 = vmatprep.subr.bf16.mxu0 0
  %5657 = vmatpush1.bf16.msra.mxu0 %v5637
  %5658 = vmatprep.subr.bf16.mxu0 0
  %5659 = vmatpush1.bf16.msra.mxu0 %v5638
  %5660 = vmatprep.subr.bf16.mxu0 0
  %5661 = vmatpush1.bf16.msra.mxu0 %v5639
  %5662 = vmatprep.subr.bf16.mxu0 0
  %5663 = vmatpush1.bf16.msra.mxu0 %v5640
  %5664 = vmatprep.subr.bf16.mxu0 0
  %5665 = vmatpush1.bf16.msra.mxu0 %v5641
  %5666 = vmatprep.subr.bf16.mxu0 0
  %5667 = vmatpush1.bf16.msra.mxu0 0
  %5668 = vmatprep.subr.bf16.mxu0 0
  %5669 = vmatpush1.bf16.msra.mxu0 0
  %5670 = vmatprep.subr.bf16.mxu0 0
  %5671 = vmatpush1.bf16.msra.mxu0 0
  %5672 = vmatprep.subr.bf16.mxu0 0
  %5673 = vmatpush1.bf16.msra.mxu0 0
  %5674 = vmatprep.subr.bf16.mxu0 0
  %5675 = vmatpush1.bf16.msra.mxu0 0
  %5676 = vmatprep.subr.bf16.mxu0 0
  %5677 = vmatpush1.bf16.msra.mxu0 0
  %5678 = vmatprep.subr.bf16.mxu0 0
  %5679 = vmatpush1.bf16.msra.mxu0 0
  %5680 = vmatprep.subr.bf16.mxu0 0
  %5681 = vmatpush1.bf16.msra.mxu0 0
  %5682 = vmatprep.mubr.bf16.mxu0 0
  %5683 = vmatmul.mubr.bf16.gmra.mrb[0].mxu0 %v3702
  %v5684 = vpop.f32.mrb[0].mxu0
  %v5685 = vadd.f32 0.0, %v5684
  %v5686 = vpop.f32.mrb[0].mxu0
  %v5687 = vpop.f32.mrb[0].mxu0
  %v5688 = vadd.f32 0.0, %v5687
  %v5689 = vpop.f32.mrb[0].mxu0
  %5690 = vmatprep.mubr.bf16.mxu0 0
  %5691 = vmatmul.mubr.bf16.gmra.mrb[0].mxu0 %v3703
  %v5692 = vpop.f32.mrb[0].mxu0
  %v5693 = vadd.f32 0.0, %v5692
  %v5694 = vpop.f32.mrb[0].mxu0
  %v5695 = vpop.f32.mrb[0].mxu0
  %v5696 = vadd.f32 0.0, %v5695
  %v5697 = vpop.f32.mrb[0].mxu0
  %5698 = vmatprep.mubr.bf16.mxu0 0
  %5699 = vmatmul.mubr.bf16.gmra.mrb[0].mxu0 %v3704
  %v5700 = vpop.f32.mrb[0].mxu0
  %v5701 = vadd.f32 0.0, %v5700
  %v5702 = vpop.f32.mrb[0].mxu0
  %v5703 = vpop.f32.mrb[0].mxu0
  %v5704 = vadd.f32 0.0, %v5703
  %v5705 = vpop.f32.mrb[0].mxu0
  %5706 = vmatprep.mubr.bf16.mxu0 0
  %5707 = vmatmul.mubr.bf16.gmra.mrb[0].mxu0 %v3705
  %v5708 = vpop.f32.mrb[0].mxu0
  %v5709 = vadd.f32 0.0, %v5708
  %v5710 = vpop.f32.mrb[0].mxu0
  %v5711 = vpop.f32.mrb[0].mxu0
  %v5712 = vadd.f32 0.0, %v5711
  %v5713 = vpop.f32.mrb[0].mxu0
  %5714 = vmatprep.mubr.bf16.mxu0 0
  %5715 = vmatmul.mubr.bf16.gmra.mrb[0].mxu0 %v3706
  %v5716 = vpop.f32.mrb[0].mxu0
  %v5717 = vadd.f32 0.0, %v5716
  %v5718 = vpop.f32.mrb[0].mxu0
  %v5719 = vpop.f32.mrb[0].mxu0
  %v5720 = vadd.f32 0.0, %v5719
  %v5721 = vpop.f32.mrb[0].mxu0
  %5722 = vmatprep.mubr.bf16.mxu0 0
  %5723 = vmatmul.mubr.bf16.gmra.mrb[0].mxu0 %v3707
  %v5724 = vpop.f32.mrb[0].mxu0
  %v5725 = vadd.f32 0.0, %v5724
  %v5726 = vpop.f32.mrb[0].mxu0
  %v5727 = vpop.f32.mrb[0].mxu0
  %v5728 = vadd.f32 0.0, %v5727
  %v5729 = vpop.f32.mrb[0].mxu0
  %5730 = vmatprep.mubr.bf16.mxu0 0
  %5731 = vmatmul.mubr.bf16.gmra.mrb[0].mxu0 %v3708
  %v5732 = vpop.f32.mrb[0].mxu0
  %v5733 = vadd.f32 0.0, %v5732
  %v5734 = vpop.f32.mrb[0].mxu0
  %v5735 = vpop.f32.mrb[0].mxu0
  %v5736 = vadd.f32 0.0, %v5735
  %v5737 = vpop.f32.mrb[0].mxu0
  %5738 = vmatprep.mubr.bf16.mxu0 0
  %5739 = vmatmul.mubr.bf16.gmra.mrb[0].mxu0 %v3709
  %v5740 = vpop.f32.mrb[0].mxu0
  %v5741 = vadd.f32 0.0, %v5740
  %v5742 = vpop.f32.mrb[0].mxu0
  %v5743 = vpop.f32.mrb[0].mxu0
  %v5744 = vadd.f32 0.0, %v5743
  %v5745 = vpop.f32.mrb[0].mxu0
  %5746 = vdwg.mxu0
  %5747 = vst [vmem:[%s8] sm:$0xff] %v5685
  %5748 = vst [vmem:[%s8 + $0x8] sm:$0xff] %v5688
  %5749 = vst [vmem:[%s8 + $0x10] sm:$0xff] %v5693
  %5750 = vst [vmem:[%s8 + $0x18] sm:$0xff] %v5696
  %5751 = vst [vmem:[%s8 + $0x20] sm:$0xff] %v5701
  %5752 = vst [vmem:[%s8 + $0x28] sm:$0xff] %v5704
  %5753 = vst [vmem:[%s8 + $0x30] sm:$0xff] %v5709
  %5754 = vst [vmem:[%s8 + $0x38] sm:$0xff] %v5712
  %5755 = vst [vmem:[%s8 + $0x40] sm:$0xff] %v5717
  %5756 = vst [vmem:[%s8 + $0x48] sm:$0xff] %v5720
  %5757 = vst [vmem:[%s8 + $0x50] sm:$0xff] %v5725
  %5758 = vst [vmem:[%s8 + $0x58] sm:$0xff] %v5728
  %5759 = vst [vmem:[%s8 + $0x60] sm:$0xff] %v5733
  %5760 = vst [vmem:[%s8 + $0x68] sm:$0xff] %v5736
  %5761 = vst [vmem:[%s8 + $0x70] sm:$0xff] %v5741
  %5762 = vst [vmem:[%s8 + $0x78] sm:$0xff] %v5744
  // Predicated region
  $region30: #{conv_group_forward.4} parent=0 // pred_check
    _
  $region31: #{conv_group_forward.4} parent=0 // pred_check_branch
    %5764 = sbr.rel (0) target = $region33
  $region32: #{conv_group_forward.4} parent=0 // pred_region
    _
  $region33: #{conv_group_forward.4} parent=0 // pred_fallthru
    _
  // Predicated region
  $region34: #{conv_group_forward.4} parent=0 // pred_check
    _
  $region35: #{conv_group_forward.4} parent=0 // pred_check_branch
    %5766 = sbr.rel (0) target = $region37
  $region36: #{conv_group_forward.4} parent=0 // pred_region
    _
  $region37: #{conv_group_forward.4} parent=0 // pred_fallthru
    _
  // Predicated region
  $region38: #{conv_group_forward.4} parent=0 // pred_check
    _
  $region39: #{conv_group_forward.4} parent=0 // pred_check_branch
    %5768 = sbr.rel (0) target = $region41
  $region40: #{conv_group_forward.4} parent=0 // pred_region
    _
  $region41: #{conv_group_forward.4} parent=0 // pred_fallthru
    _
  // Predicated region
  $region42: #{conv_group_forward.4} parent=0 // pred_check
    _
  $region43: #{conv_group_forward.4} parent=0 // pred_check_branch
    %5770 = sbr.rel (0) target = $region45
  $region44: #{conv_group_forward.4} parent=0 // pred_region
    _
  $region45: #{conv_group_forward.4} parent=0 // pred_fallthru
    _

</llo_original>
